<compile_context>
chip_gen: v6e
topology: v6e:2x2x1
jax: 0.10.0
libtpu: 0.0.40
codegen_flags: <defaults>
</compile_context>

<pallas_src>
import jax
import jax.numpy as jnp
from jax import lax
from jax.experimental import pallas as pl
from jax.experimental.pallas import tpu as pltpu


def bottleneck_kernel(x_ref, w1_ref, b1_ref, w2_ref, b2_ref, w3_ref, b3_ref,
                      o_ref, pad_ref):
    """Bt images per grid step; all (BN-folded, bf16) weights resident in VMEM.

    x_ref  : (Bt, H, W, Cin)       f32 input tile (also the identity path)
    w1_ref : (Cin, Cw)             bf16, BN1 scale folded in
    w2_ref : (9, Cw, Cw)           bf16, tap k = kh*3+kw, layout [k, cin, cout]
    w3_ref : (Cw, Cout)            bf16, BN3 scale folded in
    b*_ref : (1, C)                f32 folded BN bias
    o_ref  : (Bt, H, W, Cout)      f32
    pad_ref: (Bt, H+2, W+2, Cw)    bf16 scratch (zero-padded block2 input)
    """
    Bt, H, W, Cin = x_ref.shape
    Cw = w1_ref.shape[1]
    Cout = w3_ref.shape[1]
    M = Bt * H * W

    # ---- block1: 1x1 conv (BN scale pre-folded) + bias + ReLU -------------
    xb = x_ref[...].reshape(M, Cin).astype(jnp.bfloat16)
    y1 = jnp.dot(xb, w1_ref[...], preferred_element_type=jnp.float32)
    y1 = jnp.maximum(y1 + b1_ref[...], 0.0)

    # ---- block2: 3x3 conv (stride=1, pad=1) ---------------------------------
    # Build the padded input as a value (concat with zero borders) and write it
    # with ONE aligned full-block bf16 store.
    y1b = y1.astype(jnp.bfloat16).reshape(Bt, H, W, Cw)
    zcol = jnp.zeros((Bt, H, 1, Cw), jnp.bfloat16)
    zrow = jnp.zeros((Bt, 1, W + 2, Cw), jnp.bfloat16)
    pad_ref[...] = jnp.concatenate(
        [zrow, jnp.concatenate([zcol, y1b, zcol], axis=2), zrow], axis=1)

    # 9 accumulating matmuls on shifted views (no im2col scratch).
    y2 = jnp.zeros((M, Cw), jnp.float32)
    for k in range(9):                                    # static unroll
        kh, kw = k // 3, k % 3
        tap = pad_ref[:, kh:kh + H, kw:kw + W, :].reshape(M, Cw)
        y2 = y2 + jnp.dot(tap, w2_ref[k], preferred_element_type=jnp.float32)
    y2 = jnp.maximum(y2 + b2_ref[...], 0.0)

    # ---- block3: 1x1 conv (BN scale pre-folded) + bias, residual, ReLU ----
    y3 = jnp.dot(y2.astype(jnp.bfloat16), w3_ref[...],
                 preferred_element_type=jnp.float32)
    # identity path read late (short f32 live range); downsample=None.
    y3 = y3 + b3_ref[...] + x_ref[...].reshape(M, Cout)
    o_ref[...] = jnp.maximum(y3, 0.0).reshape(Bt, H, W, Cout).astype(o_ref.dtype)


def _pick_block_batch(n):
    """Largest Bt <= 8 dividing n with at least 2 grid steps (v7x megacore)."""
    for cand in range(min(n, 8), 0, -1):
        if n % cand == 0 and (n // cand) >= 2:
            return cand
    return 1


def bottleneck_pallas(x_nhwc, params, *, block_batch=None):
    """x_nhwc: (N, H, W, Cin) f32.  Returns (N, H, W, Cout) f32 (NHWC)."""
    w1, b1, w2, b2, w3, b3 = params
    N, H, W, Cin = x_nhwc.shape
    Cw = w1.shape[1]
    Cout = w3.shape[1]
    assert Cin == Cout, "downsample=None requires in_channel == out_channel*4"

    if block_batch is None:
        block_batch = _pick_block_batch(N)
    assert N % block_batch == 0
    Bt = block_batch

    def full(arr):
        shape = arr.shape
        return pl.BlockSpec(shape, lambda n: (0,) * len(shape))

    return pl.pallas_call(
        bottleneck_kernel,
        out_shape=jax.ShapeDtypeStruct((N, H, W, Cout), jnp.float32),
        grid=(N // Bt,),
        in_specs=[
            pl.BlockSpec((Bt, H, W, Cin), lambda n: (n, 0, 0, 0)),
            full(w1), full(b1), full(w2), full(b2), full(w3), full(b3),
        ],
        out_specs=pl.BlockSpec((Bt, H, W, Cout), lambda n: (n, 0, 0, 0)),
        scratch_shapes=[
            pltpu.VMEM((Bt, H + 2, W + 2, Cw), jnp.bfloat16),   # padded block2 input
        ],
        compiler_params=pltpu.CompilerParams(
            dimension_semantics=("parallel",),   # shard batch tiles across TCs
            vmem_limit_bytes=32 * 1024 * 1024),  # v7x-safe scoped limit
    )(x_nhwc, w1, b1, w2, b2, w3, b3)


def bottleneck_pallas_nchw(x_nchw, params):
    """Drop-in for the PyTorch NCHW interface.  Prefer the NHWC entry point:
    these two transposes are full HBM round-trips of the activations."""
    y = bottleneck_pallas(jnp.transpose(x_nchw, (0, 2, 3, 1)), params)
    return jnp.transpose(y, (0, 3, 1, 2))


# ---------------------------------------------------------------------------
# Parameter construction + pure-JAX reference (for a correctness check).
# ---------------------------------------------------------------------------
def fold_bn(gamma, beta, mean, var, eps=1e-5):
    scale = gamma / jnp.sqrt(var + eps)
    bias = beta - mean * scale
    return scale, bias


def make_params(key, in_channel, out_channel, base_width=64, groups=1):
    expansion = 4
    width = int(out_channel * (base_width / 64.0)) * groups
    cout = out_channel * expansion
    ks = jax.random.split(key, 6)

    # PyTorch conv weights are OIHW (bias=False).
    w1_oihw = 0.1 * jax.random.normal(ks[0], (width, in_channel, 1, 1), jnp.float32)
    w2_oihw = 0.1 * jax.random.normal(ks[1], (width, width, 3, 3), jnp.float32)
    w3_oihw = 0.1 * jax.random.normal(ks[2], (cout, width, 1, 1), jnp.float32)

    def bn(k, c):
        k1, k2, k3, k4 = jax.random.split(k, 4)
        gamma = 1.0 + 0.1 * jax.random.normal(k1, (c,), jnp.float32)
        beta = 0.1 * jax.random.normal(k2, (c,), jnp.float32)
        mean = 0.1 * jax.random.normal(k3, (c,), jnp.float32)
        var = jax.random.uniform(k4, (c,), jnp.float32, 0.5, 1.5)
        return gamma, beta, mean, var

    s1, b1 = fold_bn(*bn(ks[3], width))
    s2, b2 = fold_bn(*bn(ks[4], width))
    s3, b3 = fold_bn(*bn(ks[5], cout))

    # Fold the BN scale into the conv weights (per output channel), in f32.
    w1f = w1_oihw * s1[:, None, None, None]
    w2f = w2_oihw * s2[:, None, None, None]
    w3f = w3_oihw * s3[:, None, None, None]

    # Kernel matmul layouts; bf16 MXU operands (f32 accumulation in-kernel).
    w1_mat = jnp.transpose(w1f[:, :, 0, 0], (1, 0)).astype(jnp.bfloat16)   # (Cin, Cw)
    w2_mat = (jnp.transpose(w2f, (2, 3, 1, 0))                             # (kh,kw,cin,cout)
              .reshape(9, width, width).astype(jnp.bfloat16))              # (9, Cw, Cw)
    w3_mat = jnp.transpose(w3f[:, :, 0, 0], (1, 0)).astype(jnp.bfloat16)   # (Cw, Cout)

    kernel_params = (w1_mat, b1[None, :], w2_mat, b2[None, :], w3_mat, b3[None, :])
    folded_oihw = (w1f, w2f, w3f)
    biases = (b1, b2, b3)
    return kernel_params, folded_oihw, biases


def reference_bottleneck(x_nhwc, folded_oihw, biases):
    """Pure-JAX (lax.conv) reference with the same folded-BN + bf16-operand
    semantics as the kernel (f32 accumulation)."""
    w1f, w2f, w3f = folded_oihw
    b1, b2, b3 = biases

    def conv(x, w_oihw, pad):
        w = jnp.transpose(w_oihw, (2, 3, 1, 0)).astype(jnp.bfloat16)  # HWIO
        return lax.conv_general_dilated(
            x.astype(jnp.bfloat16), w, window_strides=(1, 1), padding=pad,
            dimension_numbers=("NHWC", "HWIO", "NHWC"),
            preferred_element_type=jnp.float32)

    identity = x_nhwc
    y = jnp.maximum(conv(x_nhwc, w1f, "VALID") + b1, 0.0)
    y = jnp.maximum(conv(y, w2f, ((1, 1), (1, 1))) + b2, 0.0)
    y = conv(y, w3f, "VALID") + b3
    return jnp.maximum(y + identity, 0.0)


if __name__ == "__main__":
    # Bottleneck with downsample=None => in_channel == out_channel * 4.
    # out_channel=32 -> width=32, Cout = in_channel = 128 (lane-dense output).
    # N=4 with Bt=2 exercises batch tiling and keeps grid length 2 (both TCs).
    N, out_channel, H, W = 4, 32, 16, 16
    in_channel = out_channel * 4          # 128
    key = jax.random.PRNGKey(0)
    kx, kp = jax.random.split(key)

    x = jax.random.normal(kx, (N, H, W, in_channel), jnp.float32)   # NHWC
    kernel_params, folded_oihw, biases = make_params(kp, in_channel, out_channel)

    y = jax.block_until_ready(bottleneck_pallas(x, kernel_params))
    y_ref = reference_bottleneck(x, folded_oihw, biases)

    assert y.shape == (N, H, W, in_channel)
    err = float(jnp.max(jnp.abs(y - y_ref)))
    assert jnp.allclose(y, y_ref, rtol=1e-2, atol=1e-2), err

    # PyTorch-style NCHW drop-in wrapper path.
    x_nchw = jnp.transpose(x, (0, 3, 1, 2))
    y_nchw = jax.block_until_ready(bottleneck_pallas_nchw(x_nchw, kernel_params))
    assert jnp.allclose(jnp.transpose(y_nchw, (0, 2, 3, 1)), y_ref,
                        rtol=1e-2, atol=1e-2)

    print("KERNEL_OK")
</pallas_src>

<mosaic_0001>
module attributes {stable_mosaic.version = 11 : i64} {
  func.func @bottleneck_kernel(%arg0: i32, %arg1: memref<2x16x16x128xf32, #tpu.memory_space<vmem>>, %arg2: memref<128x32xbf16, #tpu.memory_space<vmem>>, %arg3: memref<1x32xf32, #tpu.memory_space<vmem>>, %arg4: memref<9x32x32xbf16, #tpu.memory_space<vmem>>, %arg5: memref<1x32xf32, #tpu.memory_space<vmem>>, %arg6: memref<32x128xbf16, #tpu.memory_space<vmem>>, %arg7: memref<1x128xf32, #tpu.memory_space<vmem>>, %arg8: memref<2x16x16x128xf32, #tpu.memory_space<vmem>>, %arg9: memref<2x18x18x32xbf16, #tpu.memory_space<vmem>>) attributes {dimension_semantics = [#tpu.dimension_semantics<parallel>], iteration_bounds = array<i64: 2>, scalar_prefetch = 0 : i64, scratch_operands = 1 : i64, tpu.core_type = #tpu.core_type<tc>, window_params = [{transform_indices = @transform_0, window_bounds = array<i64: 2, 16, 16, 128>}, {pipeline_mode = #tpu.pipeline_mode<synchronous>, transform_indices = @transform_1, window_bounds = array<i64: 128, 32>}, {pipeline_mode = #tpu.pipeline_mode<synchronous>, transform_indices = @transform_2, window_bounds = array<i64: 1, 32>}, {pipeline_mode = #tpu.pipeline_mode<synchronous>, transform_indices = @transform_3, window_bounds = array<i64: 9, 32, 32>}, {pipeline_mode = #tpu.pipeline_mode<synchronous>, transform_indices = @transform_4, window_bounds = array<i64: 1, 32>}, {pipeline_mode = #tpu.pipeline_mode<synchronous>, transform_indices = @transform_5, window_bounds = array<i64: 32, 128>}, {pipeline_mode = #tpu.pipeline_mode<synchronous>, transform_indices = @transform_6, window_bounds = array<i64: 1, 128>}, {transform_indices = @transform_7, window_bounds = array<i64: 2, 16, 16, 128>}]} {
    %c0 = arith.constant 0 : index
    %c0_0 = arith.constant 0 : index
    %c0_1 = arith.constant 0 : index
    %c0_2 = arith.constant 0 : index
    %0 = vector.load %arg1[%c0, %c0_0, %c0_1, %c0_2] : memref<2x16x16x128xf32, #tpu.memory_space<vmem>>, vector<2x16x16x128xf32>
    %1 = vector.shape_cast %0 : vector<2x16x16x128xf32> to vector<512x128xf32>
    %2 = arith.truncf %1 : vector<512x128xf32> to vector<512x128xbf16>
    %c0_3 = arith.constant 0 : index
    %c0_4 = arith.constant 0 : index
    %3 = vector.load %arg2[%c0_3, %c0_4] : memref<128x32xbf16, #tpu.memory_space<vmem>>, vector<128x32xbf16>
    %cst = arith.constant dense<0.000000e+00> : vector<512x32xf32>
    %4 = tpu.matmul %2, %3, %cst {dimension_numbers = #tpu.dot_dimension_numbers<[1], [0], [0], [1], [0, 0, 1, 1], [], []>} : vector<512x128xbf16>, vector<128x32xbf16>, vector<512x32xf32> -> vector<512x32xf32>
    %c0_5 = arith.constant 0 : index
    %c0_6 = arith.constant 0 : index
    %5 = vector.load %arg3[%c0_5, %c0_6] : memref<1x32xf32, #tpu.memory_space<vmem>>, vector<1x32xf32>
    %6 = vector.broadcast %5 : vector<1x32xf32> to vector<512x32xf32>
    %7 = arith.addf %4, %6 : vector<512x32xf32>
    %cst_7 = arith.constant 0.000000e+00 : f32
    %8 = vector.broadcast %cst_7 : f32 to vector<512x32xf32>
    %9 = arith.maximumf %7, %8 : vector<512x32xf32>
    %10 = arith.truncf %9 : vector<512x32xf32> to vector<512x32xbf16>
    %11 = vector.shape_cast %10 : vector<512x32xbf16> to vector<2x16x16x32xbf16>
    %cst_8 = arith.constant 0.000000e+00 : bf16
    %12 = vector.broadcast %cst_8 : bf16 to vector<2x16x1x32xbf16>
    %cst_9 = arith.constant 0.000000e+00 : bf16
    %13 = vector.broadcast %cst_9 : bf16 to vector<2x1x18x32xbf16>
    %14 = tpu.concatenate %12, %11, %12 in 2 : vector<2x16x1x32xbf16>, vector<2x16x16x32xbf16>, vector<2x16x1x32xbf16> -> vector<2x16x18x32xbf16>
    %15 = tpu.concatenate %13, %14, %13 in 1 : vector<2x1x18x32xbf16>, vector<2x16x18x32xbf16>, vector<2x1x18x32xbf16> -> vector<2x18x18x32xbf16>
    %c0_10 = arith.constant 0 : index
    %c0_11 = arith.constant 0 : index
    %c0_12 = arith.constant 0 : index
    %c0_13 = arith.constant 0 : index
    %16 = vector.load %arg9[%c0_10, %c0_11, %c0_12, %c0_13] : memref<2x18x18x32xbf16, #tpu.memory_space<vmem>>, vector<2x18x18x32xbf16>
    tpu.vector_store %arg9[%c0_10, %c0_11, %c0_12, %c0_13], %15 {strides = array<i32>} : memref<2x18x18x32xbf16, #tpu.memory_space<vmem>>, vector<2x18x18x32xbf16>,
    %cst_14 = arith.constant 0.000000e+00 : f32
    %17 = vector.broadcast %cst_14 : f32 to vector<512x32xf32>
    %c0_15 = arith.constant 0 : index
    %c0_16 = arith.constant 0 : index
    %c0_17 = arith.constant 0 : index
    %c0_18 = arith.constant 0 : index
    %18 = vector.load %arg9[%c0_15, %c0_16, %c0_17, %c0_18] : memref<2x18x18x32xbf16, #tpu.memory_space<vmem>>, vector<2x16x16x32xbf16>
    %19 = vector.shape_cast %18 : vector<2x16x16x32xbf16> to vector<512x32xbf16>
    %c0_19 = arith.constant 0 : index
    %c0_20 = arith.constant 0 : index
    %c0_21 = arith.constant 0 : index
    %20 = vector.load %arg4[%c0_19, %c0_20, %c0_21] : memref<9x32x32xbf16, #tpu.memory_space<vmem>>, vector<1x32x32xbf16>
    %21 = vector.shape_cast %20 : vector<1x32x32xbf16> to vector<32x32xbf16>
    %cst_22 = arith.constant dense<0.000000e+00> : vector<512x32xf32>
    %22 = tpu.matmul %19, %21, %cst_22 {dimension_numbers = #tpu.dot_dimension_numbers<[1], [0], [0], [1], [0, 0, 1, 1], [], []>} : vector<512x32xbf16>, vector<32x32xbf16>, vector<512x32xf32> -> vector<512x32xf32>
    %23 = arith.addf %17, %22 : vector<512x32xf32>
    %c0_23 = arith.constant 0 : index
    %c0_24 = arith.constant 0 : index
    %c1 = arith.constant 1 : index
    %c0_25 = arith.constant 0 : index
    %24 = vector.load %arg9[%c0_23, %c0_24, %c1, %c0_25] : memref<2x18x18x32xbf16, #tpu.memory_space<vmem>>, vector<2x16x16x32xbf16>
    %25 = vector.shape_cast %24 : vector<2x16x16x32xbf16> to vector<512x32xbf16>
    %c1_26 = arith.constant 1 : index
    %c0_27 = arith.constant 0 : index
    %c0_28 = arith.constant 0 : index
    %26 = vector.load %arg4[%c1_26, %c0_27, %c0_28] : memref<9x32x32xbf16, #tpu.memory_space<vmem>>, vector<1x32x32xbf16>
    %27 = vector.shape_cast %26 : vector<1x32x32xbf16> to vector<32x32xbf16>
    %cst_29 = arith.constant dense<0.000000e+00> : vector<512x32xf32>
    %28 = tpu.matmul %25, %27, %cst_29 {dimension_numbers = #tpu.dot_dimension_numbers<[1], [0], [0], [1], [0, 0, 1, 1], [], []>} : vector<512x32xbf16>, vector<32x32xbf16>, vector<512x32xf32> -> vector<512x32xf32>
    %29 = arith.addf %23, %28 : vector<512x32xf32>
    %c0_30 = arith.constant 0 : index
    %c0_31 = arith.constant 0 : index
    %c2 = arith.constant 2 : index
    %c0_32 = arith.constant 0 : index
    %30 = vector.load %arg9[%c0_30, %c0_31, %c2, %c0_32] : memref<2x18x18x32xbf16, #tpu.memory_space<vmem>>, vector<2x16x16x32xbf16>
    %31 = vector.shape_cast %30 : vector<2x16x16x32xbf16> to vector<512x32xbf16>
    %c2_33 = arith.constant 2 : index
    %c0_34 = arith.constant 0 : index
    %c0_35 = arith.constant 0 : index
    %32 = vector.load %arg4[%c2_33, %c0_34, %c0_35] : memref<9x32x32xbf16, #tpu.memory_space<vmem>>, vector<1x32x32xbf16>
    %33 = vector.shape_cast %32 : vector<1x32x32xbf16> to vector<32x32xbf16>
    %cst_36 = arith.constant dense<0.000000e+00> : vector<512x32xf32>
    %34 = tpu.matmul %31, %33, %cst_36 {dimension_numbers = #tpu.dot_dimension_numbers<[1], [0], [0], [1], [0, 0, 1, 1], [], []>} : vector<512x32xbf16>, vector<32x32xbf16>, vector<512x32xf32> -> vector<512x32xf32>
    %35 = arith.addf %29, %34 : vector<512x32xf32>
    %c0_37 = arith.constant 0 : index
    %c1_38 = arith.constant 1 : index
    %c0_39 = arith.constant 0 : index
    %c0_40 = arith.constant 0 : index
    %36 = vector.load %arg9[%c0_37, %c1_38, %c0_39, %c0_40] : memref<2x18x18x32xbf16, #tpu.memory_space<vmem>>, vector<2x16x16x32xbf16>
    %37 = vector.shape_cast %36 : vector<2x16x16x32xbf16> to vector<512x32xbf16>
    %c3 = arith.constant 3 : index
    %c0_41 = arith.constant 0 : index
    %c0_42 = arith.constant 0 : index
    %38 = vector.load %arg4[%c3, %c0_41, %c0_42] : memref<9x32x32xbf16, #tpu.memory_space<vmem>>, vector<1x32x32xbf16>
    %39 = vector.shape_cast %38 : vector<1x32x32xbf16> to vector<32x32xbf16>
    %cst_43 = arith.constant dense<0.000000e+00> : vector<512x32xf32>
    %40 = tpu.matmul %37, %39, %cst_43 {dimension_numbers = #tpu.dot_dimension_numbers<[1], [0], [0], [1], [0, 0, 1, 1], [], []>} : vector<512x32xbf16>, vector<32x32xbf16>, vector<512x32xf32> -> vector<512x32xf32>
    %41 = arith.addf %35, %40 : vector<512x32xf32>
    %c0_44 = arith.constant 0 : index
    %c1_45 = arith.constant 1 : index
    %c1_46 = arith.constant 1 : index
    %c0_47 = arith.constant 0 : index
    %42 = vector.load %arg9[%c0_44, %c1_45, %c1_46, %c0_47] : memref<2x18x18x32xbf16, #tpu.memory_space<vmem>>, vector<2x16x16x32xbf16>
    %43 = vector.shape_cast %42 : vector<2x16x16x32xbf16> to vector<512x32xbf16>
    %c4 = arith.constant 4 : index
    %c0_48 = arith.constant 0 : index
    %c0_49 = arith.constant 0 : index
    %44 = vector.load %arg4[%c4, %c0_48, %c0_49] : memref<9x32x32xbf16, #tpu.memory_space<vmem>>, vector<1x32x32xbf16>
    %45 = vector.shape_cast %44 : vector<1x32x32xbf16> to vector<32x32xbf16>
    %cst_50 = arith.constant dense<0.000000e+00> : vector<512x32xf32>
    %46 = tpu.matmul %43, %45, %cst_50 {dimension_numbers = #tpu.dot_dimension_numbers<[1], [0], [0], [1], [0, 0, 1, 1], [], []>} : vector<512x32xbf16>, vector<32x32xbf16>, vector<512x32xf32> -> vector<512x32xf32>
    %47 = arith.addf %41, %46 : vector<512x32xf32>
    %c0_51 = arith.constant 0 : index
    %c1_52 = arith.constant 1 : index
    %c2_53 = arith.constant 2 : index
    %c0_54 = arith.constant 0 : index
    %48 = vector.load %arg9[%c0_51, %c1_52, %c2_53, %c0_54] : memref<2x18x18x32xbf16, #tpu.memory_space<vmem>>, vector<2x16x16x32xbf16>
    %49 = vector.shape_cast %48 : vector<2x16x16x32xbf16> to vector<512x32xbf16>
    %c5 = arith.constant 5 : index
    %c0_55 = arith.constant 0 : index
    %c0_56 = arith.constant 0 : index
    %50 = vector.load %arg4[%c5, %c0_55, %c0_56] : memref<9x32x32xbf16, #tpu.memory_space<vmem>>, vector<1x32x32xbf16>
    %51 = vector.shape_cast %50 : vector<1x32x32xbf16> to vector<32x32xbf16>
    %cst_57 = arith.constant dense<0.000000e+00> : vector<512x32xf32>
    %52 = tpu.matmul %49, %51, %cst_57 {dimension_numbers = #tpu.dot_dimension_numbers<[1], [0], [0], [1], [0, 0, 1, 1], [], []>} : vector<512x32xbf16>, vector<32x32xbf16>, vector<512x32xf32> -> vector<512x32xf32>
    %53 = arith.addf %47, %52 : vector<512x32xf32>
    %c0_58 = arith.constant 0 : index
    %c2_59 = arith.constant 2 : index
    %c0_60 = arith.constant 0 : index
    %c0_61 = arith.constant 0 : index
    %54 = vector.load %arg9[%c0_58, %c2_59, %c0_60, %c0_61] : memref<2x18x18x32xbf16, #tpu.memory_space<vmem>>, vector<2x16x16x32xbf16>
    %55 = vector.shape_cast %54 : vector<2x16x16x32xbf16> to vector<512x32xbf16>
    %c6 = arith.constant 6 : index
    %c0_62 = arith.constant 0 : index
    %c0_63 = arith.constant 0 : index
    %56 = vector.load %arg4[%c6, %c0_62, %c0_63] : memref<9x32x32xbf16, #tpu.memory_space<vmem>>, vector<1x32x32xbf16>
    %57 = vector.shape_cast %56 : vector<1x32x32xbf16> to vector<32x32xbf16>
    %cst_64 = arith.constant dense<0.000000e+00> : vector<512x32xf32>
    %58 = tpu.matmul %55, %57, %cst_64 {dimension_numbers = #tpu.dot_dimension_numbers<[1], [0], [0], [1], [0, 0, 1, 1], [], []>} : vector<512x32xbf16>, vector<32x32xbf16>, vector<512x32xf32> -> vector<512x32xf32>
    %59 = arith.addf %53, %58 : vector<512x32xf32>
    %c0_65 = arith.constant 0 : index
    %c2_66 = arith.constant 2 : index
    %c1_67 = arith.constant 1 : index
    %c0_68 = arith.constant 0 : index
    %60 = vector.load %arg9[%c0_65, %c2_66, %c1_67, %c0_68] : memref<2x18x18x32xbf16, #tpu.memory_space<vmem>>, vector<2x16x16x32xbf16>
    %61 = vector.shape_cast %60 : vector<2x16x16x32xbf16> to vector<512x32xbf16>
    %c7 = arith.constant 7 : index
    %c0_69 = arith.constant 0 : index
    %c0_70 = arith.constant 0 : index
    %62 = vector.load %arg4[%c7, %c0_69, %c0_70] : memref<9x32x32xbf16, #tpu.memory_space<vmem>>, vector<1x32x32xbf16>
    %63 = vector.shape_cast %62 : vector<1x32x32xbf16> to vector<32x32xbf16>
    %cst_71 = arith.constant dense<0.000000e+00> : vector<512x32xf32>
    %64 = tpu.matmul %61, %63, %cst_71 {dimension_numbers = #tpu.dot_dimension_numbers<[1], [0], [0], [1], [0, 0, 1, 1], [], []>} : vector<512x32xbf16>, vector<32x32xbf16>, vector<512x32xf32> -> vector<512x32xf32>
    %65 = arith.addf %59, %64 : vector<512x32xf32>
    %c0_72 = arith.constant 0 : index
    %c2_73 = arith.constant 2 : index
    %c2_74 = arith.constant 2 : index
    %c0_75 = arith.constant 0 : index
    %66 = vector.load %arg9[%c0_72, %c2_73, %c2_74, %c0_75] : memref<2x18x18x32xbf16, #tpu.memory_space<vmem>>, vector<2x16x16x32xbf16>
    %67 = vector.shape_cast %66 : vector<2x16x16x32xbf16> to vector<512x32xbf16>
    %c8 = arith.constant 8 : index
    %c0_76 = arith.constant 0 : index
    %c0_77 = arith.constant 0 : index
    %68 = vector.load %arg4[%c8, %c0_76, %c0_77] : memref<9x32x32xbf16, #tpu.memory_space<vmem>>, vector<1x32x32xbf16>
    %69 = vector.shape_cast %68 : vector<1x32x32xbf16> to vector<32x32xbf16>
    %cst_78 = arith.constant dense<0.000000e+00> : vector<512x32xf32>
    %70 = tpu.matmul %67, %69, %cst_78 {dimension_numbers = #tpu.dot_dimension_numbers<[1], [0], [0], [1], [0, 0, 1, 1], [], []>} : vector<512x32xbf16>, vector<32x32xbf16>, vector<512x32xf32> -> vector<512x32xf32>
    %71 = arith.addf %65, %70 : vector<512x32xf32>
    %c0_79 = arith.constant 0 : index
    %c0_80 = arith.constant 0 : index
    %72 = vector.load %arg5[%c0_79, %c0_80] : memref<1x32xf32, #tpu.memory_space<vmem>>, vector<1x32xf32>
    %73 = vector.broadcast %72 : vector<1x32xf32> to vector<512x32xf32>
    %74 = arith.addf %71, %73 : vector<512x32xf32>
    %cst_81 = arith.constant 0.000000e+00 : f32
    %75 = vector.broadcast %cst_81 : f32 to vector<512x32xf32>
    %76 = arith.maximumf %74, %75 : vector<512x32xf32>
    %77 = arith.truncf %76 : vector<512x32xf32> to vector<512x32xbf16>
    %c0_82 = arith.constant 0 : index
    %c0_83 = arith.constant 0 : index
    %78 = vector.load %arg6[%c0_82, %c0_83] : memref<32x128xbf16, #tpu.memory_space<vmem>>, vector<32x128xbf16>
    %cst_84 = arith.constant dense<0.000000e+00> : vector<512x128xf32>
    %79 = tpu.matmul %77, %78, %cst_84 {dimension_numbers = #tpu.dot_dimension_numbers<[1], [0], [0], [1], [0, 0, 1, 1], [], []>} : vector<512x32xbf16>, vector<32x128xbf16>, vector<512x128xf32> -> vector<512x128xf32>
    %c0_85 = arith.constant 0 : index
    %c0_86 = arith.constant 0 : index
    %80 = vector.load %arg7[%c0_85, %c0_86] : memref<1x128xf32, #tpu.memory_space<vmem>>, vector<1x128xf32>
    %81 = vector.broadcast %80 : vector<1x128xf32> to vector<512x128xf32>
    %82 = arith.addf %79, %81 : vector<512x128xf32>
    %c0_87 = arith.constant 0 : index
    %c0_88 = arith.constant 0 : index
    %c0_89 = arith.constant 0 : index
    %c0_90 = arith.constant 0 : index
    %83 = vector.load %arg1[%c0_87, %c0_88, %c0_89, %c0_90] : memref<2x16x16x128xf32, #tpu.memory_space<vmem>>, vector<2x16x16x128xf32>
    %84 = vector.shape_cast %83 : vector<2x16x16x128xf32> to vector<512x128xf32>
    %85 = arith.addf %82, %84 : vector<512x128xf32>
    %cst_91 = arith.constant 0.000000e+00 : f32
    %86 = vector.broadcast %cst_91 : f32 to vector<512x128xf32>
    %87 = arith.maximumf %85, %86 : vector<512x128xf32>
    %88 = vector.shape_cast %87 : vector<512x128xf32> to vector<2x16x16x128xf32>
    %c0_92 = arith.constant 0 : index
    %c0_93 = arith.constant 0 : index
    %c0_94 = arith.constant 0 : index
    %c0_95 = arith.constant 0 : index
    %89 = vector.load %arg8[%c0_92, %c0_93, %c0_94, %c0_95] : memref<2x16x16x128xf32, #tpu.memory_space<vmem>>, vector<2x16x16x128xf32>
    tpu.vector_store %arg8[%c0_92, %c0_93, %c0_94, %c0_95], %88 {strides = array<i32>} : memref<2x16x16x128xf32, #tpu.memory_space<vmem>>, vector<2x16x16x128xf32>,
    return
  }
  func.func @transform_0(%arg0: i32) -> (i32, i32, i32, i32) {
    %c0_i32 = arith.constant 0 : i32
    %c0_i32_0 = arith.constant 0 : i32
    %c0_i32_1 = arith.constant 0 : i32
    %c0_i32_2 = arith.constant 0 : i32
    return %arg0, %c0_i32, %c0_i32_0, %c0_i32_1 : i32, i32, i32, i32
  }
  func.func @transform_1(%arg0: i32) -> (i32, i32) {
    %c0_i32 = arith.constant 0 : i32
    %c0_i32_0 = arith.constant 0 : i32
    %c0_i32_1 = arith.constant 0 : i32
    return %c0_i32, %c0_i32_0 : i32, i32
  }
  func.func @transform_2(%arg0: i32) -> (i32, i32) {
    %c0_i32 = arith.constant 0 : i32
    %c0_i32_0 = arith.constant 0 : i32
    %c0_i32_1 = arith.constant 0 : i32
    return %c0_i32, %c0_i32_0 : i32, i32
  }
  func.func @transform_3(%arg0: i32) -> (i32, i32, i32) {
    %c0_i32 = arith.constant 0 : i32
    %c0_i32_0 = arith.constant 0 : i32
    %c0_i32_1 = arith.constant 0 : i32
    %c0_i32_2 = arith.constant 0 : i32
    return %c0_i32, %c0_i32_0, %c0_i32_1 : i32, i32, i32
  }
  func.func @transform_4(%arg0: i32) -> (i32, i32) {
    %c0_i32 = arith.constant 0 : i32
    %c0_i32_0 = arith.constant 0 : i32
    %c0_i32_1 = arith.constant 0 : i32
    return %c0_i32, %c0_i32_0 : i32, i32
  }
  func.func @transform_5(%arg0: i32) -> (i32, i32) {
    %c0_i32 = arith.constant 0 : i32
    %c0_i32_0 = arith.constant 0 : i32
    %c0_i32_1 = arith.constant 0 : i32
    return %c0_i32, %c0_i32_0 : i32, i32
  }
  func.func @transform_6(%arg0: i32) -> (i32, i32) {
    %c0_i32 = arith.constant 0 : i32
    %c0_i32_0 = arith.constant 0 : i32
    %c0_i32_1 = arith.constant 0 : i32
    return %c0_i32, %c0_i32_0 : i32, i32
  }
  func.func @transform_7(%arg0: i32) -> (i32, i32, i32, i32) {
    %c0_i32 = arith.constant 0 : i32
    %c0_i32_0 = arith.constant 0 : i32
    %c0_i32_1 = arith.constant 0 : i32
    %c0_i32_2 = arith.constant 0 : i32
    return %arg0, %c0_i32, %c0_i32_0, %c0_i32_1 : i32, i32, i32, i32
  }
}

</mosaic_0001>

<llo_original>
// kernel: tpu_custom_call.1
$region0: #{tpu_custom_call.1}
  #allocation0 [shape = 'u32[]', space=smem, size = 0x4, offset = 0x4, fixed_abs, tag = 'smem constant byte address 0x4 - core index']
  #allocation1 [shape = 'u32[144,128]{1,0:T(1,128)}', space=vmem, size = 0x12000, scoped, tag = 'internal scratch']
  #allocation2 [shape = 'bf16[2,18,18,32]{3,2,1,0:T(8,128)(2,1)}', space=vmem, size = 0x36000, scoped, tag = 'scratch operand']
  %s0 = inlined_call_operand.hbm [shape: f32[4,16,16,128], index: 0, kind: input, shape index: {}]
  %s1 = inlined_call_operand.vmem [shape: bf16[128,32], index: 1, kind: input, shape index: {}]
  %s2 = inlined_call_operand.vmem [shape: f32[1,32], index: 2, kind: input, shape index: {}]
  %s3 = inlined_call_operand.hbm [shape: bf16[9,32,32], index: 3, kind: input, shape index: {}]
  %s4 = inlined_call_operand.vmem [shape: f32[1,32], index: 4, kind: input, shape index: {}]
  %s5 = inlined_call_operand.vmem [shape: bf16[32,128], index: 5, kind: input, shape index: {}]
  %s6 = inlined_call_operand.vmem [shape: f32[1,128], index: 6, kind: input, shape index: {}]
  %s7 = inlined_call_operand.hbm [shape: f32[4,16,16,128], index: 7, kind: output, shape index: {}]
  %s8 = sld [smem:[#allocation0]]
  $region69: #{tpu_custom_call.1} parent=0
    _
  %s10 = ssub.s32 1, %s8
  %s11 = scalar_select 0, %s10, %s8
  $region1: #{tpu_custom_call.1} parent=0
    #allocation3 [shape = 'u8[524288]{0}', space=vmem, size = 0x80000, scoped, tag = 'input window, operand 0']
    #allocation4 [shape = 's32[2]{0}', space=sflag, size = 0x8, scoped, tag = 'scoped memory for tpu_custom_call.1']
    #allocation5 [shape = 's32[2]{0}', space=sflag, size = 0x8, scoped, tag = 'scoped memory for tpu_custom_call.1']
    #allocation6 [shape = 'u8[73728]{0}', space=vmem, size = 0x12000, scoped, tag = 'input window, operand 3, single buffered']
    #allocation7 [shape = 's32[1]{0}', space=sflag, size = 0x4, scoped, tag = 'scoped memory for tpu_custom_call.1']
    #allocation8 [shape = 'u8[524288]{0}', space=vmem, size = 0x80000, scoped, tag = 'output window, operand 0']
    %12 = vsyncpa [#allocation4], 0
    %s13 = scalar_lea.sflag [#allocation4], 1
    %14 = vsyncpa %s13, 0
    %15 = vsyncpa [#allocation7], 0
    %16 = vsyncpa [#allocation5], 0
    %s17 = scalar_lea.sflag [#allocation5], 1
    %18 = vsyncpa %s17, 0
    loop: start=0, step=1, limit=4
    $region2: #{tpu_custom_call.1} parent=1 // loop_pre_header
      _
    $region3: #{tpu_custom_call.1} parent=1 // loop_header
      %s20 = sphi 0, %s24
      %p21 = scmp.ge.s32.totalorder %s20, 4
      %s30 = sphi 0, %s32
      %s33 = sphi 0, %s30
      %s34 = sphi 0, %s33
      %s50 = sphi 0, %s34
      %s54 = sphi 0, %s54
      %s56 = sphi 0, %s54
      %s57 = sphi 0, %s56
      %s71 = sphi 0, %s57
      %s75 = sphi 0, %s75
      %s77 = sphi 0, %s75
      %s78 = sphi 0, %s77
      %s92 = sphi 0, %s78
      %s96 = sphi 0, %s96
      %s98 = sphi 0, %s96
      %s99 = sphi 0, %s98
      %s113 = sphi 0, %s99
      %s117 = sphi 0, %s117
      %s119 = sphi 0, %s117
      %s120 = sphi 0, %s119
      %s134 = sphi 0, %s120
      %s138 = sphi 0, %s138
      %s140 = sphi 0, %s138
      %s141 = sphi 0, %s140
      %s155 = sphi 0, %s141
      %s159 = sphi 0, %s159
      %s161 = sphi 0, %s159
      %s162 = sphi 0, %s161
      %s176 = sphi 0, %s162
      %s182 = sphi 0, %s184
      %s185 = sphi 0, %s182
      %s186 = sphi 0, %s185
      %s202 = sphi 0, %s186
    $region4: #{tpu_custom_call.1} parent=1 // loop_header_branch
      %23 = sbr.rel (%p21) target = $region8
    $region5: #{tpu_custom_call.1} parent=1 // loop_body
      %s25 = ssub.s32 %s20, 1
      %s26 = ssub.s32 %s20, 2
      %s27 = sadd.s32 %s20, 1
      %s28 = ssub.s32 %s20, %s27
      %p29 = scmp.eq.s32.totalorder %s28, 0
      %s31 = sadd.s32 %s30, 1
      %s32 = scalar_select %p29, %s30, %s31
      %p35 = pneg %p29
      %p36 = scmp.eq.s32.totalorder %s20, 1
      %p37 = por %p35, %p36
      %p38 = scmp.ne.s32.totalorder %s30, %s33
      %p39 = scmp.eq.s32.totalorder %s20, 0
      %p40 = por %p38, %p39
      %p41 = scmp.ne.s32.totalorder %s30, %s33
      %p42 = scmp.eq.s32.totalorder %s25, 1
      %p43 = por %p41, %p42
      %p44 = scmp.ne.s32.totalorder %s33, %s34
      %p45 = scmp.eq.s32.totalorder %s25, 0
      %p46 = por %p44, %p45
      %p47 = scmp.ne.s32.totalorder %s33, %s34
      %p48 = scmp.eq.s32.totalorder %s26, 1
      %p49 = por %p47, %p48
      %p51 = scmp.ne.s32.totalorder %s34, %s50
      %p52 = scmp.eq.s32.totalorder %s26, 0
      %p53 = por %p51, %p52
      %s55 = sadd.s32 %s54, 1
      %p58 = scmp.eq.s32.totalorder %s20, 1
      %p59 = scmp.ne.s32.totalorder %s54, %s56
      %p60 = scmp.eq.s32.totalorder %s20, 0
      %p61 = por %p59, %p60
      %p62 = scmp.ne.s32.totalorder %s54, %s56
      %p63 = scmp.eq.s32.totalorder %s25, 1
      %p64 = por %p62, %p63
      %p65 = scmp.ne.s32.totalorder %s56, %s57
      %p66 = scmp.eq.s32.totalorder %s25, 0
      %p67 = por %p65, %p66
      %p68 = scmp.ne.s32.totalorder %s56, %s57
      %p69 = scmp.eq.s32.totalorder %s26, 1
      %p70 = por %p68, %p69
      %p72 = scmp.ne.s32.totalorder %s57, %s71
      %p73 = scmp.eq.s32.totalorder %s26, 0
      %p74 = por %p72, %p73
      %s76 = sadd.s32 %s75, 1
      %p79 = scmp.eq.s32.totalorder %s20, 1
      %p80 = scmp.ne.s32.totalorder %s75, %s77
      %p81 = scmp.eq.s32.totalorder %s20, 0
      %p82 = por %p80, %p81
      %p83 = scmp.ne.s32.totalorder %s75, %s77
      %p84 = scmp.eq.s32.totalorder %s25, 1
      %p85 = por %p83, %p84
      %p86 = scmp.ne.s32.totalorder %s77, %s78
      %p87 = scmp.eq.s32.totalorder %s25, 0
      %p88 = por %p86, %p87
      %p89 = scmp.ne.s32.totalorder %s77, %s78
      %p90 = scmp.eq.s32.totalorder %s26, 1
      %p91 = por %p89, %p90
      %p93 = scmp.ne.s32.totalorder %s78, %s92
      %p94 = scmp.eq.s32.totalorder %s26, 0
      %p95 = por %p93, %p94
      %s97 = sadd.s32 %s96, 1
      %p100 = scmp.eq.s32.totalorder %s20, 1
      %p101 = scmp.ne.s32.totalorder %s96, %s98
      %p102 = scmp.eq.s32.totalorder %s20, 0
      %p103 = por %p101, %p102
      %p104 = scmp.ne.s32.totalorder %s96, %s98
      %p105 = scmp.eq.s32.totalorder %s25, 1
      %p106 = por %p104, %p105
      %p107 = scmp.ne.s32.totalorder %s98, %s99
      %p108 = scmp.eq.s32.totalorder %s25, 0
      %p109 = por %p107, %p108
      %p110 = scmp.ne.s32.totalorder %s98, %s99
      %p111 = scmp.eq.s32.totalorder %s26, 1
      %p112 = por %p110, %p111
      %p114 = scmp.ne.s32.totalorder %s99, %s113
      %p115 = scmp.eq.s32.totalorder %s26, 0
      %p116 = por %p114, %p115
      %s118 = sadd.s32 %s117, 1
      %p121 = scmp.eq.s32.totalorder %s20, 1
      %p122 = scmp.ne.s32.totalorder %s117, %s119
      %p123 = scmp.eq.s32.totalorder %s20, 0
      %p124 = por %p122, %p123
      %p125 = scmp.ne.s32.totalorder %s117, %s119
      %p126 = scmp.eq.s32.totalorder %s25, 1
      %p127 = por %p125, %p126
      %p128 = scmp.ne.s32.totalorder %s119, %s120
      %p129 = scmp.eq.s32.totalorder %s25, 0
      %p130 = por %p128, %p129
      %p131 = scmp.ne.s32.totalorder %s119, %s120
      %p132 = scmp.eq.s32.totalorder %s26, 1
      %p133 = por %p131, %p132
      %p135 = scmp.ne.s32.totalorder %s120, %s134
      %p136 = scmp.eq.s32.totalorder %s26, 0
      %p137 = por %p135, %p136
      %s139 = sadd.s32 %s138, 1
      %p142 = scmp.eq.s32.totalorder %s20, 1
      %p143 = scmp.ne.s32.totalorder %s138, %s140
      %p144 = scmp.eq.s32.totalorder %s20, 0
      %p145 = por %p143, %p144
      %p146 = scmp.ne.s32.totalorder %s138, %s140
      %p147 = scmp.eq.s32.totalorder %s25, 1
      %p148 = por %p146, %p147
      %p149 = scmp.ne.s32.totalorder %s140, %s141
      %p150 = scmp.eq.s32.totalorder %s25, 0
      %p151 = por %p149, %p150
      %p152 = scmp.ne.s32.totalorder %s140, %s141
      %p153 = scmp.eq.s32.totalorder %s26, 1
      %p154 = por %p152, %p153
      %p156 = scmp.ne.s32.totalorder %s141, %s155
      %p157 = scmp.eq.s32.totalorder %s26, 0
      %p158 = por %p156, %p157
      %s160 = sadd.s32 %s159, 1
      %p163 = scmp.eq.s32.totalorder %s20, 1
      %p164 = scmp.ne.s32.totalorder %s159, %s161
      %p165 = scmp.eq.s32.totalorder %s20, 0
      %p166 = por %p164, %p165
      %p167 = scmp.ne.s32.totalorder %s159, %s161
      %p168 = scmp.eq.s32.totalorder %s25, 1
      %p169 = por %p167, %p168
      %p170 = scmp.ne.s32.totalorder %s161, %s162
      %p171 = scmp.eq.s32.totalorder %s25, 0
      %p172 = por %p170, %p171
      %p173 = scmp.ne.s32.totalorder %s161, %s162
      %p174 = scmp.eq.s32.totalorder %s26, 1
      %p175 = por %p173, %p174
      %p177 = scmp.ne.s32.totalorder %s162, %s176
      %p178 = scmp.eq.s32.totalorder %s26, 0
      %p179 = por %p177, %p178
      %s180 = ssub.s32 %s20, %s27
      %p181 = scmp.eq.s32.totalorder %s180, 0
      %s183 = sadd.s32 %s182, 1
      %s184 = scalar_select %p181, %s182, %s183
      %p187 = pneg %p181
      %p188 = scmp.eq.s32.totalorder %s20, 1
      %p189 = por %p187, %p188
      %p190 = scmp.ne.s32.totalorder %s182, %s185
      %p191 = scmp.eq.s32.totalorder %s20, 0
      %p192 = por %p190, %p191
      %p193 = scmp.ne.s32.totalorder %s182, %s185
      %p194 = scmp.eq.s32.totalorder %s25, 1
      %p195 = por %p193, %p194
      %p196 = scmp.ne.s32.totalorder %s185, %s186
      %p197 = scmp.eq.s32.totalorder %s25, 0
      %p198 = por %p196, %p197
      %p199 = scmp.ne.s32.totalorder %s185, %s186
      %p200 = scmp.eq.s32.totalorder %s26, 1
      %p201 = por %p199, %p200
      %p203 = scmp.ne.s32.totalorder %s186, %s202
      %p204 = scmp.eq.s32.totalorder %s26, 0
      %p205 = por %p203, %p204
      %p206 = scmp.le.s32.totalorder 1, %s20
      %p207 = scmp.lt.s32.totalorder %s20, 3
      %p208 = pnand %p206, %p207
      %p209 = pneg %p208
      // Predicated region
      $region9: #{tpu_custom_call.1} parent=5 // pred_check
        _
      $region10: #{tpu_custom_call.1} parent=5 // pred_check_branch
        %211 = sbr.rel (%p208) target = $region12
      $region11: #{tpu_custom_call.1} parent=5 // pred_region
        %s212 = ssub.s32 %s20, 1
        // Predicated region
        $region13: #{tpu_custom_call.1} parent=11 // pred_check
          %p213 = pneg %p67
        $region14: #{tpu_custom_call.1} parent=11 // pred_check_branch
          %215 = sbr.rel (%p213) target = $region16
        $region15: #{tpu_custom_call.1} parent=11 // pred_region
          _
        $region16: #{tpu_custom_call.1} parent=11 // pred_fallthru
          _
        // Predicated region
        $region17: #{tpu_custom_call.1} parent=11 // pred_check
          %p216 = pneg %p88
        $region18: #{tpu_custom_call.1} parent=11 // pred_check_branch
          %218 = sbr.rel (%p216) target = $region20
        $region19: #{tpu_custom_call.1} parent=11 // pred_region
          _
        $region20: #{tpu_custom_call.1} parent=11 // pred_fallthru
          _
        // Predicated region
        $region21: #{tpu_custom_call.1} parent=11 // pred_check
          %p219 = pneg %p109
        $region22: #{tpu_custom_call.1} parent=11 // pred_check_branch
          %221 = sbr.rel (%p219) target = $region24
        $region23: #{tpu_custom_call.1} parent=11 // pred_region
          %s223 = ssub.s32 2304, 2304
          %224 = vsyncadd [#allocation7], %s223
          %s225 = sshll.u32 [#allocation6], 4
          %s226 = int_to_ptr.vmem [resolvable:$true] %s225
          %231 = dma.hbm_to_vmem [thread:$0]  %s3, 2304, %s226, [#allocation7], 64, 64, 4
        $region24: #{tpu_custom_call.1} parent=11 // pred_fallthru
          _
        // Predicated region
        $region25: #{tpu_custom_call.1} parent=11 // pred_check
          %p232 = pneg %p130
        $region26: #{tpu_custom_call.1} parent=11 // pred_check_branch
          %234 = sbr.rel (%p232) target = $region28
        $region27: #{tpu_custom_call.1} parent=11 // pred_region
          _
        $region28: #{tpu_custom_call.1} parent=11 // pred_fallthru
          _
        // Predicated region
        $region29: #{tpu_custom_call.1} parent=11 // pred_check
          %p235 = pneg %p151
        $region30: #{tpu_custom_call.1} parent=11 // pred_check_branch
          %237 = sbr.rel (%p235) target = $region32
        $region31: #{tpu_custom_call.1} parent=11 // pred_region
          _
        $region32: #{tpu_custom_call.1} parent=11 // pred_fallthru
          _
        // Predicated region
        $region33: #{tpu_custom_call.1} parent=11 // pred_check
          %p238 = pneg %p172
        $region34: #{tpu_custom_call.1} parent=11 // pred_check_branch
          %240 = sbr.rel (%p238) target = $region36
        $region35: #{tpu_custom_call.1} parent=11 // pred_region
          _
        $region36: #{tpu_custom_call.1} parent=11 // pred_fallthru
          _
      $region12: #{tpu_custom_call.1} parent=5 // pred_fallthru
        _
      %p241 = scmp.lt.s32.totalorder %s20, 2
      // Predicated region
      $region37: #{tpu_custom_call.1} parent=5 // pred_check
        %p242 = pneg %p241
      $region38: #{tpu_custom_call.1} parent=5 // pred_check_branch
        %244 = sbr.rel (%p242) target = $region40
      $region39: #{tpu_custom_call.1} parent=5 // pred_region
        // Predicated region
        $region41: #{tpu_custom_call.1} parent=39 // pred_check
          %p245 = pneg %p40
        $region42: #{tpu_custom_call.1} parent=39 // pred_check_branch
          %247 = sbr.rel (%p245) target = $region44
        $region43: #{tpu_custom_call.1} parent=39 // pred_region
          %s248 = sand.u32 %s30, 1
          %s249 = scalar_lea.sflag [#allocation4], %s248
          %s250 = sand.u32 %s30, 1
          %s251 = smul.addr %s250, 512
          %s252 = scalar_lea.vmem [#allocation3], %s251
          %s253 = smul.u32 2, %s20
          %s255 = ssub.s32 8192, 8192
          %256 = vsyncadd %s249, %s255
          %s257 = smul.addr %s253, 32
          %s258 = smul.addr %s257, 128
          %s259 = scalar_lea.hbm %s0, %s258
          %s260 = sshll.u32 %s252, 4
          %s261 = int_to_ptr.vmem [resolvable:$true] %s260
          %266 = dma.hbm_to_vmem [thread:$0]  %s259, 8192, %s261, %s249, 128, 128, 8
        $region44: #{tpu_custom_call.1} parent=39 // pred_fallthru
          _
      $region40: #{tpu_custom_call.1} parent=5 // pred_fallthru
        _
      %p267 = scmp.le.s32.totalorder 1, %s20
      %p268 = scmp.lt.s32.totalorder %s20, 3
      %p269 = pnand %p267, %p268
      %p270 = pneg %p269
      // Predicated region
      $region45: #{tpu_custom_call.1} parent=5 // pred_check
        _
      $region46: #{tpu_custom_call.1} parent=5 // pred_check_branch
        %272 = sbr.rel (%p269) target = $region48
      $region47: #{tpu_custom_call.1} parent=5 // pred_region
        %s273 = ssub.s32 %s20, 1
        %s274 = sand.u32 %s33, 1
        %s275 = scalar_lea.sflag [#allocation4], %s274
        %s276 = sand.u32 %s33, 1
        %s277 = smul.addr %s276, 512
        %s278 = scalar_lea.vmem [#allocation3], %s277
        // Predicated region
        $region49: #{tpu_custom_call.1} parent=47 // pred_check
          %p279 = pneg %p46
        $region50: #{tpu_custom_call.1} parent=47 // pred_check_branch
          %281 = sbr.rel (%p279) target = $region52
        $region51: #{tpu_custom_call.1} parent=47 // pred_region
          %282 = dma.done %s275, 8192
        $region52: #{tpu_custom_call.1} parent=47 // pred_fallthru
          _
        // Predicated region
        $region53: #{tpu_custom_call.1} parent=47 // pred_check
          %p283 = pneg %p109
        $region54: #{tpu_custom_call.1} parent=47 // pred_check_branch
          %285 = sbr.rel (%p283) target = $region56
        $region55: #{tpu_custom_call.1} parent=47 // pred_region
          %286 = dma.done [#allocation7], 2304
        $region56: #{tpu_custom_call.1} parent=47 // pred_fallthru
          _
        %s287 = sand.u32 %s33, 1
        %s288 = scalar_lea.sflag [#allocation4], %s287
        %s289 = sand.u32 %s33, 1
        %s290 = smul.addr %s289, 512
        %s291 = scalar_lea.vmem [#allocation3], %s290
        %p292 = pneg %p46
        %p293 = pneg %p43
        %p294 = pneg %p67
        %p295 = pneg %p64
        %p296 = pneg %p88
        %p297 = pneg %p85
        %p298 = pneg %p109
        %p299 = pneg %p106
        %p300 = pneg %p130
        %p301 = pneg %p127
        %p302 = pneg %p151
        %p303 = pneg %p148
        %p304 = pneg %p172
        %p305 = pneg %p169
        %p306 = pneg %p198
        %p307 = pneg %p195
        %s308 = sand.u32 %s185, 1
        %s309 = scalar_lea.sflag [#allocation5], %s308
        %s310 = sand.u32 %s185, 1
        %s311 = smul.addr %s310, 512
        %s312 = scalar_lea.vmem [#allocation8], %s311
        %s313 = smul.u32 2, %s25
        %s314 = smul.u32 2, %s25
        %v316 = vld [vmem:[%s278] sm:$0xff]
        %v317 = vld [vmem:[%s278 + $0x8] sm:$0xff]
        %v318 = vld [vmem:[%s278 + $0x10] sm:$0xff]
        %v319 = vld [vmem:[%s278 + $0x18] sm:$0xff]
        %v320 = vld [vmem:[%s278 + $0x20] sm:$0xff]
        %v321 = vld [vmem:[%s278 + $0x28] sm:$0xff]
        %v322 = vld [vmem:[%s278 + $0x30] sm:$0xff]
        %v323 = vld [vmem:[%s278 + $0x38] sm:$0xff]
        %v324 = vld [vmem:[%s278 + $0x40] sm:$0xff]
        %v325 = vld [vmem:[%s278 + $0x48] sm:$0xff]
        %v326 = vld [vmem:[%s278 + $0x50] sm:$0xff]
        %v327 = vld [vmem:[%s278 + $0x58] sm:$0xff]
        %v328 = vld [vmem:[%s278 + $0x60] sm:$0xff]
        %v329 = vld [vmem:[%s278 + $0x68] sm:$0xff]
        %v330 = vld [vmem:[%s278 + $0x70] sm:$0xff]
        %v331 = vld [vmem:[%s278 + $0x78] sm:$0xff]
        %v332 = vld [vmem:[%s278 + $0x80] sm:$0xff]
        %v333 = vld [vmem:[%s278 + $0x88] sm:$0xff]
        %v334 = vld [vmem:[%s278 + $0x90] sm:$0xff]
        %v335 = vld [vmem:[%s278 + $0x98] sm:$0xff]
        %v336 = vld [vmem:[%s278 + $0xa0] sm:$0xff]
        %v337 = vld [vmem:[%s278 + $0xa8] sm:$0xff]
        %v338 = vld [vmem:[%s278 + $0xb0] sm:$0xff]
        %v339 = vld [vmem:[%s278 + $0xb8] sm:$0xff]
        %v340 = vld [vmem:[%s278 + $0xc0] sm:$0xff]
        %v341 = vld [vmem:[%s278 + $0xc8] sm:$0xff]
        %v342 = vld [vmem:[%s278 + $0xd0] sm:$0xff]
        %v343 = vld [vmem:[%s278 + $0xd8] sm:$0xff]
        %v344 = vld [vmem:[%s278 + $0xe0] sm:$0xff]
        %v345 = vld [vmem:[%s278 + $0xe8] sm:$0xff]
        %v346 = vld [vmem:[%s278 + $0xf0] sm:$0xff]
        %v347 = vld [vmem:[%s278 + $0xf8] sm:$0xff]
        %v348 = vld [vmem:[%s278 + $0x100] sm:$0xff]
        %v349 = vld [vmem:[%s278 + $0x108] sm:$0xff]
        %v350 = vld [vmem:[%s278 + $0x110] sm:$0xff]
        %v351 = vld [vmem:[%s278 + $0x118] sm:$0xff]
        %v352 = vld [vmem:[%s278 + $0x120] sm:$0xff]
        %v353 = vld [vmem:[%s278 + $0x128] sm:$0xff]
        %v354 = vld [vmem:[%s278 + $0x130] sm:$0xff]
        %v355 = vld [vmem:[%s278 + $0x138] sm:$0xff]
        %v356 = vld [vmem:[%s278 + $0x140] sm:$0xff]
        %v357 = vld [vmem:[%s278 + $0x148] sm:$0xff]
        %v358 = vld [vmem:[%s278 + $0x150] sm:$0xff]
        %v359 = vld [vmem:[%s278 + $0x158] sm:$0xff]
        %v360 = vld [vmem:[%s278 + $0x160] sm:$0xff]
        %v361 = vld [vmem:[%s278 + $0x168] sm:$0xff]
        %v362 = vld [vmem:[%s278 + $0x170] sm:$0xff]
        %v363 = vld [vmem:[%s278 + $0x178] sm:$0xff]
        %v364 = vld [vmem:[%s278 + $0x180] sm:$0xff]
        %v365 = vld [vmem:[%s278 + $0x188] sm:$0xff]
        %v366 = vld [vmem:[%s278 + $0x190] sm:$0xff]
        %v367 = vld [vmem:[%s278 + $0x198] sm:$0xff]
        %v368 = vld [vmem:[%s278 + $0x1a0] sm:$0xff]
        %v369 = vld [vmem:[%s278 + $0x1a8] sm:$0xff]
        %v370 = vld [vmem:[%s278 + $0x1b0] sm:$0xff]
        %v371 = vld [vmem:[%s278 + $0x1b8] sm:$0xff]
        %v372 = vld [vmem:[%s278 + $0x1c0] sm:$0xff]
        %v373 = vld [vmem:[%s278 + $0x1c8] sm:$0xff]
        %v374 = vld [vmem:[%s278 + $0x1d0] sm:$0xff]
        %v375 = vld [vmem:[%s278 + $0x1d8] sm:$0xff]
        %v376 = vld [vmem:[%s278 + $0x1e0] sm:$0xff]
        %v377 = vld [vmem:[%s278 + $0x1e8] sm:$0xff]
        %v378 = vld [vmem:[%s278 + $0x1f0] sm:$0xff]
        %v379 = vld [vmem:[%s278 + $0x1f8] sm:$0xff]
        %v380 = vpack.c.bf16 %v317, %v316
        %v381 = vpack.c.bf16 %v319, %v318
        %v382 = vpack.c.bf16 %v321, %v320
        %v383 = vpack.c.bf16 %v323, %v322
        %v384 = vpack.c.bf16 %v325, %v324
        %v385 = vpack.c.bf16 %v327, %v326
        %v386 = vpack.c.bf16 %v329, %v328
        %v387 = vpack.c.bf16 %v331, %v330
        %v388 = vpack.c.bf16 %v333, %v332
        %v389 = vpack.c.bf16 %v335, %v334
        %v390 = vpack.c.bf16 %v337, %v336
        %v391 = vpack.c.bf16 %v339, %v338
        %v392 = vpack.c.bf16 %v341, %v340
        %v393 = vpack.c.bf16 %v343, %v342
        %v394 = vpack.c.bf16 %v345, %v344
        %v395 = vpack.c.bf16 %v347, %v346
        %v396 = vpack.c.bf16 %v349, %v348
        %v397 = vpack.c.bf16 %v351, %v350
        %v398 = vpack.c.bf16 %v353, %v352
        %v399 = vpack.c.bf16 %v355, %v354
        %v400 = vpack.c.bf16 %v357, %v356
        %v401 = vpack.c.bf16 %v359, %v358
        %v402 = vpack.c.bf16 %v361, %v360
        %v403 = vpack.c.bf16 %v363, %v362
        %v404 = vpack.c.bf16 %v365, %v364
        %v405 = vpack.c.bf16 %v367, %v366
        %v406 = vpack.c.bf16 %v369, %v368
        %v407 = vpack.c.bf16 %v371, %v370
        %v408 = vpack.c.bf16 %v373, %v372
        %v409 = vpack.c.bf16 %v375, %v374
        %v410 = vpack.c.bf16 %v377, %v376
        %v411 = vpack.c.bf16 %v379, %v378
        %v412 = vld [vmem:[%s1] sm:$0xf]
        %v413 = vld [vmem:[%s1 + $0x4] sm:$0xf]
        %v414 = vld [vmem:[%s1 + $0x8] sm:$0xf]
        %v415 = vld [vmem:[%s1 + $0xc] sm:$0xf]
        %v416 = vld [vmem:[%s1 + $0x10] sm:$0xf]
        %v417 = vld [vmem:[%s1 + $0x14] sm:$0xf]
        %v418 = vld [vmem:[%s1 + $0x18] sm:$0xf]
        %v419 = vld [vmem:[%s1 + $0x1c] sm:$0xf]
        %v420 = vld [vmem:[%s1 + $0x20] sm:$0xf]
        %v421 = vld [vmem:[%s1 + $0x24] sm:$0xf]
        %v422 = vld [vmem:[%s1 + $0x28] sm:$0xf]
        %v423 = vld [vmem:[%s1 + $0x2c] sm:$0xf]
        %v424 = vld [vmem:[%s1 + $0x30] sm:$0xf]
        %v425 = vld [vmem:[%s1 + $0x34] sm:$0xf]
        %v426 = vld [vmem:[%s1 + $0x38] sm:$0xf]
        %v427 = vld [vmem:[%s1 + $0x3c] sm:$0xf]
        %v428 = vld [vmem:[%s2] sm:$0x1]
        %v430 = vlaneseq
        %v431 = vshrl.u32 %v430, 7
        %v432 = vsub.s32 0, %v431
        %v433 = vrot.slane %v428, %v432
        %v451 = vunpack.c.l.b16 %v412
        %v452 = vunpack.c.l.b16 %v413
        %v453 = vunpack.c.l.b16 %v414
        %v454 = vunpack.c.l.b16 %v415
        %v455 = vunpack.c.l.b16 %v416
        %v456 = vunpack.c.l.b16 %v417
        %v457 = vunpack.c.l.b16 %v418
        %v458 = vunpack.c.l.b16 %v419
        %v459 = vunpack.c.l.b16 %v420
        %v460 = vunpack.c.l.b16 %v421
        %v461 = vunpack.c.l.b16 %v422
        %v462 = vunpack.c.l.b16 %v423
        %v463 = vunpack.c.l.b16 %v424
        %v464 = vunpack.c.l.b16 %v425
        %v465 = vunpack.c.l.b16 %v426
        %v466 = vunpack.c.l.b16 %v427
        %v467 = vpack.c.b16 %v452, %v451
        %v468 = vpack.c.b16 %v454, %v453
        %v469 = vpack.c.b16 %v456, %v455
        %v470 = vpack.c.b16 %v458, %v457
        %v471 = vpack.c.b16 %v460, %v459
        %v472 = vpack.c.b16 %v462, %v461
        %v473 = vpack.c.b16 %v464, %v463
        %v474 = vpack.c.b16 %v466, %v465
        %483 = vmatprep.subr.bf16.mxu0 0
        %484 = vmatpush1.bf16.msra.mxu0 %v474
        %485 = vmatprep.subr.bf16.mxu0 0
        %486 = vmatpush1.bf16.msra.mxu0 %v473
        %487 = vmatprep.subr.bf16.mxu0 0
        %488 = vmatpush1.bf16.msra.mxu0 %v472
        %489 = vmatprep.subr.bf16.mxu0 0
        %490 = vmatpush1.bf16.msra.mxu0 %v471
        %491 = vmatprep.subr.bf16.mxu0 0
        %492 = vmatpush1.bf16.msra.mxu0 %v470
        %493 = vmatprep.subr.bf16.mxu0 0
        %494 = vmatpush1.bf16.msra.mxu0 %v469
        %495 = vmatprep.subr.bf16.mxu0 0
        %496 = vmatpush1.bf16.msra.mxu0 %v468
        %497 = vmatprep.subr.bf16.mxu0 0
        %498 = vmatpush1.bf16.msra.mxu0 %v467
        %499 = vmatprep.subr.bf16.mxu0 0
        %500 = vmatpush2.bf16.msra.mxu0 0
        %501 = vmatprep.subr.bf16.mxu0 0
        %502 = vmatpush2.bf16.msra.mxu0 0
        %503 = vmatprep.subr.bf16.mxu0 0
        %504 = vmatpush2.bf16.msra.mxu0 0
        %505 = vmatprep.subr.bf16.mxu0 0
        %506 = vmatpush2.bf16.msra.mxu0 0
        %507 = vmatprep.subr.bf16.mxu0 0
        %508 = vmatpush2.bf16.msra.mxu0 0
        %509 = vmatprep.subr.bf16.mxu0 0
        %510 = vmatpush2.bf16.msra.mxu0 0
        %511 = vmatprep.subr.bf16.mxu0 0
        %512 = vmatpush2.bf16.msra.mxu0 0
        %513 = vmatprep.subr.bf16.mxu0 0
        %514 = vmatpush2.bf16.msra.mxu0 0
        %515 = vmatprep.mubr.bf16.mxu0 0
        %516 = vmatmul.mubr.bf16.gmra.mxu0 %v380
        %v517 = vpop.f32.mrf.mxu0
        %v518 = vadd.f32 %v433, %v517
        %v519 = vpop.f32.mrf.mxu0
        %v520 = vpop.f32.mrf.mxu0
        %v521 = vadd.f32 %v433, %v520
        %v522 = vpop.f32.mrf.mxu0
        %523 = vmatprep.mubr.bf16.mxu0 0
        %524 = vmatmul.mubr.bf16.gmra.mxu0 %v381
        %v525 = vpop.f32.mrf.mxu0
        %v526 = vadd.f32 %v433, %v525
        %v527 = vpop.f32.mrf.mxu0
        %v528 = vpop.f32.mrf.mxu0
        %v529 = vadd.f32 %v433, %v528
        %v530 = vpop.f32.mrf.mxu0
        %531 = vmatprep.mubr.bf16.mxu0 0
        %532 = vmatmul.mubr.bf16.gmra.mxu0 %v382
        %v533 = vpop.f32.mrf.mxu0
        %v534 = vadd.f32 %v433, %v533
        %v535 = vpop.f32.mrf.mxu0
        %v536 = vpop.f32.mrf.mxu0
        %v537 = vadd.f32 %v433, %v536
        %v538 = vpop.f32.mrf.mxu0
        %539 = vmatprep.mubr.bf16.mxu0 0
        %540 = vmatmul.mubr.bf16.gmra.mxu0 %v383
        %v541 = vpop.f32.mrf.mxu0
        %v542 = vadd.f32 %v433, %v541
        %v543 = vpop.f32.mrf.mxu0
        %v544 = vpop.f32.mrf.mxu0
        %v545 = vadd.f32 %v433, %v544
        %v546 = vpop.f32.mrf.mxu0
        %547 = vmatprep.mubr.bf16.mxu0 0
        %548 = vmatmul.mubr.bf16.gmra.mxu0 %v384
        %v549 = vpop.f32.mrf.mxu0
        %v550 = vadd.f32 %v433, %v549
        %v551 = vpop.f32.mrf.mxu0
        %v552 = vpop.f32.mrf.mxu0
        %v553 = vadd.f32 %v433, %v552
        %v554 = vpop.f32.mrf.mxu0
        %555 = vmatprep.mubr.bf16.mxu0 0
        %556 = vmatmul.mubr.bf16.gmra.mxu0 %v385
        %v557 = vpop.f32.mrf.mxu0
        %v558 = vadd.f32 %v433, %v557
        %v559 = vpop.f32.mrf.mxu0
        %v560 = vpop.f32.mrf.mxu0
        %v561 = vadd.f32 %v433, %v560
        %v562 = vpop.f32.mrf.mxu0
        %563 = vmatprep.mubr.bf16.mxu0 0
        %564 = vmatmul.mubr.bf16.gmra.mxu0 %v386
        %v565 = vpop.f32.mrf.mxu0
        %v566 = vadd.f32 %v433, %v565
        %v567 = vpop.f32.mrf.mxu0
        %v568 = vpop.f32.mrf.mxu0
        %v569 = vadd.f32 %v433, %v568
        %v570 = vpop.f32.mrf.mxu0
        %571 = vmatprep.mubr.bf16.mxu0 0
        %572 = vmatmul.mubr.bf16.gmra.mxu0 %v387
        %v573 = vpop.f32.mrf.mxu0
        %v574 = vadd.f32 %v433, %v573
        %v575 = vpop.f32.mrf.mxu0
        %v576 = vpop.f32.mrf.mxu0
        %v577 = vadd.f32 %v433, %v576
        %v578 = vpop.f32.mrf.mxu0
        %579 = vmatprep.mubr.bf16.mxu0 0
        %580 = vmatmul.mubr.bf16.gmra.mxu0 %v388
        %v581 = vpop.f32.mrf.mxu0
        %v582 = vadd.f32 %v433, %v581
        %v583 = vpop.f32.mrf.mxu0
        %v584 = vpop.f32.mrf.mxu0
        %v585 = vadd.f32 %v433, %v584
        %v586 = vpop.f32.mrf.mxu0
        %587 = vmatprep.mubr.bf16.mxu0 0
        %588 = vmatmul.mubr.bf16.gmra.mxu0 %v389
        %v589 = vpop.f32.mrf.mxu0
        %v590 = vadd.f32 %v433, %v589
        %v591 = vpop.f32.mrf.mxu0
        %v592 = vpop.f32.mrf.mxu0
        %v593 = vadd.f32 %v433, %v592
        %v594 = vpop.f32.mrf.mxu0
        %595 = vmatprep.mubr.bf16.mxu0 0
        %596 = vmatmul.mubr.bf16.gmra.mxu0 %v390
        %v597 = vpop.f32.mrf.mxu0
        %v598 = vadd.f32 %v433, %v597
        %v599 = vpop.f32.mrf.mxu0
        %v600 = vpop.f32.mrf.mxu0
        %v601 = vadd.f32 %v433, %v600
        %v602 = vpop.f32.mrf.mxu0
        %603 = vmatprep.mubr.bf16.mxu0 0
        %604 = vmatmul.mubr.bf16.gmra.mxu0 %v391
        %v605 = vpop.f32.mrf.mxu0
        %v606 = vadd.f32 %v433, %v605
        %v607 = vpop.f32.mrf.mxu0
        %v608 = vpop.f32.mrf.mxu0
        %v609 = vadd.f32 %v433, %v608
        %v610 = vpop.f32.mrf.mxu0
        %611 = vmatprep.mubr.bf16.mxu0 0
        %612 = vmatmul.mubr.bf16.gmra.mxu0 %v392
        %v613 = vpop.f32.mrf.mxu0
        %v614 = vadd.f32 %v433, %v613
        %v615 = vpop.f32.mrf.mxu0
        %v616 = vpop.f32.mrf.mxu0
        %v617 = vadd.f32 %v433, %v616
        %v618 = vpop.f32.mrf.mxu0
        %619 = vmatprep.mubr.bf16.mxu0 0
        %620 = vmatmul.mubr.bf16.gmra.mxu0 %v393
        %v621 = vpop.f32.mrf.mxu0
        %v622 = vadd.f32 %v433, %v621
        %v623 = vpop.f32.mrf.mxu0
        %v624 = vpop.f32.mrf.mxu0
        %v625 = vadd.f32 %v433, %v624
        %v626 = vpop.f32.mrf.mxu0
        %627 = vmatprep.mubr.bf16.mxu0 0
        %628 = vmatmul.mubr.bf16.gmra.mxu0 %v394
        %v629 = vpop.f32.mrf.mxu0
        %v630 = vadd.f32 %v433, %v629
        %v631 = vpop.f32.mrf.mxu0
        %v632 = vpop.f32.mrf.mxu0
        %v633 = vadd.f32 %v433, %v632
        %v634 = vpop.f32.mrf.mxu0
        %635 = vmatprep.mubr.bf16.mxu0 0
        %636 = vmatmul.mubr.bf16.gmra.mxu0 %v395
        %v637 = vpop.f32.mrf.mxu0
        %v638 = vadd.f32 %v433, %v637
        %v639 = vpop.f32.mrf.mxu0
        %v640 = vpop.f32.mrf.mxu0
        %v641 = vadd.f32 %v433, %v640
        %v642 = vpop.f32.mrf.mxu0
        %643 = vmatprep.mubr.bf16.mxu0 0
        %644 = vmatmul.mubr.bf16.gmra.mxu0 %v396
        %v645 = vpop.f32.mrf.mxu0
        %v646 = vadd.f32 %v433, %v645
        %v647 = vpop.f32.mrf.mxu0
        %v648 = vpop.f32.mrf.mxu0
        %v649 = vadd.f32 %v433, %v648
        %v650 = vpop.f32.mrf.mxu0
        %651 = vmatprep.mubr.bf16.mxu0 0
        %652 = vmatmul.mubr.bf16.gmra.mxu0 %v397
        %v653 = vpop.f32.mrf.mxu0
        %v654 = vadd.f32 %v433, %v653
        %v655 = vpop.f32.mrf.mxu0
        %v656 = vpop.f32.mrf.mxu0
        %v657 = vadd.f32 %v433, %v656
        %v658 = vpop.f32.mrf.mxu0
        %659 = vmatprep.mubr.bf16.mxu0 0
        %660 = vmatmul.mubr.bf16.gmra.mxu0 %v398
        %v661 = vpop.f32.mrf.mxu0
        %v662 = vadd.f32 %v433, %v661
        %v663 = vpop.f32.mrf.mxu0
        %v664 = vpop.f32.mrf.mxu0
        %v665 = vadd.f32 %v433, %v664
        %v666 = vpop.f32.mrf.mxu0
        %667 = vmatprep.mubr.bf16.mxu0 0
        %668 = vmatmul.mubr.bf16.gmra.mxu0 %v399
        %v669 = vpop.f32.mrf.mxu0
        %v670 = vadd.f32 %v433, %v669
        %v671 = vpop.f32.mrf.mxu0
        %v672 = vpop.f32.mrf.mxu0
        %v673 = vadd.f32 %v433, %v672
        %v674 = vpop.f32.mrf.mxu0
        %675 = vmatprep.mubr.bf16.mxu0 0
        %676 = vmatmul.mubr.bf16.gmra.mxu0 %v400
        %v677 = vpop.f32.mrf.mxu0
        %v678 = vadd.f32 %v433, %v677
        %v679 = vpop.f32.mrf.mxu0
        %v680 = vpop.f32.mrf.mxu0
        %v681 = vadd.f32 %v433, %v680
        %v682 = vpop.f32.mrf.mxu0
        %683 = vmatprep.mubr.bf16.mxu0 0
        %684 = vmatmul.mubr.bf16.gmra.mxu0 %v401
        %v685 = vpop.f32.mrf.mxu0
        %v686 = vadd.f32 %v433, %v685
        %v687 = vpop.f32.mrf.mxu0
        %v688 = vpop.f32.mrf.mxu0
        %v689 = vadd.f32 %v433, %v688
        %v690 = vpop.f32.mrf.mxu0
        %691 = vmatprep.mubr.bf16.mxu0 0
        %692 = vmatmul.mubr.bf16.gmra.mxu0 %v402
        %v693 = vpop.f32.mrf.mxu0
        %v694 = vadd.f32 %v433, %v693
        %v695 = vpop.f32.mrf.mxu0
        %v696 = vpop.f32.mrf.mxu0
        %v697 = vadd.f32 %v433, %v696
        %v698 = vpop.f32.mrf.mxu0
        %699 = vmatprep.mubr.bf16.mxu0 0
        %700 = vmatmul.mubr.bf16.gmra.mxu0 %v403
        %v701 = vpop.f32.mrf.mxu0
        %v702 = vadd.f32 %v433, %v701
        %v703 = vpop.f32.mrf.mxu0
        %v704 = vpop.f32.mrf.mxu0
        %v705 = vadd.f32 %v433, %v704
        %v706 = vpop.f32.mrf.mxu0
        %707 = vmatprep.mubr.bf16.mxu0 0
        %708 = vmatmul.mubr.bf16.gmra.mxu0 %v404
        %v709 = vpop.f32.mrf.mxu0
        %v710 = vadd.f32 %v433, %v709
        %v711 = vpop.f32.mrf.mxu0
        %v712 = vpop.f32.mrf.mxu0
        %v713 = vadd.f32 %v433, %v712
        %v714 = vpop.f32.mrf.mxu0
        %715 = vmatprep.mubr.bf16.mxu0 0
        %716 = vmatmul.mubr.bf16.gmra.mxu0 %v405
        %v717 = vpop.f32.mrf.mxu0
        %v718 = vadd.f32 %v433, %v717
        %v719 = vpop.f32.mrf.mxu0
        %v720 = vpop.f32.mrf.mxu0
        %v721 = vadd.f32 %v433, %v720
        %v722 = vpop.f32.mrf.mxu0
        %723 = vmatprep.mubr.bf16.mxu0 0
        %724 = vmatmul.mubr.bf16.gmra.mxu0 %v406
        %v725 = vpop.f32.mrf.mxu0
        %v726 = vadd.f32 %v433, %v725
        %v727 = vpop.f32.mrf.mxu0
        %v728 = vpop.f32.mrf.mxu0
        %v729 = vadd.f32 %v433, %v728
        %v730 = vpop.f32.mrf.mxu0
        %731 = vmatprep.mubr.bf16.mxu0 0
        %732 = vmatmul.mubr.bf16.gmra.mxu0 %v407
        %v733 = vpop.f32.mrf.mxu0
        %v734 = vadd.f32 %v433, %v733
        %v735 = vpop.f32.mrf.mxu0
        %v736 = vpop.f32.mrf.mxu0
        %v737 = vadd.f32 %v433, %v736
        %v738 = vpop.f32.mrf.mxu0
        %739 = vmatprep.mubr.bf16.mxu0 0
        %740 = vmatmul.mubr.bf16.gmra.mxu0 %v408
        %v741 = vpop.f32.mrf.mxu0
        %v742 = vadd.f32 %v433, %v741
        %v743 = vpop.f32.mrf.mxu0
        %v744 = vpop.f32.mrf.mxu0
        %v745 = vadd.f32 %v433, %v744
        %v746 = vpop.f32.mrf.mxu0
        %747 = vmatprep.mubr.bf16.mxu0 0
        %748 = vmatmul.mubr.bf16.gmra.mxu0 %v409
        %v749 = vpop.f32.mrf.mxu0
        %v750 = vadd.f32 %v433, %v749
        %v751 = vpop.f32.mrf.mxu0
        %v752 = vpop.f32.mrf.mxu0
        %v753 = vadd.f32 %v433, %v752
        %v754 = vpop.f32.mrf.mxu0
        %755 = vmatprep.mubr.bf16.mxu0 0
        %756 = vmatmul.mubr.bf16.gmra.mxu0 %v410
        %v757 = vpop.f32.mrf.mxu0
        %v758 = vadd.f32 %v433, %v757
        %v759 = vpop.f32.mrf.mxu0
        %v760 = vpop.f32.mrf.mxu0
        %v761 = vadd.f32 %v433, %v760
        %v762 = vpop.f32.mrf.mxu0
        %763 = vmatprep.mubr.bf16.mxu0 0
        %764 = vmatmul.mubr.bf16.gmra.mxu0 %v411
        %v765 = vpop.f32.mrf.mxu0
        %v766 = vadd.f32 %v433, %v765
        %v767 = vpop.f32.mrf.mxu0
        %v768 = vpop.f32.mrf.mxu0
        %v769 = vadd.f32 %v433, %v768
        %v770 = vpop.f32.mrf.mxu0
        %771 = vdwg.mxu0
        %v772 = vmax.f32 %v518, 0.0
        %v773 = vmax.f32 %v521, 0.0
        %v774 = vmax.f32 %v526, 0.0
        %v775 = vmax.f32 %v529, 0.0
        %v776 = vmax.f32 %v534, 0.0
        %v777 = vmax.f32 %v537, 0.0
        %v778 = vmax.f32 %v542, 0.0
        %v779 = vmax.f32 %v545, 0.0
        %v780 = vmax.f32 %v550, 0.0
        %v781 = vmax.f32 %v553, 0.0
        %v782 = vmax.f32 %v558, 0.0
        %v783 = vmax.f32 %v561, 0.0
        %v784 = vmax.f32 %v566, 0.0
        %v785 = vmax.f32 %v569, 0.0
        %v786 = vmax.f32 %v574, 0.0
        %v787 = vmax.f32 %v577, 0.0
        %v788 = vmax.f32 %v582, 0.0
        %v789 = vmax.f32 %v585, 0.0
        %v790 = vmax.f32 %v590, 0.0
        %v791 = vmax.f32 %v593, 0.0
        %v792 = vmax.f32 %v598, 0.0
        %v793 = vmax.f32 %v601, 0.0
        %v794 = vmax.f32 %v606, 0.0
        %v795 = vmax.f32 %v609, 0.0
        %v796 = vmax.f32 %v614, 0.0
        %v797 = vmax.f32 %v617, 0.0
        %v798 = vmax.f32 %v622, 0.0
        %v799 = vmax.f32 %v625, 0.0
        %v800 = vmax.f32 %v630, 0.0
        %v801 = vmax.f32 %v633, 0.0
        %v802 = vmax.f32 %v638, 0.0
        %v803 = vmax.f32 %v641, 0.0
        %v804 = vmax.f32 %v646, 0.0
        %v805 = vmax.f32 %v649, 0.0
        %v806 = vmax.f32 %v654, 0.0
        %v807 = vmax.f32 %v657, 0.0
        %v808 = vmax.f32 %v662, 0.0
        %v809 = vmax.f32 %v665, 0.0
        %v810 = vmax.f32 %v670, 0.0
        %v811 = vmax.f32 %v673, 0.0
        %v812 = vmax.f32 %v678, 0.0
        %v813 = vmax.f32 %v681, 0.0
        %v814 = vmax.f32 %v686, 0.0
        %v815 = vmax.f32 %v689, 0.0
        %v816 = vmax.f32 %v694, 0.0
        %v817 = vmax.f32 %v697, 0.0
        %v818 = vmax.f32 %v702, 0.0
        %v819 = vmax.f32 %v705, 0.0
        %v820 = vmax.f32 %v710, 0.0
        %v821 = vmax.f32 %v713, 0.0
        %v822 = vmax.f32 %v718, 0.0
        %v823 = vmax.f32 %v721, 0.0
        %v824 = vmax.f32 %v726, 0.0
        %v825 = vmax.f32 %v729, 0.0
        %v826 = vmax.f32 %v734, 0.0
        %v827 = vmax.f32 %v737, 0.0
        %v828 = vmax.f32 %v742, 0.0
        %v829 = vmax.f32 %v745, 0.0
        %v830 = vmax.f32 %v750, 0.0
        %v831 = vmax.f32 %v753, 0.0
        %v832 = vmax.f32 %v758, 0.0
        %v833 = vmax.f32 %v761, 0.0
        %v834 = vmax.f32 %v766, 0.0
        %v835 = vmax.f32 %v769, 0.0
        %v836 = vpack.c.bf16 %v773, %v772
        %v837 = vpack.c.bf16 %v775, %v774
        %v838 = vpack.c.bf16 %v777, %v776
        %v839 = vpack.c.bf16 %v779, %v778
        %v840 = vpack.c.bf16 %v781, %v780
        %v841 = vpack.c.bf16 %v783, %v782
        %v842 = vpack.c.bf16 %v785, %v784
        %v843 = vpack.c.bf16 %v787, %v786
        %v844 = vpack.c.bf16 %v789, %v788
        %v845 = vpack.c.bf16 %v791, %v790
        %v846 = vpack.c.bf16 %v793, %v792
        %v847 = vpack.c.bf16 %v795, %v794
        %v848 = vpack.c.bf16 %v797, %v796
        %v849 = vpack.c.bf16 %v799, %v798
        %v850 = vpack.c.bf16 %v801, %v800
        %v851 = vpack.c.bf16 %v803, %v802
        %v852 = vpack.c.bf16 %v805, %v804
        %v853 = vpack.c.bf16 %v807, %v806
        %v854 = vpack.c.bf16 %v809, %v808
        %v855 = vpack.c.bf16 %v811, %v810
        %v856 = vpack.c.bf16 %v813, %v812
        %v857 = vpack.c.bf16 %v815, %v814
        %v858 = vpack.c.bf16 %v817, %v816
        %v859 = vpack.c.bf16 %v819, %v818
        %v860 = vpack.c.bf16 %v821, %v820
        %v861 = vpack.c.bf16 %v823, %v822
        %v862 = vpack.c.bf16 %v825, %v824
        %v863 = vpack.c.bf16 %v827, %v826
        %v864 = vpack.c.bf16 %v829, %v828
        %v865 = vpack.c.bf16 %v831, %v830
        %v866 = vpack.c.bf16 %v833, %v832
        %v867 = vpack.c.bf16 %v835, %v834
        %v869 = vshrl.u32 %v836, 16
        %v871 = vrot.slane %v869, 7
        %v872 = vshll.u32 %v836, 16
        %v874 = vor.u32 %v871, %v872
        %v876 = vshrl.u32 %v837, 16
        %v878 = vrot.slane %v876, 7
        %v879 = vshll.u32 %v837, 16
        %v881 = vor.u32 %v878, %v879
        %v883 = vshrl.u32 %v838, 16
        %v885 = vrot.slane %v883, 7
        %v886 = vshll.u32 %v838, 16
        %v888 = vor.u32 %v885, %v886
        %v890 = vshrl.u32 %v839, 16
        %v892 = vrot.slane %v890, 7
        %v893 = vshll.u32 %v839, 16
        %v895 = vor.u32 %v892, %v893
        %v897 = vshrl.u32 %v840, 16
        %v899 = vrot.slane %v897, 7
        %v900 = vshll.u32 %v840, 16
        %v902 = vor.u32 %v899, %v900
        %v904 = vshrl.u32 %v841, 16
        %v906 = vrot.slane %v904, 7
        %v907 = vshll.u32 %v841, 16
        %v909 = vor.u32 %v906, %v907
        %v911 = vshrl.u32 %v842, 16
        %v913 = vrot.slane %v911, 7
        %v914 = vshll.u32 %v842, 16
        %v916 = vor.u32 %v913, %v914
        %v918 = vshrl.u32 %v843, 16
        %v920 = vrot.slane %v918, 7
        %v921 = vshll.u32 %v843, 16
        %v923 = vor.u32 %v920, %v921
        %v925 = vshrl.u32 %v844, 16
        %v927 = vrot.slane %v925, 7
        %v928 = vshll.u32 %v844, 16
        %v930 = vor.u32 %v927, %v928
        %v932 = vshrl.u32 %v845, 16
        %v934 = vrot.slane %v932, 7
        %v935 = vshll.u32 %v845, 16
        %v937 = vor.u32 %v934, %v935
        %v939 = vshrl.u32 %v846, 16
        %v941 = vrot.slane %v939, 7
        %v942 = vshll.u32 %v846, 16
        %v944 = vor.u32 %v941, %v942
        %v946 = vshrl.u32 %v847, 16
        %v948 = vrot.slane %v946, 7
        %v949 = vshll.u32 %v847, 16
        %v951 = vor.u32 %v948, %v949
        %v953 = vshrl.u32 %v848, 16
        %v955 = vrot.slane %v953, 7
        %v956 = vshll.u32 %v848, 16
        %v958 = vor.u32 %v955, %v956
        %v960 = vshrl.u32 %v849, 16
        %v962 = vrot.slane %v960, 7
        %v963 = vshll.u32 %v849, 16
        %v965 = vor.u32 %v962, %v963
        %v967 = vshrl.u32 %v850, 16
        %v969 = vrot.slane %v967, 7
        %v970 = vshll.u32 %v850, 16
        %v972 = vor.u32 %v969, %v970
        %v974 = vshrl.u32 %v851, 16
        %v976 = vrot.slane %v974, 7
        %v977 = vshll.u32 %v851, 16
        %v979 = vor.u32 %v976, %v977
        %v981 = vshrl.u32 %v852, 16
        %v983 = vrot.slane %v981, 7
        %v984 = vshll.u32 %v852, 16
        %v986 = vor.u32 %v983, %v984
        %v988 = vshrl.u32 %v853, 16
        %v990 = vrot.slane %v988, 7
        %v991 = vshll.u32 %v853, 16
        %v993 = vor.u32 %v990, %v991
        %v995 = vshrl.u32 %v854, 16
        %v997 = vrot.slane %v995, 7
        %v998 = vshll.u32 %v854, 16
        %v1000 = vor.u32 %v997, %v998
        %v1002 = vshrl.u32 %v855, 16
        %v1004 = vrot.slane %v1002, 7
        %v1005 = vshll.u32 %v855, 16
        %v1007 = vor.u32 %v1004, %v1005
        %v1009 = vshrl.u32 %v856, 16
        %v1011 = vrot.slane %v1009, 7
        %v1012 = vshll.u32 %v856, 16
        %v1014 = vor.u32 %v1011, %v1012
        %v1016 = vshrl.u32 %v857, 16
        %v1018 = vrot.slane %v1016, 7
        %v1019 = vshll.u32 %v857, 16
        %v1021 = vor.u32 %v1018, %v1019
        %v1023 = vshrl.u32 %v858, 16
        %v1025 = vrot.slane %v1023, 7
        %v1026 = vshll.u32 %v858, 16
        %v1028 = vor.u32 %v1025, %v1026
        %v1030 = vshrl.u32 %v859, 16
        %v1032 = vrot.slane %v1030, 7
        %v1033 = vshll.u32 %v859, 16
        %v1035 = vor.u32 %v1032, %v1033
        %v1037 = vshrl.u32 %v860, 16
        %v1039 = vrot.slane %v1037, 7
        %v1040 = vshll.u32 %v860, 16
        %v1042 = vor.u32 %v1039, %v1040
        %v1044 = vshrl.u32 %v861, 16
        %v1046 = vrot.slane %v1044, 7
        %v1047 = vshll.u32 %v861, 16
        %v1049 = vor.u32 %v1046, %v1047
        %v1051 = vshrl.u32 %v862, 16
        %v1053 = vrot.slane %v1051, 7
        %v1054 = vshll.u32 %v862, 16
        %v1056 = vor.u32 %v1053, %v1054
        %v1058 = vshrl.u32 %v863, 16
        %v1060 = vrot.slane %v1058, 7
        %v1061 = vshll.u32 %v863, 16
        %v1063 = vor.u32 %v1060, %v1061
        %v1065 = vshrl.u32 %v864, 16
        %v1067 = vrot.slane %v1065, 7
        %v1068 = vshll.u32 %v864, 16
        %v1070 = vor.u32 %v1067, %v1068
        %v1072 = vshrl.u32 %v865, 16
        %v1074 = vrot.slane %v1072, 7
        %v1075 = vshll.u32 %v865, 16
        %v1077 = vor.u32 %v1074, %v1075
        %v1079 = vshrl.u32 %v866, 16
        %v1081 = vrot.slane %v1079, 7
        %v1082 = vshll.u32 %v866, 16
        %v1084 = vor.u32 %v1081, %v1082
        %v1086 = vshrl.u32 %v867, 16
        %v1088 = vrot.slane %v1086, 7
        %v1089 = vshll.u32 %v867, 16
        %v1091 = vor.u32 %v1088, %v1089
        %vm1156 = vcmask 1040384
        %vm1157 = vsmask.f32 256
        %vm1158 = vmand %vm1156, %vm1157
        %v1159 = vsel %vm1158, 0, %v874
        %v1160 = vsel %vm1158, 0, %v881
        %v1161 = vsel %vm1158, 0, %v888
        %v1162 = vsel %vm1158, 0, %v895
        %v1163 = vsel %vm1158, 0, %v902
        %v1164 = vsel %vm1158, 0, %v909
        %v1165 = vsel %vm1158, 0, %v916
        %v1166 = vsel %vm1158, 0, %v923
        %v1167 = vsel %vm1158, 0, %v930
        %v1168 = vsel %vm1158, 0, %v937
        %v1169 = vsel %vm1158, 0, %v944
        %v1170 = vsel %vm1158, 0, %v951
        %v1171 = vsel %vm1158, 0, %v958
        %v1172 = vsel %vm1158, 0, %v965
        %v1173 = vsel %vm1158, 0, %v972
        %v1174 = vsel %vm1158, 0, %v979
        %v1175 = vsel %vm1158, 0, %v986
        %v1176 = vsel %vm1158, 0, %v993
        %v1177 = vsel %vm1158, 0, %v1000
        %v1178 = vsel %vm1158, 0, %v1007
        %v1179 = vsel %vm1158, 0, %v1014
        %v1180 = vsel %vm1158, 0, %v1021
        %v1181 = vsel %vm1158, 0, %v1028
        %v1182 = vsel %vm1158, 0, %v1035
        %v1183 = vsel %vm1158, 0, %v1042
        %v1184 = vsel %vm1158, 0, %v1049
        %v1185 = vsel %vm1158, 0, %v1056
        %v1186 = vsel %vm1158, 0, %v1063
        %v1187 = vsel %vm1158, 0, %v1070
        %v1188 = vsel %vm1158, 0, %v1077
        %v1189 = vsel %vm1158, 0, %v1084
        %v1190 = vsel %vm1158, 0, %v1091
        %v1191 = vsel %vm1158, %v871, 0
        %v1192 = vsel %vm1158, %v878, 0
        %v1193 = vsel %vm1158, %v885, 0
        %v1194 = vsel %vm1158, %v892, 0
        %v1195 = vsel %vm1158, %v899, 0
        %v1196 = vsel %vm1158, %v906, 0
        %v1197 = vsel %vm1158, %v913, 0
        %v1198 = vsel %vm1158, %v920, 0
        %v1199 = vsel %vm1158, %v927, 0
        %v1200 = vsel %vm1158, %v934, 0
        %v1201 = vsel %vm1158, %v941, 0
        %v1202 = vsel %vm1158, %v948, 0
        %v1203 = vsel %vm1158, %v955, 0
        %v1204 = vsel %vm1158, %v962, 0
        %v1205 = vsel %vm1158, %v969, 0
        %v1206 = vsel %vm1158, %v976, 0
        %v1207 = vsel %vm1158, %v983, 0
        %v1208 = vsel %vm1158, %v990, 0
        %v1209 = vsel %vm1158, %v997, 0
        %v1210 = vsel %vm1158, %v1004, 0
        %v1211 = vsel %vm1158, %v1011, 0
        %v1212 = vsel %vm1158, %v1018, 0
        %v1213 = vsel %vm1158, %v1025, 0
        %v1214 = vsel %vm1158, %v1032, 0
        %v1215 = vsel %vm1158, %v1039, 0
        %v1216 = vsel %vm1158, %v1046, 0
        %v1217 = vsel %vm1158, %v1053, 0
        %v1218 = vsel %vm1158, %v1060, 0
        %v1219 = vsel %vm1158, %v1067, 0
        %v1220 = vsel %vm1158, %v1074, 0
        %v1221 = vsel %vm1158, %v1081, 0
        %v1222 = vsel %vm1158, %v1088, 0
        %v1288 = vunpack.c.l.b16 0
        %v1289 = vunpack.c.h.b16 0
        %v1290 = vunpack.c.l.b16 %v1159
        %v1291 = vunpack.c.h.b16 %v1159
        %v1292 = vunpack.c.l.b16 %v1191
        %v1293 = vunpack.c.l.b16 %v1160
        %v1294 = vunpack.c.h.b16 %v1160
        %v1295 = vunpack.c.l.b16 %v1192
        %v1296 = vunpack.c.l.b16 %v1161
        %v1297 = vunpack.c.h.b16 %v1161
        %v1298 = vunpack.c.l.b16 %v1193
        %v1299 = vunpack.c.l.b16 %v1162
        %v1300 = vunpack.c.h.b16 %v1162
        %v1301 = vunpack.c.l.b16 %v1194
        %v1302 = vunpack.c.l.b16 %v1163
        %v1303 = vunpack.c.h.b16 %v1163
        %v1304 = vunpack.c.l.b16 %v1195
        %v1305 = vunpack.c.l.b16 %v1164
        %v1306 = vunpack.c.h.b16 %v1164
        %v1307 = vunpack.c.l.b16 %v1196
        %v1308 = vunpack.c.l.b16 %v1165
        %v1309 = vunpack.c.h.b16 %v1165
        %v1310 = vunpack.c.l.b16 %v1197
        %v1311 = vunpack.c.l.b16 %v1166
        %v1312 = vunpack.c.h.b16 %v1166
        %v1313 = vunpack.c.l.b16 %v1198
        %v1314 = vunpack.c.l.b16 %v1167
        %v1315 = vunpack.c.h.b16 %v1167
        %v1316 = vunpack.c.l.b16 %v1199
        %v1317 = vunpack.c.l.b16 %v1168
        %v1318 = vunpack.c.h.b16 %v1168
        %v1319 = vunpack.c.l.b16 %v1200
        %v1320 = vunpack.c.l.b16 %v1169
        %v1321 = vunpack.c.h.b16 %v1169
        %v1322 = vunpack.c.l.b16 %v1201
        %v1323 = vunpack.c.l.b16 %v1170
        %v1324 = vunpack.c.h.b16 %v1170
        %v1325 = vunpack.c.l.b16 %v1202
        %v1326 = vunpack.c.l.b16 %v1171
        %v1327 = vunpack.c.h.b16 %v1171
        %v1328 = vunpack.c.l.b16 %v1203
        %v1329 = vunpack.c.l.b16 %v1172
        %v1330 = vunpack.c.h.b16 %v1172
        %v1331 = vunpack.c.l.b16 %v1204
        %v1332 = vunpack.c.l.b16 %v1173
        %v1333 = vunpack.c.h.b16 %v1173
        %v1334 = vunpack.c.l.b16 %v1205
        %v1335 = vunpack.c.l.b16 %v1174
        %v1336 = vunpack.c.h.b16 %v1174
        %v1337 = vunpack.c.l.b16 %v1206
        %v1338 = vunpack.c.l.b16 %v1175
        %v1339 = vunpack.c.h.b16 %v1175
        %v1340 = vunpack.c.l.b16 %v1207
        %v1341 = vunpack.c.l.b16 %v1176
        %v1342 = vunpack.c.h.b16 %v1176
        %v1343 = vunpack.c.l.b16 %v1208
        %v1344 = vunpack.c.l.b16 %v1177
        %v1345 = vunpack.c.h.b16 %v1177
        %v1346 = vunpack.c.l.b16 %v1209
        %v1347 = vunpack.c.l.b16 %v1178
        %v1348 = vunpack.c.h.b16 %v1178
        %v1349 = vunpack.c.l.b16 %v1210
        %v1350 = vunpack.c.l.b16 %v1179
        %v1351 = vunpack.c.h.b16 %v1179
        %v1352 = vunpack.c.l.b16 %v1211
        %v1353 = vunpack.c.l.b16 %v1180
        %v1354 = vunpack.c.h.b16 %v1180
        %v1355 = vunpack.c.l.b16 %v1212
        %v1356 = vunpack.c.l.b16 %v1181
        %v1357 = vunpack.c.h.b16 %v1181
        %v1358 = vunpack.c.l.b16 %v1213
        %v1359 = vunpack.c.l.b16 %v1182
        %v1360 = vunpack.c.h.b16 %v1182
        %v1361 = vunpack.c.l.b16 %v1214
        %v1362 = vunpack.c.l.b16 %v1183
        %v1363 = vunpack.c.h.b16 %v1183
        %v1364 = vunpack.c.l.b16 %v1215
        %v1365 = vunpack.c.l.b16 %v1184
        %v1366 = vunpack.c.h.b16 %v1184
        %v1367 = vunpack.c.l.b16 %v1216
        %v1368 = vunpack.c.l.b16 %v1185
        %v1369 = vunpack.c.h.b16 %v1185
        %v1370 = vunpack.c.l.b16 %v1217
        %v1371 = vunpack.c.l.b16 %v1186
        %v1372 = vunpack.c.h.b16 %v1186
        %v1373 = vunpack.c.l.b16 %v1218
        %v1374 = vunpack.c.l.b16 %v1187
        %v1375 = vunpack.c.h.b16 %v1187
        %v1376 = vunpack.c.l.b16 %v1219
        %v1377 = vunpack.c.l.b16 %v1188
        %v1378 = vunpack.c.h.b16 %v1188
        %v1379 = vunpack.c.l.b16 %v1220
        %v1380 = vunpack.c.l.b16 %v1189
        %v1381 = vunpack.c.h.b16 %v1189
        %v1382 = vunpack.c.l.b16 %v1221
        %v1383 = vunpack.c.l.b16 %v1190
        %v1384 = vunpack.c.h.b16 %v1190
        %v1385 = vunpack.c.l.b16 %v1222
        %v1386 = vpack.c.b16 %v1288, %v1288
        %v1387 = vpack.c.b16 %v1289, %v1289
        %v1388 = vpack.c.b16 %v1290, %v1290
        %v1389 = vpack.c.b16 %v1291, %v1291
        %v1390 = vpack.c.b16 %v1292, %v1292
        %v1391 = vpack.c.b16 %v1293, %v1293
        %v1392 = vpack.c.b16 %v1294, %v1294
        %v1393 = vpack.c.b16 %v1295, %v1295
        %v1394 = vpack.c.b16 %v1296, %v1296
        %v1395 = vpack.c.b16 %v1297, %v1297
        %v1396 = vpack.c.b16 %v1298, %v1298
        %v1397 = vpack.c.b16 %v1299, %v1299
        %v1398 = vpack.c.b16 %v1300, %v1300
        %v1399 = vpack.c.b16 %v1301, %v1301
        %v1400 = vpack.c.b16 %v1302, %v1302
        %v1401 = vpack.c.b16 %v1303, %v1303
        %v1402 = vpack.c.b16 %v1304, %v1304
        %v1403 = vpack.c.b16 %v1305, %v1305
        %v1404 = vpack.c.b16 %v1306, %v1306
        %v1405 = vpack.c.b16 %v1307, %v1307
        %v1406 = vpack.c.b16 %v1308, %v1308
        %v1407 = vpack.c.b16 %v1309, %v1309
        %v1408 = vpack.c.b16 %v1310, %v1310
        %v1409 = vpack.c.b16 %v1311, %v1311
        %v1410 = vpack.c.b16 %v1312, %v1312
        %v1411 = vpack.c.b16 %v1313, %v1313
        %v1412 = vpack.c.b16 %v1314, %v1314
        %v1413 = vpack.c.b16 %v1315, %v1315
        %v1414 = vpack.c.b16 %v1316, %v1316
        %v1415 = vpack.c.b16 %v1317, %v1317
        %v1416 = vpack.c.b16 %v1318, %v1318
        %v1417 = vpack.c.b16 %v1319, %v1319
        %v1418 = vpack.c.b16 %v1320, %v1320
        %v1419 = vpack.c.b16 %v1321, %v1321
        %v1420 = vpack.c.b16 %v1322, %v1322
        %v1421 = vpack.c.b16 %v1323, %v1323
        %v1422 = vpack.c.b16 %v1324, %v1324
        %v1423 = vpack.c.b16 %v1325, %v1325
        %v1424 = vpack.c.b16 %v1326, %v1326
        %v1425 = vpack.c.b16 %v1327, %v1327
        %v1426 = vpack.c.b16 %v1328, %v1328
        %v1427 = vpack.c.b16 %v1329, %v1329
        %v1428 = vpack.c.b16 %v1330, %v1330
        %v1429 = vpack.c.b16 %v1331, %v1331
        %v1430 = vpack.c.b16 %v1332, %v1332
        %v1431 = vpack.c.b16 %v1333, %v1333
        %v1432 = vpack.c.b16 %v1334, %v1334
        %v1433 = vpack.c.b16 %v1335, %v1335
        %v1434 = vpack.c.b16 %v1336, %v1336
        %v1435 = vpack.c.b16 %v1337, %v1337
        %v1436 = vpack.c.b16 %v1338, %v1338
        %v1437 = vpack.c.b16 %v1339, %v1339
        %v1438 = vpack.c.b16 %v1340, %v1340
        %v1439 = vpack.c.b16 %v1341, %v1341
        %v1440 = vpack.c.b16 %v1342, %v1342
        %v1441 = vpack.c.b16 %v1343, %v1343
        %v1442 = vpack.c.b16 %v1344, %v1344
        %v1443 = vpack.c.b16 %v1345, %v1345
        %v1444 = vpack.c.b16 %v1346, %v1346
        %v1445 = vpack.c.b16 %v1347, %v1347
        %v1446 = vpack.c.b16 %v1348, %v1348
        %v1447 = vpack.c.b16 %v1349, %v1349
        %v1448 = vpack.c.b16 %v1350, %v1350
        %v1449 = vpack.c.b16 %v1351, %v1351
        %v1450 = vpack.c.b16 %v1352, %v1352
        %v1451 = vpack.c.b16 %v1353, %v1353
        %v1452 = vpack.c.b16 %v1354, %v1354
        %v1453 = vpack.c.b16 %v1355, %v1355
        %v1454 = vpack.c.b16 %v1356, %v1356
        %v1455 = vpack.c.b16 %v1357, %v1357
        %v1456 = vpack.c.b16 %v1358, %v1358
        %v1457 = vpack.c.b16 %v1359, %v1359
        %v1458 = vpack.c.b16 %v1360, %v1360
        %v1459 = vpack.c.b16 %v1361, %v1361
        %v1460 = vpack.c.b16 %v1362, %v1362
        %v1461 = vpack.c.b16 %v1363, %v1363
        %v1462 = vpack.c.b16 %v1364, %v1364
        %v1463 = vpack.c.b16 %v1365, %v1365
        %v1464 = vpack.c.b16 %v1366, %v1366
        %v1465 = vpack.c.b16 %v1367, %v1367
        %v1466 = vpack.c.b16 %v1368, %v1368
        %v1467 = vpack.c.b16 %v1369, %v1369
        %v1468 = vpack.c.b16 %v1370, %v1370
        %v1469 = vpack.c.b16 %v1371, %v1371
        %v1470 = vpack.c.b16 %v1372, %v1372
        %v1471 = vpack.c.b16 %v1373, %v1373
        %v1472 = vpack.c.b16 %v1374, %v1374
        %v1473 = vpack.c.b16 %v1375, %v1375
        %v1474 = vpack.c.b16 %v1376, %v1376
        %v1475 = vpack.c.b16 %v1377, %v1377
        %v1476 = vpack.c.b16 %v1378, %v1378
        %v1477 = vpack.c.b16 %v1379, %v1379
        %v1478 = vpack.c.b16 %v1380, %v1380
        %v1479 = vpack.c.b16 %v1381, %v1381
        %v1480 = vpack.c.b16 %v1382, %v1382
        %v1481 = vpack.c.b16 %v1383, %v1383
        %v1482 = vpack.c.b16 %v1384, %v1384
        %v1483 = vpack.c.b16 %v1385, %v1385
        %vm1582 = vcmask 257024
        %1583 = vst.msk [vmem:[#allocation2] sm:$0xf] %vm1582, %v1386
        %1584 = vst.msk [vmem:[#allocation2 + $0x4] sm:$0xf] %vm1582, %v1387
        %vm1585 = vcmask 253952
        %1586 = vst.msk [vmem:[#allocation2 + $0x8] sm:$0x1] %vm1585, %v1386
        %1587 = vst.msk [vmem:[#allocation2 + $0xc] sm:$0xf] %vm1582, %v1388
        %1588 = vst.msk [vmem:[#allocation2 + $0x10] sm:$0xf] %vm1582, %v1389
        %1589 = vst.msk [vmem:[#allocation2 + $0x14] sm:$0x1] %vm1585, %v1390
        %1590 = vst.msk [vmem:[#allocation2 + $0x18] sm:$0xf] %vm1582, %v1391
        %1591 = vst.msk [vmem:[#allocation2 + $0x1c] sm:$0xf] %vm1582, %v1392
        %1592 = vst.msk [vmem:[#allocation2 + $0x20] sm:$0x1] %vm1585, %v1393
        %1593 = vst.msk [vmem:[#allocation2 + $0x24] sm:$0xf] %vm1582, %v1394
        %1594 = vst.msk [vmem:[#allocation2 + $0x28] sm:$0xf] %vm1582, %v1395
        %1595 = vst.msk [vmem:[#allocation2 + $0x2c] sm:$0x1] %vm1585, %v1396
        %1596 = vst.msk [vmem:[#allocation2 + $0x30] sm:$0xf] %vm1582, %v1397
        %1597 = vst.msk [vmem:[#allocation2 + $0x34] sm:$0xf] %vm1582, %v1398
        %1598 = vst.msk [vmem:[#allocation2 + $0x38] sm:$0x1] %vm1585, %v1399
        %1599 = vst.msk [vmem:[#allocation2 + $0x3c] sm:$0xf] %vm1582, %v1400
        %1600 = vst.msk [vmem:[#allocation2 + $0x40] sm:$0xf] %vm1582, %v1401
        %1601 = vst.msk [vmem:[#allocation2 + $0x44] sm:$0x1] %vm1585, %v1402
        %1602 = vst.msk [vmem:[#allocation2 + $0x48] sm:$0xf] %vm1582, %v1403
        %1603 = vst.msk [vmem:[#allocation2 + $0x4c] sm:$0xf] %vm1582, %v1404
        %1604 = vst.msk [vmem:[#allocation2 + $0x50] sm:$0x1] %vm1585, %v1405
        %1605 = vst.msk [vmem:[#allocation2 + $0x54] sm:$0xf] %vm1582, %v1406
        %1606 = vst.msk [vmem:[#allocation2 + $0x58] sm:$0xf] %vm1582, %v1407
        %1607 = vst.msk [vmem:[#allocation2 + $0x5c] sm:$0x1] %vm1585, %v1408
        %1608 = vst.msk [vmem:[#allocation2 + $0x60] sm:$0xf] %vm1582, %v1409
        %1609 = vst.msk [vmem:[#allocation2 + $0x64] sm:$0xf] %vm1582, %v1410
        %1610 = vst.msk [vmem:[#allocation2 + $0x68] sm:$0x1] %vm1585, %v1411
        %1611 = vst.msk [vmem:[#allocation2 + $0x6c] sm:$0xf] %vm1582, %v1412
        %1612 = vst.msk [vmem:[#allocation2 + $0x70] sm:$0xf] %vm1582, %v1413
        %1613 = vst.msk [vmem:[#allocation2 + $0x74] sm:$0x1] %vm1585, %v1414
        %1614 = vst.msk [vmem:[#allocation2 + $0x78] sm:$0xf] %vm1582, %v1415
        %1615 = vst.msk [vmem:[#allocation2 + $0x7c] sm:$0xf] %vm1582, %v1416
        %1616 = vst.msk [vmem:[#allocation2 + $0x80] sm:$0x1] %vm1585, %v1417
        %1617 = vst.msk [vmem:[#allocation2 + $0x84] sm:$0xf] %vm1582, %v1418
        %1618 = vst.msk [vmem:[#allocation2 + $0x88] sm:$0xf] %vm1582, %v1419
        %1619 = vst.msk [vmem:[#allocation2 + $0x8c] sm:$0x1] %vm1585, %v1420
        %1620 = vst.msk [vmem:[#allocation2 + $0x90] sm:$0xf] %vm1582, %v1421
        %1621 = vst.msk [vmem:[#allocation2 + $0x94] sm:$0xf] %vm1582, %v1422
        %1622 = vst.msk [vmem:[#allocation2 + $0x98] sm:$0x1] %vm1585, %v1423
        %1623 = vst.msk [vmem:[#allocation2 + $0x9c] sm:$0xf] %vm1582, %v1424
        %1624 = vst.msk [vmem:[#allocation2 + $0xa0] sm:$0xf] %vm1582, %v1425
        %1625 = vst.msk [vmem:[#allocation2 + $0xa4] sm:$0x1] %vm1585, %v1426
        %1626 = vst.msk [vmem:[#allocation2 + $0xa8] sm:$0xf] %vm1582, %v1427
        %1627 = vst.msk [vmem:[#allocation2 + $0xac] sm:$0xf] %vm1582, %v1428
        %1628 = vst.msk [vmem:[#allocation2 + $0xb0] sm:$0x1] %vm1585, %v1429
        %1629 = vst.msk [vmem:[#allocation2 + $0xb4] sm:$0xf] %vm1582, %v1430
        %1630 = vst.msk [vmem:[#allocation2 + $0xb8] sm:$0xf] %vm1582, %v1431
        %1631 = vst.msk [vmem:[#allocation2 + $0xbc] sm:$0x1] %vm1585, %v1432
        %1632 = vst.msk [vmem:[#allocation2 + $0xc0] sm:$0xf] %vm1582, %v1433
        %1633 = vst.msk [vmem:[#allocation2 + $0xc4] sm:$0xf] %vm1582, %v1434
        %1634 = vst.msk [vmem:[#allocation2 + $0xc8] sm:$0x1] %vm1585, %v1435
        %1635 = vst.msk [vmem:[#allocation2 + $0xcc] sm:$0xf] %vm1582, %v1386
        %1636 = vst.msk [vmem:[#allocation2 + $0xd0] sm:$0xf] %vm1582, %v1387
        %1637 = vst.msk [vmem:[#allocation2 + $0xd4] sm:$0x1] %vm1585, %v1386
        %1638 = vst.msk [vmem:[#allocation2 + $0xd8] sm:$0xf] %vm1582, %v1386
        %1639 = vst.msk [vmem:[#allocation2 + $0xdc] sm:$0xf] %vm1582, %v1387
        %1640 = vst.msk [vmem:[#allocation2 + $0xe0] sm:$0x1] %vm1585, %v1386
        %1641 = vst.msk [vmem:[#allocation2 + $0xe4] sm:$0xf] %vm1582, %v1436
        %1642 = vst.msk [vmem:[#allocation2 + $0xe8] sm:$0xf] %vm1582, %v1437
        %1643 = vst.msk [vmem:[#allocation2 + $0xec] sm:$0x1] %vm1585, %v1438
        %1644 = vst.msk [vmem:[#allocation2 + $0xf0] sm:$0xf] %vm1582, %v1439
        %1645 = vst.msk [vmem:[#allocation2 + $0xf4] sm:$0xf] %vm1582, %v1440
        %1646 = vst.msk [vmem:[#allocation2 + $0xf8] sm:$0x1] %vm1585, %v1441
        %1647 = vst.msk [vmem:[#allocation2 + $0xfc] sm:$0xf] %vm1582, %v1442
        %1648 = vst.msk [vmem:[#allocation2 + $0x100] sm:$0xf] %vm1582, %v1443
        %1649 = vst.msk [vmem:[#allocation2 + $0x104] sm:$0x1] %vm1585, %v1444
        %1650 = vst.msk [vmem:[#allocation2 + $0x108] sm:$0xf] %vm1582, %v1445
        %1651 = vst.msk [vmem:[#allocation2 + $0x10c] sm:$0xf] %vm1582, %v1446
        %1652 = vst.msk [vmem:[#allocation2 + $0x110] sm:$0x1] %vm1585, %v1447
        %1653 = vst.msk [vmem:[#allocation2 + $0x114] sm:$0xf] %vm1582, %v1448
        %1654 = vst.msk [vmem:[#allocation2 + $0x118] sm:$0xf] %vm1582, %v1449
        %1655 = vst.msk [vmem:[#allocation2 + $0x11c] sm:$0x1] %vm1585, %v1450
        %1656 = vst.msk [vmem:[#allocation2 + $0x120] sm:$0xf] %vm1582, %v1451
        %1657 = vst.msk [vmem:[#allocation2 + $0x124] sm:$0xf] %vm1582, %v1452
        %1658 = vst.msk [vmem:[#allocation2 + $0x128] sm:$0x1] %vm1585, %v1453
        %1659 = vst.msk [vmem:[#allocation2 + $0x12c] sm:$0xf] %vm1582, %v1454
        %1660 = vst.msk [vmem:[#allocation2 + $0x130] sm:$0xf] %vm1582, %v1455
        %1661 = vst.msk [vmem:[#allocation2 + $0x134] sm:$0x1] %vm1585, %v1456
        %1662 = vst.msk [vmem:[#allocation2 + $0x138] sm:$0xf] %vm1582, %v1457
        %1663 = vst.msk [vmem:[#allocation2 + $0x13c] sm:$0xf] %vm1582, %v1458
        %1664 = vst.msk [vmem:[#allocation2 + $0x140] sm:$0x1] %vm1585, %v1459
        %1665 = vst.msk [vmem:[#allocation2 + $0x144] sm:$0xf] %vm1582, %v1460
        %1666 = vst.msk [vmem:[#allocation2 + $0x148] sm:$0xf] %vm1582, %v1461
        %1667 = vst.msk [vmem:[#allocation2 + $0x14c] sm:$0x1] %vm1585, %v1462
        %1668 = vst.msk [vmem:[#allocation2 + $0x150] sm:$0xf] %vm1582, %v1463
        %1669 = vst.msk [vmem:[#allocation2 + $0x154] sm:$0xf] %vm1582, %v1464
        %1670 = vst.msk [vmem:[#allocation2 + $0x158] sm:$0x1] %vm1585, %v1465
        %1671 = vst.msk [vmem:[#allocation2 + $0x15c] sm:$0xf] %vm1582, %v1466
        %1672 = vst.msk [vmem:[#allocation2 + $0x160] sm:$0xf] %vm1582, %v1467
        %1673 = vst.msk [vmem:[#allocation2 + $0x164] sm:$0x1] %vm1585, %v1468
        %1674 = vst.msk [vmem:[#allocation2 + $0x168] sm:$0xf] %vm1582, %v1469
        %1675 = vst.msk [vmem:[#allocation2 + $0x16c] sm:$0xf] %vm1582, %v1470
        %1676 = vst.msk [vmem:[#allocation2 + $0x170] sm:$0x1] %vm1585, %v1471
        %1677 = vst.msk [vmem:[#allocation2 + $0x174] sm:$0xf] %vm1582, %v1472
        %1678 = vst.msk [vmem:[#allocation2 + $0x178] sm:$0xf] %vm1582, %v1473
        %1679 = vst.msk [vmem:[#allocation2 + $0x17c] sm:$0x1] %vm1585, %v1474
        %1680 = vst.msk [vmem:[#allocation2 + $0x180] sm:$0xf] %vm1582, %v1475
        %1681 = vst.msk [vmem:[#allocation2 + $0x184] sm:$0xf] %vm1582, %v1476
        %1682 = vst.msk [vmem:[#allocation2 + $0x188] sm:$0x1] %vm1585, %v1477
        %1683 = vst.msk [vmem:[#allocation2 + $0x18c] sm:$0xf] %vm1582, %v1478
        %1684 = vst.msk [vmem:[#allocation2 + $0x190] sm:$0xf] %vm1582, %v1479
        %1685 = vst.msk [vmem:[#allocation2 + $0x194] sm:$0x1] %vm1585, %v1480
        %1686 = vst.msk [vmem:[#allocation2 + $0x198] sm:$0xf] %vm1582, %v1481
        %1687 = vst.msk [vmem:[#allocation2 + $0x19c] sm:$0xf] %vm1582, %v1482
        %1688 = vst.msk [vmem:[#allocation2 + $0x1a0] sm:$0x1] %vm1585, %v1483
        %1689 = vst.msk [vmem:[#allocation2 + $0x1a4] sm:$0xf] %vm1582, %v1386
        %1690 = vst.msk [vmem:[#allocation2 + $0x1a8] sm:$0xf] %vm1582, %v1387
        %1691 = vst.msk [vmem:[#allocation2 + $0x1ac] sm:$0x1] %vm1585, %v1386
        %v1692 = vld [vmem:[#allocation2] sm:$0xf]
        %v1693 = vld [vmem:[#allocation2 + $0x4] sm:$0xf]
        %v1694 = vld [vmem:[#allocation2 + $0xc] sm:$0xf]
        %v1695 = vld [vmem:[#allocation2 + $0x10] sm:$0xf]
        %v1696 = vld [vmem:[#allocation2 + $0x18] sm:$0xf]
        %v1697 = vld [vmem:[#allocation2 + $0x1c] sm:$0xf]
        %v1698 = vld [vmem:[#allocation2 + $0x24] sm:$0xf]
        %v1699 = vld [vmem:[#allocation2 + $0x28] sm:$0xf]
        %v1700 = vld [vmem:[#allocation2 + $0x30] sm:$0xf]
        %v1701 = vld [vmem:[#allocation2 + $0x34] sm:$0xf]
        %v1702 = vld [vmem:[#allocation2 + $0x3c] sm:$0xf]
        %v1703 = vld [vmem:[#allocation2 + $0x40] sm:$0xf]
        %v1704 = vld [vmem:[#allocation2 + $0x48] sm:$0xf]
        %v1705 = vld [vmem:[#allocation2 + $0x4c] sm:$0xf]
        %v1706 = vld [vmem:[#allocation2 + $0x54] sm:$0xf]
        %v1707 = vld [vmem:[#allocation2 + $0x58] sm:$0xf]
        %v1708 = vld [vmem:[#allocation2 + $0x60] sm:$0xf]
        %v1709 = vld [vmem:[#allocation2 + $0x64] sm:$0xf]
        %v1710 = vld [vmem:[#allocation2 + $0x6c] sm:$0xf]
        %v1711 = vld [vmem:[#allocation2 + $0x70] sm:$0xf]
        %v1712 = vld [vmem:[#allocation2 + $0x78] sm:$0xf]
        %v1713 = vld [vmem:[#allocation2 + $0x7c] sm:$0xf]
        %v1714 = vld [vmem:[#allocation2 + $0x84] sm:$0xf]
        %v1715 = vld [vmem:[#allocation2 + $0x88] sm:$0xf]
        %v1716 = vld [vmem:[#allocation2 + $0x90] sm:$0xf]
        %v1717 = vld [vmem:[#allocation2 + $0x94] sm:$0xf]
        %v1718 = vld [vmem:[#allocation2 + $0x9c] sm:$0xf]
        %v1719 = vld [vmem:[#allocation2 + $0xa0] sm:$0xf]
        %v1720 = vld [vmem:[#allocation2 + $0xa8] sm:$0xf]
        %v1721 = vld [vmem:[#allocation2 + $0xac] sm:$0xf]
        %v1722 = vld [vmem:[#allocation2 + $0xb4] sm:$0xf]
        %v1723 = vld [vmem:[#allocation2 + $0xb8] sm:$0xf]
        %v1724 = vld [vmem:[#allocation2 + $0xd8] sm:$0xf]
        %v1725 = vld [vmem:[#allocation2 + $0xdc] sm:$0xf]
        %v1726 = vld [vmem:[#allocation2 + $0xe4] sm:$0xf]
        %v1727 = vld [vmem:[#allocation2 + $0xe8] sm:$0xf]
        %v1728 = vld [vmem:[#allocation2 + $0xf0] sm:$0xf]
        %v1729 = vld [vmem:[#allocation2 + $0xf4] sm:$0xf]
        %v1730 = vld [vmem:[#allocation2 + $0xfc] sm:$0xf]
        %v1731 = vld [vmem:[#allocation2 + $0x100] sm:$0xf]
        %v1732 = vld [vmem:[#allocation2 + $0x108] sm:$0xf]
        %v1733 = vld [vmem:[#allocation2 + $0x10c] sm:$0xf]
        %v1734 = vld [vmem:[#allocation2 + $0x114] sm:$0xf]
        %v1735 = vld [vmem:[#allocation2 + $0x118] sm:$0xf]
        %v1736 = vld [vmem:[#allocation2 + $0x120] sm:$0xf]
        %v1737 = vld [vmem:[#allocation2 + $0x124] sm:$0xf]
        %v1738 = vld [vmem:[#allocation2 + $0x12c] sm:$0xf]
        %v1739 = vld [vmem:[#allocation2 + $0x130] sm:$0xf]
        %v1740 = vld [vmem:[#allocation2 + $0x138] sm:$0xf]
        %v1741 = vld [vmem:[#allocation2 + $0x13c] sm:$0xf]
        %v1742 = vld [vmem:[#allocation2 + $0x144] sm:$0xf]
        %v1743 = vld [vmem:[#allocation2 + $0x148] sm:$0xf]
        %v1744 = vld [vmem:[#allocation2 + $0x150] sm:$0xf]
        %v1745 = vld [vmem:[#allocation2 + $0x154] sm:$0xf]
        %v1746 = vld [vmem:[#allocation2 + $0x15c] sm:$0xf]
        %v1747 = vld [vmem:[#allocation2 + $0x160] sm:$0xf]
        %v1748 = vld [vmem:[#allocation2 + $0x168] sm:$0xf]
        %v1749 = vld [vmem:[#allocation2 + $0x16c] sm:$0xf]
        %v1750 = vld [vmem:[#allocation2 + $0x174] sm:$0xf]
        %v1751 = vld [vmem:[#allocation2 + $0x178] sm:$0xf]
        %v1752 = vld [vmem:[#allocation2 + $0x180] sm:$0xf]
        %v1753 = vld [vmem:[#allocation2 + $0x184] sm:$0xf]
        %v1754 = vld [vmem:[#allocation2 + $0x18c] sm:$0xf]
        %v1755 = vld [vmem:[#allocation2 + $0x190] sm:$0xf]
        %v1756 = vld [vmem:[#allocation6] sm:$0xf]
        %v1757 = vld [vmem:[#allocation6 + $0x4] sm:$0xf]
        %v1758 = vld [vmem:[#allocation6 + $0x8] sm:$0xf]
        %v1759 = vld [vmem:[#allocation6 + $0xc] sm:$0xf]
        %v1760 = vld [vmem:[#allocation2 + $0x8] sm:$0x1]
        %v1761 = vld [vmem:[#allocation2 + $0x14] sm:$0x1]
        %v1762 = vld [vmem:[#allocation2 + $0x20] sm:$0x1]
        %v1763 = vld [vmem:[#allocation2 + $0x2c] sm:$0x1]
        %v1764 = vld [vmem:[#allocation2 + $0x38] sm:$0x1]
        %v1765 = vld [vmem:[#allocation2 + $0x44] sm:$0x1]
        %v1766 = vld [vmem:[#allocation2 + $0x50] sm:$0x1]
        %v1767 = vld [vmem:[#allocation2 + $0x5c] sm:$0x1]
        %v1768 = vld [vmem:[#allocation2 + $0x68] sm:$0x1]
        %v1769 = vld [vmem:[#allocation2 + $0x74] sm:$0x1]
        %v1770 = vld [vmem:[#allocation2 + $0x80] sm:$0x1]
        %v1771 = vld [vmem:[#allocation2 + $0x8c] sm:$0x1]
        %v1772 = vld [vmem:[#allocation2 + $0x98] sm:$0x1]
        %v1773 = vld [vmem:[#allocation2 + $0xa4] sm:$0x1]
        %v1774 = vld [vmem:[#allocation2 + $0xb0] sm:$0x1]
        %v1775 = vld [vmem:[#allocation2 + $0xbc] sm:$0x1]
        %v1776 = vld [vmem:[#allocation2 + $0xe0] sm:$0x1]
        %v1777 = vld [vmem:[#allocation2 + $0xec] sm:$0x1]
        %v1778 = vld [vmem:[#allocation2 + $0xf8] sm:$0x1]
        %v1779 = vld [vmem:[#allocation2 + $0x104] sm:$0x1]
        %v1780 = vld [vmem:[#allocation2 + $0x110] sm:$0x1]
        %v1781 = vld [vmem:[#allocation2 + $0x11c] sm:$0x1]
        %v1782 = vld [vmem:[#allocation2 + $0x128] sm:$0x1]
        %v1783 = vld [vmem:[#allocation2 + $0x134] sm:$0x1]
        %v1784 = vld [vmem:[#allocation2 + $0x140] sm:$0x1]
        %v1785 = vld [vmem:[#allocation2 + $0x14c] sm:$0x1]
        %v1786 = vld [vmem:[#allocation2 + $0x158] sm:$0x1]
        %v1787 = vld [vmem:[#allocation2 + $0x164] sm:$0x1]
        %v1788 = vld [vmem:[#allocation2 + $0x170] sm:$0x1]
        %v1789 = vld [vmem:[#allocation2 + $0x17c] sm:$0x1]
        %v1790 = vld [vmem:[#allocation2 + $0x188] sm:$0x1]
        %v1791 = vld [vmem:[#allocation2 + $0x194] sm:$0x1]
        %vm1792 = vsmask.f32 3328
        %vm1793 = vsmask.f32 7440
        %vm1794 = vmor %vm1792, %vm1793
        %v1796 = vshrl.u32 %v1692, 16
        %v1798 = vrot.slane %v1796, 4
        %v1799 = vshll.u32 %v1692, 16
        %v1801 = vrot.slane %v1799, 5
        %v1802 = vor.u32 %v1798, %v1801
        %v1803 = vrot.slane %v1802, 4
        %v1805 = vshll.u32 %v1693, 16
        %v1807 = vrot.slane %v1805, 5
        %v1808 = vsel %vm1794, %v1803, %v1807
        %v1809 = vshrl.u32 %v1693, 16
        %v1811 = vrot.slane %v1809, 4
        %v1812 = vor.u32 %v1811, %v1807
        %v1813 = vrot.slane %v1812, 4
        %v1815 = vshll.u32 %v1760, 16
        %v1817 = vrot.slane %v1815, 5
        %v1818 = vsel %vm1794, %v1813, %v1817
        %v1820 = vshrl.u32 %v1694, 16
        %v1822 = vrot.slane %v1820, 4
        %v1823 = vshll.u32 %v1694, 16
        %v1825 = vrot.slane %v1823, 5
        %v1826 = vor.u32 %v1822, %v1825
        %v1827 = vrot.slane %v1826, 4
        %v1829 = vshll.u32 %v1695, 16
        %v1831 = vrot.slane %v1829, 5
        %v1832 = vsel %vm1794, %v1827, %v1831
        %v1833 = vshrl.u32 %v1695, 16
        %v1835 = vrot.slane %v1833, 4
        %v1836 = vor.u32 %v1835, %v1831
        %v1837 = vrot.slane %v1836, 4
        %v1839 = vshll.u32 %v1761, 16
        %v1841 = vrot.slane %v1839, 5
        %v1842 = vsel %vm1794, %v1837, %v1841
        %v1844 = vshrl.u32 %v1696, 16
        %v1846 = vrot.slane %v1844, 4
        %v1847 = vshll.u32 %v1696, 16
        %v1849 = vrot.slane %v1847, 5
        %v1850 = vor.u32 %v1846, %v1849
        %v1851 = vrot.slane %v1850, 4
        %v1853 = vshll.u32 %v1697, 16
        %v1855 = vrot.slane %v1853, 5
        %v1856 = vsel %vm1794, %v1851, %v1855
        %v1857 = vshrl.u32 %v1697, 16
        %v1859 = vrot.slane %v1857, 4
        %v1860 = vor.u32 %v1859, %v1855
        %v1861 = vrot.slane %v1860, 4
        %v1863 = vshll.u32 %v1762, 16
        %v1865 = vrot.slane %v1863, 5
        %v1866 = vsel %vm1794, %v1861, %v1865
        %v1868 = vshrl.u32 %v1698, 16
        %v1870 = vrot.slane %v1868, 4
        %v1871 = vshll.u32 %v1698, 16
        %v1873 = vrot.slane %v1871, 5
        %v1874 = vor.u32 %v1870, %v1873
        %v1875 = vrot.slane %v1874, 4
        %v1877 = vshll.u32 %v1699, 16
        %v1879 = vrot.slane %v1877, 5
        %v1880 = vsel %vm1794, %v1875, %v1879
        %v1881 = vshrl.u32 %v1699, 16
        %v1883 = vrot.slane %v1881, 4
        %v1884 = vor.u32 %v1883, %v1879
        %v1885 = vrot.slane %v1884, 4
        %v1887 = vshll.u32 %v1763, 16
        %v1889 = vrot.slane %v1887, 5
        %v1890 = vsel %vm1794, %v1885, %v1889
        %v1892 = vshrl.u32 %v1700, 16
        %v1894 = vrot.slane %v1892, 4
        %v1895 = vshll.u32 %v1700, 16
        %v1897 = vrot.slane %v1895, 5
        %v1898 = vor.u32 %v1894, %v1897
        %v1899 = vrot.slane %v1898, 4
        %v1901 = vshll.u32 %v1701, 16
        %v1903 = vrot.slane %v1901, 5
        %v1904 = vsel %vm1794, %v1899, %v1903
        %v1905 = vshrl.u32 %v1701, 16
        %v1907 = vrot.slane %v1905, 4
        %v1908 = vor.u32 %v1907, %v1903
        %v1909 = vrot.slane %v1908, 4
        %v1911 = vshll.u32 %v1764, 16
        %v1913 = vrot.slane %v1911, 5
        %v1914 = vsel %vm1794, %v1909, %v1913
        %v1916 = vshrl.u32 %v1702, 16
        %v1918 = vrot.slane %v1916, 4
        %v1919 = vshll.u32 %v1702, 16
        %v1921 = vrot.slane %v1919, 5
        %v1922 = vor.u32 %v1918, %v1921
        %v1923 = vrot.slane %v1922, 4
        %v1925 = vshll.u32 %v1703, 16
        %v1927 = vrot.slane %v1925, 5
        %v1928 = vsel %vm1794, %v1923, %v1927
        %v1929 = vshrl.u32 %v1703, 16
        %v1931 = vrot.slane %v1929, 4
        %v1932 = vor.u32 %v1931, %v1927
        %v1933 = vrot.slane %v1932, 4
        %v1935 = vshll.u32 %v1765, 16
        %v1937 = vrot.slane %v1935, 5
        %v1938 = vsel %vm1794, %v1933, %v1937
        %v1940 = vshrl.u32 %v1704, 16
        %v1942 = vrot.slane %v1940, 4
        %v1943 = vshll.u32 %v1704, 16
        %v1945 = vrot.slane %v1943, 5
        %v1946 = vor.u32 %v1942, %v1945
        %v1947 = vrot.slane %v1946, 4
        %v1949 = vshll.u32 %v1705, 16
        %v1951 = vrot.slane %v1949, 5
        %v1952 = vsel %vm1794, %v1947, %v1951
        %v1953 = vshrl.u32 %v1705, 16
        %v1955 = vrot.slane %v1953, 4
        %v1956 = vor.u32 %v1955, %v1951
        %v1957 = vrot.slane %v1956, 4
        %v1959 = vshll.u32 %v1766, 16
        %v1961 = vrot.slane %v1959, 5
        %v1962 = vsel %vm1794, %v1957, %v1961
        %v1964 = vshrl.u32 %v1706, 16
        %v1966 = vrot.slane %v1964, 4
        %v1967 = vshll.u32 %v1706, 16
        %v1969 = vrot.slane %v1967, 5
        %v1970 = vor.u32 %v1966, %v1969
        %v1971 = vrot.slane %v1970, 4
        %v1973 = vshll.u32 %v1707, 16
        %v1975 = vrot.slane %v1973, 5
        %v1976 = vsel %vm1794, %v1971, %v1975
        %v1977 = vshrl.u32 %v1707, 16
        %v1979 = vrot.slane %v1977, 4
        %v1980 = vor.u32 %v1979, %v1975
        %v1981 = vrot.slane %v1980, 4
        %v1983 = vshll.u32 %v1767, 16
        %v1985 = vrot.slane %v1983, 5
        %v1986 = vsel %vm1794, %v1981, %v1985
        %v1988 = vshrl.u32 %v1708, 16
        %v1990 = vrot.slane %v1988, 4
        %v1991 = vshll.u32 %v1708, 16
        %v1993 = vrot.slane %v1991, 5
        %v1994 = vor.u32 %v1990, %v1993
        %v1995 = vrot.slane %v1994, 4
        %v1997 = vshll.u32 %v1709, 16
        %v1999 = vrot.slane %v1997, 5
        %v2000 = vsel %vm1794, %v1995, %v1999
        %v2001 = vshrl.u32 %v1709, 16
        %v2003 = vrot.slane %v2001, 4
        %v2004 = vor.u32 %v2003, %v1999
        %v2005 = vrot.slane %v2004, 4
        %v2007 = vshll.u32 %v1768, 16
        %v2009 = vrot.slane %v2007, 5
        %v2010 = vsel %vm1794, %v2005, %v2009
        %v2012 = vshrl.u32 %v1710, 16
        %v2014 = vrot.slane %v2012, 4
        %v2015 = vshll.u32 %v1710, 16
        %v2017 = vrot.slane %v2015, 5
        %v2018 = vor.u32 %v2014, %v2017
        %v2019 = vrot.slane %v2018, 4
        %v2021 = vshll.u32 %v1711, 16
        %v2023 = vrot.slane %v2021, 5
        %v2024 = vsel %vm1794, %v2019, %v2023
        %v2025 = vshrl.u32 %v1711, 16
        %v2027 = vrot.slane %v2025, 4
        %v2028 = vor.u32 %v2027, %v2023
        %v2029 = vrot.slane %v2028, 4
        %v2031 = vshll.u32 %v1769, 16
        %v2033 = vrot.slane %v2031, 5
        %v2034 = vsel %vm1794, %v2029, %v2033
        %v2036 = vshrl.u32 %v1712, 16
        %v2038 = vrot.slane %v2036, 4
        %v2039 = vshll.u32 %v1712, 16
        %v2041 = vrot.slane %v2039, 5
        %v2042 = vor.u32 %v2038, %v2041
        %v2043 = vrot.slane %v2042, 4
        %v2045 = vshll.u32 %v1713, 16
        %v2047 = vrot.slane %v2045, 5
        %v2048 = vsel %vm1794, %v2043, %v2047
        %v2049 = vshrl.u32 %v1713, 16
        %v2051 = vrot.slane %v2049, 4
        %v2052 = vor.u32 %v2051, %v2047
        %v2053 = vrot.slane %v2052, 4
        %v2055 = vshll.u32 %v1770, 16
        %v2057 = vrot.slane %v2055, 5
        %v2058 = vsel %vm1794, %v2053, %v2057
        %v2060 = vshrl.u32 %v1714, 16
        %v2062 = vrot.slane %v2060, 4
        %v2063 = vshll.u32 %v1714, 16
        %v2065 = vrot.slane %v2063, 5
        %v2066 = vor.u32 %v2062, %v2065
        %v2067 = vrot.slane %v2066, 4
        %v2069 = vshll.u32 %v1715, 16
        %v2071 = vrot.slane %v2069, 5
        %v2072 = vsel %vm1794, %v2067, %v2071
        %v2073 = vshrl.u32 %v1715, 16
        %v2075 = vrot.slane %v2073, 4
        %v2076 = vor.u32 %v2075, %v2071
        %v2077 = vrot.slane %v2076, 4
        %v2079 = vshll.u32 %v1771, 16
        %v2081 = vrot.slane %v2079, 5
        %v2082 = vsel %vm1794, %v2077, %v2081
        %v2084 = vshrl.u32 %v1716, 16
        %v2086 = vrot.slane %v2084, 4
        %v2087 = vshll.u32 %v1716, 16
        %v2089 = vrot.slane %v2087, 5
        %v2090 = vor.u32 %v2086, %v2089
        %v2091 = vrot.slane %v2090, 4
        %v2093 = vshll.u32 %v1717, 16
        %v2095 = vrot.slane %v2093, 5
        %v2096 = vsel %vm1794, %v2091, %v2095
        %v2097 = vshrl.u32 %v1717, 16
        %v2099 = vrot.slane %v2097, 4
        %v2100 = vor.u32 %v2099, %v2095
        %v2101 = vrot.slane %v2100, 4
        %v2103 = vshll.u32 %v1772, 16
        %v2105 = vrot.slane %v2103, 5
        %v2106 = vsel %vm1794, %v2101, %v2105
        %v2108 = vshrl.u32 %v1718, 16
        %v2110 = vrot.slane %v2108, 4
        %v2111 = vshll.u32 %v1718, 16
        %v2113 = vrot.slane %v2111, 5
        %v2114 = vor.u32 %v2110, %v2113
        %v2115 = vrot.slane %v2114, 4
        %v2117 = vshll.u32 %v1719, 16
        %v2119 = vrot.slane %v2117, 5
        %v2120 = vsel %vm1794, %v2115, %v2119
        %v2121 = vshrl.u32 %v1719, 16
        %v2123 = vrot.slane %v2121, 4
        %v2124 = vor.u32 %v2123, %v2119
        %v2125 = vrot.slane %v2124, 4
        %v2127 = vshll.u32 %v1773, 16
        %v2129 = vrot.slane %v2127, 5
        %v2130 = vsel %vm1794, %v2125, %v2129
        %v2132 = vshrl.u32 %v1720, 16
        %v2134 = vrot.slane %v2132, 4
        %v2135 = vshll.u32 %v1720, 16
        %v2137 = vrot.slane %v2135, 5
        %v2138 = vor.u32 %v2134, %v2137
        %v2139 = vrot.slane %v2138, 4
        %v2141 = vshll.u32 %v1721, 16
        %v2143 = vrot.slane %v2141, 5
        %v2144 = vsel %vm1794, %v2139, %v2143
        %v2145 = vshrl.u32 %v1721, 16
        %v2147 = vrot.slane %v2145, 4
        %v2148 = vor.u32 %v2147, %v2143
        %v2149 = vrot.slane %v2148, 4
        %v2151 = vshll.u32 %v1774, 16
        %v2153 = vrot.slane %v2151, 5
        %v2154 = vsel %vm1794, %v2149, %v2153
        %v2156 = vshrl.u32 %v1722, 16
        %v2158 = vrot.slane %v2156, 4
        %v2159 = vshll.u32 %v1722, 16
        %v2161 = vrot.slane %v2159, 5
        %v2162 = vor.u32 %v2158, %v2161
        %v2163 = vrot.slane %v2162, 4
        %v2165 = vshll.u32 %v1723, 16
        %v2167 = vrot.slane %v2165, 5
        %v2168 = vsel %vm1794, %v2163, %v2167
        %v2169 = vshrl.u32 %v1723, 16
        %v2171 = vrot.slane %v2169, 4
        %v2172 = vor.u32 %v2171, %v2167
        %v2173 = vrot.slane %v2172, 4
        %v2175 = vshll.u32 %v1775, 16
        %v2177 = vrot.slane %v2175, 5
        %v2178 = vsel %vm1794, %v2173, %v2177
        %v2180 = vshrl.u32 %v1724, 16
        %v2182 = vrot.slane %v2180, 4
        %v2183 = vshll.u32 %v1724, 16
        %v2185 = vrot.slane %v2183, 5
        %v2186 = vor.u32 %v2182, %v2185
        %v2187 = vrot.slane %v2186, 4
        %v2189 = vshll.u32 %v1725, 16
        %v2191 = vrot.slane %v2189, 5
        %v2192 = vsel %vm1794, %v2187, %v2191
        %v2193 = vshrl.u32 %v1725, 16
        %v2195 = vrot.slane %v2193, 4
        %v2196 = vor.u32 %v2195, %v2191
        %v2197 = vrot.slane %v2196, 4
        %v2199 = vshll.u32 %v1776, 16
        %v2201 = vrot.slane %v2199, 5
        %v2202 = vsel %vm1794, %v2197, %v2201
        %v2204 = vshrl.u32 %v1726, 16
        %v2206 = vrot.slane %v2204, 4
        %v2207 = vshll.u32 %v1726, 16
        %v2209 = vrot.slane %v2207, 5
        %v2210 = vor.u32 %v2206, %v2209
        %v2211 = vrot.slane %v2210, 4
        %v2213 = vshll.u32 %v1727, 16
        %v2215 = vrot.slane %v2213, 5
        %v2216 = vsel %vm1794, %v2211, %v2215
        %v2217 = vshrl.u32 %v1727, 16
        %v2219 = vrot.slane %v2217, 4
        %v2220 = vor.u32 %v2219, %v2215
        %v2221 = vrot.slane %v2220, 4
        %v2223 = vshll.u32 %v1777, 16
        %v2225 = vrot.slane %v2223, 5
        %v2226 = vsel %vm1794, %v2221, %v2225
        %v2228 = vshrl.u32 %v1728, 16
        %v2230 = vrot.slane %v2228, 4
        %v2231 = vshll.u32 %v1728, 16
        %v2233 = vrot.slane %v2231, 5
        %v2234 = vor.u32 %v2230, %v2233
        %v2235 = vrot.slane %v2234, 4
        %v2237 = vshll.u32 %v1729, 16
        %v2239 = vrot.slane %v2237, 5
        %v2240 = vsel %vm1794, %v2235, %v2239
        %v2241 = vshrl.u32 %v1729, 16
        %v2243 = vrot.slane %v2241, 4
        %v2244 = vor.u32 %v2243, %v2239
        %v2245 = vrot.slane %v2244, 4
        %v2247 = vshll.u32 %v1778, 16
        %v2249 = vrot.slane %v2247, 5
        %v2250 = vsel %vm1794, %v2245, %v2249
        %v2252 = vshrl.u32 %v1730, 16
        %v2254 = vrot.slane %v2252, 4
        %v2255 = vshll.u32 %v1730, 16
        %v2257 = vrot.slane %v2255, 5
        %v2258 = vor.u32 %v2254, %v2257
        %v2259 = vrot.slane %v2258, 4
        %v2261 = vshll.u32 %v1731, 16
        %v2263 = vrot.slane %v2261, 5
        %v2264 = vsel %vm1794, %v2259, %v2263
        %v2265 = vshrl.u32 %v1731, 16
        %v2267 = vrot.slane %v2265, 4
        %v2268 = vor.u32 %v2267, %v2263
        %v2269 = vrot.slane %v2268, 4
        %v2271 = vshll.u32 %v1779, 16
        %v2273 = vrot.slane %v2271, 5
        %v2274 = vsel %vm1794, %v2269, %v2273
        %v2276 = vshrl.u32 %v1732, 16
        %v2278 = vrot.slane %v2276, 4
        %v2279 = vshll.u32 %v1732, 16
        %v2281 = vrot.slane %v2279, 5
        %v2282 = vor.u32 %v2278, %v2281
        %v2283 = vrot.slane %v2282, 4
        %v2285 = vshll.u32 %v1733, 16
        %v2287 = vrot.slane %v2285, 5
        %v2288 = vsel %vm1794, %v2283, %v2287
        %v2289 = vshrl.u32 %v1733, 16
        %v2291 = vrot.slane %v2289, 4
        %v2292 = vor.u32 %v2291, %v2287
        %v2293 = vrot.slane %v2292, 4
        %v2295 = vshll.u32 %v1780, 16
        %v2297 = vrot.slane %v2295, 5
        %v2298 = vsel %vm1794, %v2293, %v2297
        %v2300 = vshrl.u32 %v1734, 16
        %v2302 = vrot.slane %v2300, 4
        %v2303 = vshll.u32 %v1734, 16
        %v2305 = vrot.slane %v2303, 5
        %v2306 = vor.u32 %v2302, %v2305
        %v2307 = vrot.slane %v2306, 4
        %v2309 = vshll.u32 %v1735, 16
        %v2311 = vrot.slane %v2309, 5
        %v2312 = vsel %vm1794, %v2307, %v2311
        %v2313 = vshrl.u32 %v1735, 16
        %v2315 = vrot.slane %v2313, 4
        %v2316 = vor.u32 %v2315, %v2311
        %v2317 = vrot.slane %v2316, 4
        %v2319 = vshll.u32 %v1781, 16
        %v2321 = vrot.slane %v2319, 5
        %v2322 = vsel %vm1794, %v2317, %v2321
        %v2324 = vshrl.u32 %v1736, 16
        %v2326 = vrot.slane %v2324, 4
        %v2327 = vshll.u32 %v1736, 16
        %v2329 = vrot.slane %v2327, 5
        %v2330 = vor.u32 %v2326, %v2329
        %v2331 = vrot.slane %v2330, 4
        %v2333 = vshll.u32 %v1737, 16
        %v2335 = vrot.slane %v2333, 5
        %v2336 = vsel %vm1794, %v2331, %v2335
        %v2337 = vshrl.u32 %v1737, 16
        %v2339 = vrot.slane %v2337, 4
        %v2340 = vor.u32 %v2339, %v2335
        %v2341 = vrot.slane %v2340, 4
        %v2343 = vshll.u32 %v1782, 16
        %v2345 = vrot.slane %v2343, 5
        %v2346 = vsel %vm1794, %v2341, %v2345
        %v2348 = vshrl.u32 %v1738, 16
        %v2350 = vrot.slane %v2348, 4
        %v2351 = vshll.u32 %v1738, 16
        %v2353 = vrot.slane %v2351, 5
        %v2354 = vor.u32 %v2350, %v2353
        %v2355 = vrot.slane %v2354, 4
        %v2357 = vshll.u32 %v1739, 16
        %v2359 = vrot.slane %v2357, 5
        %v2360 = vsel %vm1794, %v2355, %v2359
        %v2361 = vshrl.u32 %v1739, 16
        %v2363 = vrot.slane %v2361, 4
        %v2364 = vor.u32 %v2363, %v2359
        %v2365 = vrot.slane %v2364, 4
        %v2367 = vshll.u32 %v1783, 16
        %v2369 = vrot.slane %v2367, 5
        %v2370 = vsel %vm1794, %v2365, %v2369
        %v2372 = vshrl.u32 %v1740, 16
        %v2374 = vrot.slane %v2372, 4
        %v2375 = vshll.u32 %v1740, 16
        %v2377 = vrot.slane %v2375, 5
        %v2378 = vor.u32 %v2374, %v2377
        %v2379 = vrot.slane %v2378, 4
        %v2381 = vshll.u32 %v1741, 16
        %v2383 = vrot.slane %v2381, 5
        %v2384 = vsel %vm1794, %v2379, %v2383
        %v2385 = vshrl.u32 %v1741, 16
        %v2387 = vrot.slane %v2385, 4
        %v2388 = vor.u32 %v2387, %v2383
        %v2389 = vrot.slane %v2388, 4
        %v2391 = vshll.u32 %v1784, 16
        %v2393 = vrot.slane %v2391, 5
        %v2394 = vsel %vm1794, %v2389, %v2393
        %v2396 = vshrl.u32 %v1742, 16
        %v2398 = vrot.slane %v2396, 4
        %v2399 = vshll.u32 %v1742, 16
        %v2401 = vrot.slane %v2399, 5
        %v2402 = vor.u32 %v2398, %v2401
        %v2403 = vrot.slane %v2402, 4
        %v2405 = vshll.u32 %v1743, 16
        %v2407 = vrot.slane %v2405, 5
        %v2408 = vsel %vm1794, %v2403, %v2407
        %v2409 = vshrl.u32 %v1743, 16
        %v2411 = vrot.slane %v2409, 4
        %v2412 = vor.u32 %v2411, %v2407
        %v2413 = vrot.slane %v2412, 4
        %v2415 = vshll.u32 %v1785, 16
        %v2417 = vrot.slane %v2415, 5
        %v2418 = vsel %vm1794, %v2413, %v2417
        %v2420 = vshrl.u32 %v1744, 16
        %v2422 = vrot.slane %v2420, 4
        %v2423 = vshll.u32 %v1744, 16
        %v2425 = vrot.slane %v2423, 5
        %v2426 = vor.u32 %v2422, %v2425
        %v2427 = vrot.slane %v2426, 4
        %v2429 = vshll.u32 %v1745, 16
        %v2431 = vrot.slane %v2429, 5
        %v2432 = vsel %vm1794, %v2427, %v2431
        %v2433 = vshrl.u32 %v1745, 16
        %v2435 = vrot.slane %v2433, 4
        %v2436 = vor.u32 %v2435, %v2431
        %v2437 = vrot.slane %v2436, 4
        %v2439 = vshll.u32 %v1786, 16
        %v2441 = vrot.slane %v2439, 5
        %v2442 = vsel %vm1794, %v2437, %v2441
        %v2444 = vshrl.u32 %v1746, 16
        %v2446 = vrot.slane %v2444, 4
        %v2447 = vshll.u32 %v1746, 16
        %v2449 = vrot.slane %v2447, 5
        %v2450 = vor.u32 %v2446, %v2449
        %v2451 = vrot.slane %v2450, 4
        %v2453 = vshll.u32 %v1747, 16
        %v2455 = vrot.slane %v2453, 5
        %v2456 = vsel %vm1794, %v2451, %v2455
        %v2457 = vshrl.u32 %v1747, 16
        %v2459 = vrot.slane %v2457, 4
        %v2460 = vor.u32 %v2459, %v2455
        %v2461 = vrot.slane %v2460, 4
        %v2463 = vshll.u32 %v1787, 16
        %v2465 = vrot.slane %v2463, 5
        %v2466 = vsel %vm1794, %v2461, %v2465
        %v2468 = vshrl.u32 %v1748, 16
        %v2470 = vrot.slane %v2468, 4
        %v2471 = vshll.u32 %v1748, 16
        %v2473 = vrot.slane %v2471, 5
        %v2474 = vor.u32 %v2470, %v2473
        %v2475 = vrot.slane %v2474, 4
        %v2477 = vshll.u32 %v1749, 16
        %v2479 = vrot.slane %v2477, 5
        %v2480 = vsel %vm1794, %v2475, %v2479
        %v2481 = vshrl.u32 %v1749, 16
        %v2483 = vrot.slane %v2481, 4
        %v2484 = vor.u32 %v2483, %v2479
        %v2485 = vrot.slane %v2484, 4
        %v2487 = vshll.u32 %v1788, 16
        %v2489 = vrot.slane %v2487, 5
        %v2490 = vsel %vm1794, %v2485, %v2489
        %v2492 = vshrl.u32 %v1750, 16
        %v2494 = vrot.slane %v2492, 4
        %v2495 = vshll.u32 %v1750, 16
        %v2497 = vrot.slane %v2495, 5
        %v2498 = vor.u32 %v2494, %v2497
        %v2499 = vrot.slane %v2498, 4
        %v2501 = vshll.u32 %v1751, 16
        %v2503 = vrot.slane %v2501, 5
        %v2504 = vsel %vm1794, %v2499, %v2503
        %v2505 = vshrl.u32 %v1751, 16
        %v2507 = vrot.slane %v2505, 4
        %v2508 = vor.u32 %v2507, %v2503
        %v2509 = vrot.slane %v2508, 4
        %v2511 = vshll.u32 %v1789, 16
        %v2513 = vrot.slane %v2511, 5
        %v2514 = vsel %vm1794, %v2509, %v2513
        %v2516 = vshrl.u32 %v1752, 16
        %v2518 = vrot.slane %v2516, 4
        %v2519 = vshll.u32 %v1752, 16
        %v2521 = vrot.slane %v2519, 5
        %v2522 = vor.u32 %v2518, %v2521
        %v2523 = vrot.slane %v2522, 4
        %v2525 = vshll.u32 %v1753, 16
        %v2527 = vrot.slane %v2525, 5
        %v2528 = vsel %vm1794, %v2523, %v2527
        %v2529 = vshrl.u32 %v1753, 16
        %v2531 = vrot.slane %v2529, 4
        %v2532 = vor.u32 %v2531, %v2527
        %v2533 = vrot.slane %v2532, 4
        %v2535 = vshll.u32 %v1790, 16
        %v2537 = vrot.slane %v2535, 5
        %v2538 = vsel %vm1794, %v2533, %v2537
        %v2540 = vshrl.u32 %v1754, 16
        %v2542 = vrot.slane %v2540, 4
        %v2543 = vshll.u32 %v1754, 16
        %v2545 = vrot.slane %v2543, 5
        %v2546 = vor.u32 %v2542, %v2545
        %v2547 = vrot.slane %v2546, 4
        %v2549 = vshll.u32 %v1755, 16
        %v2551 = vrot.slane %v2549, 5
        %v2552 = vsel %vm1794, %v2547, %v2551
        %v2553 = vshrl.u32 %v1755, 16
        %v2555 = vrot.slane %v2553, 4
        %v2556 = vor.u32 %v2555, %v2551
        %v2557 = vrot.slane %v2556, 4
        %v2559 = vshll.u32 %v1791, 16
        %v2561 = vrot.slane %v2559, 5
        %v2562 = vsel %vm1794, %v2557, %v2561
        %s2563 = scalar_lea.vmem [#allocation6], 16
        %v2564 = vld [vmem:[%s2563] sm:$0xf]
        %v2565 = vld [vmem:[%s2563 + $0x4] sm:$0xf]
        %v2566 = vld [vmem:[%s2563 + $0x8] sm:$0xf]
        %v2567 = vld [vmem:[%s2563 + $0xc] sm:$0xf]
        %v2568 = vunpack.c.l.b16 %v1808
        %v2569 = vunpack.c.l.b16 %v1818
        %v2570 = vunpack.c.l.b16 %v1832
        %v2571 = vunpack.c.l.b16 %v1842
        %v2572 = vunpack.c.l.b16 %v1856
        %v2573 = vunpack.c.l.b16 %v1866
        %v2574 = vunpack.c.l.b16 %v1880
        %v2575 = vunpack.c.l.b16 %v1890
        %v2576 = vunpack.c.l.b16 %v1904
        %v2577 = vunpack.c.l.b16 %v1914
        %v2578 = vunpack.c.l.b16 %v1928
        %v2579 = vunpack.c.l.b16 %v1938
        %v2580 = vunpack.c.l.b16 %v1952
        %v2581 = vunpack.c.l.b16 %v1962
        %v2582 = vunpack.c.l.b16 %v1976
        %v2583 = vunpack.c.l.b16 %v1986
        %v2584 = vunpack.c.l.b16 %v2000
        %v2585 = vunpack.c.l.b16 %v2010
        %v2586 = vunpack.c.l.b16 %v2024
        %v2587 = vunpack.c.l.b16 %v2034
        %v2588 = vunpack.c.l.b16 %v2048
        %v2589 = vunpack.c.l.b16 %v2058
        %v2590 = vunpack.c.l.b16 %v2072
        %v2591 = vunpack.c.l.b16 %v2082
        %v2592 = vunpack.c.l.b16 %v2096
        %v2593 = vunpack.c.l.b16 %v2106
        %v2594 = vunpack.c.l.b16 %v2120
        %v2595 = vunpack.c.l.b16 %v2130
        %v2596 = vunpack.c.l.b16 %v2144
        %v2597 = vunpack.c.l.b16 %v2154
        %v2598 = vunpack.c.l.b16 %v2168
        %v2599 = vunpack.c.l.b16 %v2178
        %v2600 = vunpack.c.l.b16 %v2192
        %v2601 = vunpack.c.l.b16 %v2202
        %v2602 = vunpack.c.l.b16 %v2216
        %v2603 = vunpack.c.l.b16 %v2226
        %v2604 = vunpack.c.l.b16 %v2240
        %v2605 = vunpack.c.l.b16 %v2250
        %v2606 = vunpack.c.l.b16 %v2264
        %v2607 = vunpack.c.l.b16 %v2274
        %v2608 = vunpack.c.l.b16 %v2288
        %v2609 = vunpack.c.l.b16 %v2298
        %v2610 = vunpack.c.l.b16 %v2312
        %v2611 = vunpack.c.l.b16 %v2322
        %v2612 = vunpack.c.l.b16 %v2336
        %v2613 = vunpack.c.l.b16 %v2346
        %v2614 = vunpack.c.l.b16 %v2360
        %v2615 = vunpack.c.l.b16 %v2370
        %v2616 = vunpack.c.l.b16 %v2384
        %v2617 = vunpack.c.l.b16 %v2394
        %v2618 = vunpack.c.l.b16 %v2408
        %v2619 = vunpack.c.l.b16 %v2418
        %v2620 = vunpack.c.l.b16 %v2432
        %v2621 = vunpack.c.l.b16 %v2442
        %v2622 = vunpack.c.l.b16 %v2456
        %v2623 = vunpack.c.l.b16 %v2466
        %v2624 = vunpack.c.l.b16 %v2480
        %v2625 = vunpack.c.l.b16 %v2490
        %v2626 = vunpack.c.l.b16 %v2504
        %v2627 = vunpack.c.l.b16 %v2514
        %v2628 = vunpack.c.l.b16 %v2528
        %v2629 = vunpack.c.l.b16 %v2538
        %v2630 = vunpack.c.l.b16 %v2552
        %v2631 = vunpack.c.l.b16 %v2562
        %v2632 = vpack.c.b16 %v2569, %v2568
        %v2633 = vpack.c.b16 %v2571, %v2570
        %v2634 = vpack.c.b16 %v2573, %v2572
        %v2635 = vpack.c.b16 %v2575, %v2574
        %v2636 = vpack.c.b16 %v2577, %v2576
        %v2637 = vpack.c.b16 %v2579, %v2578
        %v2638 = vpack.c.b16 %v2581, %v2580
        %v2639 = vpack.c.b16 %v2583, %v2582
        %v2640 = vpack.c.b16 %v2585, %v2584
        %v2641 = vpack.c.b16 %v2587, %v2586
        %v2642 = vpack.c.b16 %v2589, %v2588
        %v2643 = vpack.c.b16 %v2591, %v2590
        %v2644 = vpack.c.b16 %v2593, %v2592
        %v2645 = vpack.c.b16 %v2595, %v2594
        %v2646 = vpack.c.b16 %v2597, %v2596
        %v2647 = vpack.c.b16 %v2599, %v2598
        %v2648 = vpack.c.b16 %v2601, %v2600
        %v2649 = vpack.c.b16 %v2603, %v2602
        %v2650 = vpack.c.b16 %v2605, %v2604
        %v2651 = vpack.c.b16 %v2607, %v2606
        %v2652 = vpack.c.b16 %v2609, %v2608
        %v2653 = vpack.c.b16 %v2611, %v2610
        %v2654 = vpack.c.b16 %v2613, %v2612
        %v2655 = vpack.c.b16 %v2615, %v2614
        %v2656 = vpack.c.b16 %v2617, %v2616
        %v2657 = vpack.c.b16 %v2619, %v2618
        %v2658 = vpack.c.b16 %v2621, %v2620
        %v2659 = vpack.c.b16 %v2623, %v2622
        %v2660 = vpack.c.b16 %v2625, %v2624
        %v2661 = vpack.c.b16 %v2627, %v2626
        %v2662 = vpack.c.b16 %v2629, %v2628
        %v2663 = vpack.c.b16 %v2631, %v2630
        %v2668 = vunpack.c.l.b16 %v2564
        %v2669 = vunpack.c.l.b16 %v2565
        %v2670 = vunpack.c.l.b16 %v2566
        %v2671 = vunpack.c.l.b16 %v2567
        %v2672 = vpack.c.b16 %v2669, %v2668
        %v2673 = vpack.c.b16 %v2671, %v2670
        %vm2676 = vcmask 261120
        %v2678 = vsel %vm2676, %v2632, 0
        %v2681 = vsel %vm2676, %v2633, 0
        %v2684 = vsel %vm2676, %v2634, 0
        %v2687 = vsel %vm2676, %v2635, 0
        %v2690 = vsel %vm2676, %v2636, 0
        %v2693 = vsel %vm2676, %v2637, 0
        %v2696 = vsel %vm2676, %v2638, 0
        %v2699 = vsel %vm2676, %v2639, 0
        %v2702 = vsel %vm2676, %v2640, 0
        %v2705 = vsel %vm2676, %v2641, 0
        %v2708 = vsel %vm2676, %v2642, 0
        %v2711 = vsel %vm2676, %v2643, 0
        %v2714 = vsel %vm2676, %v2644, 0
        %v2717 = vsel %vm2676, %v2645, 0
        %v2720 = vsel %vm2676, %v2646, 0
        %v2723 = vsel %vm2676, %v2647, 0
        %v2726 = vsel %vm2676, %v2648, 0
        %v2729 = vsel %vm2676, %v2649, 0
        %v2732 = vsel %vm2676, %v2650, 0
        %v2735 = vsel %vm2676, %v2651, 0
        %v2738 = vsel %vm2676, %v2652, 0
        %v2741 = vsel %vm2676, %v2653, 0
        %v2744 = vsel %vm2676, %v2654, 0
        %v2747 = vsel %vm2676, %v2655, 0
        %v2750 = vsel %vm2676, %v2656, 0
        %v2753 = vsel %vm2676, %v2657, 0
        %v2756 = vsel %vm2676, %v2658, 0
        %v2759 = vsel %vm2676, %v2659, 0
        %v2762 = vsel %vm2676, %v2660, 0
        %v2765 = vsel %vm2676, %v2661, 0
        %v2768 = vsel %vm2676, %v2662, 0
        %v2771 = vsel %vm2676, %v2663, 0
        %2773 = vmatprep.subr.bf16.mxu0 0
        %2774 = vmatpush1.bf16.msra.mxu0 0
        %2775 = vmatprep.subr.bf16.mxu0 0
        %2776 = vmatpush1.bf16.msra.mxu0 0
        %2777 = vmatprep.subr.bf16.mxu0 0
        %2778 = vmatpush1.bf16.msra.mxu0 0
        %2779 = vmatprep.subr.bf16.mxu0 0
        %2780 = vmatpush1.bf16.msra.mxu0 0
        %2781 = vmatprep.subr.bf16.mxu0 0
        %2782 = vmatpush1.bf16.msra.mxu0 0
        %2783 = vmatprep.subr.bf16.mxu0 0
        %2784 = vmatpush1.bf16.msra.mxu0 0
        %2785 = vmatprep.subr.bf16.mxu0 0
        %2786 = vmatpush1.bf16.msra.mxu0 %v2673
        %2787 = vmatprep.subr.bf16.mxu0 0
        %2788 = vmatpush1.bf16.msra.mxu0 %v2672
        %2789 = vmatprep.subr.bf16.mxu0 0
        %2790 = vmatpush2.bf16.msra.mxu0 0
        %2791 = vmatprep.subr.bf16.mxu0 0
        %2792 = vmatpush2.bf16.msra.mxu0 0
        %2793 = vmatprep.subr.bf16.mxu0 0
        %2794 = vmatpush2.bf16.msra.mxu0 0
        %2795 = vmatprep.subr.bf16.mxu0 0
        %2796 = vmatpush2.bf16.msra.mxu0 0
        %2797 = vmatprep.subr.bf16.mxu0 0
        %2798 = vmatpush2.bf16.msra.mxu0 0
        %2799 = vmatprep.subr.bf16.mxu0 0
        %2800 = vmatpush2.bf16.msra.mxu0 0
        %2801 = vmatprep.subr.bf16.mxu0 0
        %2802 = vmatpush2.bf16.msra.mxu0 0
        %2803 = vmatprep.subr.bf16.mxu0 0
        %2804 = vmatpush2.bf16.msra.mxu0 0
        %2805 = vmatprep.mubr.bf16.mxu0 0
        %2806 = vmatmul.mubr.bf16.gmra.mxu0 %v2678
        %v2807 = vpop.f32.mrf.mxu0
        %v2808 = vadd.f32 0.0, %v2807
        %v2809 = vpop.f32.mrf.mxu0
        %v2810 = vpop.f32.mrf.mxu0
        %v2811 = vadd.f32 0.0, %v2810
        %v2812 = vpop.f32.mrf.mxu0
        %2813 = vmatprep.mubr.bf16.mxu0 0
        %2814 = vmatmul.mubr.bf16.gmra.mxu0 %v2681
        %v2815 = vpop.f32.mrf.mxu0
        %v2816 = vadd.f32 0.0, %v2815
        %v2817 = vpop.f32.mrf.mxu0
        %v2818 = vpop.f32.mrf.mxu0
        %v2819 = vadd.f32 0.0, %v2818
        %v2820 = vpop.f32.mrf.mxu0
        %2821 = vmatprep.mubr.bf16.mxu0 0
        %2822 = vmatmul.mubr.bf16.gmra.mxu0 %v2684
        %v2823 = vpop.f32.mrf.mxu0
        %v2824 = vadd.f32 0.0, %v2823
        %v2825 = vpop.f32.mrf.mxu0
        %v2826 = vpop.f32.mrf.mxu0
        %v2827 = vadd.f32 0.0, %v2826
        %v2828 = vpop.f32.mrf.mxu0
        %2829 = vmatprep.mubr.bf16.mxu0 0
        %2830 = vmatmul.mubr.bf16.gmra.mxu0 %v2687
        %v2831 = vpop.f32.mrf.mxu0
        %v2832 = vadd.f32 0.0, %v2831
        %v2833 = vpop.f32.mrf.mxu0
        %v2834 = vpop.f32.mrf.mxu0
        %v2835 = vadd.f32 0.0, %v2834
        %v2836 = vpop.f32.mrf.mxu0
        %2837 = vmatprep.mubr.bf16.mxu0 0
        %2838 = vmatmul.mubr.bf16.gmra.mxu0 %v2690
        %v2839 = vpop.f32.mrf.mxu0
        %v2840 = vadd.f32 0.0, %v2839
        %v2841 = vpop.f32.mrf.mxu0
        %v2842 = vpop.f32.mrf.mxu0
        %v2843 = vadd.f32 0.0, %v2842
        %v2844 = vpop.f32.mrf.mxu0
        %2845 = vmatprep.mubr.bf16.mxu0 0
        %2846 = vmatmul.mubr.bf16.gmra.mxu0 %v2693
        %v2847 = vpop.f32.mrf.mxu0
        %v2848 = vadd.f32 0.0, %v2847
        %v2849 = vpop.f32.mrf.mxu0
        %v2850 = vpop.f32.mrf.mxu0
        %v2851 = vadd.f32 0.0, %v2850
        %v2852 = vpop.f32.mrf.mxu0
        %2853 = vmatprep.mubr.bf16.mxu0 0
        %2854 = vmatmul.mubr.bf16.gmra.mxu0 %v2696
        %v2855 = vpop.f32.mrf.mxu0
        %v2856 = vadd.f32 0.0, %v2855
        %v2857 = vpop.f32.mrf.mxu0
        %v2858 = vpop.f32.mrf.mxu0
        %v2859 = vadd.f32 0.0, %v2858
        %v2860 = vpop.f32.mrf.mxu0
        %2861 = vmatprep.mubr.bf16.mxu0 0
        %2862 = vmatmul.mubr.bf16.gmra.mxu0 %v2699
        %v2863 = vpop.f32.mrf.mxu0
        %v2864 = vadd.f32 0.0, %v2863
        %v2865 = vpop.f32.mrf.mxu0
        %v2866 = vpop.f32.mrf.mxu0
        %v2867 = vadd.f32 0.0, %v2866
        %v2868 = vpop.f32.mrf.mxu0
        %2869 = vmatprep.mubr.bf16.mxu0 0
        %2870 = vmatmul.mubr.bf16.gmra.mxu0 %v2702
        %v2871 = vpop.f32.mrf.mxu0
        %v2872 = vadd.f32 0.0, %v2871
        %v2873 = vpop.f32.mrf.mxu0
        %v2874 = vpop.f32.mrf.mxu0
        %v2875 = vadd.f32 0.0, %v2874
        %v2876 = vpop.f32.mrf.mxu0
        %2877 = vmatprep.mubr.bf16.mxu0 0
        %2878 = vmatmul.mubr.bf16.gmra.mxu0 %v2705
        %v2879 = vpop.f32.mrf.mxu0
        %v2880 = vadd.f32 0.0, %v2879
        %v2881 = vpop.f32.mrf.mxu0
        %v2882 = vpop.f32.mrf.mxu0
        %v2883 = vadd.f32 0.0, %v2882
        %v2884 = vpop.f32.mrf.mxu0
        %2885 = vmatprep.mubr.bf16.mxu0 0
        %2886 = vmatmul.mubr.bf16.gmra.mxu0 %v2708
        %v2887 = vpop.f32.mrf.mxu0
        %v2888 = vadd.f32 0.0, %v2887
        %v2889 = vpop.f32.mrf.mxu0
        %v2890 = vpop.f32.mrf.mxu0
        %v2891 = vadd.f32 0.0, %v2890
        %v2892 = vpop.f32.mrf.mxu0
        %2893 = vmatprep.mubr.bf16.mxu0 0
        %2894 = vmatmul.mubr.bf16.gmra.mxu0 %v2711
        %v2895 = vpop.f32.mrf.mxu0
        %v2896 = vadd.f32 0.0, %v2895
        %v2897 = vpop.f32.mrf.mxu0
        %v2898 = vpop.f32.mrf.mxu0
        %v2899 = vadd.f32 0.0, %v2898
        %v2900 = vpop.f32.mrf.mxu0
        %2901 = vmatprep.mubr.bf16.mxu0 0
        %2902 = vmatmul.mubr.bf16.gmra.mxu0 %v2714
        %v2903 = vpop.f32.mrf.mxu0
        %v2904 = vadd.f32 0.0, %v2903
        %v2905 = vpop.f32.mrf.mxu0
        %v2906 = vpop.f32.mrf.mxu0
        %v2907 = vadd.f32 0.0, %v2906
        %v2908 = vpop.f32.mrf.mxu0
        %2909 = vmatprep.mubr.bf16.mxu0 0
        %2910 = vmatmul.mubr.bf16.gmra.mxu0 %v2717
        %v2911 = vpop.f32.mrf.mxu0
        %v2912 = vadd.f32 0.0, %v2911
        %v2913 = vpop.f32.mrf.mxu0
        %v2914 = vpop.f32.mrf.mxu0
        %v2915 = vadd.f32 0.0, %v2914
        %v2916 = vpop.f32.mrf.mxu0
        %2917 = vmatprep.mubr.bf16.mxu0 0
        %2918 = vmatmul.mubr.bf16.gmra.mxu0 %v2720
        %v2919 = vpop.f32.mrf.mxu0
        %v2920 = vadd.f32 0.0, %v2919
        %v2921 = vpop.f32.mrf.mxu0
        %v2922 = vpop.f32.mrf.mxu0
        %v2923 = vadd.f32 0.0, %v2922
        %v2924 = vpop.f32.mrf.mxu0
        %2925 = vmatprep.mubr.bf16.mxu0 0
        %2926 = vmatmul.mubr.bf16.gmra.mxu0 %v2723
        %v2927 = vpop.f32.mrf.mxu0
        %v2928 = vadd.f32 0.0, %v2927
        %v2929 = vpop.f32.mrf.mxu0
        %v2930 = vpop.f32.mrf.mxu0
        %v2931 = vadd.f32 0.0, %v2930
        %v2932 = vpop.f32.mrf.mxu0
        %2933 = vmatprep.mubr.bf16.mxu0 0
        %2934 = vmatmul.mubr.bf16.gmra.mxu0 %v2726
        %v2935 = vpop.f32.mrf.mxu0
        %v2936 = vadd.f32 0.0, %v2935
        %v2937 = vpop.f32.mrf.mxu0
        %v2938 = vpop.f32.mrf.mxu0
        %v2939 = vadd.f32 0.0, %v2938
        %v2940 = vpop.f32.mrf.mxu0
        %2941 = vmatprep.mubr.bf16.mxu0 0
        %2942 = vmatmul.mubr.bf16.gmra.mxu0 %v2729
        %v2943 = vpop.f32.mrf.mxu0
        %v2944 = vadd.f32 0.0, %v2943
        %v2945 = vpop.f32.mrf.mxu0
        %v2946 = vpop.f32.mrf.mxu0
        %v2947 = vadd.f32 0.0, %v2946
        %v2948 = vpop.f32.mrf.mxu0
        %2949 = vmatprep.mubr.bf16.mxu0 0
        %2950 = vmatmul.mubr.bf16.gmra.mxu0 %v2732
        %v2951 = vpop.f32.mrf.mxu0
        %v2952 = vadd.f32 0.0, %v2951
        %v2953 = vpop.f32.mrf.mxu0
        %v2954 = vpop.f32.mrf.mxu0
        %v2955 = vadd.f32 0.0, %v2954
        %v2956 = vpop.f32.mrf.mxu0
        %2957 = vmatprep.mubr.bf16.mxu0 0
        %2958 = vmatmul.mubr.bf16.gmra.mxu0 %v2735
        %v2959 = vpop.f32.mrf.mxu0
        %v2960 = vadd.f32 0.0, %v2959
        %v2961 = vpop.f32.mrf.mxu0
        %v2962 = vpop.f32.mrf.mxu0
        %v2963 = vadd.f32 0.0, %v2962
        %v2964 = vpop.f32.mrf.mxu0
        %2965 = vmatprep.mubr.bf16.mxu0 0
        %2966 = vmatmul.mubr.bf16.gmra.mxu0 %v2738
        %v2967 = vpop.f32.mrf.mxu0
        %v2968 = vadd.f32 0.0, %v2967
        %v2969 = vpop.f32.mrf.mxu0
        %v2970 = vpop.f32.mrf.mxu0
        %v2971 = vadd.f32 0.0, %v2970
        %v2972 = vpop.f32.mrf.mxu0
        %2973 = vmatprep.mubr.bf16.mxu0 0
        %2974 = vmatmul.mubr.bf16.gmra.mxu0 %v2741
        %v2975 = vpop.f32.mrf.mxu0
        %v2976 = vadd.f32 0.0, %v2975
        %v2977 = vpop.f32.mrf.mxu0
        %v2978 = vpop.f32.mrf.mxu0
        %v2979 = vadd.f32 0.0, %v2978
        %v2980 = vpop.f32.mrf.mxu0
        %2981 = vmatprep.mubr.bf16.mxu0 0
        %2982 = vmatmul.mubr.bf16.gmra.mxu0 %v2744
        %v2983 = vpop.f32.mrf.mxu0
        %v2984 = vadd.f32 0.0, %v2983
        %v2985 = vpop.f32.mrf.mxu0
        %v2986 = vpop.f32.mrf.mxu0
        %v2987 = vadd.f32 0.0, %v2986
        %v2988 = vpop.f32.mrf.mxu0
        %2989 = vmatprep.mubr.bf16.mxu0 0
        %2990 = vmatmul.mubr.bf16.gmra.mxu0 %v2747
        %v2991 = vpop.f32.mrf.mxu0
        %v2992 = vadd.f32 0.0, %v2991
        %v2993 = vpop.f32.mrf.mxu0
        %v2994 = vpop.f32.mrf.mxu0
        %v2995 = vadd.f32 0.0, %v2994
        %v2996 = vpop.f32.mrf.mxu0
        %2997 = vmatprep.mubr.bf16.mxu0 0
        %2998 = vmatmul.mubr.bf16.gmra.mxu0 %v2750
        %v2999 = vpop.f32.mrf.mxu0
        %v3000 = vadd.f32 0.0, %v2999
        %v3001 = vpop.f32.mrf.mxu0
        %v3002 = vpop.f32.mrf.mxu0
        %v3003 = vadd.f32 0.0, %v3002
        %v3004 = vpop.f32.mrf.mxu0
        %3005 = vmatprep.mubr.bf16.mxu0 0
        %3006 = vmatmul.mubr.bf16.gmra.mxu0 %v2753
        %v3007 = vpop.f32.mrf.mxu0
        %v3008 = vadd.f32 0.0, %v3007
        %v3009 = vpop.f32.mrf.mxu0
        %v3010 = vpop.f32.mrf.mxu0
        %v3011 = vadd.f32 0.0, %v3010
        %v3012 = vpop.f32.mrf.mxu0
        %3013 = vmatprep.mubr.bf16.mxu0 0
        %3014 = vmatmul.mubr.bf16.gmra.mxu0 %v2756
        %v3015 = vpop.f32.mrf.mxu0
        %v3016 = vadd.f32 0.0, %v3015
        %v3017 = vpop.f32.mrf.mxu0
        %v3018 = vpop.f32.mrf.mxu0
        %v3019 = vadd.f32 0.0, %v3018
        %v3020 = vpop.f32.mrf.mxu0
        %3021 = vmatprep.mubr.bf16.mxu0 0
        %3022 = vmatmul.mubr.bf16.gmra.mxu0 %v2759
        %v3023 = vpop.f32.mrf.mxu0
        %v3024 = vadd.f32 0.0, %v3023
        %v3025 = vpop.f32.mrf.mxu0
        %v3026 = vpop.f32.mrf.mxu0
        %v3027 = vadd.f32 0.0, %v3026
        %v3028 = vpop.f32.mrf.mxu0
        %3029 = vmatprep.mubr.bf16.mxu0 0
        %3030 = vmatmul.mubr.bf16.gmra.mxu0 %v2762
        %v3031 = vpop.f32.mrf.mxu0
        %v3032 = vadd.f32 0.0, %v3031
        %v3033 = vpop.f32.mrf.mxu0
        %v3034 = vpop.f32.mrf.mxu0
        %v3035 = vadd.f32 0.0, %v3034
        %v3036 = vpop.f32.mrf.mxu0
        %3037 = vmatprep.mubr.bf16.mxu0 0
        %3038 = vmatmul.mubr.bf16.gmra.mxu0 %v2765
        %v3039 = vpop.f32.mrf.mxu0
        %v3040 = vadd.f32 0.0, %v3039
        %v3041 = vpop.f32.mrf.mxu0
        %v3042 = vpop.f32.mrf.mxu0
        %v3043 = vadd.f32 0.0, %v3042
        %v3044 = vpop.f32.mrf.mxu0
        %3045 = vmatprep.mubr.bf16.mxu0 0
        %3046 = vmatmul.mubr.bf16.gmra.mxu0 %v2768
        %v3047 = vpop.f32.mrf.mxu0
        %v3048 = vadd.f32 0.0, %v3047
        %v3049 = vpop.f32.mrf.mxu0
        %v3050 = vpop.f32.mrf.mxu0
        %v3051 = vadd.f32 0.0, %v3050
        %v3052 = vpop.f32.mrf.mxu0
        %3053 = vmatprep.mubr.bf16.mxu0 0
        %3054 = vmatmul.mubr.bf16.gmra.mxu0 %v2771
        %v3055 = vpop.f32.mrf.mxu0
        %v3056 = vadd.f32 0.0, %v3055
        %v3057 = vpop.f32.mrf.mxu0
        %v3058 = vpop.f32.mrf.mxu0
        %v3059 = vadd.f32 0.0, %v3058
        %v3060 = vpop.f32.mrf.mxu0
        %3061 = vdwg.mxu0
        %v3126 = vunpack.c.l.b16 %v1692
        %v3127 = vunpack.c.l.b16 %v1693
        %v3128 = vunpack.c.l.b16 %v1694
        %v3129 = vunpack.c.l.b16 %v1695
        %v3130 = vunpack.c.l.b16 %v1696
        %v3131 = vunpack.c.l.b16 %v1697
        %v3132 = vunpack.c.l.b16 %v1698
        %v3133 = vunpack.c.l.b16 %v1699
        %v3134 = vunpack.c.l.b16 %v1700
        %v3135 = vunpack.c.l.b16 %v1701
        %v3136 = vunpack.c.l.b16 %v1702
        %v3137 = vunpack.c.l.b16 %v1703
        %v3138 = vunpack.c.l.b16 %v1704
        %v3139 = vunpack.c.l.b16 %v1705
        %v3140 = vunpack.c.l.b16 %v1706
        %v3141 = vunpack.c.l.b16 %v1707
        %v3142 = vunpack.c.l.b16 %v1708
        %v3143 = vunpack.c.l.b16 %v1709
        %v3144 = vunpack.c.l.b16 %v1710
        %v3145 = vunpack.c.l.b16 %v1711
        %v3146 = vunpack.c.l.b16 %v1712
        %v3147 = vunpack.c.l.b16 %v1713
        %v3148 = vunpack.c.l.b16 %v1714
        %v3149 = vunpack.c.l.b16 %v1715
        %v3150 = vunpack.c.l.b16 %v1716
        %v3151 = vunpack.c.l.b16 %v1717
        %v3152 = vunpack.c.l.b16 %v1718
        %v3153 = vunpack.c.l.b16 %v1719
        %v3154 = vunpack.c.l.b16 %v1720
        %v3155 = vunpack.c.l.b16 %v1721
        %v3156 = vunpack.c.l.b16 %v1722
        %v3157 = vunpack.c.l.b16 %v1723
        %v3158 = vunpack.c.l.b16 %v1724
        %v3159 = vunpack.c.l.b16 %v1725
        %v3160 = vunpack.c.l.b16 %v1726
        %v3161 = vunpack.c.l.b16 %v1727
        %v3162 = vunpack.c.l.b16 %v1728
        %v3163 = vunpack.c.l.b16 %v1729
        %v3164 = vunpack.c.l.b16 %v1730
        %v3165 = vunpack.c.l.b16 %v1731
        %v3166 = vunpack.c.l.b16 %v1732
        %v3167 = vunpack.c.l.b16 %v1733
        %v3168 = vunpack.c.l.b16 %v1734
        %v3169 = vunpack.c.l.b16 %v1735
        %v3170 = vunpack.c.l.b16 %v1736
        %v3171 = vunpack.c.l.b16 %v1737
        %v3172 = vunpack.c.l.b16 %v1738
        %v3173 = vunpack.c.l.b16 %v1739
        %v3174 = vunpack.c.l.b16 %v1740
        %v3175 = vunpack.c.l.b16 %v1741
        %v3176 = vunpack.c.l.b16 %v1742
        %v3177 = vunpack.c.l.b16 %v1743
        %v3178 = vunpack.c.l.b16 %v1744
        %v3179 = vunpack.c.l.b16 %v1745
        %v3180 = vunpack.c.l.b16 %v1746
        %v3181 = vunpack.c.l.b16 %v1747
        %v3182 = vunpack.c.l.b16 %v1748
        %v3183 = vunpack.c.l.b16 %v1749
        %v3184 = vunpack.c.l.b16 %v1750
        %v3185 = vunpack.c.l.b16 %v1751
        %v3186 = vunpack.c.l.b16 %v1752
        %v3187 = vunpack.c.l.b16 %v1753
        %v3188 = vunpack.c.l.b16 %v1754
        %v3189 = vunpack.c.l.b16 %v1755
        %v3190 = vpack.c.b16 %v3127, %v3126
        %v3191 = vpack.c.b16 %v3129, %v3128
        %v3192 = vpack.c.b16 %v3131, %v3130
        %v3193 = vpack.c.b16 %v3133, %v3132
        %v3194 = vpack.c.b16 %v3135, %v3134
        %v3195 = vpack.c.b16 %v3137, %v3136
        %v3196 = vpack.c.b16 %v3139, %v3138
        %v3197 = vpack.c.b16 %v3141, %v3140
        %v3198 = vpack.c.b16 %v3143, %v3142
        %v3199 = vpack.c.b16 %v3145, %v3144
        %v3200 = vpack.c.b16 %v3147, %v3146
        %v3201 = vpack.c.b16 %v3149, %v3148
        %v3202 = vpack.c.b16 %v3151, %v3150
        %v3203 = vpack.c.b16 %v3153, %v3152
        %v3204 = vpack.c.b16 %v3155, %v3154
        %v3205 = vpack.c.b16 %v3157, %v3156
        %v3206 = vpack.c.b16 %v3159, %v3158
        %v3207 = vpack.c.b16 %v3161, %v3160
        %v3208 = vpack.c.b16 %v3163, %v3162
        %v3209 = vpack.c.b16 %v3165, %v3164
        %v3210 = vpack.c.b16 %v3167, %v3166
        %v3211 = vpack.c.b16 %v3169, %v3168
        %v3212 = vpack.c.b16 %v3171, %v3170
        %v3213 = vpack.c.b16 %v3173, %v3172
        %v3214 = vpack.c.b16 %v3175, %v3174
        %v3215 = vpack.c.b16 %v3177, %v3176
        %v3216 = vpack.c.b16 %v3179, %v3178
        %v3217 = vpack.c.b16 %v3181, %v3180
        %v3218 = vpack.c.b16 %v3183, %v3182
        %v3219 = vpack.c.b16 %v3185, %v3184
        %v3220 = vpack.c.b16 %v3187, %v3186
        %v3221 = vpack.c.b16 %v3189, %v3188
        %v3226 = vunpack.c.l.b16 %v1756
        %v3227 = vunpack.c.l.b16 %v1757
        %v3228 = vunpack.c.l.b16 %v1758
        %v3229 = vunpack.c.l.b16 %v1759
        %v3230 = vpack.c.b16 %v3227, %v3226
        %v3231 = vpack.c.b16 %v3229, %v3228
        %v3235 = vsel %vm2676, %v3190, 0
        %v3238 = vsel %vm2676, %v3191, 0
        %v3241 = vsel %vm2676, %v3192, 0
        %v3244 = vsel %vm2676, %v3193, 0
        %v3247 = vsel %vm2676, %v3194, 0
        %v3250 = vsel %vm2676, %v3195, 0
        %v3253 = vsel %vm2676, %v3196, 0
        %v3256 = vsel %vm2676, %v3197, 0
        %v3259 = vsel %vm2676, %v3198, 0
        %v3262 = vsel %vm2676, %v3199, 0
        %v3265 = vsel %vm2676, %v3200, 0
        %v3268 = vsel %vm2676, %v3201, 0
        %v3271 = vsel %vm2676, %v3202, 0
        %v3274 = vsel %vm2676, %v3203, 0
        %v3277 = vsel %vm2676, %v3204, 0
        %v3280 = vsel %vm2676, %v3205, 0
        %v3283 = vsel %vm2676, %v3206, 0
        %v3286 = vsel %vm2676, %v3207, 0
        %v3289 = vsel %vm2676, %v3208, 0
        %v3292 = vsel %vm2676, %v3209, 0
        %v3295 = vsel %vm2676, %v3210, 0
        %v3298 = vsel %vm2676, %v3211, 0
        %v3301 = vsel %vm2676, %v3212, 0
        %v3304 = vsel %vm2676, %v3213, 0
        %v3307 = vsel %vm2676, %v3214, 0
        %v3310 = vsel %vm2676, %v3215, 0
        %v3313 = vsel %vm2676, %v3216, 0
        %v3316 = vsel %vm2676, %v3217, 0
        %v3319 = vsel %vm2676, %v3218, 0
        %v3322 = vsel %vm2676, %v3219, 0
        %v3325 = vsel %vm2676, %v3220, 0
        %v3328 = vsel %vm2676, %v3221, 0
        %3330 = vmatprep.subr.bf16.mxu0 0
        %3331 = vmatpush1.bf16.msra.mxu0 0
        %3332 = vmatprep.subr.bf16.mxu0 0
        %3333 = vmatpush1.bf16.msra.mxu0 0
        %3334 = vmatprep.subr.bf16.mxu0 0
        %3335 = vmatpush1.bf16.msra.mxu0 0
        %3336 = vmatprep.subr.bf16.mxu0 0
        %3337 = vmatpush1.bf16.msra.mxu0 0
        %3338 = vmatprep.subr.bf16.mxu0 0
        %3339 = vmatpush1.bf16.msra.mxu0 0
        %3340 = vmatprep.subr.bf16.mxu0 0
        %3341 = vmatpush1.bf16.msra.mxu0 0
        %3342 = vmatprep.subr.bf16.mxu0 0
        %3343 = vmatpush1.bf16.msra.mxu0 %v3231
        %3344 = vmatprep.subr.bf16.mxu0 0
        %3345 = vmatpush1.bf16.msra.mxu0 %v3230
        %3346 = vmatprep.subr.bf16.mxu0 0
        %3347 = vmatpush2.bf16.msra.mxu0 0
        %3348 = vmatprep.subr.bf16.mxu0 0
        %3349 = vmatpush2.bf16.msra.mxu0 0
        %3350 = vmatprep.subr.bf16.mxu0 0
        %3351 = vmatpush2.bf16.msra.mxu0 0
        %3352 = vmatprep.subr.bf16.mxu0 0
        %3353 = vmatpush2.bf16.msra.mxu0 0
        %3354 = vmatprep.subr.bf16.mxu0 0
        %3355 = vmatpush2.bf16.msra.mxu0 0
        %3356 = vmatprep.subr.bf16.mxu0 0
        %3357 = vmatpush2.bf16.msra.mxu0 0
        %3358 = vmatprep.subr.bf16.mxu0 0
        %3359 = vmatpush2.bf16.msra.mxu0 0
        %3360 = vmatprep.subr.bf16.mxu0 0
        %3361 = vmatpush2.bf16.msra.mxu0 0
        %3362 = vmatprep.mubr.bf16.mxu0 0
        %3363 = vmatmul.mubr.bf16.gmra.mxu0 %v3235
        %v3364 = vpop.f32.mrf.mxu0
        %v3365 = vadd.f32 %v2808, %v3364
        %v3366 = vpop.f32.mrf.mxu0
        %v3367 = vpop.f32.mrf.mxu0
        %v3368 = vadd.f32 %v2811, %v3367
        %v3369 = vpop.f32.mrf.mxu0
        %3370 = vmatprep.mubr.bf16.mxu0 0
        %3371 = vmatmul.mubr.bf16.gmra.mxu0 %v3238
        %v3372 = vpop.f32.mrf.mxu0
        %v3373 = vadd.f32 %v2816, %v3372
        %v3374 = vpop.f32.mrf.mxu0
        %v3375 = vpop.f32.mrf.mxu0
        %v3376 = vadd.f32 %v2819, %v3375
        %v3377 = vpop.f32.mrf.mxu0
        %3378 = vmatprep.mubr.bf16.mxu0 0
        %3379 = vmatmul.mubr.bf16.gmra.mxu0 %v3241
        %v3380 = vpop.f32.mrf.mxu0
        %v3381 = vadd.f32 %v2824, %v3380
        %v3382 = vpop.f32.mrf.mxu0
        %v3383 = vpop.f32.mrf.mxu0
        %v3384 = vadd.f32 %v2827, %v3383
        %v3385 = vpop.f32.mrf.mxu0
        %3386 = vmatprep.mubr.bf16.mxu0 0
        %3387 = vmatmul.mubr.bf16.gmra.mxu0 %v3244
        %v3388 = vpop.f32.mrf.mxu0
        %v3389 = vadd.f32 %v2832, %v3388
        %v3390 = vpop.f32.mrf.mxu0
        %v3391 = vpop.f32.mrf.mxu0
        %v3392 = vadd.f32 %v2835, %v3391
        %v3393 = vpop.f32.mrf.mxu0
        %3394 = vmatprep.mubr.bf16.mxu0 0
        %3395 = vmatmul.mubr.bf16.gmra.mxu0 %v3247
        %v3396 = vpop.f32.mrf.mxu0
        %v3397 = vadd.f32 %v2840, %v3396
        %v3398 = vpop.f32.mrf.mxu0
        %v3399 = vpop.f32.mrf.mxu0
        %v3400 = vadd.f32 %v2843, %v3399
        %v3401 = vpop.f32.mrf.mxu0
        %3402 = vmatprep.mubr.bf16.mxu0 0
        %3403 = vmatmul.mubr.bf16.gmra.mxu0 %v3250
        %v3404 = vpop.f32.mrf.mxu0
        %v3405 = vadd.f32 %v2848, %v3404
        %v3406 = vpop.f32.mrf.mxu0
        %v3407 = vpop.f32.mrf.mxu0
        %v3408 = vadd.f32 %v2851, %v3407
        %v3409 = vpop.f32.mrf.mxu0
        %3410 = vmatprep.mubr.bf16.mxu0 0
        %3411 = vmatmul.mubr.bf16.gmra.mxu0 %v3253
        %v3412 = vpop.f32.mrf.mxu0
        %v3413 = vadd.f32 %v2856, %v3412
        %v3414 = vpop.f32.mrf.mxu0
        %v3415 = vpop.f32.mrf.mxu0
        %v3416 = vadd.f32 %v2859, %v3415
        %v3417 = vpop.f32.mrf.mxu0
        %3418 = vmatprep.mubr.bf16.mxu0 0
        %3419 = vmatmul.mubr.bf16.gmra.mxu0 %v3256
        %v3420 = vpop.f32.mrf.mxu0
        %v3421 = vadd.f32 %v2864, %v3420
        %v3422 = vpop.f32.mrf.mxu0
        %v3423 = vpop.f32.mrf.mxu0
        %v3424 = vadd.f32 %v2867, %v3423
        %v3425 = vpop.f32.mrf.mxu0
        %3426 = vmatprep.mubr.bf16.mxu0 0
        %3427 = vmatmul.mubr.bf16.gmra.mxu0 %v3259
        %v3428 = vpop.f32.mrf.mxu0
        %v3429 = vadd.f32 %v2872, %v3428
        %v3430 = vpop.f32.mrf.mxu0
        %v3431 = vpop.f32.mrf.mxu0
        %v3432 = vadd.f32 %v2875, %v3431
        %v3433 = vpop.f32.mrf.mxu0
        %3434 = vmatprep.mubr.bf16.mxu0 0
        %3435 = vmatmul.mubr.bf16.gmra.mxu0 %v3262
        %v3436 = vpop.f32.mrf.mxu0
        %v3437 = vadd.f32 %v2880, %v3436
        %v3438 = vpop.f32.mrf.mxu0
        %v3439 = vpop.f32.mrf.mxu0
        %v3440 = vadd.f32 %v2883, %v3439
        %v3441 = vpop.f32.mrf.mxu0
        %3442 = vmatprep.mubr.bf16.mxu0 0
        %3443 = vmatmul.mubr.bf16.gmra.mxu0 %v3265
        %v3444 = vpop.f32.mrf.mxu0
        %v3445 = vadd.f32 %v2888, %v3444
        %v3446 = vpop.f32.mrf.mxu0
        %v3447 = vpop.f32.mrf.mxu0
        %v3448 = vadd.f32 %v2891, %v3447
        %v3449 = vpop.f32.mrf.mxu0
        %3450 = vmatprep.mubr.bf16.mxu0 0
        %3451 = vmatmul.mubr.bf16.gmra.mxu0 %v3268
        %v3452 = vpop.f32.mrf.mxu0
        %v3453 = vadd.f32 %v2896, %v3452
        %v3454 = vpop.f32.mrf.mxu0
        %v3455 = vpop.f32.mrf.mxu0
        %v3456 = vadd.f32 %v2899, %v3455
        %v3457 = vpop.f32.mrf.mxu0
        %3458 = vmatprep.mubr.bf16.mxu0 0
        %3459 = vmatmul.mubr.bf16.gmra.mxu0 %v3271
        %v3460 = vpop.f32.mrf.mxu0
        %v3461 = vadd.f32 %v2904, %v3460
        %v3462 = vpop.f32.mrf.mxu0
        %v3463 = vpop.f32.mrf.mxu0
        %v3464 = vadd.f32 %v2907, %v3463
        %v3465 = vpop.f32.mrf.mxu0
        %3466 = vmatprep.mubr.bf16.mxu0 0
        %3467 = vmatmul.mubr.bf16.gmra.mxu0 %v3274
        %v3468 = vpop.f32.mrf.mxu0
        %v3469 = vadd.f32 %v2912, %v3468
        %v3470 = vpop.f32.mrf.mxu0
        %v3471 = vpop.f32.mrf.mxu0
        %v3472 = vadd.f32 %v2915, %v3471
        %v3473 = vpop.f32.mrf.mxu0
        %3474 = vmatprep.mubr.bf16.mxu0 0
        %3475 = vmatmul.mubr.bf16.gmra.mxu0 %v3277
        %v3476 = vpop.f32.mrf.mxu0
        %v3477 = vadd.f32 %v2920, %v3476
        %v3478 = vpop.f32.mrf.mxu0
        %v3479 = vpop.f32.mrf.mxu0
        %v3480 = vadd.f32 %v2923, %v3479
        %v3481 = vpop.f32.mrf.mxu0
        %3482 = vmatprep.mubr.bf16.mxu0 0
        %3483 = vmatmul.mubr.bf16.gmra.mxu0 %v3280
        %v3484 = vpop.f32.mrf.mxu0
        %v3485 = vadd.f32 %v2928, %v3484
        %v3486 = vpop.f32.mrf.mxu0
        %v3487 = vpop.f32.mrf.mxu0
        %v3488 = vadd.f32 %v2931, %v3487
        %v3489 = vpop.f32.mrf.mxu0
        %3490 = vmatprep.mubr.bf16.mxu0 0
        %3491 = vmatmul.mubr.bf16.gmra.mxu0 %v3283
        %v3492 = vpop.f32.mrf.mxu0
        %v3493 = vadd.f32 %v2936, %v3492
        %v3494 = vpop.f32.mrf.mxu0
        %v3495 = vpop.f32.mrf.mxu0
        %v3496 = vadd.f32 %v2939, %v3495
        %v3497 = vpop.f32.mrf.mxu0
        %3498 = vmatprep.mubr.bf16.mxu0 0
        %3499 = vmatmul.mubr.bf16.gmra.mxu0 %v3286
        %v3500 = vpop.f32.mrf.mxu0
        %v3501 = vadd.f32 %v2944, %v3500
        %v3502 = vpop.f32.mrf.mxu0
        %v3503 = vpop.f32.mrf.mxu0
        %v3504 = vadd.f32 %v2947, %v3503
        %v3505 = vpop.f32.mrf.mxu0
        %3506 = vmatprep.mubr.bf16.mxu0 0
        %3507 = vmatmul.mubr.bf16.gmra.mxu0 %v3289
        %v3508 = vpop.f32.mrf.mxu0
        %v3509 = vadd.f32 %v2952, %v3508
        %v3510 = vpop.f32.mrf.mxu0
        %v3511 = vpop.f32.mrf.mxu0
        %v3512 = vadd.f32 %v2955, %v3511
        %v3513 = vpop.f32.mrf.mxu0
        %3514 = vmatprep.mubr.bf16.mxu0 0
        %3515 = vmatmul.mubr.bf16.gmra.mxu0 %v3292
        %v3516 = vpop.f32.mrf.mxu0
        %v3517 = vadd.f32 %v2960, %v3516
        %v3518 = vpop.f32.mrf.mxu0
        %v3519 = vpop.f32.mrf.mxu0
        %v3520 = vadd.f32 %v2963, %v3519
        %v3521 = vpop.f32.mrf.mxu0
        %3522 = vmatprep.mubr.bf16.mxu0 0
        %3523 = vmatmul.mubr.bf16.gmra.mxu0 %v3295
        %v3524 = vpop.f32.mrf.mxu0
        %v3525 = vadd.f32 %v2968, %v3524
        %v3526 = vpop.f32.mrf.mxu0
        %v3527 = vpop.f32.mrf.mxu0
        %v3528 = vadd.f32 %v2971, %v3527
        %v3529 = vpop.f32.mrf.mxu0
        %3530 = vmatprep.mubr.bf16.mxu0 0
        %3531 = vmatmul.mubr.bf16.gmra.mxu0 %v3298
        %v3532 = vpop.f32.mrf.mxu0
        %v3533 = vadd.f32 %v2976, %v3532
        %v3534 = vpop.f32.mrf.mxu0
        %v3535 = vpop.f32.mrf.mxu0
        %v3536 = vadd.f32 %v2979, %v3535
        %v3537 = vpop.f32.mrf.mxu0
        %3538 = vmatprep.mubr.bf16.mxu0 0
        %3539 = vmatmul.mubr.bf16.gmra.mxu0 %v3301
        %v3540 = vpop.f32.mrf.mxu0
        %v3541 = vadd.f32 %v2984, %v3540
        %v3542 = vpop.f32.mrf.mxu0
        %v3543 = vpop.f32.mrf.mxu0
        %v3544 = vadd.f32 %v2987, %v3543
        %v3545 = vpop.f32.mrf.mxu0
        %3546 = vmatprep.mubr.bf16.mxu0 0
        %3547 = vmatmul.mubr.bf16.gmra.mxu0 %v3304
        %v3548 = vpop.f32.mrf.mxu0
        %v3549 = vadd.f32 %v2992, %v3548
        %v3550 = vpop.f32.mrf.mxu0
        %v3551 = vpop.f32.mrf.mxu0
        %v3552 = vadd.f32 %v2995, %v3551
        %v3553 = vpop.f32.mrf.mxu0
        %3554 = vmatprep.mubr.bf16.mxu0 0
        %3555 = vmatmul.mubr.bf16.gmra.mxu0 %v3307
        %v3556 = vpop.f32.mrf.mxu0
        %v3557 = vadd.f32 %v3000, %v3556
        %v3558 = vpop.f32.mrf.mxu0
        %v3559 = vpop.f32.mrf.mxu0
        %v3560 = vadd.f32 %v3003, %v3559
        %v3561 = vpop.f32.mrf.mxu0
        %3562 = vmatprep.mubr.bf16.mxu0 0
        %3563 = vmatmul.mubr.bf16.gmra.mxu0 %v3310
        %v3564 = vpop.f32.mrf.mxu0
        %v3565 = vadd.f32 %v3008, %v3564
        %v3566 = vpop.f32.mrf.mxu0
        %v3567 = vpop.f32.mrf.mxu0
        %v3568 = vadd.f32 %v3011, %v3567
        %v3569 = vpop.f32.mrf.mxu0
        %3570 = vmatprep.mubr.bf16.mxu0 0
        %3571 = vmatmul.mubr.bf16.gmra.mxu0 %v3313
        %v3572 = vpop.f32.mrf.mxu0
        %v3573 = vadd.f32 %v3016, %v3572
        %v3574 = vpop.f32.mrf.mxu0
        %v3575 = vpop.f32.mrf.mxu0
        %v3576 = vadd.f32 %v3019, %v3575
        %v3577 = vpop.f32.mrf.mxu0
        %3578 = vmatprep.mubr.bf16.mxu0 0
        %3579 = vmatmul.mubr.bf16.gmra.mxu0 %v3316
        %v3580 = vpop.f32.mrf.mxu0
        %v3581 = vadd.f32 %v3024, %v3580
        %v3582 = vpop.f32.mrf.mxu0
        %v3583 = vpop.f32.mrf.mxu0
        %v3584 = vadd.f32 %v3027, %v3583
        %v3585 = vpop.f32.mrf.mxu0
        %3586 = vmatprep.mubr.bf16.mxu0 0
        %3587 = vmatmul.mubr.bf16.gmra.mxu0 %v3319
        %v3588 = vpop.f32.mrf.mxu0
        %v3589 = vadd.f32 %v3032, %v3588
        %v3590 = vpop.f32.mrf.mxu0
        %v3591 = vpop.f32.mrf.mxu0
        %v3592 = vadd.f32 %v3035, %v3591
        %v3593 = vpop.f32.mrf.mxu0
        %3594 = vmatprep.mubr.bf16.mxu0 0
        %3595 = vmatmul.mubr.bf16.gmra.mxu0 %v3322
        %v3596 = vpop.f32.mrf.mxu0
        %v3597 = vadd.f32 %v3040, %v3596
        %v3598 = vpop.f32.mrf.mxu0
        %v3599 = vpop.f32.mrf.mxu0
        %v3600 = vadd.f32 %v3043, %v3599
        %v3601 = vpop.f32.mrf.mxu0
        %3602 = vmatprep.mubr.bf16.mxu0 0
        %3603 = vmatmul.mubr.bf16.gmra.mxu0 %v3325
        %v3604 = vpop.f32.mrf.mxu0
        %v3605 = vadd.f32 %v3048, %v3604
        %v3606 = vpop.f32.mrf.mxu0
        %v3607 = vpop.f32.mrf.mxu0
        %v3608 = vadd.f32 %v3051, %v3607
        %v3609 = vpop.f32.mrf.mxu0
        %3610 = vmatprep.mubr.bf16.mxu0 0
        %3611 = vmatmul.mubr.bf16.gmra.mxu0 %v3328
        %v3612 = vpop.f32.mrf.mxu0
        %v3613 = vadd.f32 %v3056, %v3612
        %v3614 = vpop.f32.mrf.mxu0
        %v3615 = vpop.f32.mrf.mxu0
        %v3616 = vadd.f32 %v3059, %v3615
        %v3617 = vpop.f32.mrf.mxu0
        %3618 = vdwg.mxu0
        %v3619 = vld [vmem:[#allocation2] sm:$0xe]
        %v3620 = vld [vmem:[#allocation2 + $0xc] sm:$0xe]
        %v3621 = vld [vmem:[#allocation2 + $0x18] sm:$0xe]
        %v3622 = vld [vmem:[#allocation2 + $0x24] sm:$0xe]
        %v3623 = vld [vmem:[#allocation2 + $0x30] sm:$0xe]
        %v3624 = vld [vmem:[#allocation2 + $0x3c] sm:$0xe]
        %v3625 = vld [vmem:[#allocation2 + $0x48] sm:$0xe]
        %v3626 = vld [vmem:[#allocation2 + $0x54] sm:$0xe]
        %v3627 = vld [vmem:[#allocation2 + $0x60] sm:$0xe]
        %v3628 = vld [vmem:[#allocation2 + $0x6c] sm:$0xe]
        %v3629 = vld [vmem:[#allocation2 + $0x78] sm:$0xe]
        %v3630 = vld [vmem:[#allocation2 + $0x84] sm:$0xe]
        %v3631 = vld [vmem:[#allocation2 + $0x90] sm:$0xe]
        %v3632 = vld [vmem:[#allocation2 + $0x9c] sm:$0xe]
        %v3633 = vld [vmem:[#allocation2 + $0xa8] sm:$0xe]
        %v3634 = vld [vmem:[#allocation2 + $0xb4] sm:$0xe]
        %v3635 = vld [vmem:[#allocation2 + $0xd8] sm:$0xe]
        %v3636 = vld [vmem:[#allocation2 + $0xe4] sm:$0xe]
        %v3637 = vld [vmem:[#allocation2 + $0xf0] sm:$0xe]
        %v3638 = vld [vmem:[#allocation2 + $0xfc] sm:$0xe]
        %v3639 = vld [vmem:[#allocation2 + $0x108] sm:$0xe]
        %v3640 = vld [vmem:[#allocation2 + $0x114] sm:$0xe]
        %v3641 = vld [vmem:[#allocation2 + $0x120] sm:$0xe]
        %v3642 = vld [vmem:[#allocation2 + $0x12c] sm:$0xe]
        %v3643 = vld [vmem:[#allocation2 + $0x138] sm:$0xe]
        %v3644 = vld [vmem:[#allocation2 + $0x144] sm:$0xe]
        %v3645 = vld [vmem:[#allocation2 + $0x150] sm:$0xe]
        %v3646 = vld [vmem:[#allocation2 + $0x15c] sm:$0xe]
        %v3647 = vld [vmem:[#allocation2 + $0x168] sm:$0xe]
        %v3648 = vld [vmem:[#allocation2 + $0x174] sm:$0xe]
        %v3649 = vld [vmem:[#allocation2 + $0x180] sm:$0xe]
        %v3650 = vld [vmem:[#allocation2 + $0x18c] sm:$0xe]
        %vm3715 = vcmask 1042432
        %vm3716 = vcmask 1046532
        %vm3717 = vmor %vm3715, %vm3716
        %v3718 = vrot.slane %v3619, 5
        %v3719 = vrot.slane %v3718, 4
        %v3720 = vrot.slane %v1693, 5
        %v3721 = vsel %vm3717, %v3719, %v3720
        %v3722 = vrot.slane %v3720, 4
        %v3723 = vrot.slane %v1760, 5
        %v3724 = vsel %vm3717, %v3722, %v3723
        %v3725 = vrot.slane %v3620, 5
        %v3726 = vrot.slane %v3725, 4
        %v3727 = vrot.slane %v1695, 5
        %v3728 = vsel %vm3717, %v3726, %v3727
        %v3729 = vrot.slane %v3727, 4
        %v3730 = vrot.slane %v1761, 5
        %v3731 = vsel %vm3717, %v3729, %v3730
        %v3732 = vrot.slane %v3621, 5
        %v3733 = vrot.slane %v3732, 4
        %v3734 = vrot.slane %v1697, 5
        %v3735 = vsel %vm3717, %v3733, %v3734
        %v3736 = vrot.slane %v3734, 4
        %v3737 = vrot.slane %v1762, 5
        %v3738 = vsel %vm3717, %v3736, %v3737
        %v3739 = vrot.slane %v3622, 5
        %v3740 = vrot.slane %v3739, 4
        %v3741 = vrot.slane %v1699, 5
        %v3742 = vsel %vm3717, %v3740, %v3741
        %v3743 = vrot.slane %v3741, 4
        %v3744 = vrot.slane %v1763, 5
        %v3745 = vsel %vm3717, %v3743, %v3744
        %v3746 = vrot.slane %v3623, 5
        %v3747 = vrot.slane %v3746, 4
        %v3748 = vrot.slane %v1701, 5
        %v3749 = vsel %vm3717, %v3747, %v3748
        %v3750 = vrot.slane %v3748, 4
        %v3751 = vrot.slane %v1764, 5
        %v3752 = vsel %vm3717, %v3750, %v3751
        %v3753 = vrot.slane %v3624, 5
        %v3754 = vrot.slane %v3753, 4
        %v3755 = vrot.slane %v1703, 5
        %v3756 = vsel %vm3717, %v3754, %v3755
        %v3757 = vrot.slane %v3755, 4
        %v3758 = vrot.slane %v1765, 5
        %v3759 = vsel %vm3717, %v3757, %v3758
        %v3760 = vrot.slane %v3625, 5
        %v3761 = vrot.slane %v3760, 4
        %v3762 = vrot.slane %v1705, 5
        %v3763 = vsel %vm3717, %v3761, %v3762
        %v3764 = vrot.slane %v3762, 4
        %v3765 = vrot.slane %v1766, 5
        %v3766 = vsel %vm3717, %v3764, %v3765
        %v3767 = vrot.slane %v3626, 5
        %v3768 = vrot.slane %v3767, 4
        %v3769 = vrot.slane %v1707, 5
        %v3770 = vsel %vm3717, %v3768, %v3769
        %v3771 = vrot.slane %v3769, 4
        %v3772 = vrot.slane %v1767, 5
        %v3773 = vsel %vm3717, %v3771, %v3772
        %v3774 = vrot.slane %v3627, 5
        %v3775 = vrot.slane %v3774, 4
        %v3776 = vrot.slane %v1709, 5
        %v3777 = vsel %vm3717, %v3775, %v3776
        %v3778 = vrot.slane %v3776, 4
        %v3779 = vrot.slane %v1768, 5
        %v3780 = vsel %vm3717, %v3778, %v3779
        %v3781 = vrot.slane %v3628, 5
        %v3782 = vrot.slane %v3781, 4
        %v3783 = vrot.slane %v1711, 5
        %v3784 = vsel %vm3717, %v3782, %v3783
        %v3785 = vrot.slane %v3783, 4
        %v3786 = vrot.slane %v1769, 5
        %v3787 = vsel %vm3717, %v3785, %v3786
        %v3788 = vrot.slane %v3629, 5
        %v3789 = vrot.slane %v3788, 4
        %v3790 = vrot.slane %v1713, 5
        %v3791 = vsel %vm3717, %v3789, %v3790
        %v3792 = vrot.slane %v3790, 4
        %v3793 = vrot.slane %v1770, 5
        %v3794 = vsel %vm3717, %v3792, %v3793
        %v3795 = vrot.slane %v3630, 5
        %v3796 = vrot.slane %v3795, 4
        %v3797 = vrot.slane %v1715, 5
        %v3798 = vsel %vm3717, %v3796, %v3797
        %v3799 = vrot.slane %v3797, 4
        %v3800 = vrot.slane %v1771, 5
        %v3801 = vsel %vm3717, %v3799, %v3800
        %v3802 = vrot.slane %v3631, 5
        %v3803 = vrot.slane %v3802, 4
        %v3804 = vrot.slane %v1717, 5
        %v3805 = vsel %vm3717, %v3803, %v3804
        %v3806 = vrot.slane %v3804, 4
        %v3807 = vrot.slane %v1772, 5
        %v3808 = vsel %vm3717, %v3806, %v3807
        %v3809 = vrot.slane %v3632, 5
        %v3810 = vrot.slane %v3809, 4
        %v3811 = vrot.slane %v1719, 5
        %v3812 = vsel %vm3717, %v3810, %v3811
        %v3813 = vrot.slane %v3811, 4
        %v3814 = vrot.slane %v1773, 5
        %v3815 = vsel %vm3717, %v3813, %v3814
        %v3816 = vrot.slane %v3633, 5
        %v3817 = vrot.slane %v3816, 4
        %v3818 = vrot.slane %v1721, 5
        %v3819 = vsel %vm3717, %v3817, %v3818
        %v3820 = vrot.slane %v3818, 4
        %v3821 = vrot.slane %v1774, 5
        %v3822 = vsel %vm3717, %v3820, %v3821
        %v3823 = vrot.slane %v3634, 5
        %v3824 = vrot.slane %v3823, 4
        %v3825 = vrot.slane %v1723, 5
        %v3826 = vsel %vm3717, %v3824, %v3825
        %v3827 = vrot.slane %v3825, 4
        %v3828 = vrot.slane %v1775, 5
        %v3829 = vsel %vm3717, %v3827, %v3828
        %v3830 = vrot.slane %v3635, 5
        %v3831 = vrot.slane %v3830, 4
        %v3832 = vrot.slane %v1725, 5
        %v3833 = vsel %vm3717, %v3831, %v3832
        %v3834 = vrot.slane %v3832, 4
        %v3835 = vrot.slane %v1776, 5
        %v3836 = vsel %vm3717, %v3834, %v3835
        %v3837 = vrot.slane %v3636, 5
        %v3838 = vrot.slane %v3837, 4
        %v3839 = vrot.slane %v1727, 5
        %v3840 = vsel %vm3717, %v3838, %v3839
        %v3841 = vrot.slane %v3839, 4
        %v3842 = vrot.slane %v1777, 5
        %v3843 = vsel %vm3717, %v3841, %v3842
        %v3844 = vrot.slane %v3637, 5
        %v3845 = vrot.slane %v3844, 4
        %v3846 = vrot.slane %v1729, 5
        %v3847 = vsel %vm3717, %v3845, %v3846
        %v3848 = vrot.slane %v3846, 4
        %v3849 = vrot.slane %v1778, 5
        %v3850 = vsel %vm3717, %v3848, %v3849
        %v3851 = vrot.slane %v3638, 5
        %v3852 = vrot.slane %v3851, 4
        %v3853 = vrot.slane %v1731, 5
        %v3854 = vsel %vm3717, %v3852, %v3853
        %v3855 = vrot.slane %v3853, 4
        %v3856 = vrot.slane %v1779, 5
        %v3857 = vsel %vm3717, %v3855, %v3856
        %v3858 = vrot.slane %v3639, 5
        %v3859 = vrot.slane %v3858, 4
        %v3860 = vrot.slane %v1733, 5
        %v3861 = vsel %vm3717, %v3859, %v3860
        %v3862 = vrot.slane %v3860, 4
        %v3863 = vrot.slane %v1780, 5
        %v3864 = vsel %vm3717, %v3862, %v3863
        %v3865 = vrot.slane %v3640, 5
        %v3866 = vrot.slane %v3865, 4
        %v3867 = vrot.slane %v1735, 5
        %v3868 = vsel %vm3717, %v3866, %v3867
        %v3869 = vrot.slane %v3867, 4
        %v3870 = vrot.slane %v1781, 5
        %v3871 = vsel %vm3717, %v3869, %v3870
        %v3872 = vrot.slane %v3641, 5
        %v3873 = vrot.slane %v3872, 4
        %v3874 = vrot.slane %v1737, 5
        %v3875 = vsel %vm3717, %v3873, %v3874
        %v3876 = vrot.slane %v3874, 4
        %v3877 = vrot.slane %v1782, 5
        %v3878 = vsel %vm3717, %v3876, %v3877
        %v3879 = vrot.slane %v3642, 5
        %v3880 = vrot.slane %v3879, 4
        %v3881 = vrot.slane %v1739, 5
        %v3882 = vsel %vm3717, %v3880, %v3881
        %v3883 = vrot.slane %v3881, 4
        %v3884 = vrot.slane %v1783, 5
        %v3885 = vsel %vm3717, %v3883, %v3884
        %v3886 = vrot.slane %v3643, 5
        %v3887 = vrot.slane %v3886, 4
        %v3888 = vrot.slane %v1741, 5
        %v3889 = vsel %vm3717, %v3887, %v3888
        %v3890 = vrot.slane %v3888, 4
        %v3891 = vrot.slane %v1784, 5
        %v3892 = vsel %vm3717, %v3890, %v3891
        %v3893 = vrot.slane %v3644, 5
        %v3894 = vrot.slane %v3893, 4
        %v3895 = vrot.slane %v1743, 5
        %v3896 = vsel %vm3717, %v3894, %v3895
        %v3897 = vrot.slane %v3895, 4
        %v3898 = vrot.slane %v1785, 5
        %v3899 = vsel %vm3717, %v3897, %v3898
        %v3900 = vrot.slane %v3645, 5
        %v3901 = vrot.slane %v3900, 4
        %v3902 = vrot.slane %v1745, 5
        %v3903 = vsel %vm3717, %v3901, %v3902
        %v3904 = vrot.slane %v3902, 4
        %v3905 = vrot.slane %v1786, 5
        %v3906 = vsel %vm3717, %v3904, %v3905
        %v3907 = vrot.slane %v3646, 5
        %v3908 = vrot.slane %v3907, 4
        %v3909 = vrot.slane %v1747, 5
        %v3910 = vsel %vm3717, %v3908, %v3909
        %v3911 = vrot.slane %v3909, 4
        %v3912 = vrot.slane %v1787, 5
        %v3913 = vsel %vm3717, %v3911, %v3912
        %v3914 = vrot.slane %v3647, 5
        %v3915 = vrot.slane %v3914, 4
        %v3916 = vrot.slane %v1749, 5
        %v3917 = vsel %vm3717, %v3915, %v3916
        %v3918 = vrot.slane %v3916, 4
        %v3919 = vrot.slane %v1788, 5
        %v3920 = vsel %vm3717, %v3918, %v3919
        %v3921 = vrot.slane %v3648, 5
        %v3922 = vrot.slane %v3921, 4
        %v3923 = vrot.slane %v1751, 5
        %v3924 = vsel %vm3717, %v3922, %v3923
        %v3925 = vrot.slane %v3923, 4
        %v3926 = vrot.slane %v1789, 5
        %v3927 = vsel %vm3717, %v3925, %v3926
        %v3928 = vrot.slane %v3649, 5
        %v3929 = vrot.slane %v3928, 4
        %v3930 = vrot.slane %v1753, 5
        %v3931 = vsel %vm3717, %v3929, %v3930
        %v3932 = vrot.slane %v3930, 4
        %v3933 = vrot.slane %v1790, 5
        %v3934 = vsel %vm3717, %v3932, %v3933
        %v3935 = vrot.slane %v3650, 5
        %v3936 = vrot.slane %v3935, 4
        %v3937 = vrot.slane %v1755, 5
        %v3938 = vsel %vm3717, %v3936, %v3937
        %v3939 = vrot.slane %v3937, 4
        %v3940 = vrot.slane %v1791, 5
        %v3941 = vsel %vm3717, %v3939, %v3940
        %s3942 = scalar_lea.vmem [#allocation6], 32
        %v3943 = vld [vmem:[%s3942] sm:$0xf]
        %v3944 = vld [vmem:[%s3942 + $0x4] sm:$0xf]
        %v3945 = vld [vmem:[%s3942 + $0x8] sm:$0xf]
        %v3946 = vld [vmem:[%s3942 + $0xc] sm:$0xf]
        %v3947 = vunpack.c.l.b16 %v3721
        %v3948 = vunpack.c.l.b16 %v3724
        %v3949 = vunpack.c.l.b16 %v3728
        %v3950 = vunpack.c.l.b16 %v3731
        %v3951 = vunpack.c.l.b16 %v3735
        %v3952 = vunpack.c.l.b16 %v3738
        %v3953 = vunpack.c.l.b16 %v3742
        %v3954 = vunpack.c.l.b16 %v3745
        %v3955 = vunpack.c.l.b16 %v3749
        %v3956 = vunpack.c.l.b16 %v3752
        %v3957 = vunpack.c.l.b16 %v3756
        %v3958 = vunpack.c.l.b16 %v3759
        %v3959 = vunpack.c.l.b16 %v3763
        %v3960 = vunpack.c.l.b16 %v3766
        %v3961 = vunpack.c.l.b16 %v3770
        %v3962 = vunpack.c.l.b16 %v3773
        %v3963 = vunpack.c.l.b16 %v3777
        %v3964 = vunpack.c.l.b16 %v3780
        %v3965 = vunpack.c.l.b16 %v3784
        %v3966 = vunpack.c.l.b16 %v3787
        %v3967 = vunpack.c.l.b16 %v3791
        %v3968 = vunpack.c.l.b16 %v3794
        %v3969 = vunpack.c.l.b16 %v3798
        %v3970 = vunpack.c.l.b16 %v3801
        %v3971 = vunpack.c.l.b16 %v3805
        %v3972 = vunpack.c.l.b16 %v3808
        %v3973 = vunpack.c.l.b16 %v3812
        %v3974 = vunpack.c.l.b16 %v3815
        %v3975 = vunpack.c.l.b16 %v3819
        %v3976 = vunpack.c.l.b16 %v3822
        %v3977 = vunpack.c.l.b16 %v3826
        %v3978 = vunpack.c.l.b16 %v3829
        %v3979 = vunpack.c.l.b16 %v3833
        %v3980 = vunpack.c.l.b16 %v3836
        %v3981 = vunpack.c.l.b16 %v3840
        %v3982 = vunpack.c.l.b16 %v3843
        %v3983 = vunpack.c.l.b16 %v3847
        %v3984 = vunpack.c.l.b16 %v3850
        %v3985 = vunpack.c.l.b16 %v3854
        %v3986 = vunpack.c.l.b16 %v3857
        %v3987 = vunpack.c.l.b16 %v3861
        %v3988 = vunpack.c.l.b16 %v3864
        %v3989 = vunpack.c.l.b16 %v3868
        %v3990 = vunpack.c.l.b16 %v3871
        %v3991 = vunpack.c.l.b16 %v3875
        %v3992 = vunpack.c.l.b16 %v3878
        %v3993 = vunpack.c.l.b16 %v3882
        %v3994 = vunpack.c.l.b16 %v3885
        %v3995 = vunpack.c.l.b16 %v3889
        %v3996 = vunpack.c.l.b16 %v3892
        %v3997 = vunpack.c.l.b16 %v3896
        %v3998 = vunpack.c.l.b16 %v3899
        %v3999 = vunpack.c.l.b16 %v3903
        %v4000 = vunpack.c.l.b16 %v3906
        %v4001 = vunpack.c.l.b16 %v3910
        %v4002 = vunpack.c.l.b16 %v3913
        %v4003 = vunpack.c.l.b16 %v3917
        %v4004 = vunpack.c.l.b16 %v3920
        %v4005 = vunpack.c.l.b16 %v3924
        %v4006 = vunpack.c.l.b16 %v3927
        %v4007 = vunpack.c.l.b16 %v3931
        %v4008 = vunpack.c.l.b16 %v3934
        %v4009 = vunpack.c.l.b16 %v3938
        %v4010 = vunpack.c.l.b16 %v3941
        %v4011 = vpack.c.b16 %v3948, %v3947
        %v4012 = vpack.c.b16 %v3950, %v3949
        %v4013 = vpack.c.b16 %v3952, %v3951
        %v4014 = vpack.c.b16 %v3954, %v3953
        %v4015 = vpack.c.b16 %v3956, %v3955
        %v4016 = vpack.c.b16 %v3958, %v3957
        %v4017 = vpack.c.b16 %v3960, %v3959
        %v4018 = vpack.c.b16 %v3962, %v3961
        %v4019 = vpack.c.b16 %v3964, %v3963
        %v4020 = vpack.c.b16 %v3966, %v3965
        %v4021 = vpack.c.b16 %v3968, %v3967
        %v4022 = vpack.c.b16 %v3970, %v3969
        %v4023 = vpack.c.b16 %v3972, %v3971
        %v4024 = vpack.c.b16 %v3974, %v3973
        %v4025 = vpack.c.b16 %v3976, %v3975
        %v4026 = vpack.c.b16 %v3978, %v3977
        %v4027 = vpack.c.b16 %v3980, %v3979
        %v4028 = vpack.c.b16 %v3982, %v3981
        %v4029 = vpack.c.b16 %v3984, %v3983
        %v4030 = vpack.c.b16 %v3986, %v3985
        %v4031 = vpack.c.b16 %v3988, %v3987
        %v4032 = vpack.c.b16 %v3990, %v3989
        %v4033 = vpack.c.b16 %v3992, %v3991
        %v4034 = vpack.c.b16 %v3994, %v3993
        %v4035 = vpack.c.b16 %v3996, %v3995
        %v4036 = vpack.c.b16 %v3998, %v3997
        %v4037 = vpack.c.b16 %v4000, %v3999
        %v4038 = vpack.c.b16 %v4002, %v4001
        %v4039 = vpack.c.b16 %v4004, %v4003
        %v4040 = vpack.c.b16 %v4006, %v4005
        %v4041 = vpack.c.b16 %v4008, %v4007
        %v4042 = vpack.c.b16 %v4010, %v4009
        %v4047 = vunpack.c.l.b16 %v3943
        %v4048 = vunpack.c.l.b16 %v3944
        %v4049 = vunpack.c.l.b16 %v3945
        %v4050 = vunpack.c.l.b16 %v3946
        %v4051 = vpack.c.b16 %v4048, %v4047
        %v4052 = vpack.c.b16 %v4050, %v4049
        %v4056 = vsel %vm2676, %v4011, 0
        %v4059 = vsel %vm2676, %v4012, 0
        %v4062 = vsel %vm2676, %v4013, 0
        %v4065 = vsel %vm2676, %v4014, 0
        %v4068 = vsel %vm2676, %v4015, 0
        %v4071 = vsel %vm2676, %v4016, 0
        %v4074 = vsel %vm2676, %v4017, 0
        %v4077 = vsel %vm2676, %v4018, 0
        %v4080 = vsel %vm2676, %v4019, 0
        %v4083 = vsel %vm2676, %v4020, 0
        %v4086 = vsel %vm2676, %v4021, 0
        %v4089 = vsel %vm2676, %v4022, 0
        %v4092 = vsel %vm2676, %v4023, 0
        %v4095 = vsel %vm2676, %v4024, 0
        %v4098 = vsel %vm2676, %v4025, 0
        %v4101 = vsel %vm2676, %v4026, 0
        %v4104 = vsel %vm2676, %v4027, 0
        %v4107 = vsel %vm2676, %v4028, 0
        %v4110 = vsel %vm2676, %v4029, 0
        %v4113 = vsel %vm2676, %v4030, 0
        %v4116 = vsel %vm2676, %v4031, 0
        %v4119 = vsel %vm2676, %v4032, 0
        %v4122 = vsel %vm2676, %v4033, 0
        %v4125 = vsel %vm2676, %v4034, 0
        %v4128 = vsel %vm2676, %v4035, 0
        %v4131 = vsel %vm2676, %v4036, 0
        %v4134 = vsel %vm2676, %v4037, 0
        %v4137 = vsel %vm2676, %v4038, 0
        %v4140 = vsel %vm2676, %v4039, 0
        %v4143 = vsel %vm2676, %v4040, 0
        %v4146 = vsel %vm2676, %v4041, 0
        %v4149 = vsel %vm2676, %v4042, 0
        %4151 = vmatprep.subr.bf16.mxu0 0
        %4152 = vmatpush1.bf16.msra.mxu0 0
        %4153 = vmatprep.subr.bf16.mxu0 0
        %4154 = vmatpush1.bf16.msra.mxu0 0
        %4155 = vmatprep.subr.bf16.mxu0 0
        %4156 = vmatpush1.bf16.msra.mxu0 0
        %4157 = vmatprep.subr.bf16.mxu0 0
        %4158 = vmatpush1.bf16.msra.mxu0 0
        %4159 = vmatprep.subr.bf16.mxu0 0
        %4160 = vmatpush1.bf16.msra.mxu0 0
        %4161 = vmatprep.subr.bf16.mxu0 0
        %4162 = vmatpush1.bf16.msra.mxu0 0
        %4163 = vmatprep.subr.bf16.mxu0 0
        %4164 = vmatpush1.bf16.msra.mxu0 %v4052
        %4165 = vmatprep.subr.bf16.mxu0 0
        %4166 = vmatpush1.bf16.msra.mxu0 %v4051
        %4167 = vmatprep.subr.bf16.mxu0 0
        %4168 = vmatpush2.bf16.msra.mxu0 0
        %4169 = vmatprep.subr.bf16.mxu0 0
        %4170 = vmatpush2.bf16.msra.mxu0 0
        %4171 = vmatprep.subr.bf16.mxu0 0
        %4172 = vmatpush2.bf16.msra.mxu0 0
        %4173 = vmatprep.subr.bf16.mxu0 0
        %4174 = vmatpush2.bf16.msra.mxu0 0
        %4175 = vmatprep.subr.bf16.mxu0 0
        %4176 = vmatpush2.bf16.msra.mxu0 0
        %4177 = vmatprep.subr.bf16.mxu0 0
        %4178 = vmatpush2.bf16.msra.mxu0 0
        %4179 = vmatprep.subr.bf16.mxu0 0
        %4180 = vmatpush2.bf16.msra.mxu0 0
        %4181 = vmatprep.subr.bf16.mxu0 0
        %4182 = vmatpush2.bf16.msra.mxu0 0
        %4183 = vmatprep.mubr.bf16.mxu0 0
        %4184 = vmatmul.mubr.bf16.gmra.mxu0 %v4056
        %v4185 = vpop.f32.mrf.mxu0
        %v4186 = vadd.f32 0.0, %v4185
        %v4187 = vpop.f32.mrf.mxu0
        %v4188 = vpop.f32.mrf.mxu0
        %v4189 = vadd.f32 0.0, %v4188
        %v4190 = vpop.f32.mrf.mxu0
        %4191 = vmatprep.mubr.bf16.mxu0 0
        %4192 = vmatmul.mubr.bf16.gmra.mxu0 %v4059
        %v4193 = vpop.f32.mrf.mxu0
        %v4194 = vadd.f32 0.0, %v4193
        %v4195 = vpop.f32.mrf.mxu0
        %v4196 = vpop.f32.mrf.mxu0
        %v4197 = vadd.f32 0.0, %v4196
        %v4198 = vpop.f32.mrf.mxu0
        %4199 = vmatprep.mubr.bf16.mxu0 0
        %4200 = vmatmul.mubr.bf16.gmra.mxu0 %v4062
        %v4201 = vpop.f32.mrf.mxu0
        %v4202 = vadd.f32 0.0, %v4201
        %v4203 = vpop.f32.mrf.mxu0
        %v4204 = vpop.f32.mrf.mxu0
        %v4205 = vadd.f32 0.0, %v4204
        %v4206 = vpop.f32.mrf.mxu0
        %4207 = vmatprep.mubr.bf16.mxu0 0
        %4208 = vmatmul.mubr.bf16.gmra.mxu0 %v4065
        %v4209 = vpop.f32.mrf.mxu0
        %v4210 = vadd.f32 0.0, %v4209
        %v4211 = vpop.f32.mrf.mxu0
        %v4212 = vpop.f32.mrf.mxu0
        %v4213 = vadd.f32 0.0, %v4212
        %v4214 = vpop.f32.mrf.mxu0
        %4215 = vmatprep.mubr.bf16.mxu0 0
        %4216 = vmatmul.mubr.bf16.gmra.mxu0 %v4068
        %v4217 = vpop.f32.mrf.mxu0
        %v4218 = vadd.f32 0.0, %v4217
        %v4219 = vpop.f32.mrf.mxu0
        %v4220 = vpop.f32.mrf.mxu0
        %v4221 = vadd.f32 0.0, %v4220
        %v4222 = vpop.f32.mrf.mxu0
        %4223 = vmatprep.mubr.bf16.mxu0 0
        %4224 = vmatmul.mubr.bf16.gmra.mxu0 %v4071
        %v4225 = vpop.f32.mrf.mxu0
        %v4226 = vadd.f32 0.0, %v4225
        %v4227 = vpop.f32.mrf.mxu0
        %v4228 = vpop.f32.mrf.mxu0
        %v4229 = vadd.f32 0.0, %v4228
        %v4230 = vpop.f32.mrf.mxu0
        %4231 = vmatprep.mubr.bf16.mxu0 0
        %4232 = vmatmul.mubr.bf16.gmra.mxu0 %v4074
        %v4233 = vpop.f32.mrf.mxu0
        %v4234 = vadd.f32 0.0, %v4233
        %v4235 = vpop.f32.mrf.mxu0
        %v4236 = vpop.f32.mrf.mxu0
        %v4237 = vadd.f32 0.0, %v4236
        %v4238 = vpop.f32.mrf.mxu0
        %4239 = vmatprep.mubr.bf16.mxu0 0
        %4240 = vmatmul.mubr.bf16.gmra.mxu0 %v4077
        %v4241 = vpop.f32.mrf.mxu0
        %v4242 = vadd.f32 0.0, %v4241
        %v4243 = vpop.f32.mrf.mxu0
        %v4244 = vpop.f32.mrf.mxu0
        %v4245 = vadd.f32 0.0, %v4244
        %v4246 = vpop.f32.mrf.mxu0
        %4247 = vmatprep.mubr.bf16.mxu0 0
        %4248 = vmatmul.mubr.bf16.gmra.mxu0 %v4080
        %v4249 = vpop.f32.mrf.mxu0
        %v4250 = vadd.f32 0.0, %v4249
        %v4251 = vpop.f32.mrf.mxu0
        %v4252 = vpop.f32.mrf.mxu0
        %v4253 = vadd.f32 0.0, %v4252
        %v4254 = vpop.f32.mrf.mxu0
        %4255 = vmatprep.mubr.bf16.mxu0 0
        %4256 = vmatmul.mubr.bf16.gmra.mxu0 %v4083
        %v4257 = vpop.f32.mrf.mxu0
        %v4258 = vadd.f32 0.0, %v4257
        %v4259 = vpop.f32.mrf.mxu0
        %v4260 = vpop.f32.mrf.mxu0
        %v4261 = vadd.f32 0.0, %v4260
        %v4262 = vpop.f32.mrf.mxu0
        %4263 = vmatprep.mubr.bf16.mxu0 0
        %4264 = vmatmul.mubr.bf16.gmra.mxu0 %v4086
        %v4265 = vpop.f32.mrf.mxu0
        %v4266 = vadd.f32 0.0, %v4265
        %v4267 = vpop.f32.mrf.mxu0
        %v4268 = vpop.f32.mrf.mxu0
        %v4269 = vadd.f32 0.0, %v4268
        %v4270 = vpop.f32.mrf.mxu0
        %4271 = vmatprep.mubr.bf16.mxu0 0
        %4272 = vmatmul.mubr.bf16.gmra.mxu0 %v4089
        %v4273 = vpop.f32.mrf.mxu0
        %v4274 = vadd.f32 0.0, %v4273
        %v4275 = vpop.f32.mrf.mxu0
        %v4276 = vpop.f32.mrf.mxu0
        %v4277 = vadd.f32 0.0, %v4276
        %v4278 = vpop.f32.mrf.mxu0
        %4279 = vmatprep.mubr.bf16.mxu0 0
        %4280 = vmatmul.mubr.bf16.gmra.mxu0 %v4092
        %v4281 = vpop.f32.mrf.mxu0
        %v4282 = vadd.f32 0.0, %v4281
        %v4283 = vpop.f32.mrf.mxu0
        %v4284 = vpop.f32.mrf.mxu0
        %v4285 = vadd.f32 0.0, %v4284
        %v4286 = vpop.f32.mrf.mxu0
        %4287 = vmatprep.mubr.bf16.mxu0 0
        %4288 = vmatmul.mubr.bf16.gmra.mxu0 %v4095
        %v4289 = vpop.f32.mrf.mxu0
        %v4290 = vadd.f32 0.0, %v4289
        %v4291 = vpop.f32.mrf.mxu0
        %v4292 = vpop.f32.mrf.mxu0
        %v4293 = vadd.f32 0.0, %v4292
        %v4294 = vpop.f32.mrf.mxu0
        %4295 = vmatprep.mubr.bf16.mxu0 0
        %4296 = vmatmul.mubr.bf16.gmra.mxu0 %v4098
        %v4297 = vpop.f32.mrf.mxu0
        %v4298 = vadd.f32 0.0, %v4297
        %v4299 = vpop.f32.mrf.mxu0
        %v4300 = vpop.f32.mrf.mxu0
        %v4301 = vadd.f32 0.0, %v4300
        %v4302 = vpop.f32.mrf.mxu0
        %4303 = vmatprep.mubr.bf16.mxu0 0
        %4304 = vmatmul.mubr.bf16.gmra.mxu0 %v4101
        %v4305 = vpop.f32.mrf.mxu0
        %v4306 = vadd.f32 0.0, %v4305
        %v4307 = vpop.f32.mrf.mxu0
        %v4308 = vpop.f32.mrf.mxu0
        %v4309 = vadd.f32 0.0, %v4308
        %v4310 = vpop.f32.mrf.mxu0
        %4311 = vmatprep.mubr.bf16.mxu0 0
        %4312 = vmatmul.mubr.bf16.gmra.mxu0 %v4104
        %v4313 = vpop.f32.mrf.mxu0
        %v4314 = vadd.f32 0.0, %v4313
        %v4315 = vpop.f32.mrf.mxu0
        %v4316 = vpop.f32.mrf.mxu0
        %v4317 = vadd.f32 0.0, %v4316
        %v4318 = vpop.f32.mrf.mxu0
        %4319 = vmatprep.mubr.bf16.mxu0 0
        %4320 = vmatmul.mubr.bf16.gmra.mxu0 %v4107
        %v4321 = vpop.f32.mrf.mxu0
        %v4322 = vadd.f32 0.0, %v4321
        %v4323 = vpop.f32.mrf.mxu0
        %v4324 = vpop.f32.mrf.mxu0
        %v4325 = vadd.f32 0.0, %v4324
        %v4326 = vpop.f32.mrf.mxu0
        %4327 = vmatprep.mubr.bf16.mxu0 0
        %4328 = vmatmul.mubr.bf16.gmra.mxu0 %v4110
        %v4329 = vpop.f32.mrf.mxu0
        %v4330 = vadd.f32 0.0, %v4329
        %v4331 = vpop.f32.mrf.mxu0
        %v4332 = vpop.f32.mrf.mxu0
        %v4333 = vadd.f32 0.0, %v4332
        %v4334 = vpop.f32.mrf.mxu0
        %4335 = vmatprep.mubr.bf16.mxu0 0
        %4336 = vmatmul.mubr.bf16.gmra.mxu0 %v4113
        %v4337 = vpop.f32.mrf.mxu0
        %v4338 = vadd.f32 0.0, %v4337
        %v4339 = vpop.f32.mrf.mxu0
        %v4340 = vpop.f32.mrf.mxu0
        %v4341 = vadd.f32 0.0, %v4340
        %v4342 = vpop.f32.mrf.mxu0
        %4343 = vmatprep.mubr.bf16.mxu0 0
        %4344 = vmatmul.mubr.bf16.gmra.mxu0 %v4116
        %v4345 = vpop.f32.mrf.mxu0
        %v4346 = vadd.f32 0.0, %v4345
        %v4347 = vpop.f32.mrf.mxu0
        %v4348 = vpop.f32.mrf.mxu0
        %v4349 = vadd.f32 0.0, %v4348
        %v4350 = vpop.f32.mrf.mxu0
        %4351 = vmatprep.mubr.bf16.mxu0 0
        %4352 = vmatmul.mubr.bf16.gmra.mxu0 %v4119
        %v4353 = vpop.f32.mrf.mxu0
        %v4354 = vadd.f32 0.0, %v4353
        %v4355 = vpop.f32.mrf.mxu0
        %v4356 = vpop.f32.mrf.mxu0
        %v4357 = vadd.f32 0.0, %v4356
        %v4358 = vpop.f32.mrf.mxu0
        %4359 = vmatprep.mubr.bf16.mxu0 0
        %4360 = vmatmul.mubr.bf16.gmra.mxu0 %v4122
        %v4361 = vpop.f32.mrf.mxu0
        %v4362 = vadd.f32 0.0, %v4361
        %v4363 = vpop.f32.mrf.mxu0
        %v4364 = vpop.f32.mrf.mxu0
        %v4365 = vadd.f32 0.0, %v4364
        %v4366 = vpop.f32.mrf.mxu0
        %4367 = vmatprep.mubr.bf16.mxu0 0
        %4368 = vmatmul.mubr.bf16.gmra.mxu0 %v4125
        %v4369 = vpop.f32.mrf.mxu0
        %v4370 = vadd.f32 0.0, %v4369
        %v4371 = vpop.f32.mrf.mxu0
        %v4372 = vpop.f32.mrf.mxu0
        %v4373 = vadd.f32 0.0, %v4372
        %v4374 = vpop.f32.mrf.mxu0
        %4375 = vmatprep.mubr.bf16.mxu0 0
        %4376 = vmatmul.mubr.bf16.gmra.mxu0 %v4128
        %v4377 = vpop.f32.mrf.mxu0
        %v4378 = vadd.f32 0.0, %v4377
        %v4379 = vpop.f32.mrf.mxu0
        %v4380 = vpop.f32.mrf.mxu0
        %v4381 = vadd.f32 0.0, %v4380
        %v4382 = vpop.f32.mrf.mxu0
        %4383 = vmatprep.mubr.bf16.mxu0 0
        %4384 = vmatmul.mubr.bf16.gmra.mxu0 %v4131
        %v4385 = vpop.f32.mrf.mxu0
        %v4386 = vadd.f32 0.0, %v4385
        %v4387 = vpop.f32.mrf.mxu0
        %v4388 = vpop.f32.mrf.mxu0
        %v4389 = vadd.f32 0.0, %v4388
        %v4390 = vpop.f32.mrf.mxu0
        %4391 = vmatprep.mubr.bf16.mxu0 0
        %4392 = vmatmul.mubr.bf16.gmra.mxu0 %v4134
        %v4393 = vpop.f32.mrf.mxu0
        %v4394 = vadd.f32 0.0, %v4393
        %v4395 = vpop.f32.mrf.mxu0
        %v4396 = vpop.f32.mrf.mxu0
        %v4397 = vadd.f32 0.0, %v4396
        %v4398 = vpop.f32.mrf.mxu0
        %4399 = vmatprep.mubr.bf16.mxu0 0
        %4400 = vmatmul.mubr.bf16.gmra.mxu0 %v4137
        %v4401 = vpop.f32.mrf.mxu0
        %v4402 = vadd.f32 0.0, %v4401
        %v4403 = vpop.f32.mrf.mxu0
        %v4404 = vpop.f32.mrf.mxu0
        %v4405 = vadd.f32 0.0, %v4404
        %v4406 = vpop.f32.mrf.mxu0
        %4407 = vmatprep.mubr.bf16.mxu0 0
        %4408 = vmatmul.mubr.bf16.gmra.mxu0 %v4140
        %v4409 = vpop.f32.mrf.mxu0
        %v4410 = vadd.f32 0.0, %v4409
        %v4411 = vpop.f32.mrf.mxu0
        %v4412 = vpop.f32.mrf.mxu0
        %v4413 = vadd.f32 0.0, %v4412
        %v4414 = vpop.f32.mrf.mxu0
        %4415 = vmatprep.mubr.bf16.mxu0 0
        %4416 = vmatmul.mubr.bf16.gmra.mxu0 %v4143
        %v4417 = vpop.f32.mrf.mxu0
        %v4418 = vadd.f32 0.0, %v4417
        %v4419 = vpop.f32.mrf.mxu0
        %v4420 = vpop.f32.mrf.mxu0
        %v4421 = vadd.f32 0.0, %v4420
        %v4422 = vpop.f32.mrf.mxu0
        %4423 = vmatprep.mubr.bf16.mxu0 0
        %4424 = vmatmul.mubr.bf16.gmra.mxu0 %v4146
        %v4425 = vpop.f32.mrf.mxu0
        %v4426 = vadd.f32 0.0, %v4425
        %v4427 = vpop.f32.mrf.mxu0
        %v4428 = vpop.f32.mrf.mxu0
        %v4429 = vadd.f32 0.0, %v4428
        %v4430 = vpop.f32.mrf.mxu0
        %4431 = vmatprep.mubr.bf16.mxu0 0
        %4432 = vmatmul.mubr.bf16.gmra.mxu0 %v4149
        %v4433 = vpop.f32.mrf.mxu0
        %v4434 = vadd.f32 0.0, %v4433
        %v4435 = vpop.f32.mrf.mxu0
        %v4436 = vpop.f32.mrf.mxu0
        %v4437 = vadd.f32 0.0, %v4436
        %v4438 = vpop.f32.mrf.mxu0
        %4439 = vdwg.mxu0
        %v4440 = vadd.f32 %v3365, %v4186
        %v4441 = vadd.f32 %v3368, %v4189
        %v4442 = vadd.f32 %v3373, %v4194
        %v4443 = vadd.f32 %v3376, %v4197
        %v4444 = vadd.f32 %v3381, %v4202
        %v4445 = vadd.f32 %v3384, %v4205
        %v4446 = vadd.f32 %v3389, %v4210
        %v4447 = vadd.f32 %v3392, %v4213
        %v4448 = vadd.f32 %v3397, %v4218
        %v4449 = vadd.f32 %v3400, %v4221
        %v4450 = vadd.f32 %v3405, %v4226
        %v4451 = vadd.f32 %v3408, %v4229
        %v4452 = vadd.f32 %v3413, %v4234
        %v4453 = vadd.f32 %v3416, %v4237
        %v4454 = vadd.f32 %v3421, %v4242
        %v4455 = vadd.f32 %v3424, %v4245
        %v4456 = vadd.f32 %v3429, %v4250
        %v4457 = vadd.f32 %v3432, %v4253
        %v4458 = vadd.f32 %v3437, %v4258
        %v4459 = vadd.f32 %v3440, %v4261
        %v4460 = vadd.f32 %v3445, %v4266
        %v4461 = vadd.f32 %v3448, %v4269
        %v4462 = vadd.f32 %v3453, %v4274
        %v4463 = vadd.f32 %v3456, %v4277
        %v4464 = vadd.f32 %v3461, %v4282
        %v4465 = vadd.f32 %v3464, %v4285
        %v4466 = vadd.f32 %v3469, %v4290
        %v4467 = vadd.f32 %v3472, %v4293
        %v4468 = vadd.f32 %v3477, %v4298
        %v4469 = vadd.f32 %v3480, %v4301
        %v4470 = vadd.f32 %v3485, %v4306
        %v4471 = vadd.f32 %v3488, %v4309
        %v4472 = vadd.f32 %v3493, %v4314
        %v4473 = vadd.f32 %v3496, %v4317
        %v4474 = vadd.f32 %v3501, %v4322
        %v4475 = vadd.f32 %v3504, %v4325
        %v4476 = vadd.f32 %v3509, %v4330
        %v4477 = vadd.f32 %v3512, %v4333
        %v4478 = vadd.f32 %v3517, %v4338
        %v4479 = vadd.f32 %v3520, %v4341
        %v4480 = vadd.f32 %v3525, %v4346
        %v4481 = vadd.f32 %v3528, %v4349
        %v4482 = vadd.f32 %v3533, %v4354
        %v4483 = vadd.f32 %v3536, %v4357
        %v4484 = vadd.f32 %v3541, %v4362
        %v4485 = vadd.f32 %v3544, %v4365
        %v4486 = vadd.f32 %v3549, %v4370
        %v4487 = vadd.f32 %v3552, %v4373
        %v4488 = vadd.f32 %v3557, %v4378
        %v4489 = vadd.f32 %v3560, %v4381
        %v4490 = vadd.f32 %v3565, %v4386
        %v4491 = vadd.f32 %v3568, %v4389
        %v4492 = vadd.f32 %v3573, %v4394
        %v4493 = vadd.f32 %v3576, %v4397
        %v4494 = vadd.f32 %v3581, %v4402
        %v4495 = vadd.f32 %v3584, %v4405
        %v4496 = vadd.f32 %v3589, %v4410
        %v4497 = vadd.f32 %v3592, %v4413
        %v4498 = vadd.f32 %v3597, %v4418
        %v4499 = vadd.f32 %v3600, %v4421
        %v4500 = vadd.f32 %v3605, %v4426
        %v4501 = vadd.f32 %v3608, %v4429
        %v4502 = vadd.f32 %v3613, %v4434
        %v4503 = vadd.f32 %v3616, %v4437
        %s4504 = scalar_lea.vmem [#allocation2], 12
        %v4505 = vld [vmem:[%s4504] sm:$0xf]
        %v4506 = vld [vmem:[%s4504 + $0x4] sm:$0xf]
        %v4507 = vld [vmem:[%s4504 + $0xc] sm:$0xf]
        %v4508 = vld [vmem:[%s4504 + $0x10] sm:$0xf]
        %v4509 = vld [vmem:[%s4504 + $0x18] sm:$0xf]
        %v4510 = vld [vmem:[%s4504 + $0x1c] sm:$0xf]
        %v4511 = vld [vmem:[%s4504 + $0x24] sm:$0xf]
        %v4512 = vld [vmem:[%s4504 + $0x28] sm:$0xf]
        %v4513 = vld [vmem:[%s4504 + $0x30] sm:$0xf]
        %v4514 = vld [vmem:[%s4504 + $0x34] sm:$0xf]
        %v4515 = vld [vmem:[%s4504 + $0x3c] sm:$0xf]
        %v4516 = vld [vmem:[%s4504 + $0x40] sm:$0xf]
        %v4517 = vld [vmem:[%s4504 + $0x48] sm:$0xf]
        %v4518 = vld [vmem:[%s4504 + $0x4c] sm:$0xf]
        %v4519 = vld [vmem:[%s4504 + $0x54] sm:$0xf]
        %v4520 = vld [vmem:[%s4504 + $0x58] sm:$0xf]
        %v4521 = vld [vmem:[%s4504 + $0x60] sm:$0xf]
        %v4522 = vld [vmem:[%s4504 + $0x64] sm:$0xf]
        %v4523 = vld [vmem:[%s4504 + $0x6c] sm:$0xf]
        %v4524 = vld [vmem:[%s4504 + $0x70] sm:$0xf]
        %v4525 = vld [vmem:[%s4504 + $0x78] sm:$0xf]
        %v4526 = vld [vmem:[%s4504 + $0x7c] sm:$0xf]
        %v4527 = vld [vmem:[%s4504 + $0x84] sm:$0xf]
        %v4528 = vld [vmem:[%s4504 + $0x88] sm:$0xf]
        %v4529 = vld [vmem:[%s4504 + $0x90] sm:$0xf]
        %v4530 = vld [vmem:[%s4504 + $0x94] sm:$0xf]
        %v4531 = vld [vmem:[%s4504 + $0x9c] sm:$0xf]
        %v4532 = vld [vmem:[%s4504 + $0xa0] sm:$0xf]
        %v4533 = vld [vmem:[%s4504 + $0xa8] sm:$0xf]
        %v4534 = vld [vmem:[%s4504 + $0xac] sm:$0xf]
        %v4535 = vld [vmem:[%s4504 + $0xb4] sm:$0xf]
        %v4536 = vld [vmem:[%s4504 + $0xb8] sm:$0xf]
        %v4537 = vld [vmem:[%s4504 + $0xd8] sm:$0xf]
        %v4538 = vld [vmem:[%s4504 + $0xdc] sm:$0xf]
        %v4539 = vld [vmem:[%s4504 + $0xe4] sm:$0xf]
        %v4540 = vld [vmem:[%s4504 + $0xe8] sm:$0xf]
        %v4541 = vld [vmem:[%s4504 + $0xf0] sm:$0xf]
        %v4542 = vld [vmem:[%s4504 + $0xf4] sm:$0xf]
        %v4543 = vld [vmem:[%s4504 + $0xfc] sm:$0xf]
        %v4544 = vld [vmem:[%s4504 + $0x100] sm:$0xf]
        %v4545 = vld [vmem:[%s4504 + $0x108] sm:$0xf]
        %v4546 = vld [vmem:[%s4504 + $0x10c] sm:$0xf]
        %v4547 = vld [vmem:[%s4504 + $0x114] sm:$0xf]
        %v4548 = vld [vmem:[%s4504 + $0x118] sm:$0xf]
        %v4549 = vld [vmem:[%s4504 + $0x120] sm:$0xf]
        %v4550 = vld [vmem:[%s4504 + $0x124] sm:$0xf]
        %v4551 = vld [vmem:[%s4504 + $0x12c] sm:$0xf]
        %v4552 = vld [vmem:[%s4504 + $0x130] sm:$0xf]
        %v4553 = vld [vmem:[%s4504 + $0x138] sm:$0xf]
        %v4554 = vld [vmem:[%s4504 + $0x13c] sm:$0xf]
        %v4555 = vld [vmem:[%s4504 + $0x144] sm:$0xf]
        %v4556 = vld [vmem:[%s4504 + $0x148] sm:$0xf]
        %v4557 = vld [vmem:[%s4504 + $0x150] sm:$0xf]
        %v4558 = vld [vmem:[%s4504 + $0x154] sm:$0xf]
        %v4559 = vld [vmem:[%s4504 + $0x15c] sm:$0xf]
        %v4560 = vld [vmem:[%s4504 + $0x160] sm:$0xf]
        %v4561 = vld [vmem:[%s4504 + $0x168] sm:$0xf]
        %v4562 = vld [vmem:[%s4504 + $0x16c] sm:$0xf]
        %v4563 = vld [vmem:[%s4504 + $0x174] sm:$0xf]
        %v4564 = vld [vmem:[%s4504 + $0x178] sm:$0xf]
        %v4565 = vld [vmem:[%s4504 + $0x180] sm:$0xf]
        %v4566 = vld [vmem:[%s4504 + $0x184] sm:$0xf]
        %v4567 = vld [vmem:[%s4504 + $0x18c] sm:$0xf]
        %v4568 = vld [vmem:[%s4504 + $0x190] sm:$0xf]
        %s4569 = scalar_lea.vmem [#allocation6], 48
        %v4570 = vld [vmem:[%s4569] sm:$0xf]
        %v4571 = vld [vmem:[%s4569 + $0x4] sm:$0xf]
        %v4572 = vld [vmem:[%s4569 + $0x8] sm:$0xf]
        %v4573 = vld [vmem:[%s4569 + $0xc] sm:$0xf]
        %v4638 = vunpack.c.l.b16 %v4505
        %v4639 = vunpack.c.l.b16 %v4506
        %v4640 = vunpack.c.l.b16 %v4507
        %v4641 = vunpack.c.l.b16 %v4508
        %v4642 = vunpack.c.l.b16 %v4509
        %v4643 = vunpack.c.l.b16 %v4510
        %v4644 = vunpack.c.l.b16 %v4511
        %v4645 = vunpack.c.l.b16 %v4512
        %v4646 = vunpack.c.l.b16 %v4513
        %v4647 = vunpack.c.l.b16 %v4514
        %v4648 = vunpack.c.l.b16 %v4515
        %v4649 = vunpack.c.l.b16 %v4516
        %v4650 = vunpack.c.l.b16 %v4517
        %v4651 = vunpack.c.l.b16 %v4518
        %v4652 = vunpack.c.l.b16 %v4519
        %v4653 = vunpack.c.l.b16 %v4520
        %v4654 = vunpack.c.l.b16 %v4521
        %v4655 = vunpack.c.l.b16 %v4522
        %v4656 = vunpack.c.l.b16 %v4523
        %v4657 = vunpack.c.l.b16 %v4524
        %v4658 = vunpack.c.l.b16 %v4525
        %v4659 = vunpack.c.l.b16 %v4526
        %v4660 = vunpack.c.l.b16 %v4527
        %v4661 = vunpack.c.l.b16 %v4528
        %v4662 = vunpack.c.l.b16 %v4529
        %v4663 = vunpack.c.l.b16 %v4530
        %v4664 = vunpack.c.l.b16 %v4531
        %v4665 = vunpack.c.l.b16 %v4532
        %v4666 = vunpack.c.l.b16 %v4533
        %v4667 = vunpack.c.l.b16 %v4534
        %v4668 = vunpack.c.l.b16 %v4535
        %v4669 = vunpack.c.l.b16 %v4536
        %v4670 = vunpack.c.l.b16 %v4537
        %v4671 = vunpack.c.l.b16 %v4538
        %v4672 = vunpack.c.l.b16 %v4539
        %v4673 = vunpack.c.l.b16 %v4540
        %v4674 = vunpack.c.l.b16 %v4541
        %v4675 = vunpack.c.l.b16 %v4542
        %v4676 = vunpack.c.l.b16 %v4543
        %v4677 = vunpack.c.l.b16 %v4544
        %v4678 = vunpack.c.l.b16 %v4545
        %v4679 = vunpack.c.l.b16 %v4546
        %v4680 = vunpack.c.l.b16 %v4547
        %v4681 = vunpack.c.l.b16 %v4548
        %v4682 = vunpack.c.l.b16 %v4549
        %v4683 = vunpack.c.l.b16 %v4550
        %v4684 = vunpack.c.l.b16 %v4551
        %v4685 = vunpack.c.l.b16 %v4552
        %v4686 = vunpack.c.l.b16 %v4553
        %v4687 = vunpack.c.l.b16 %v4554
        %v4688 = vunpack.c.l.b16 %v4555
        %v4689 = vunpack.c.l.b16 %v4556
        %v4690 = vunpack.c.l.b16 %v4557
        %v4691 = vunpack.c.l.b16 %v4558
        %v4692 = vunpack.c.l.b16 %v4559
        %v4693 = vunpack.c.l.b16 %v4560
        %v4694 = vunpack.c.l.b16 %v4561
        %v4695 = vunpack.c.l.b16 %v4562
        %v4696 = vunpack.c.l.b16 %v4563
        %v4697 = vunpack.c.l.b16 %v4564
        %v4698 = vunpack.c.l.b16 %v4565
        %v4699 = vunpack.c.l.b16 %v4566
        %v4700 = vunpack.c.l.b16 %v4567
        %v4701 = vunpack.c.l.b16 %v4568
        %v4702 = vpack.c.b16 %v4639, %v4638
        %v4703 = vpack.c.b16 %v4641, %v4640
        %v4704 = vpack.c.b16 %v4643, %v4642
        %v4705 = vpack.c.b16 %v4645, %v4644
        %v4706 = vpack.c.b16 %v4647, %v4646
        %v4707 = vpack.c.b16 %v4649, %v4648
        %v4708 = vpack.c.b16 %v4651, %v4650
        %v4709 = vpack.c.b16 %v4653, %v4652
        %v4710 = vpack.c.b16 %v4655, %v4654
        %v4711 = vpack.c.b16 %v4657, %v4656
        %v4712 = vpack.c.b16 %v4659, %v4658
        %v4713 = vpack.c.b16 %v4661, %v4660
        %v4714 = vpack.c.b16 %v4663, %v4662
        %v4715 = vpack.c.b16 %v4665, %v4664
        %v4716 = vpack.c.b16 %v4667, %v4666
        %v4717 = vpack.c.b16 %v4669, %v4668
        %v4718 = vpack.c.b16 %v4671, %v4670
        %v4719 = vpack.c.b16 %v4673, %v4672
        %v4720 = vpack.c.b16 %v4675, %v4674
        %v4721 = vpack.c.b16 %v4677, %v4676
        %v4722 = vpack.c.b16 %v4679, %v4678
        %v4723 = vpack.c.b16 %v4681, %v4680
        %v4724 = vpack.c.b16 %v4683, %v4682
        %v4725 = vpack.c.b16 %v4685, %v4684
        %v4726 = vpack.c.b16 %v4687, %v4686
        %v4727 = vpack.c.b16 %v4689, %v4688
        %v4728 = vpack.c.b16 %v4691, %v4690
        %v4729 = vpack.c.b16 %v4693, %v4692
        %v4730 = vpack.c.b16 %v4695, %v4694
        %v4731 = vpack.c.b16 %v4697, %v4696
        %v4732 = vpack.c.b16 %v4699, %v4698
        %v4733 = vpack.c.b16 %v4701, %v4700
        %v4738 = vunpack.c.l.b16 %v4570
        %v4739 = vunpack.c.l.b16 %v4571
        %v4740 = vunpack.c.l.b16 %v4572
        %v4741 = vunpack.c.l.b16 %v4573
        %v4742 = vpack.c.b16 %v4739, %v4738
        %v4743 = vpack.c.b16 %v4741, %v4740
        %v4747 = vsel %vm2676, %v4702, 0
        %v4750 = vsel %vm2676, %v4703, 0
        %v4753 = vsel %vm2676, %v4704, 0
        %v4756 = vsel %vm2676, %v4705, 0
        %v4759 = vsel %vm2676, %v4706, 0
        %v4762 = vsel %vm2676, %v4707, 0
        %v4765 = vsel %vm2676, %v4708, 0
        %v4768 = vsel %vm2676, %v4709, 0
        %v4771 = vsel %vm2676, %v4710, 0
        %v4774 = vsel %vm2676, %v4711, 0
        %v4777 = vsel %vm2676, %v4712, 0
        %v4780 = vsel %vm2676, %v4713, 0
        %v4783 = vsel %vm2676, %v4714, 0
        %v4786 = vsel %vm2676, %v4715, 0
        %v4789 = vsel %vm2676, %v4716, 0
        %v4792 = vsel %vm2676, %v4717, 0
        %v4795 = vsel %vm2676, %v4718, 0
        %v4798 = vsel %vm2676, %v4719, 0
        %v4801 = vsel %vm2676, %v4720, 0
        %v4804 = vsel %vm2676, %v4721, 0
        %v4807 = vsel %vm2676, %v4722, 0
        %v4810 = vsel %vm2676, %v4723, 0
        %v4813 = vsel %vm2676, %v4724, 0
        %v4816 = vsel %vm2676, %v4725, 0
        %v4819 = vsel %vm2676, %v4726, 0
        %v4822 = vsel %vm2676, %v4727, 0
        %v4825 = vsel %vm2676, %v4728, 0
        %v4828 = vsel %vm2676, %v4729, 0
        %v4831 = vsel %vm2676, %v4730, 0
        %v4834 = vsel %vm2676, %v4731, 0
        %v4837 = vsel %vm2676, %v4732, 0
        %v4840 = vsel %vm2676, %v4733, 0
        %4842 = vmatprep.subr.bf16.mxu0 0
        %4843 = vmatpush1.bf16.msra.mxu0 0
        %4844 = vmatprep.subr.bf16.mxu0 0
        %4845 = vmatpush1.bf16.msra.mxu0 0
        %4846 = vmatprep.subr.bf16.mxu0 0
        %4847 = vmatpush1.bf16.msra.mxu0 0
        %4848 = vmatprep.subr.bf16.mxu0 0
        %4849 = vmatpush1.bf16.msra.mxu0 0
        %4850 = vmatprep.subr.bf16.mxu0 0
        %4851 = vmatpush1.bf16.msra.mxu0 0
        %4852 = vmatprep.subr.bf16.mxu0 0
        %4853 = vmatpush1.bf16.msra.mxu0 0
        %4854 = vmatprep.subr.bf16.mxu0 0
        %4855 = vmatpush1.bf16.msra.mxu0 %v4743
        %4856 = vmatprep.subr.bf16.mxu0 0
        %4857 = vmatpush1.bf16.msra.mxu0 %v4742
        %4858 = vmatprep.subr.bf16.mxu0 0
        %4859 = vmatpush2.bf16.msra.mxu0 0
        %4860 = vmatprep.subr.bf16.mxu0 0
        %4861 = vmatpush2.bf16.msra.mxu0 0
        %4862 = vmatprep.subr.bf16.mxu0 0
        %4863 = vmatpush2.bf16.msra.mxu0 0
        %4864 = vmatprep.subr.bf16.mxu0 0
        %4865 = vmatpush2.bf16.msra.mxu0 0
        %4866 = vmatprep.subr.bf16.mxu0 0
        %4867 = vmatpush2.bf16.msra.mxu0 0
        %4868 = vmatprep.subr.bf16.mxu0 0
        %4869 = vmatpush2.bf16.msra.mxu0 0
        %4870 = vmatprep.subr.bf16.mxu0 0
        %4871 = vmatpush2.bf16.msra.mxu0 0
        %4872 = vmatprep.subr.bf16.mxu0 0
        %4873 = vmatpush2.bf16.msra.mxu0 0
        %4874 = vmatprep.mubr.bf16.mxu0 0
        %4875 = vmatmul.mubr.bf16.gmra.mxu0 %v4747
        %v4876 = vpop.f32.mrf.mxu0
        %v4877 = vadd.f32 0.0, %v4876
        %v4878 = vpop.f32.mrf.mxu0
        %v4879 = vpop.f32.mrf.mxu0
        %v4880 = vadd.f32 0.0, %v4879
        %v4881 = vpop.f32.mrf.mxu0
        %4882 = vmatprep.mubr.bf16.mxu0 0
        %4883 = vmatmul.mubr.bf16.gmra.mxu0 %v4750
        %v4884 = vpop.f32.mrf.mxu0
        %v4885 = vadd.f32 0.0, %v4884
        %v4886 = vpop.f32.mrf.mxu0
        %v4887 = vpop.f32.mrf.mxu0
        %v4888 = vadd.f32 0.0, %v4887
        %v4889 = vpop.f32.mrf.mxu0
        %4890 = vmatprep.mubr.bf16.mxu0 0
        %4891 = vmatmul.mubr.bf16.gmra.mxu0 %v4753
        %v4892 = vpop.f32.mrf.mxu0
        %v4893 = vadd.f32 0.0, %v4892
        %v4894 = vpop.f32.mrf.mxu0
        %v4895 = vpop.f32.mrf.mxu0
        %v4896 = vadd.f32 0.0, %v4895
        %v4897 = vpop.f32.mrf.mxu0
        %4898 = vmatprep.mubr.bf16.mxu0 0
        %4899 = vmatmul.mubr.bf16.gmra.mxu0 %v4756
        %v4900 = vpop.f32.mrf.mxu0
        %v4901 = vadd.f32 0.0, %v4900
        %v4902 = vpop.f32.mrf.mxu0
        %v4903 = vpop.f32.mrf.mxu0
        %v4904 = vadd.f32 0.0, %v4903
        %v4905 = vpop.f32.mrf.mxu0
        %4906 = vmatprep.mubr.bf16.mxu0 0
        %4907 = vmatmul.mubr.bf16.gmra.mxu0 %v4759
        %v4908 = vpop.f32.mrf.mxu0
        %v4909 = vadd.f32 0.0, %v4908
        %v4910 = vpop.f32.mrf.mxu0
        %v4911 = vpop.f32.mrf.mxu0
        %v4912 = vadd.f32 0.0, %v4911
        %v4913 = vpop.f32.mrf.mxu0
        %4914 = vmatprep.mubr.bf16.mxu0 0
        %4915 = vmatmul.mubr.bf16.gmra.mxu0 %v4762
        %v4916 = vpop.f32.mrf.mxu0
        %v4917 = vadd.f32 0.0, %v4916
        %v4918 = vpop.f32.mrf.mxu0
        %v4919 = vpop.f32.mrf.mxu0
        %v4920 = vadd.f32 0.0, %v4919
        %v4921 = vpop.f32.mrf.mxu0
        %4922 = vmatprep.mubr.bf16.mxu0 0
        %4923 = vmatmul.mubr.bf16.gmra.mxu0 %v4765
        %v4924 = vpop.f32.mrf.mxu0
        %v4925 = vadd.f32 0.0, %v4924
        %v4926 = vpop.f32.mrf.mxu0
        %v4927 = vpop.f32.mrf.mxu0
        %v4928 = vadd.f32 0.0, %v4927
        %v4929 = vpop.f32.mrf.mxu0
        %4930 = vmatprep.mubr.bf16.mxu0 0
        %4931 = vmatmul.mubr.bf16.gmra.mxu0 %v4768
        %v4932 = vpop.f32.mrf.mxu0
        %v4933 = vadd.f32 0.0, %v4932
        %v4934 = vpop.f32.mrf.mxu0
        %v4935 = vpop.f32.mrf.mxu0
        %v4936 = vadd.f32 0.0, %v4935
        %v4937 = vpop.f32.mrf.mxu0
        %4938 = vmatprep.mubr.bf16.mxu0 0
        %4939 = vmatmul.mubr.bf16.gmra.mxu0 %v4771
        %v4940 = vpop.f32.mrf.mxu0
        %v4941 = vadd.f32 0.0, %v4940
        %v4942 = vpop.f32.mrf.mxu0
        %v4943 = vpop.f32.mrf.mxu0
        %v4944 = vadd.f32 0.0, %v4943
        %v4945 = vpop.f32.mrf.mxu0
        %4946 = vmatprep.mubr.bf16.mxu0 0
        %4947 = vmatmul.mubr.bf16.gmra.mxu0 %v4774
        %v4948 = vpop.f32.mrf.mxu0
        %v4949 = vadd.f32 0.0, %v4948
        %v4950 = vpop.f32.mrf.mxu0
        %v4951 = vpop.f32.mrf.mxu0
        %v4952 = vadd.f32 0.0, %v4951
        %v4953 = vpop.f32.mrf.mxu0
        %4954 = vmatprep.mubr.bf16.mxu0 0
        %4955 = vmatmul.mubr.bf16.gmra.mxu0 %v4777
        %v4956 = vpop.f32.mrf.mxu0
        %v4957 = vadd.f32 0.0, %v4956
        %v4958 = vpop.f32.mrf.mxu0
        %v4959 = vpop.f32.mrf.mxu0
        %v4960 = vadd.f32 0.0, %v4959
        %v4961 = vpop.f32.mrf.mxu0
        %4962 = vmatprep.mubr.bf16.mxu0 0
        %4963 = vmatmul.mubr.bf16.gmra.mxu0 %v4780
        %v4964 = vpop.f32.mrf.mxu0
        %v4965 = vadd.f32 0.0, %v4964
        %v4966 = vpop.f32.mrf.mxu0
        %v4967 = vpop.f32.mrf.mxu0
        %v4968 = vadd.f32 0.0, %v4967
        %v4969 = vpop.f32.mrf.mxu0
        %4970 = vmatprep.mubr.bf16.mxu0 0
        %4971 = vmatmul.mubr.bf16.gmra.mxu0 %v4783
        %v4972 = vpop.f32.mrf.mxu0
        %v4973 = vadd.f32 0.0, %v4972
        %v4974 = vpop.f32.mrf.mxu0
        %v4975 = vpop.f32.mrf.mxu0
        %v4976 = vadd.f32 0.0, %v4975
        %v4977 = vpop.f32.mrf.mxu0
        %4978 = vmatprep.mubr.bf16.mxu0 0
        %4979 = vmatmul.mubr.bf16.gmra.mxu0 %v4786
        %v4980 = vpop.f32.mrf.mxu0
        %v4981 = vadd.f32 0.0, %v4980
        %v4982 = vpop.f32.mrf.mxu0
        %v4983 = vpop.f32.mrf.mxu0
        %v4984 = vadd.f32 0.0, %v4983
        %v4985 = vpop.f32.mrf.mxu0
        %4986 = vmatprep.mubr.bf16.mxu0 0
        %4987 = vmatmul.mubr.bf16.gmra.mxu0 %v4789
        %v4988 = vpop.f32.mrf.mxu0
        %v4989 = vadd.f32 0.0, %v4988
        %v4990 = vpop.f32.mrf.mxu0
        %v4991 = vpop.f32.mrf.mxu0
        %v4992 = vadd.f32 0.0, %v4991
        %v4993 = vpop.f32.mrf.mxu0
        %4994 = vmatprep.mubr.bf16.mxu0 0
        %4995 = vmatmul.mubr.bf16.gmra.mxu0 %v4792
        %v4996 = vpop.f32.mrf.mxu0
        %v4997 = vadd.f32 0.0, %v4996
        %v4998 = vpop.f32.mrf.mxu0
        %v4999 = vpop.f32.mrf.mxu0
        %v5000 = vadd.f32 0.0, %v4999
        %v5001 = vpop.f32.mrf.mxu0
        %5002 = vmatprep.mubr.bf16.mxu0 0
        %5003 = vmatmul.mubr.bf16.gmra.mxu0 %v4795
        %v5004 = vpop.f32.mrf.mxu0
        %v5005 = vadd.f32 0.0, %v5004
        %v5006 = vpop.f32.mrf.mxu0
        %v5007 = vpop.f32.mrf.mxu0
        %v5008 = vadd.f32 0.0, %v5007
        %v5009 = vpop.f32.mrf.mxu0
        %5010 = vmatprep.mubr.bf16.mxu0 0
        %5011 = vmatmul.mubr.bf16.gmra.mxu0 %v4798
        %v5012 = vpop.f32.mrf.mxu0
        %v5013 = vadd.f32 0.0, %v5012
        %v5014 = vpop.f32.mrf.mxu0
        %v5015 = vpop.f32.mrf.mxu0
        %v5016 = vadd.f32 0.0, %v5015
        %v5017 = vpop.f32.mrf.mxu0
        %5018 = vmatprep.mubr.bf16.mxu0 0
        %5019 = vmatmul.mubr.bf16.gmra.mxu0 %v4801
        %v5020 = vpop.f32.mrf.mxu0
        %v5021 = vadd.f32 0.0, %v5020
        %v5022 = vpop.f32.mrf.mxu0
        %v5023 = vpop.f32.mrf.mxu0
        %v5024 = vadd.f32 0.0, %v5023
        %v5025 = vpop.f32.mrf.mxu0
        %5026 = vmatprep.mubr.bf16.mxu0 0
        %5027 = vmatmul.mubr.bf16.gmra.mxu0 %v4804
        %v5028 = vpop.f32.mrf.mxu0
        %v5029 = vadd.f32 0.0, %v5028
        %v5030 = vpop.f32.mrf.mxu0
        %v5031 = vpop.f32.mrf.mxu0
        %v5032 = vadd.f32 0.0, %v5031
        %v5033 = vpop.f32.mrf.mxu0
        %5034 = vmatprep.mubr.bf16.mxu0 0
        %5035 = vmatmul.mubr.bf16.gmra.mxu0 %v4807
        %v5036 = vpop.f32.mrf.mxu0
        %v5037 = vadd.f32 0.0, %v5036
        %v5038 = vpop.f32.mrf.mxu0
        %v5039 = vpop.f32.mrf.mxu0
        %v5040 = vadd.f32 0.0, %v5039
        %v5041 = vpop.f32.mrf.mxu0
        %5042 = vmatprep.mubr.bf16.mxu0 0
        %5043 = vmatmul.mubr.bf16.gmra.mxu0 %v4810
        %v5044 = vpop.f32.mrf.mxu0
        %v5045 = vadd.f32 0.0, %v5044
        %v5046 = vpop.f32.mrf.mxu0
        %v5047 = vpop.f32.mrf.mxu0
        %v5048 = vadd.f32 0.0, %v5047
        %v5049 = vpop.f32.mrf.mxu0
        %5050 = vmatprep.mubr.bf16.mxu0 0
        %5051 = vmatmul.mubr.bf16.gmra.mxu0 %v4813
        %v5052 = vpop.f32.mrf.mxu0
        %v5053 = vadd.f32 0.0, %v5052
        %v5054 = vpop.f32.mrf.mxu0
        %v5055 = vpop.f32.mrf.mxu0
        %v5056 = vadd.f32 0.0, %v5055
        %v5057 = vpop.f32.mrf.mxu0
        %5058 = vmatprep.mubr.bf16.mxu0 0
        %5059 = vmatmul.mubr.bf16.gmra.mxu0 %v4816
        %v5060 = vpop.f32.mrf.mxu0
        %v5061 = vadd.f32 0.0, %v5060
        %v5062 = vpop.f32.mrf.mxu0
        %v5063 = vpop.f32.mrf.mxu0
        %v5064 = vadd.f32 0.0, %v5063
        %v5065 = vpop.f32.mrf.mxu0
        %5066 = vmatprep.mubr.bf16.mxu0 0
        %5067 = vmatmul.mubr.bf16.gmra.mxu0 %v4819
        %v5068 = vpop.f32.mrf.mxu0
        %v5069 = vadd.f32 0.0, %v5068
        %v5070 = vpop.f32.mrf.mxu0
        %v5071 = vpop.f32.mrf.mxu0
        %v5072 = vadd.f32 0.0, %v5071
        %v5073 = vpop.f32.mrf.mxu0
        %5074 = vmatprep.mubr.bf16.mxu0 0
        %5075 = vmatmul.mubr.bf16.gmra.mxu0 %v4822
        %v5076 = vpop.f32.mrf.mxu0
        %v5077 = vadd.f32 0.0, %v5076
        %v5078 = vpop.f32.mrf.mxu0
        %v5079 = vpop.f32.mrf.mxu0
        %v5080 = vadd.f32 0.0, %v5079
        %v5081 = vpop.f32.mrf.mxu0
        %5082 = vmatprep.mubr.bf16.mxu0 0
        %5083 = vmatmul.mubr.bf16.gmra.mxu0 %v4825
        %v5084 = vpop.f32.mrf.mxu0
        %v5085 = vadd.f32 0.0, %v5084
        %v5086 = vpop.f32.mrf.mxu0
        %v5087 = vpop.f32.mrf.mxu0
        %v5088 = vadd.f32 0.0, %v5087
        %v5089 = vpop.f32.mrf.mxu0
        %5090 = vmatprep.mubr.bf16.mxu0 0
        %5091 = vmatmul.mubr.bf16.gmra.mxu0 %v4828
        %v5092 = vpop.f32.mrf.mxu0
        %v5093 = vadd.f32 0.0, %v5092
        %v5094 = vpop.f32.mrf.mxu0
        %v5095 = vpop.f32.mrf.mxu0
        %v5096 = vadd.f32 0.0, %v5095
        %v5097 = vpop.f32.mrf.mxu0
        %5098 = vmatprep.mubr.bf16.mxu0 0
        %5099 = vmatmul.mubr.bf16.gmra.mxu0 %v4831
        %v5100 = vpop.f32.mrf.mxu0
        %v5101 = vadd.f32 0.0, %v5100
        %v5102 = vpop.f32.mrf.mxu0
        %v5103 = vpop.f32.mrf.mxu0
        %v5104 = vadd.f32 0.0, %v5103
        %v5105 = vpop.f32.mrf.mxu0
        %5106 = vmatprep.mubr.bf16.mxu0 0
        %5107 = vmatmul.mubr.bf16.gmra.mxu0 %v4834
        %v5108 = vpop.f32.mrf.mxu0
        %v5109 = vadd.f32 0.0, %v5108
        %v5110 = vpop.f32.mrf.mxu0
        %v5111 = vpop.f32.mrf.mxu0
        %v5112 = vadd.f32 0.0, %v5111
        %v5113 = vpop.f32.mrf.mxu0
        %5114 = vmatprep.mubr.bf16.mxu0 0
        %5115 = vmatmul.mubr.bf16.gmra.mxu0 %v4837
        %v5116 = vpop.f32.mrf.mxu0
        %v5117 = vadd.f32 0.0, %v5116
        %v5118 = vpop.f32.mrf.mxu0
        %v5119 = vpop.f32.mrf.mxu0
        %v5120 = vadd.f32 0.0, %v5119
        %v5121 = vpop.f32.mrf.mxu0
        %5122 = vmatprep.mubr.bf16.mxu0 0
        %5123 = vmatmul.mubr.bf16.gmra.mxu0 %v4840
        %v5124 = vpop.f32.mrf.mxu0
        %v5125 = vadd.f32 0.0, %v5124
        %v5126 = vpop.f32.mrf.mxu0
        %v5127 = vpop.f32.mrf.mxu0
        %v5128 = vadd.f32 0.0, %v5127
        %v5129 = vpop.f32.mrf.mxu0
        %5130 = vdwg.mxu0
        %v5131 = vadd.f32 %v4440, %v4877
        %v5132 = vadd.f32 %v4441, %v4880
        %v5133 = vadd.f32 %v4442, %v4885
        %v5134 = vadd.f32 %v4443, %v4888
        %v5135 = vadd.f32 %v4444, %v4893
        %v5136 = vadd.f32 %v4445, %v4896
        %v5137 = vadd.f32 %v4446, %v4901
        %v5138 = vadd.f32 %v4447, %v4904
        %v5139 = vadd.f32 %v4448, %v4909
        %v5140 = vadd.f32 %v4449, %v4912
        %v5141 = vadd.f32 %v4450, %v4917
        %v5142 = vadd.f32 %v4451, %v4920
        %v5143 = vadd.f32 %v4452, %v4925
        %v5144 = vadd.f32 %v4453, %v4928
        %v5145 = vadd.f32 %v4454, %v4933
        %v5146 = vadd.f32 %v4455, %v4936
        %v5147 = vadd.f32 %v4456, %v4941
        %v5148 = vadd.f32 %v4457, %v4944
        %v5149 = vadd.f32 %v4458, %v4949
        %v5150 = vadd.f32 %v4459, %v4952
        %v5151 = vadd.f32 %v4460, %v4957
        %v5152 = vadd.f32 %v4461, %v4960
        %v5153 = vadd.f32 %v4462, %v4965
        %v5154 = vadd.f32 %v4463, %v4968
        %v5155 = vadd.f32 %v4464, %v4973
        %v5156 = vadd.f32 %v4465, %v4976
        %v5157 = vadd.f32 %v4466, %v4981
        %v5158 = vadd.f32 %v4467, %v4984
        %v5159 = vadd.f32 %v4468, %v4989
        %v5160 = vadd.f32 %v4469, %v4992
        %v5161 = vadd.f32 %v4470, %v4997
        %v5162 = vadd.f32 %v4471, %v5000
        %v5163 = vadd.f32 %v4472, %v5005
        %v5164 = vadd.f32 %v4473, %v5008
        %v5165 = vadd.f32 %v4474, %v5013
        %v5166 = vadd.f32 %v4475, %v5016
        %v5167 = vadd.f32 %v4476, %v5021
        %v5168 = vadd.f32 %v4477, %v5024
        %v5169 = vadd.f32 %v4478, %v5029
        %v5170 = vadd.f32 %v4479, %v5032
        %v5171 = vadd.f32 %v4480, %v5037
        %v5172 = vadd.f32 %v4481, %v5040
        %v5173 = vadd.f32 %v4482, %v5045
        %v5174 = vadd.f32 %v4483, %v5048
        %v5175 = vadd.f32 %v4484, %v5053
        %v5176 = vadd.f32 %v4485, %v5056
        %v5177 = vadd.f32 %v4486, %v5061
        %v5178 = vadd.f32 %v4487, %v5064
        %v5179 = vadd.f32 %v4488, %v5069
        %v5180 = vadd.f32 %v4489, %v5072
        %v5181 = vadd.f32 %v4490, %v5077
        %v5182 = vadd.f32 %v4491, %v5080
        %v5183 = vadd.f32 %v4492, %v5085
        %v5184 = vadd.f32 %v4493, %v5088
        %v5185 = vadd.f32 %v4494, %v5093
        %v5186 = vadd.f32 %v4495, %v5096
        %v5187 = vadd.f32 %v4496, %v5101
        %v5188 = vadd.f32 %v4497, %v5104
        %v5189 = vadd.f32 %v4498, %v5109
        %v5190 = vadd.f32 %v4499, %v5112
        %v5191 = vadd.f32 %v4500, %v5117
        %v5192 = vadd.f32 %v4501, %v5120
        %v5193 = vadd.f32 %v4502, %v5125
        %v5194 = vadd.f32 %v4503, %v5128
        %v5195 = vld [vmem:[%s4504] sm:$0xf]
        %v5196 = vld [vmem:[%s4504 + $0x4] sm:$0xf]
        %v5197 = vld [vmem:[%s4504 + $0x8] sm:$0x1]
        %v5198 = vld [vmem:[%s4504 + $0xc] sm:$0xf]
        %v5199 = vld [vmem:[%s4504 + $0x10] sm:$0xf]
        %v5200 = vld [vmem:[%s4504 + $0x14] sm:$0x1]
        %v5201 = vld [vmem:[%s4504 + $0x18] sm:$0xf]
        %v5202 = vld [vmem:[%s4504 + $0x1c] sm:$0xf]
        %v5203 = vld [vmem:[%s4504 + $0x20] sm:$0x1]
        %v5204 = vld [vmem:[%s4504 + $0x24] sm:$0xf]
        %v5205 = vld [vmem:[%s4504 + $0x28] sm:$0xf]
        %v5206 = vld [vmem:[%s4504 + $0x2c] sm:$0x1]
        %v5207 = vld [vmem:[%s4504 + $0x30] sm:$0xf]
        %v5208 = vld [vmem:[%s4504 + $0x34] sm:$0xf]
        %v5209 = vld [vmem:[%s4504 + $0x38] sm:$0x1]
        %v5210 = vld [vmem:[%s4504 + $0x3c] sm:$0xf]
        %v5211 = vld [vmem:[%s4504 + $0x40] sm:$0xf]
        %v5212 = vld [vmem:[%s4504 + $0x44] sm:$0x1]
        %v5213 = vld [vmem:[%s4504 + $0x48] sm:$0xf]
        %v5214 = vld [vmem:[%s4504 + $0x4c] sm:$0xf]
        %v5215 = vld [vmem:[%s4504 + $0x50] sm:$0x1]
        %v5216 = vld [vmem:[%s4504 + $0x54] sm:$0xf]
        %v5217 = vld [vmem:[%s4504 + $0x58] sm:$0xf]
        %v5218 = vld [vmem:[%s4504 + $0x5c] sm:$0x1]
        %v5219 = vld [vmem:[%s4504 + $0x60] sm:$0xf]
        %v5220 = vld [vmem:[%s4504 + $0x64] sm:$0xf]
        %v5221 = vld [vmem:[%s4504 + $0x68] sm:$0x1]
        %v5222 = vld [vmem:[%s4504 + $0x6c] sm:$0xf]
        %v5223 = vld [vmem:[%s4504 + $0x70] sm:$0xf]
        %v5224 = vld [vmem:[%s4504 + $0x74] sm:$0x1]
        %v5225 = vld [vmem:[%s4504 + $0x78] sm:$0xf]
        %v5226 = vld [vmem:[%s4504 + $0x7c] sm:$0xf]
        %v5227 = vld [vmem:[%s4504 + $0x80] sm:$0x1]
        %v5228 = vld [vmem:[%s4504 + $0x84] sm:$0xf]
        %v5229 = vld [vmem:[%s4504 + $0x88] sm:$0xf]
        %v5230 = vld [vmem:[%s4504 + $0x8c] sm:$0x1]
        %v5231 = vld [vmem:[%s4504 + $0x90] sm:$0xf]
        %v5232 = vld [vmem:[%s4504 + $0x94] sm:$0xf]
        %v5233 = vld [vmem:[%s4504 + $0x98] sm:$0x1]
        %v5234 = vld [vmem:[%s4504 + $0x9c] sm:$0xf]
        %v5235 = vld [vmem:[%s4504 + $0xa0] sm:$0xf]
        %v5236 = vld [vmem:[%s4504 + $0xa4] sm:$0x1]
        %v5237 = vld [vmem:[%s4504 + $0xa8] sm:$0xf]
        %v5238 = vld [vmem:[%s4504 + $0xac] sm:$0xf]
        %v5239 = vld [vmem:[%s4504 + $0xb0] sm:$0x1]
        %v5240 = vld [vmem:[%s4504 + $0xb4] sm:$0xf]
        %v5241 = vld [vmem:[%s4504 + $0xb8] sm:$0xf]
        %v5242 = vld [vmem:[%s4504 + $0xbc] sm:$0x1]
        %v5243 = vld [vmem:[%s4504 + $0xd8] sm:$0xf]
        %v5244 = vld [vmem:[%s4504 + $0xdc] sm:$0xf]
        %v5245 = vld [vmem:[%s4504 + $0xe0] sm:$0x1]
        %v5246 = vld [vmem:[%s4504 + $0xe4] sm:$0xf]
        %v5247 = vld [vmem:[%s4504 + $0xe8] sm:$0xf]
        %v5248 = vld [vmem:[%s4504 + $0xec] sm:$0x1]
        %v5249 = vld [vmem:[%s4504 + $0xf0] sm:$0xf]
        %v5250 = vld [vmem:[%s4504 + $0xf4] sm:$0xf]
        %v5251 = vld [vmem:[%s4504 + $0xf8] sm:$0x1]
        %v5252 = vld [vmem:[%s4504 + $0xfc] sm:$0xf]
        %v5253 = vld [vmem:[%s4504 + $0x100] sm:$0xf]
        %v5254 = vld [vmem:[%s4504 + $0x104] sm:$0x1]
        %v5255 = vld [vmem:[%s4504 + $0x108] sm:$0xf]
        %v5256 = vld [vmem:[%s4504 + $0x10c] sm:$0xf]
        %v5257 = vld [vmem:[%s4504 + $0x110] sm:$0x1]
        %v5258 = vld [vmem:[%s4504 + $0x114] sm:$0xf]
        %v5259 = vld [vmem:[%s4504 + $0x118] sm:$0xf]
        %v5260 = vld [vmem:[%s4504 + $0x11c] sm:$0x1]
        %v5261 = vld [vmem:[%s4504 + $0x120] sm:$0xf]
        %v5262 = vld [vmem:[%s4504 + $0x124] sm:$0xf]
        %v5263 = vld [vmem:[%s4504 + $0x128] sm:$0x1]
        %v5264 = vld [vmem:[%s4504 + $0x12c] sm:$0xf]
        %v5265 = vld [vmem:[%s4504 + $0x130] sm:$0xf]
        %v5266 = vld [vmem:[%s4504 + $0x134] sm:$0x1]
        %v5267 = vld [vmem:[%s4504 + $0x138] sm:$0xf]
        %v5268 = vld [vmem:[%s4504 + $0x13c] sm:$0xf]
        %v5269 = vld [vmem:[%s4504 + $0x140] sm:$0x1]
        %v5270 = vld [vmem:[%s4504 + $0x144] sm:$0xf]
        %v5271 = vld [vmem:[%s4504 + $0x148] sm:$0xf]
        %v5272 = vld [vmem:[%s4504 + $0x14c] sm:$0x1]
        %v5273 = vld [vmem:[%s4504 + $0x150] sm:$0xf]
        %v5274 = vld [vmem:[%s4504 + $0x154] sm:$0xf]
        %v5275 = vld [vmem:[%s4504 + $0x158] sm:$0x1]
        %v5276 = vld [vmem:[%s4504 + $0x15c] sm:$0xf]
        %v5277 = vld [vmem:[%s4504 + $0x160] sm:$0xf]
        %v5278 = vld [vmem:[%s4504 + $0x164] sm:$0x1]
        %v5279 = vld [vmem:[%s4504 + $0x168] sm:$0xf]
        %v5280 = vld [vmem:[%s4504 + $0x16c] sm:$0xf]
        %v5281 = vld [vmem:[%s4504 + $0x170] sm:$0x1]
        %v5282 = vld [vmem:[%s4504 + $0x174] sm:$0xf]
        %v5283 = vld [vmem:[%s4504 + $0x178] sm:$0xf]
        %v5284 = vld [vmem:[%s4504 + $0x17c] sm:$0x1]
        %v5285 = vld [vmem:[%s4504 + $0x180] sm:$0xf]
        %v5286 = vld [vmem:[%s4504 + $0x184] sm:$0xf]
        %v5287 = vld [vmem:[%s4504 + $0x188] sm:$0x1]
        %v5288 = vld [vmem:[%s4504 + $0x18c] sm:$0xf]
        %v5289 = vld [vmem:[%s4504 + $0x190] sm:$0xf]
        %v5290 = vld [vmem:[%s4504 + $0x194] sm:$0x1]
        %v5292 = vshrl.u32 %v5195, 16
        %v5294 = vrot.slane %v5292, 4
        %v5295 = vshll.u32 %v5195, 16
        %v5297 = vrot.slane %v5295, 5
        %v5298 = vor.u32 %v5294, %v5297
        %v5299 = vrot.slane %v5298, 4
        %v5301 = vshll.u32 %v5196, 16
        %v5303 = vrot.slane %v5301, 5
        %v5304 = vsel %vm1794, %v5299, %v5303
        %v5305 = vshrl.u32 %v5196, 16
        %v5307 = vrot.slane %v5305, 4
        %v5308 = vor.u32 %v5307, %v5303
        %v5309 = vrot.slane %v5308, 4
        %v5311 = vshll.u32 %v5197, 16
        %v5313 = vrot.slane %v5311, 5
        %v5314 = vsel %vm1794, %v5309, %v5313
        %v5316 = vshrl.u32 %v5198, 16
        %v5318 = vrot.slane %v5316, 4
        %v5319 = vshll.u32 %v5198, 16
        %v5321 = vrot.slane %v5319, 5
        %v5322 = vor.u32 %v5318, %v5321
        %v5323 = vrot.slane %v5322, 4
        %v5325 = vshll.u32 %v5199, 16
        %v5327 = vrot.slane %v5325, 5
        %v5328 = vsel %vm1794, %v5323, %v5327
        %v5329 = vshrl.u32 %v5199, 16
        %v5331 = vrot.slane %v5329, 4
        %v5332 = vor.u32 %v5331, %v5327
        %v5333 = vrot.slane %v5332, 4
        %v5335 = vshll.u32 %v5200, 16
        %v5337 = vrot.slane %v5335, 5
        %v5338 = vsel %vm1794, %v5333, %v5337
        %v5340 = vshrl.u32 %v5201, 16
        %v5342 = vrot.slane %v5340, 4
        %v5343 = vshll.u32 %v5201, 16
        %v5345 = vrot.slane %v5343, 5
        %v5346 = vor.u32 %v5342, %v5345
        %v5347 = vrot.slane %v5346, 4
        %v5349 = vshll.u32 %v5202, 16
        %v5351 = vrot.slane %v5349, 5
        %v5352 = vsel %vm1794, %v5347, %v5351
        %v5353 = vshrl.u32 %v5202, 16
        %v5355 = vrot.slane %v5353, 4
        %v5356 = vor.u32 %v5355, %v5351
        %v5357 = vrot.slane %v5356, 4
        %v5359 = vshll.u32 %v5203, 16
        %v5361 = vrot.slane %v5359, 5
        %v5362 = vsel %vm1794, %v5357, %v5361
        %v5364 = vshrl.u32 %v5204, 16
        %v5366 = vrot.slane %v5364, 4
        %v5367 = vshll.u32 %v5204, 16
        %v5369 = vrot.slane %v5367, 5
        %v5370 = vor.u32 %v5366, %v5369
        %v5371 = vrot.slane %v5370, 4
        %v5373 = vshll.u32 %v5205, 16
        %v5375 = vrot.slane %v5373, 5
        %v5376 = vsel %vm1794, %v5371, %v5375
        %v5377 = vshrl.u32 %v5205, 16
        %v5379 = vrot.slane %v5377, 4
        %v5380 = vor.u32 %v5379, %v5375
        %v5381 = vrot.slane %v5380, 4
        %v5383 = vshll.u32 %v5206, 16
        %v5385 = vrot.slane %v5383, 5
        %v5386 = vsel %vm1794, %v5381, %v5385
        %v5388 = vshrl.u32 %v5207, 16
        %v5390 = vrot.slane %v5388, 4
        %v5391 = vshll.u32 %v5207, 16
        %v5393 = vrot.slane %v5391, 5
        %v5394 = vor.u32 %v5390, %v5393
        %v5395 = vrot.slane %v5394, 4
        %v5397 = vshll.u32 %v5208, 16
        %v5399 = vrot.slane %v5397, 5
        %v5400 = vsel %vm1794, %v5395, %v5399
        %v5401 = vshrl.u32 %v5208, 16
        %v5403 = vrot.slane %v5401, 4
        %v5404 = vor.u32 %v5403, %v5399
        %v5405 = vrot.slane %v5404, 4
        %v5407 = vshll.u32 %v5209, 16
        %v5409 = vrot.slane %v5407, 5
        %v5410 = vsel %vm1794, %v5405, %v5409
        %v5412 = vshrl.u32 %v5210, 16
        %v5414 = vrot.slane %v5412, 4
        %v5415 = vshll.u32 %v5210, 16
        %v5417 = vrot.slane %v5415, 5
        %v5418 = vor.u32 %v5414, %v5417
        %v5419 = vrot.slane %v5418, 4
        %v5421 = vshll.u32 %v5211, 16
        %v5423 = vrot.slane %v5421, 5
        %v5424 = vsel %vm1794, %v5419, %v5423
        %v5425 = vshrl.u32 %v5211, 16
        %v5427 = vrot.slane %v5425, 4
        %v5428 = vor.u32 %v5427, %v5423
        %v5429 = vrot.slane %v5428, 4
        %v5431 = vshll.u32 %v5212, 16
        %v5433 = vrot.slane %v5431, 5
        %v5434 = vsel %vm1794, %v5429, %v5433
        %v5436 = vshrl.u32 %v5213, 16
        %v5438 = vrot.slane %v5436, 4
        %v5439 = vshll.u32 %v5213, 16
        %v5441 = vrot.slane %v5439, 5
        %v5442 = vor.u32 %v5438, %v5441
        %v5443 = vrot.slane %v5442, 4
        %v5445 = vshll.u32 %v5214, 16
        %v5447 = vrot.slane %v5445, 5
        %v5448 = vsel %vm1794, %v5443, %v5447
        %v5449 = vshrl.u32 %v5214, 16
        %v5451 = vrot.slane %v5449, 4
        %v5452 = vor.u32 %v5451, %v5447
        %v5453 = vrot.slane %v5452, 4
        %v5455 = vshll.u32 %v5215, 16
        %v5457 = vrot.slane %v5455, 5
        %v5458 = vsel %vm1794, %v5453, %v5457
        %v5460 = vshrl.u32 %v5216, 16
        %v5462 = vrot.slane %v5460, 4
        %v5463 = vshll.u32 %v5216, 16
        %v5465 = vrot.slane %v5463, 5
        %v5466 = vor.u32 %v5462, %v5465
        %v5467 = vrot.slane %v5466, 4
        %v5469 = vshll.u32 %v5217, 16
        %v5471 = vrot.slane %v5469, 5
        %v5472 = vsel %vm1794, %v5467, %v5471
        %v5473 = vshrl.u32 %v5217, 16
        %v5475 = vrot.slane %v5473, 4
        %v5476 = vor.u32 %v5475, %v5471
        %v5477 = vrot.slane %v5476, 4
        %v5479 = vshll.u32 %v5218, 16
        %v5481 = vrot.slane %v5479, 5
        %v5482 = vsel %vm1794, %v5477, %v5481
        %v5484 = vshrl.u32 %v5219, 16
        %v5486 = vrot.slane %v5484, 4
        %v5487 = vshll.u32 %v5219, 16
        %v5489 = vrot.slane %v5487, 5
        %v5490 = vor.u32 %v5486, %v5489
        %v5491 = vrot.slane %v5490, 4
        %v5493 = vshll.u32 %v5220, 16
        %v5495 = vrot.slane %v5493, 5
        %v5496 = vsel %vm1794, %v5491, %v5495
        %v5497 = vshrl.u32 %v5220, 16
        %v5499 = vrot.slane %v5497, 4
        %v5500 = vor.u32 %v5499, %v5495
        %v5501 = vrot.slane %v5500, 4
        %v5503 = vshll.u32 %v5221, 16
        %v5505 = vrot.slane %v5503, 5
        %v5506 = vsel %vm1794, %v5501, %v5505
        %v5508 = vshrl.u32 %v5222, 16
        %v5510 = vrot.slane %v5508, 4
        %v5511 = vshll.u32 %v5222, 16
        %v5513 = vrot.slane %v5511, 5
        %v5514 = vor.u32 %v5510, %v5513
        %v5515 = vrot.slane %v5514, 4
        %v5517 = vshll.u32 %v5223, 16
        %v5519 = vrot.slane %v5517, 5
        %v5520 = vsel %vm1794, %v5515, %v5519
        %v5521 = vshrl.u32 %v5223, 16
        %v5523 = vrot.slane %v5521, 4
        %v5524 = vor.u32 %v5523, %v5519
        %v5525 = vrot.slane %v5524, 4
        %v5527 = vshll.u32 %v5224, 16
        %v5529 = vrot.slane %v5527, 5
        %v5530 = vsel %vm1794, %v5525, %v5529
        %v5532 = vshrl.u32 %v5225, 16
        %v5534 = vrot.slane %v5532, 4
        %v5535 = vshll.u32 %v5225, 16
        %v5537 = vrot.slane %v5535, 5
        %v5538 = vor.u32 %v5534, %v5537
        %v5539 = vrot.slane %v5538, 4
        %v5541 = vshll.u32 %v5226, 16
        %v5543 = vrot.slane %v5541, 5
        %v5544 = vsel %vm1794, %v5539, %v5543
        %v5545 = vshrl.u32 %v5226, 16
        %v5547 = vrot.slane %v5545, 4
        %v5548 = vor.u32 %v5547, %v5543
        %v5549 = vrot.slane %v5548, 4
        %v5551 = vshll.u32 %v5227, 16
        %v5553 = vrot.slane %v5551, 5
        %v5554 = vsel %vm1794, %v5549, %v5553
        %v5556 = vshrl.u32 %v5228, 16
        %v5558 = vrot.slane %v5556, 4
        %v5559 = vshll.u32 %v5228, 16
        %v5561 = vrot.slane %v5559, 5
        %v5562 = vor.u32 %v5558, %v5561
        %v5563 = vrot.slane %v5562, 4
        %v5565 = vshll.u32 %v5229, 16
        %v5567 = vrot.slane %v5565, 5
        %v5568 = vsel %vm1794, %v5563, %v5567
        %v5569 = vshrl.u32 %v5229, 16
        %v5571 = vrot.slane %v5569, 4
        %v5572 = vor.u32 %v5571, %v5567
        %v5573 = vrot.slane %v5572, 4
        %v5575 = vshll.u32 %v5230, 16
        %v5577 = vrot.slane %v5575, 5
        %v5578 = vsel %vm1794, %v5573, %v5577
        %v5580 = vshrl.u32 %v5231, 16
        %v5582 = vrot.slane %v5580, 4
        %v5583 = vshll.u32 %v5231, 16
        %v5585 = vrot.slane %v5583, 5
        %v5586 = vor.u32 %v5582, %v5585
        %v5587 = vrot.slane %v5586, 4
        %v5589 = vshll.u32 %v5232, 16
        %v5591 = vrot.slane %v5589, 5
        %v5592 = vsel %vm1794, %v5587, %v5591
        %v5593 = vshrl.u32 %v5232, 16
        %v5595 = vrot.slane %v5593, 4
        %v5596 = vor.u32 %v5595, %v5591
        %v5597 = vrot.slane %v5596, 4
        %v5599 = vshll.u32 %v5233, 16
        %v5601 = vrot.slane %v5599, 5
        %v5602 = vsel %vm1794, %v5597, %v5601
        %v5604 = vshrl.u32 %v5234, 16
        %v5606 = vrot.slane %v5604, 4
        %v5607 = vshll.u32 %v5234, 16
        %v5609 = vrot.slane %v5607, 5
        %v5610 = vor.u32 %v5606, %v5609
        %v5611 = vrot.slane %v5610, 4
        %v5613 = vshll.u32 %v5235, 16
        %v5615 = vrot.slane %v5613, 5
        %v5616 = vsel %vm1794, %v5611, %v5615
        %v5617 = vshrl.u32 %v5235, 16
        %v5619 = vrot.slane %v5617, 4
        %v5620 = vor.u32 %v5619, %v5615
        %v5621 = vrot.slane %v5620, 4
        %v5623 = vshll.u32 %v5236, 16
        %v5625 = vrot.slane %v5623, 5
        %v5626 = vsel %vm1794, %v5621, %v5625
        %v5628 = vshrl.u32 %v5237, 16
        %v5630 = vrot.slane %v5628, 4
        %v5631 = vshll.u32 %v5237, 16
        %v5633 = vrot.slane %v5631, 5
        %v5634 = vor.u32 %v5630, %v5633
        %v5635 = vrot.slane %v5634, 4
        %v5637 = vshll.u32 %v5238, 16
        %v5639 = vrot.slane %v5637, 5
        %v5640 = vsel %vm1794, %v5635, %v5639
        %v5641 = vshrl.u32 %v5238, 16
        %v5643 = vrot.slane %v5641, 4
        %v5644 = vor.u32 %v5643, %v5639
        %v5645 = vrot.slane %v5644, 4
        %v5647 = vshll.u32 %v5239, 16
        %v5649 = vrot.slane %v5647, 5
        %v5650 = vsel %vm1794, %v5645, %v5649
        %v5652 = vshrl.u32 %v5240, 16
        %v5654 = vrot.slane %v5652, 4
        %v5655 = vshll.u32 %v5240, 16
        %v5657 = vrot.slane %v5655, 5
        %v5658 = vor.u32 %v5654, %v5657
        %v5659 = vrot.slane %v5658, 4
        %v5661 = vshll.u32 %v5241, 16
        %v5663 = vrot.slane %v5661, 5
        %v5664 = vsel %vm1794, %v5659, %v5663
        %v5665 = vshrl.u32 %v5241, 16
        %v5667 = vrot.slane %v5665, 4
        %v5668 = vor.u32 %v5667, %v5663
        %v5669 = vrot.slane %v5668, 4
        %v5671 = vshll.u32 %v5242, 16
        %v5673 = vrot.slane %v5671, 5
        %v5674 = vsel %vm1794, %v5669, %v5673
        %v5676 = vshrl.u32 %v5243, 16
        %v5678 = vrot.slane %v5676, 4
        %v5679 = vshll.u32 %v5243, 16
        %v5681 = vrot.slane %v5679, 5
        %v5682 = vor.u32 %v5678, %v5681
        %v5683 = vrot.slane %v5682, 4
        %v5685 = vshll.u32 %v5244, 16
        %v5687 = vrot.slane %v5685, 5
        %v5688 = vsel %vm1794, %v5683, %v5687
        %v5689 = vshrl.u32 %v5244, 16
        %v5691 = vrot.slane %v5689, 4
        %v5692 = vor.u32 %v5691, %v5687
        %v5693 = vrot.slane %v5692, 4
        %v5695 = vshll.u32 %v5245, 16
        %v5697 = vrot.slane %v5695, 5
        %v5698 = vsel %vm1794, %v5693, %v5697
        %v5700 = vshrl.u32 %v5246, 16
        %v5702 = vrot.slane %v5700, 4
        %v5703 = vshll.u32 %v5246, 16
        %v5705 = vrot.slane %v5703, 5
        %v5706 = vor.u32 %v5702, %v5705
        %v5707 = vrot.slane %v5706, 4
        %v5709 = vshll.u32 %v5247, 16
        %v5711 = vrot.slane %v5709, 5
        %v5712 = vsel %vm1794, %v5707, %v5711
        %v5713 = vshrl.u32 %v5247, 16
        %v5715 = vrot.slane %v5713, 4
        %v5716 = vor.u32 %v5715, %v5711
        %v5717 = vrot.slane %v5716, 4
        %v5719 = vshll.u32 %v5248, 16
        %v5721 = vrot.slane %v5719, 5
        %v5722 = vsel %vm1794, %v5717, %v5721
        %v5724 = vshrl.u32 %v5249, 16
        %v5726 = vrot.slane %v5724, 4
        %v5727 = vshll.u32 %v5249, 16
        %v5729 = vrot.slane %v5727, 5
        %v5730 = vor.u32 %v5726, %v5729
        %v5731 = vrot.slane %v5730, 4
        %v5733 = vshll.u32 %v5250, 16
        %v5735 = vrot.slane %v5733, 5
        %v5736 = vsel %vm1794, %v5731, %v5735
        %v5737 = vshrl.u32 %v5250, 16
        %v5739 = vrot.slane %v5737, 4
        %v5740 = vor.u32 %v5739, %v5735
        %v5741 = vrot.slane %v5740, 4
        %v5743 = vshll.u32 %v5251, 16
        %v5745 = vrot.slane %v5743, 5
        %v5746 = vsel %vm1794, %v5741, %v5745
        %v5748 = vshrl.u32 %v5252, 16
        %v5750 = vrot.slane %v5748, 4
        %v5751 = vshll.u32 %v5252, 16
        %v5753 = vrot.slane %v5751, 5
        %v5754 = vor.u32 %v5750, %v5753
        %v5755 = vrot.slane %v5754, 4
        %v5757 = vshll.u32 %v5253, 16
        %v5759 = vrot.slane %v5757, 5
        %v5760 = vsel %vm1794, %v5755, %v5759
        %v5761 = vshrl.u32 %v5253, 16
        %v5763 = vrot.slane %v5761, 4
        %v5764 = vor.u32 %v5763, %v5759
        %v5765 = vrot.slane %v5764, 4
        %v5767 = vshll.u32 %v5254, 16
        %v5769 = vrot.slane %v5767, 5
        %v5770 = vsel %vm1794, %v5765, %v5769
        %v5772 = vshrl.u32 %v5255, 16
        %v5774 = vrot.slane %v5772, 4
        %v5775 = vshll.u32 %v5255, 16
        %v5777 = vrot.slane %v5775, 5
        %v5778 = vor.u32 %v5774, %v5777
        %v5779 = vrot.slane %v5778, 4
        %v5781 = vshll.u32 %v5256, 16
        %v5783 = vrot.slane %v5781, 5
        %v5784 = vsel %vm1794, %v5779, %v5783
        %v5785 = vshrl.u32 %v5256, 16
        %v5787 = vrot.slane %v5785, 4
        %v5788 = vor.u32 %v5787, %v5783
        %v5789 = vrot.slane %v5788, 4
        %v5791 = vshll.u32 %v5257, 16
        %v5793 = vrot.slane %v5791, 5
        %v5794 = vsel %vm1794, %v5789, %v5793
        %v5796 = vshrl.u32 %v5258, 16
        %v5798 = vrot.slane %v5796, 4
        %v5799 = vshll.u32 %v5258, 16
        %v5801 = vrot.slane %v5799, 5
        %v5802 = vor.u32 %v5798, %v5801
        %v5803 = vrot.slane %v5802, 4
        %v5805 = vshll.u32 %v5259, 16
        %v5807 = vrot.slane %v5805, 5
        %v5808 = vsel %vm1794, %v5803, %v5807
        %v5809 = vshrl.u32 %v5259, 16
        %v5811 = vrot.slane %v5809, 4
        %v5812 = vor.u32 %v5811, %v5807
        %v5813 = vrot.slane %v5812, 4
        %v5815 = vshll.u32 %v5260, 16
        %v5817 = vrot.slane %v5815, 5
        %v5818 = vsel %vm1794, %v5813, %v5817
        %v5820 = vshrl.u32 %v5261, 16
        %v5822 = vrot.slane %v5820, 4
        %v5823 = vshll.u32 %v5261, 16
        %v5825 = vrot.slane %v5823, 5
        %v5826 = vor.u32 %v5822, %v5825
        %v5827 = vrot.slane %v5826, 4
        %v5829 = vshll.u32 %v5262, 16
        %v5831 = vrot.slane %v5829, 5
        %v5832 = vsel %vm1794, %v5827, %v5831
        %v5833 = vshrl.u32 %v5262, 16
        %v5835 = vrot.slane %v5833, 4
        %v5836 = vor.u32 %v5835, %v5831
        %v5837 = vrot.slane %v5836, 4
        %v5839 = vshll.u32 %v5263, 16
        %v5841 = vrot.slane %v5839, 5
        %v5842 = vsel %vm1794, %v5837, %v5841
        %v5844 = vshrl.u32 %v5264, 16
        %v5846 = vrot.slane %v5844, 4
        %v5847 = vshll.u32 %v5264, 16
        %v5849 = vrot.slane %v5847, 5
        %v5850 = vor.u32 %v5846, %v5849
        %v5851 = vrot.slane %v5850, 4
        %v5853 = vshll.u32 %v5265, 16
        %v5855 = vrot.slane %v5853, 5
        %v5856 = vsel %vm1794, %v5851, %v5855
        %v5857 = vshrl.u32 %v5265, 16
        %v5859 = vrot.slane %v5857, 4
        %v5860 = vor.u32 %v5859, %v5855
        %v5861 = vrot.slane %v5860, 4
        %v5863 = vshll.u32 %v5266, 16
        %v5865 = vrot.slane %v5863, 5
        %v5866 = vsel %vm1794, %v5861, %v5865
        %v5868 = vshrl.u32 %v5267, 16
        %v5870 = vrot.slane %v5868, 4
        %v5871 = vshll.u32 %v5267, 16
        %v5873 = vrot.slane %v5871, 5
        %v5874 = vor.u32 %v5870, %v5873
        %v5875 = vrot.slane %v5874, 4
        %v5877 = vshll.u32 %v5268, 16
        %v5879 = vrot.slane %v5877, 5
        %v5880 = vsel %vm1794, %v5875, %v5879
        %v5881 = vshrl.u32 %v5268, 16
        %v5883 = vrot.slane %v5881, 4
        %v5884 = vor.u32 %v5883, %v5879
        %v5885 = vrot.slane %v5884, 4
        %v5887 = vshll.u32 %v5269, 16
        %v5889 = vrot.slane %v5887, 5
        %v5890 = vsel %vm1794, %v5885, %v5889
        %v5892 = vshrl.u32 %v5270, 16
        %v5894 = vrot.slane %v5892, 4
        %v5895 = vshll.u32 %v5270, 16
        %v5897 = vrot.slane %v5895, 5
        %v5898 = vor.u32 %v5894, %v5897
        %v5899 = vrot.slane %v5898, 4
        %v5901 = vshll.u32 %v5271, 16
        %v5903 = vrot.slane %v5901, 5
        %v5904 = vsel %vm1794, %v5899, %v5903
        %v5905 = vshrl.u32 %v5271, 16
        %v5907 = vrot.slane %v5905, 4
        %v5908 = vor.u32 %v5907, %v5903
        %v5909 = vrot.slane %v5908, 4
        %v5911 = vshll.u32 %v5272, 16
        %v5913 = vrot.slane %v5911, 5
        %v5914 = vsel %vm1794, %v5909, %v5913
        %v5916 = vshrl.u32 %v5273, 16
        %v5918 = vrot.slane %v5916, 4
        %v5919 = vshll.u32 %v5273, 16
        %v5921 = vrot.slane %v5919, 5
        %v5922 = vor.u32 %v5918, %v5921
        %v5923 = vrot.slane %v5922, 4
        %v5925 = vshll.u32 %v5274, 16
        %v5927 = vrot.slane %v5925, 5
        %v5928 = vsel %vm1794, %v5923, %v5927
        %v5929 = vshrl.u32 %v5274, 16
        %v5931 = vrot.slane %v5929, 4
        %v5932 = vor.u32 %v5931, %v5927
        %v5933 = vrot.slane %v5932, 4
        %v5935 = vshll.u32 %v5275, 16
        %v5937 = vrot.slane %v5935, 5
        %v5938 = vsel %vm1794, %v5933, %v5937
        %v5940 = vshrl.u32 %v5276, 16
        %v5942 = vrot.slane %v5940, 4
        %v5943 = vshll.u32 %v5276, 16
        %v5945 = vrot.slane %v5943, 5
        %v5946 = vor.u32 %v5942, %v5945
        %v5947 = vrot.slane %v5946, 4
        %v5949 = vshll.u32 %v5277, 16
        %v5951 = vrot.slane %v5949, 5
        %v5952 = vsel %vm1794, %v5947, %v5951
        %v5953 = vshrl.u32 %v5277, 16
        %v5955 = vrot.slane %v5953, 4
        %v5956 = vor.u32 %v5955, %v5951
        %v5957 = vrot.slane %v5956, 4
        %v5959 = vshll.u32 %v5278, 16
        %v5961 = vrot.slane %v5959, 5
        %v5962 = vsel %vm1794, %v5957, %v5961
        %v5964 = vshrl.u32 %v5279, 16
        %v5966 = vrot.slane %v5964, 4
        %v5967 = vshll.u32 %v5279, 16
        %v5969 = vrot.slane %v5967, 5
        %v5970 = vor.u32 %v5966, %v5969
        %v5971 = vrot.slane %v5970, 4
        %v5973 = vshll.u32 %v5280, 16
        %v5975 = vrot.slane %v5973, 5
        %v5976 = vsel %vm1794, %v5971, %v5975
        %v5977 = vshrl.u32 %v5280, 16
        %v5979 = vrot.slane %v5977, 4
        %v5980 = vor.u32 %v5979, %v5975
        %v5981 = vrot.slane %v5980, 4
        %v5983 = vshll.u32 %v5281, 16
        %v5985 = vrot.slane %v5983, 5
        %v5986 = vsel %vm1794, %v5981, %v5985
        %v5988 = vshrl.u32 %v5282, 16
        %v5990 = vrot.slane %v5988, 4
        %v5991 = vshll.u32 %v5282, 16
        %v5993 = vrot.slane %v5991, 5
        %v5994 = vor.u32 %v5990, %v5993
        %v5995 = vrot.slane %v5994, 4
        %v5997 = vshll.u32 %v5283, 16
        %v5999 = vrot.slane %v5997, 5
        %v6000 = vsel %vm1794, %v5995, %v5999
        %v6001 = vshrl.u32 %v5283, 16
        %v6003 = vrot.slane %v6001, 4
        %v6004 = vor.u32 %v6003, %v5999
        %v6005 = vrot.slane %v6004, 4
        %v6007 = vshll.u32 %v5284, 16
        %v6009 = vrot.slane %v6007, 5
        %v6010 = vsel %vm1794, %v6005, %v6009
        %v6012 = vshrl.u32 %v5285, 16
        %v6014 = vrot.slane %v6012, 4
        %v6015 = vshll.u32 %v5285, 16
        %v6017 = vrot.slane %v6015, 5
        %v6018 = vor.u32 %v6014, %v6017
        %v6019 = vrot.slane %v6018, 4
        %v6021 = vshll.u32 %v5286, 16
        %v6023 = vrot.slane %v6021, 5
        %v6024 = vsel %vm1794, %v6019, %v6023
        %v6025 = vshrl.u32 %v5286, 16
        %v6027 = vrot.slane %v6025, 4
        %v6028 = vor.u32 %v6027, %v6023
        %v6029 = vrot.slane %v6028, 4
        %v6031 = vshll.u32 %v5287, 16
        %v6033 = vrot.slane %v6031, 5
        %v6034 = vsel %vm1794, %v6029, %v6033
        %v6036 = vshrl.u32 %v5288, 16
        %v6038 = vrot.slane %v6036, 4
        %v6039 = vshll.u32 %v5288, 16
        %v6041 = vrot.slane %v6039, 5
        %v6042 = vor.u32 %v6038, %v6041
        %v6043 = vrot.slane %v6042, 4
        %v6045 = vshll.u32 %v5289, 16
        %v6047 = vrot.slane %v6045, 5
        %v6048 = vsel %vm1794, %v6043, %v6047
        %v6049 = vshrl.u32 %v5289, 16
        %v6051 = vrot.slane %v6049, 4
        %v6052 = vor.u32 %v6051, %v6047
        %v6053 = vrot.slane %v6052, 4
        %v6055 = vshll.u32 %v5290, 16
        %v6057 = vrot.slane %v6055, 5
        %v6058 = vsel %vm1794, %v6053, %v6057
        %s6059 = scalar_lea.vmem [#allocation6], 64
        %v6060 = vld [vmem:[%s6059] sm:$0xf]
        %v6061 = vld [vmem:[%s6059 + $0x4] sm:$0xf]
        %v6062 = vld [vmem:[%s6059 + $0x8] sm:$0xf]
        %v6063 = vld [vmem:[%s6059 + $0xc] sm:$0xf]
        %v6064 = vunpack.c.l.b16 %v5304
        %v6065 = vunpack.c.l.b16 %v5314
        %v6066 = vunpack.c.l.b16 %v5328
        %v6067 = vunpack.c.l.b16 %v5338
        %v6068 = vunpack.c.l.b16 %v5352
        %v6069 = vunpack.c.l.b16 %v5362
        %v6070 = vunpack.c.l.b16 %v5376
        %v6071 = vunpack.c.l.b16 %v5386
        %v6072 = vunpack.c.l.b16 %v5400
        %v6073 = vunpack.c.l.b16 %v5410
        %v6074 = vunpack.c.l.b16 %v5424
        %v6075 = vunpack.c.l.b16 %v5434
        %v6076 = vunpack.c.l.b16 %v5448
        %v6077 = vunpack.c.l.b16 %v5458
        %v6078 = vunpack.c.l.b16 %v5472
        %v6079 = vunpack.c.l.b16 %v5482
        %v6080 = vunpack.c.l.b16 %v5496
        %v6081 = vunpack.c.l.b16 %v5506
        %v6082 = vunpack.c.l.b16 %v5520
        %v6083 = vunpack.c.l.b16 %v5530
        %v6084 = vunpack.c.l.b16 %v5544
        %v6085 = vunpack.c.l.b16 %v5554
        %v6086 = vunpack.c.l.b16 %v5568
        %v6087 = vunpack.c.l.b16 %v5578
        %v6088 = vunpack.c.l.b16 %v5592
        %v6089 = vunpack.c.l.b16 %v5602
        %v6090 = vunpack.c.l.b16 %v5616
        %v6091 = vunpack.c.l.b16 %v5626
        %v6092 = vunpack.c.l.b16 %v5640
        %v6093 = vunpack.c.l.b16 %v5650
        %v6094 = vunpack.c.l.b16 %v5664
        %v6095 = vunpack.c.l.b16 %v5674
        %v6096 = vunpack.c.l.b16 %v5688
        %v6097 = vunpack.c.l.b16 %v5698
        %v6098 = vunpack.c.l.b16 %v5712
        %v6099 = vunpack.c.l.b16 %v5722
        %v6100 = vunpack.c.l.b16 %v5736
        %v6101 = vunpack.c.l.b16 %v5746
        %v6102 = vunpack.c.l.b16 %v5760
        %v6103 = vunpack.c.l.b16 %v5770
        %v6104 = vunpack.c.l.b16 %v5784
        %v6105 = vunpack.c.l.b16 %v5794
        %v6106 = vunpack.c.l.b16 %v5808
        %v6107 = vunpack.c.l.b16 %v5818
        %v6108 = vunpack.c.l.b16 %v5832
        %v6109 = vunpack.c.l.b16 %v5842
        %v6110 = vunpack.c.l.b16 %v5856
        %v6111 = vunpack.c.l.b16 %v5866
        %v6112 = vunpack.c.l.b16 %v5880
        %v6113 = vunpack.c.l.b16 %v5890
        %v6114 = vunpack.c.l.b16 %v5904
        %v6115 = vunpack.c.l.b16 %v5914
        %v6116 = vunpack.c.l.b16 %v5928
        %v6117 = vunpack.c.l.b16 %v5938
        %v6118 = vunpack.c.l.b16 %v5952
        %v6119 = vunpack.c.l.b16 %v5962
        %v6120 = vunpack.c.l.b16 %v5976
        %v6121 = vunpack.c.l.b16 %v5986
        %v6122 = vunpack.c.l.b16 %v6000
        %v6123 = vunpack.c.l.b16 %v6010
        %v6124 = vunpack.c.l.b16 %v6024
        %v6125 = vunpack.c.l.b16 %v6034
        %v6126 = vunpack.c.l.b16 %v6048
        %v6127 = vunpack.c.l.b16 %v6058
        %v6128 = vpack.c.b16 %v6065, %v6064
        %v6129 = vpack.c.b16 %v6067, %v6066
        %v6130 = vpack.c.b16 %v6069, %v6068
        %v6131 = vpack.c.b16 %v6071, %v6070
        %v6132 = vpack.c.b16 %v6073, %v6072
        %v6133 = vpack.c.b16 %v6075, %v6074
        %v6134 = vpack.c.b16 %v6077, %v6076
        %v6135 = vpack.c.b16 %v6079, %v6078
        %v6136 = vpack.c.b16 %v6081, %v6080
        %v6137 = vpack.c.b16 %v6083, %v6082
        %v6138 = vpack.c.b16 %v6085, %v6084
        %v6139 = vpack.c.b16 %v6087, %v6086
        %v6140 = vpack.c.b16 %v6089, %v6088
        %v6141 = vpack.c.b16 %v6091, %v6090
        %v6142 = vpack.c.b16 %v6093, %v6092
        %v6143 = vpack.c.b16 %v6095, %v6094
        %v6144 = vpack.c.b16 %v6097, %v6096
        %v6145 = vpack.c.b16 %v6099, %v6098
        %v6146 = vpack.c.b16 %v6101, %v6100
        %v6147 = vpack.c.b16 %v6103, %v6102
        %v6148 = vpack.c.b16 %v6105, %v6104
        %v6149 = vpack.c.b16 %v6107, %v6106
        %v6150 = vpack.c.b16 %v6109, %v6108
        %v6151 = vpack.c.b16 %v6111, %v6110
        %v6152 = vpack.c.b16 %v6113, %v6112
        %v6153 = vpack.c.b16 %v6115, %v6114
        %v6154 = vpack.c.b16 %v6117, %v6116
        %v6155 = vpack.c.b16 %v6119, %v6118
        %v6156 = vpack.c.b16 %v6121, %v6120
        %v6157 = vpack.c.b16 %v6123, %v6122
        %v6158 = vpack.c.b16 %v6125, %v6124
        %v6159 = vpack.c.b16 %v6127, %v6126
        %v6164 = vunpack.c.l.b16 %v6060
        %v6165 = vunpack.c.l.b16 %v6061
        %v6166 = vunpack.c.l.b16 %v6062
        %v6167 = vunpack.c.l.b16 %v6063
        %v6168 = vpack.c.b16 %v6165, %v6164
        %v6169 = vpack.c.b16 %v6167, %v6166
        %v6173 = vsel %vm2676, %v6128, 0
        %v6176 = vsel %vm2676, %v6129, 0
        %v6179 = vsel %vm2676, %v6130, 0
        %v6182 = vsel %vm2676, %v6131, 0
        %v6185 = vsel %vm2676, %v6132, 0
        %v6188 = vsel %vm2676, %v6133, 0
        %v6191 = vsel %vm2676, %v6134, 0
        %v6194 = vsel %vm2676, %v6135, 0
        %v6197 = vsel %vm2676, %v6136, 0
        %v6200 = vsel %vm2676, %v6137, 0
        %v6203 = vsel %vm2676, %v6138, 0
        %v6206 = vsel %vm2676, %v6139, 0
        %v6209 = vsel %vm2676, %v6140, 0
        %v6212 = vsel %vm2676, %v6141, 0
        %v6215 = vsel %vm2676, %v6142, 0
        %v6218 = vsel %vm2676, %v6143, 0
        %v6221 = vsel %vm2676, %v6144, 0
        %v6224 = vsel %vm2676, %v6145, 0
        %v6227 = vsel %vm2676, %v6146, 0
        %v6230 = vsel %vm2676, %v6147, 0
        %v6233 = vsel %vm2676, %v6148, 0
        %v6236 = vsel %vm2676, %v6149, 0
        %v6239 = vsel %vm2676, %v6150, 0
        %v6242 = vsel %vm2676, %v6151, 0
        %v6245 = vsel %vm2676, %v6152, 0
        %v6248 = vsel %vm2676, %v6153, 0
        %v6251 = vsel %vm2676, %v6154, 0
        %v6254 = vsel %vm2676, %v6155, 0
        %v6257 = vsel %vm2676, %v6156, 0
        %v6260 = vsel %vm2676, %v6157, 0
        %v6263 = vsel %vm2676, %v6158, 0
        %v6266 = vsel %vm2676, %v6159, 0
        %6268 = vmatprep.subr.bf16.mxu0 0
        %6269 = vmatpush1.bf16.msra.mxu0 0
        %6270 = vmatprep.subr.bf16.mxu0 0
        %6271 = vmatpush1.bf16.msra.mxu0 0
        %6272 = vmatprep.subr.bf16.mxu0 0
        %6273 = vmatpush1.bf16.msra.mxu0 0
        %6274 = vmatprep.subr.bf16.mxu0 0
        %6275 = vmatpush1.bf16.msra.mxu0 0
        %6276 = vmatprep.subr.bf16.mxu0 0
        %6277 = vmatpush1.bf16.msra.mxu0 0
        %6278 = vmatprep.subr.bf16.mxu0 0
        %6279 = vmatpush1.bf16.msra.mxu0 0
        %6280 = vmatprep.subr.bf16.mxu0 0
        %6281 = vmatpush1.bf16.msra.mxu0 %v6169
        %6282 = vmatprep.subr.bf16.mxu0 0
        %6283 = vmatpush1.bf16.msra.mxu0 %v6168
        %6284 = vmatprep.subr.bf16.mxu0 0
        %6285 = vmatpush2.bf16.msra.mxu0 0
        %6286 = vmatprep.subr.bf16.mxu0 0
        %6287 = vmatpush2.bf16.msra.mxu0 0
        %6288 = vmatprep.subr.bf16.mxu0 0
        %6289 = vmatpush2.bf16.msra.mxu0 0
        %6290 = vmatprep.subr.bf16.mxu0 0
        %6291 = vmatpush2.bf16.msra.mxu0 0
        %6292 = vmatprep.subr.bf16.mxu0 0
        %6293 = vmatpush2.bf16.msra.mxu0 0
        %6294 = vmatprep.subr.bf16.mxu0 0
        %6295 = vmatpush2.bf16.msra.mxu0 0
        %6296 = vmatprep.subr.bf16.mxu0 0
        %6297 = vmatpush2.bf16.msra.mxu0 0
        %6298 = vmatprep.subr.bf16.mxu0 0
        %6299 = vmatpush2.bf16.msra.mxu0 0
        %6300 = vmatprep.mubr.bf16.mxu0 0
        %6301 = vmatmul.mubr.bf16.gmra.mxu0 %v6173
        %v6302 = vpop.f32.mrf.mxu0
        %v6303 = vadd.f32 0.0, %v6302
        %v6304 = vpop.f32.mrf.mxu0
        %v6305 = vpop.f32.mrf.mxu0
        %v6306 = vadd.f32 0.0, %v6305
        %v6307 = vpop.f32.mrf.mxu0
        %6308 = vmatprep.mubr.bf16.mxu0 0
        %6309 = vmatmul.mubr.bf16.gmra.mxu0 %v6176
        %v6310 = vpop.f32.mrf.mxu0
        %v6311 = vadd.f32 0.0, %v6310
        %v6312 = vpop.f32.mrf.mxu0
        %v6313 = vpop.f32.mrf.mxu0
        %v6314 = vadd.f32 0.0, %v6313
        %v6315 = vpop.f32.mrf.mxu0
        %6316 = vmatprep.mubr.bf16.mxu0 0
        %6317 = vmatmul.mubr.bf16.gmra.mxu0 %v6179
        %v6318 = vpop.f32.mrf.mxu0
        %v6319 = vadd.f32 0.0, %v6318
        %v6320 = vpop.f32.mrf.mxu0
        %v6321 = vpop.f32.mrf.mxu0
        %v6322 = vadd.f32 0.0, %v6321
        %v6323 = vpop.f32.mrf.mxu0
        %6324 = vmatprep.mubr.bf16.mxu0 0
        %6325 = vmatmul.mubr.bf16.gmra.mxu0 %v6182
        %v6326 = vpop.f32.mrf.mxu0
        %v6327 = vadd.f32 0.0, %v6326
        %v6328 = vpop.f32.mrf.mxu0
        %v6329 = vpop.f32.mrf.mxu0
        %v6330 = vadd.f32 0.0, %v6329
        %v6331 = vpop.f32.mrf.mxu0
        %6332 = vmatprep.mubr.bf16.mxu0 0
        %6333 = vmatmul.mubr.bf16.gmra.mxu0 %v6185
        %v6334 = vpop.f32.mrf.mxu0
        %v6335 = vadd.f32 0.0, %v6334
        %v6336 = vpop.f32.mrf.mxu0
        %v6337 = vpop.f32.mrf.mxu0
        %v6338 = vadd.f32 0.0, %v6337
        %v6339 = vpop.f32.mrf.mxu0
        %6340 = vmatprep.mubr.bf16.mxu0 0
        %6341 = vmatmul.mubr.bf16.gmra.mxu0 %v6188
        %v6342 = vpop.f32.mrf.mxu0
        %v6343 = vadd.f32 0.0, %v6342
        %v6344 = vpop.f32.mrf.mxu0
        %v6345 = vpop.f32.mrf.mxu0
        %v6346 = vadd.f32 0.0, %v6345
        %v6347 = vpop.f32.mrf.mxu0
        %6348 = vmatprep.mubr.bf16.mxu0 0
        %6349 = vmatmul.mubr.bf16.gmra.mxu0 %v6191
        %v6350 = vpop.f32.mrf.mxu0
        %v6351 = vadd.f32 0.0, %v6350
        %v6352 = vpop.f32.mrf.mxu0
        %v6353 = vpop.f32.mrf.mxu0
        %v6354 = vadd.f32 0.0, %v6353
        %v6355 = vpop.f32.mrf.mxu0
        %6356 = vmatprep.mubr.bf16.mxu0 0
        %6357 = vmatmul.mubr.bf16.gmra.mxu0 %v6194
        %v6358 = vpop.f32.mrf.mxu0
        %v6359 = vadd.f32 0.0, %v6358
        %v6360 = vpop.f32.mrf.mxu0
        %v6361 = vpop.f32.mrf.mxu0
        %v6362 = vadd.f32 0.0, %v6361
        %v6363 = vpop.f32.mrf.mxu0
        %6364 = vmatprep.mubr.bf16.mxu0 0
        %6365 = vmatmul.mubr.bf16.gmra.mxu0 %v6197
        %v6366 = vpop.f32.mrf.mxu0
        %v6367 = vadd.f32 0.0, %v6366
        %v6368 = vpop.f32.mrf.mxu0
        %v6369 = vpop.f32.mrf.mxu0
        %v6370 = vadd.f32 0.0, %v6369
        %v6371 = vpop.f32.mrf.mxu0
        %6372 = vmatprep.mubr.bf16.mxu0 0
        %6373 = vmatmul.mubr.bf16.gmra.mxu0 %v6200
        %v6374 = vpop.f32.mrf.mxu0
        %v6375 = vadd.f32 0.0, %v6374
        %v6376 = vpop.f32.mrf.mxu0
        %v6377 = vpop.f32.mrf.mxu0
        %v6378 = vadd.f32 0.0, %v6377
        %v6379 = vpop.f32.mrf.mxu0
        %6380 = vmatprep.mubr.bf16.mxu0 0
        %6381 = vmatmul.mubr.bf16.gmra.mxu0 %v6203
        %v6382 = vpop.f32.mrf.mxu0
        %v6383 = vadd.f32 0.0, %v6382
        %v6384 = vpop.f32.mrf.mxu0
        %v6385 = vpop.f32.mrf.mxu0
        %v6386 = vadd.f32 0.0, %v6385
        %v6387 = vpop.f32.mrf.mxu0
        %6388 = vmatprep.mubr.bf16.mxu0 0
        %6389 = vmatmul.mubr.bf16.gmra.mxu0 %v6206
        %v6390 = vpop.f32.mrf.mxu0
        %v6391 = vadd.f32 0.0, %v6390
        %v6392 = vpop.f32.mrf.mxu0
        %v6393 = vpop.f32.mrf.mxu0
        %v6394 = vadd.f32 0.0, %v6393
        %v6395 = vpop.f32.mrf.mxu0
        %6396 = vmatprep.mubr.bf16.mxu0 0
        %6397 = vmatmul.mubr.bf16.gmra.mxu0 %v6209
        %v6398 = vpop.f32.mrf.mxu0
        %v6399 = vadd.f32 0.0, %v6398
        %v6400 = vpop.f32.mrf.mxu0
        %v6401 = vpop.f32.mrf.mxu0
        %v6402 = vadd.f32 0.0, %v6401
        %v6403 = vpop.f32.mrf.mxu0
        %6404 = vmatprep.mubr.bf16.mxu0 0
        %6405 = vmatmul.mubr.bf16.gmra.mxu0 %v6212
        %v6406 = vpop.f32.mrf.mxu0
        %v6407 = vadd.f32 0.0, %v6406
        %v6408 = vpop.f32.mrf.mxu0
        %v6409 = vpop.f32.mrf.mxu0
        %v6410 = vadd.f32 0.0, %v6409
        %v6411 = vpop.f32.mrf.mxu0
        %6412 = vmatprep.mubr.bf16.mxu0 0
        %6413 = vmatmul.mubr.bf16.gmra.mxu0 %v6215
        %v6414 = vpop.f32.mrf.mxu0
        %v6415 = vadd.f32 0.0, %v6414
        %v6416 = vpop.f32.mrf.mxu0
        %v6417 = vpop.f32.mrf.mxu0
        %v6418 = vadd.f32 0.0, %v6417
        %v6419 = vpop.f32.mrf.mxu0
        %6420 = vmatprep.mubr.bf16.mxu0 0
        %6421 = vmatmul.mubr.bf16.gmra.mxu0 %v6218
        %v6422 = vpop.f32.mrf.mxu0
        %v6423 = vadd.f32 0.0, %v6422
        %v6424 = vpop.f32.mrf.mxu0
        %v6425 = vpop.f32.mrf.mxu0
        %v6426 = vadd.f32 0.0, %v6425
        %v6427 = vpop.f32.mrf.mxu0
        %6428 = vmatprep.mubr.bf16.mxu0 0
        %6429 = vmatmul.mubr.bf16.gmra.mxu0 %v6221
        %v6430 = vpop.f32.mrf.mxu0
        %v6431 = vadd.f32 0.0, %v6430
        %v6432 = vpop.f32.mrf.mxu0
        %v6433 = vpop.f32.mrf.mxu0
        %v6434 = vadd.f32 0.0, %v6433
        %v6435 = vpop.f32.mrf.mxu0
        %6436 = vmatprep.mubr.bf16.mxu0 0
        %6437 = vmatmul.mubr.bf16.gmra.mxu0 %v6224
        %v6438 = vpop.f32.mrf.mxu0
        %v6439 = vadd.f32 0.0, %v6438
        %v6440 = vpop.f32.mrf.mxu0
        %v6441 = vpop.f32.mrf.mxu0
        %v6442 = vadd.f32 0.0, %v6441
        %v6443 = vpop.f32.mrf.mxu0
        %6444 = vmatprep.mubr.bf16.mxu0 0
        %6445 = vmatmul.mubr.bf16.gmra.mxu0 %v6227
        %v6446 = vpop.f32.mrf.mxu0
        %v6447 = vadd.f32 0.0, %v6446
        %v6448 = vpop.f32.mrf.mxu0
        %v6449 = vpop.f32.mrf.mxu0
        %v6450 = vadd.f32 0.0, %v6449
        %v6451 = vpop.f32.mrf.mxu0
        %6452 = vmatprep.mubr.bf16.mxu0 0
        %6453 = vmatmul.mubr.bf16.gmra.mxu0 %v6230
        %v6454 = vpop.f32.mrf.mxu0
        %v6455 = vadd.f32 0.0, %v6454
        %v6456 = vpop.f32.mrf.mxu0
        %v6457 = vpop.f32.mrf.mxu0
        %v6458 = vadd.f32 0.0, %v6457
        %v6459 = vpop.f32.mrf.mxu0
        %6460 = vmatprep.mubr.bf16.mxu0 0
        %6461 = vmatmul.mubr.bf16.gmra.mxu0 %v6233
        %v6462 = vpop.f32.mrf.mxu0
        %v6463 = vadd.f32 0.0, %v6462
        %v6464 = vpop.f32.mrf.mxu0
        %v6465 = vpop.f32.mrf.mxu0
        %v6466 = vadd.f32 0.0, %v6465
        %v6467 = vpop.f32.mrf.mxu0
        %6468 = vmatprep.mubr.bf16.mxu0 0
        %6469 = vmatmul.mubr.bf16.gmra.mxu0 %v6236
        %v6470 = vpop.f32.mrf.mxu0
        %v6471 = vadd.f32 0.0, %v6470
        %v6472 = vpop.f32.mrf.mxu0
        %v6473 = vpop.f32.mrf.mxu0
        %v6474 = vadd.f32 0.0, %v6473
        %v6475 = vpop.f32.mrf.mxu0
        %6476 = vmatprep.mubr.bf16.mxu0 0
        %6477 = vmatmul.mubr.bf16.gmra.mxu0 %v6239
        %v6478 = vpop.f32.mrf.mxu0
        %v6479 = vadd.f32 0.0, %v6478
        %v6480 = vpop.f32.mrf.mxu0
        %v6481 = vpop.f32.mrf.mxu0
        %v6482 = vadd.f32 0.0, %v6481
        %v6483 = vpop.f32.mrf.mxu0
        %6484 = vmatprep.mubr.bf16.mxu0 0
        %6485 = vmatmul.mubr.bf16.gmra.mxu0 %v6242
        %v6486 = vpop.f32.mrf.mxu0
        %v6487 = vadd.f32 0.0, %v6486
        %v6488 = vpop.f32.mrf.mxu0
        %v6489 = vpop.f32.mrf.mxu0
        %v6490 = vadd.f32 0.0, %v6489
        %v6491 = vpop.f32.mrf.mxu0
        %6492 = vmatprep.mubr.bf16.mxu0 0
        %6493 = vmatmul.mubr.bf16.gmra.mxu0 %v6245
        %v6494 = vpop.f32.mrf.mxu0
        %v6495 = vadd.f32 0.0, %v6494
        %v6496 = vpop.f32.mrf.mxu0
        %v6497 = vpop.f32.mrf.mxu0
        %v6498 = vadd.f32 0.0, %v6497
        %v6499 = vpop.f32.mrf.mxu0
        %6500 = vmatprep.mubr.bf16.mxu0 0
        %6501 = vmatmul.mubr.bf16.gmra.mxu0 %v6248
        %v6502 = vpop.f32.mrf.mxu0
        %v6503 = vadd.f32 0.0, %v6502
        %v6504 = vpop.f32.mrf.mxu0
        %v6505 = vpop.f32.mrf.mxu0
        %v6506 = vadd.f32 0.0, %v6505
        %v6507 = vpop.f32.mrf.mxu0
        %6508 = vmatprep.mubr.bf16.mxu0 0
        %6509 = vmatmul.mubr.bf16.gmra.mxu0 %v6251
        %v6510 = vpop.f32.mrf.mxu0
        %v6511 = vadd.f32 0.0, %v6510
        %v6512 = vpop.f32.mrf.mxu0
        %v6513 = vpop.f32.mrf.mxu0
        %v6514 = vadd.f32 0.0, %v6513
        %v6515 = vpop.f32.mrf.mxu0
        %6516 = vmatprep.mubr.bf16.mxu0 0
        %6517 = vmatmul.mubr.bf16.gmra.mxu0 %v6254
        %v6518 = vpop.f32.mrf.mxu0
        %v6519 = vadd.f32 0.0, %v6518
        %v6520 = vpop.f32.mrf.mxu0
        %v6521 = vpop.f32.mrf.mxu0
        %v6522 = vadd.f32 0.0, %v6521
        %v6523 = vpop.f32.mrf.mxu0
        %6524 = vmatprep.mubr.bf16.mxu0 0
        %6525 = vmatmul.mubr.bf16.gmra.mxu0 %v6257
        %v6526 = vpop.f32.mrf.mxu0
        %v6527 = vadd.f32 0.0, %v6526
        %v6528 = vpop.f32.mrf.mxu0
        %v6529 = vpop.f32.mrf.mxu0
        %v6530 = vadd.f32 0.0, %v6529
        %v6531 = vpop.f32.mrf.mxu0
        %6532 = vmatprep.mubr.bf16.mxu0 0
        %6533 = vmatmul.mubr.bf16.gmra.mxu0 %v6260
        %v6534 = vpop.f32.mrf.mxu0
        %v6535 = vadd.f32 0.0, %v6534
        %v6536 = vpop.f32.mrf.mxu0
        %v6537 = vpop.f32.mrf.mxu0
        %v6538 = vadd.f32 0.0, %v6537
        %v6539 = vpop.f32.mrf.mxu0
        %6540 = vmatprep.mubr.bf16.mxu0 0
        %6541 = vmatmul.mubr.bf16.gmra.mxu0 %v6263
        %v6542 = vpop.f32.mrf.mxu0
        %v6543 = vadd.f32 0.0, %v6542
        %v6544 = vpop.f32.mrf.mxu0
        %v6545 = vpop.f32.mrf.mxu0
        %v6546 = vadd.f32 0.0, %v6545
        %v6547 = vpop.f32.mrf.mxu0
        %6548 = vmatprep.mubr.bf16.mxu0 0
        %6549 = vmatmul.mubr.bf16.gmra.mxu0 %v6266
        %v6550 = vpop.f32.mrf.mxu0
        %v6551 = vadd.f32 0.0, %v6550
        %v6552 = vpop.f32.mrf.mxu0
        %v6553 = vpop.f32.mrf.mxu0
        %v6554 = vadd.f32 0.0, %v6553
        %v6555 = vpop.f32.mrf.mxu0
        %6556 = vdwg.mxu0
        %v6557 = vadd.f32 %v5131, %v6303
        %v6558 = vadd.f32 %v5132, %v6306
        %v6559 = vadd.f32 %v5133, %v6311
        %v6560 = vadd.f32 %v5134, %v6314
        %v6561 = vadd.f32 %v5135, %v6319
        %v6562 = vadd.f32 %v5136, %v6322
        %v6563 = vadd.f32 %v5137, %v6327
        %v6564 = vadd.f32 %v5138, %v6330
        %v6565 = vadd.f32 %v5139, %v6335
        %v6566 = vadd.f32 %v5140, %v6338
        %v6567 = vadd.f32 %v5141, %v6343
        %v6568 = vadd.f32 %v5142, %v6346
        %v6569 = vadd.f32 %v5143, %v6351
        %v6570 = vadd.f32 %v5144, %v6354
        %v6571 = vadd.f32 %v5145, %v6359
        %v6572 = vadd.f32 %v5146, %v6362
        %v6573 = vadd.f32 %v5147, %v6367
        %v6574 = vadd.f32 %v5148, %v6370
        %v6575 = vadd.f32 %v5149, %v6375
        %v6576 = vadd.f32 %v5150, %v6378
        %v6577 = vadd.f32 %v5151, %v6383
        %v6578 = vadd.f32 %v5152, %v6386
        %v6579 = vadd.f32 %v5153, %v6391
        %v6580 = vadd.f32 %v5154, %v6394
        %v6581 = vadd.f32 %v5155, %v6399
        %v6582 = vadd.f32 %v5156, %v6402
        %v6583 = vadd.f32 %v5157, %v6407
        %v6584 = vadd.f32 %v5158, %v6410
        %v6585 = vadd.f32 %v5159, %v6415
        %v6586 = vadd.f32 %v5160, %v6418
        %v6587 = vadd.f32 %v5161, %v6423
        %v6588 = vadd.f32 %v5162, %v6426
        %v6589 = vadd.f32 %v5163, %v6431
        %v6590 = vadd.f32 %v5164, %v6434
        %v6591 = vadd.f32 %v5165, %v6439
        %v6592 = vadd.f32 %v5166, %v6442
        %v6593 = vadd.f32 %v5167, %v6447
        %v6594 = vadd.f32 %v5168, %v6450
        %v6595 = vadd.f32 %v5169, %v6455
        %v6596 = vadd.f32 %v5170, %v6458
        %v6597 = vadd.f32 %v5171, %v6463
        %v6598 = vadd.f32 %v5172, %v6466
        %v6599 = vadd.f32 %v5173, %v6471
        %v6600 = vadd.f32 %v5174, %v6474
        %v6601 = vadd.f32 %v5175, %v6479
        %v6602 = vadd.f32 %v5176, %v6482
        %v6603 = vadd.f32 %v5177, %v6487
        %v6604 = vadd.f32 %v5178, %v6490
        %v6605 = vadd.f32 %v5179, %v6495
        %v6606 = vadd.f32 %v5180, %v6498
        %v6607 = vadd.f32 %v5181, %v6503
        %v6608 = vadd.f32 %v5182, %v6506
        %v6609 = vadd.f32 %v5183, %v6511
        %v6610 = vadd.f32 %v5184, %v6514
        %v6611 = vadd.f32 %v5185, %v6519
        %v6612 = vadd.f32 %v5186, %v6522
        %v6613 = vadd.f32 %v5187, %v6527
        %v6614 = vadd.f32 %v5188, %v6530
        %v6615 = vadd.f32 %v5189, %v6535
        %v6616 = vadd.f32 %v5190, %v6538
        %v6617 = vadd.f32 %v5191, %v6543
        %v6618 = vadd.f32 %v5192, %v6546
        %v6619 = vadd.f32 %v5193, %v6551
        %v6620 = vadd.f32 %v5194, %v6554
        %v6621 = vld [vmem:[%s4504] sm:$0xe]
        %v6622 = vld [vmem:[%s4504 + $0xc] sm:$0xe]
        %v6623 = vld [vmem:[%s4504 + $0x18] sm:$0xe]
        %v6624 = vld [vmem:[%s4504 + $0x24] sm:$0xe]
        %v6625 = vld [vmem:[%s4504 + $0x30] sm:$0xe]
        %v6626 = vld [vmem:[%s4504 + $0x3c] sm:$0xe]
        %v6627 = vld [vmem:[%s4504 + $0x48] sm:$0xe]
        %v6628 = vld [vmem:[%s4504 + $0x54] sm:$0xe]
        %v6629 = vld [vmem:[%s4504 + $0x60] sm:$0xe]
        %v6630 = vld [vmem:[%s4504 + $0x6c] sm:$0xe]
        %v6631 = vld [vmem:[%s4504 + $0x78] sm:$0xe]
        %v6632 = vld [vmem:[%s4504 + $0x84] sm:$0xe]
        %v6633 = vld [vmem:[%s4504 + $0x90] sm:$0xe]
        %v6634 = vld [vmem:[%s4504 + $0x9c] sm:$0xe]
        %v6635 = vld [vmem:[%s4504 + $0xa8] sm:$0xe]
        %v6636 = vld [vmem:[%s4504 + $0xb4] sm:$0xe]
        %v6637 = vld [vmem:[%s4504 + $0xd8] sm:$0xe]
        %v6638 = vld [vmem:[%s4504 + $0xe4] sm:$0xe]
        %v6639 = vld [vmem:[%s4504 + $0xf0] sm:$0xe]
        %v6640 = vld [vmem:[%s4504 + $0xfc] sm:$0xe]
        %v6641 = vld [vmem:[%s4504 + $0x108] sm:$0xe]
        %v6642 = vld [vmem:[%s4504 + $0x114] sm:$0xe]
        %v6643 = vld [vmem:[%s4504 + $0x120] sm:$0xe]
        %v6644 = vld [vmem:[%s4504 + $0x12c] sm:$0xe]
        %v6645 = vld [vmem:[%s4504 + $0x138] sm:$0xe]
        %v6646 = vld [vmem:[%s4504 + $0x144] sm:$0xe]
        %v6647 = vld [vmem:[%s4504 + $0x150] sm:$0xe]
        %v6648 = vld [vmem:[%s4504 + $0x15c] sm:$0xe]
        %v6649 = vld [vmem:[%s4504 + $0x168] sm:$0xe]
        %v6650 = vld [vmem:[%s4504 + $0x174] sm:$0xe]
        %v6651 = vld [vmem:[%s4504 + $0x180] sm:$0xe]
        %v6652 = vld [vmem:[%s4504 + $0x18c] sm:$0xe]
        %v6749 = vrot.slane %v6621, 5
        %v6750 = vrot.slane %v6749, 4
        %v6751 = vrot.slane %v5196, 5
        %v6752 = vsel %vm3717, %v6750, %v6751
        %v6753 = vrot.slane %v6751, 4
        %v6754 = vrot.slane %v5197, 5
        %v6755 = vsel %vm3717, %v6753, %v6754
        %v6756 = vrot.slane %v6622, 5
        %v6757 = vrot.slane %v6756, 4
        %v6758 = vrot.slane %v5199, 5
        %v6759 = vsel %vm3717, %v6757, %v6758
        %v6760 = vrot.slane %v6758, 4
        %v6761 = vrot.slane %v5200, 5
        %v6762 = vsel %vm3717, %v6760, %v6761
        %v6763 = vrot.slane %v6623, 5
        %v6764 = vrot.slane %v6763, 4
        %v6765 = vrot.slane %v5202, 5
        %v6766 = vsel %vm3717, %v6764, %v6765
        %v6767 = vrot.slane %v6765, 4
        %v6768 = vrot.slane %v5203, 5
        %v6769 = vsel %vm3717, %v6767, %v6768
        %v6770 = vrot.slane %v6624, 5
        %v6771 = vrot.slane %v6770, 4
        %v6772 = vrot.slane %v5205, 5
        %v6773 = vsel %vm3717, %v6771, %v6772
        %v6774 = vrot.slane %v6772, 4
        %v6775 = vrot.slane %v5206, 5
        %v6776 = vsel %vm3717, %v6774, %v6775
        %v6777 = vrot.slane %v6625, 5
        %v6778 = vrot.slane %v6777, 4
        %v6779 = vrot.slane %v5208, 5
        %v6780 = vsel %vm3717, %v6778, %v6779
        %v6781 = vrot.slane %v6779, 4
        %v6782 = vrot.slane %v5209, 5
        %v6783 = vsel %vm3717, %v6781, %v6782
        %v6784 = vrot.slane %v6626, 5
        %v6785 = vrot.slane %v6784, 4
        %v6786 = vrot.slane %v5211, 5
        %v6787 = vsel %vm3717, %v6785, %v6786
        %v6788 = vrot.slane %v6786, 4
        %v6789 = vrot.slane %v5212, 5
        %v6790 = vsel %vm3717, %v6788, %v6789
        %v6791 = vrot.slane %v6627, 5
        %v6792 = vrot.slane %v6791, 4
        %v6793 = vrot.slane %v5214, 5
        %v6794 = vsel %vm3717, %v6792, %v6793
        %v6795 = vrot.slane %v6793, 4
        %v6796 = vrot.slane %v5215, 5
        %v6797 = vsel %vm3717, %v6795, %v6796
        %v6798 = vrot.slane %v6628, 5
        %v6799 = vrot.slane %v6798, 4
        %v6800 = vrot.slane %v5217, 5
        %v6801 = vsel %vm3717, %v6799, %v6800
        %v6802 = vrot.slane %v6800, 4
        %v6803 = vrot.slane %v5218, 5
        %v6804 = vsel %vm3717, %v6802, %v6803
        %v6805 = vrot.slane %v6629, 5
        %v6806 = vrot.slane %v6805, 4
        %v6807 = vrot.slane %v5220, 5
        %v6808 = vsel %vm3717, %v6806, %v6807
        %v6809 = vrot.slane %v6807, 4
        %v6810 = vrot.slane %v5221, 5
        %v6811 = vsel %vm3717, %v6809, %v6810
        %v6812 = vrot.slane %v6630, 5
        %v6813 = vrot.slane %v6812, 4
        %v6814 = vrot.slane %v5223, 5
        %v6815 = vsel %vm3717, %v6813, %v6814
        %v6816 = vrot.slane %v6814, 4
        %v6817 = vrot.slane %v5224, 5
        %v6818 = vsel %vm3717, %v6816, %v6817
        %v6819 = vrot.slane %v6631, 5
        %v6820 = vrot.slane %v6819, 4
        %v6821 = vrot.slane %v5226, 5
        %v6822 = vsel %vm3717, %v6820, %v6821
        %v6823 = vrot.slane %v6821, 4
        %v6824 = vrot.slane %v5227, 5
        %v6825 = vsel %vm3717, %v6823, %v6824
        %v6826 = vrot.slane %v6632, 5
        %v6827 = vrot.slane %v6826, 4
        %v6828 = vrot.slane %v5229, 5
        %v6829 = vsel %vm3717, %v6827, %v6828
        %v6830 = vrot.slane %v6828, 4
        %v6831 = vrot.slane %v5230, 5
        %v6832 = vsel %vm3717, %v6830, %v6831
        %v6833 = vrot.slane %v6633, 5
        %v6834 = vrot.slane %v6833, 4
        %v6835 = vrot.slane %v5232, 5
        %v6836 = vsel %vm3717, %v6834, %v6835
        %v6837 = vrot.slane %v6835, 4
        %v6838 = vrot.slane %v5233, 5
        %v6839 = vsel %vm3717, %v6837, %v6838
        %v6840 = vrot.slane %v6634, 5
        %v6841 = vrot.slane %v6840, 4
        %v6842 = vrot.slane %v5235, 5
        %v6843 = vsel %vm3717, %v6841, %v6842
        %v6844 = vrot.slane %v6842, 4
        %v6845 = vrot.slane %v5236, 5
        %v6846 = vsel %vm3717, %v6844, %v6845
        %v6847 = vrot.slane %v6635, 5
        %v6848 = vrot.slane %v6847, 4
        %v6849 = vrot.slane %v5238, 5
        %v6850 = vsel %vm3717, %v6848, %v6849
        %v6851 = vrot.slane %v6849, 4
        %v6852 = vrot.slane %v5239, 5
        %v6853 = vsel %vm3717, %v6851, %v6852
        %v6854 = vrot.slane %v6636, 5
        %v6855 = vrot.slane %v6854, 4
        %v6856 = vrot.slane %v5241, 5
        %v6857 = vsel %vm3717, %v6855, %v6856
        %v6858 = vrot.slane %v6856, 4
        %v6859 = vrot.slane %v5242, 5
        %v6860 = vsel %vm3717, %v6858, %v6859
        %v6861 = vrot.slane %v6637, 5
        %v6862 = vrot.slane %v6861, 4
        %v6863 = vrot.slane %v5244, 5
        %v6864 = vsel %vm3717, %v6862, %v6863
        %v6865 = vrot.slane %v6863, 4
        %v6866 = vrot.slane %v5245, 5
        %v6867 = vsel %vm3717, %v6865, %v6866
        %v6868 = vrot.slane %v6638, 5
        %v6869 = vrot.slane %v6868, 4
        %v6870 = vrot.slane %v5247, 5
        %v6871 = vsel %vm3717, %v6869, %v6870
        %v6872 = vrot.slane %v6870, 4
        %v6873 = vrot.slane %v5248, 5
        %v6874 = vsel %vm3717, %v6872, %v6873
        %v6875 = vrot.slane %v6639, 5
        %v6876 = vrot.slane %v6875, 4
        %v6877 = vrot.slane %v5250, 5
        %v6878 = vsel %vm3717, %v6876, %v6877
        %v6879 = vrot.slane %v6877, 4
        %v6880 = vrot.slane %v5251, 5
        %v6881 = vsel %vm3717, %v6879, %v6880
        %v6882 = vrot.slane %v6640, 5
        %v6883 = vrot.slane %v6882, 4
        %v6884 = vrot.slane %v5253, 5
        %v6885 = vsel %vm3717, %v6883, %v6884
        %v6886 = vrot.slane %v6884, 4
        %v6887 = vrot.slane %v5254, 5
        %v6888 = vsel %vm3717, %v6886, %v6887
        %v6889 = vrot.slane %v6641, 5
        %v6890 = vrot.slane %v6889, 4
        %v6891 = vrot.slane %v5256, 5
        %v6892 = vsel %vm3717, %v6890, %v6891
        %v6893 = vrot.slane %v6891, 4
        %v6894 = vrot.slane %v5257, 5
        %v6895 = vsel %vm3717, %v6893, %v6894
        %v6896 = vrot.slane %v6642, 5
        %v6897 = vrot.slane %v6896, 4
        %v6898 = vrot.slane %v5259, 5
        %v6899 = vsel %vm3717, %v6897, %v6898
        %v6900 = vrot.slane %v6898, 4
        %v6901 = vrot.slane %v5260, 5
        %v6902 = vsel %vm3717, %v6900, %v6901
        %v6903 = vrot.slane %v6643, 5
        %v6904 = vrot.slane %v6903, 4
        %v6905 = vrot.slane %v5262, 5
        %v6906 = vsel %vm3717, %v6904, %v6905
        %v6907 = vrot.slane %v6905, 4
        %v6908 = vrot.slane %v5263, 5
        %v6909 = vsel %vm3717, %v6907, %v6908
        %v6910 = vrot.slane %v6644, 5
        %v6911 = vrot.slane %v6910, 4
        %v6912 = vrot.slane %v5265, 5
        %v6913 = vsel %vm3717, %v6911, %v6912
        %v6914 = vrot.slane %v6912, 4
        %v6915 = vrot.slane %v5266, 5
        %v6916 = vsel %vm3717, %v6914, %v6915
        %v6917 = vrot.slane %v6645, 5
        %v6918 = vrot.slane %v6917, 4
        %v6919 = vrot.slane %v5268, 5
        %v6920 = vsel %vm3717, %v6918, %v6919
        %v6921 = vrot.slane %v6919, 4
        %v6922 = vrot.slane %v5269, 5
        %v6923 = vsel %vm3717, %v6921, %v6922
        %v6924 = vrot.slane %v6646, 5
        %v6925 = vrot.slane %v6924, 4
        %v6926 = vrot.slane %v5271, 5
        %v6927 = vsel %vm3717, %v6925, %v6926
        %v6928 = vrot.slane %v6926, 4
        %v6929 = vrot.slane %v5272, 5
        %v6930 = vsel %vm3717, %v6928, %v6929
        %v6931 = vrot.slane %v6647, 5
        %v6932 = vrot.slane %v6931, 4
        %v6933 = vrot.slane %v5274, 5
        %v6934 = vsel %vm3717, %v6932, %v6933
        %v6935 = vrot.slane %v6933, 4
        %v6936 = vrot.slane %v5275, 5
        %v6937 = vsel %vm3717, %v6935, %v6936
        %v6938 = vrot.slane %v6648, 5
        %v6939 = vrot.slane %v6938, 4
        %v6940 = vrot.slane %v5277, 5
        %v6941 = vsel %vm3717, %v6939, %v6940
        %v6942 = vrot.slane %v6940, 4
        %v6943 = vrot.slane %v5278, 5
        %v6944 = vsel %vm3717, %v6942, %v6943
        %v6945 = vrot.slane %v6649, 5
        %v6946 = vrot.slane %v6945, 4
        %v6947 = vrot.slane %v5280, 5
        %v6948 = vsel %vm3717, %v6946, %v6947
        %v6949 = vrot.slane %v6947, 4
        %v6950 = vrot.slane %v5281, 5
        %v6951 = vsel %vm3717, %v6949, %v6950
        %v6952 = vrot.slane %v6650, 5
        %v6953 = vrot.slane %v6952, 4
        %v6954 = vrot.slane %v5283, 5
        %v6955 = vsel %vm3717, %v6953, %v6954
        %v6956 = vrot.slane %v6954, 4
        %v6957 = vrot.slane %v5284, 5
        %v6958 = vsel %vm3717, %v6956, %v6957
        %v6959 = vrot.slane %v6651, 5
        %v6960 = vrot.slane %v6959, 4
        %v6961 = vrot.slane %v5286, 5
        %v6962 = vsel %vm3717, %v6960, %v6961
        %v6963 = vrot.slane %v6961, 4
        %v6964 = vrot.slane %v5287, 5
        %v6965 = vsel %vm3717, %v6963, %v6964
        %v6966 = vrot.slane %v6652, 5
        %v6967 = vrot.slane %v6966, 4
        %v6968 = vrot.slane %v5289, 5
        %v6969 = vsel %vm3717, %v6967, %v6968
        %v6970 = vrot.slane %v6968, 4
        %v6971 = vrot.slane %v5290, 5
        %v6972 = vsel %vm3717, %v6970, %v6971
        %s6973 = scalar_lea.vmem [#allocation6], 80
        %v6974 = vld [vmem:[%s6973] sm:$0xf]
        %v6975 = vld [vmem:[%s6973 + $0x4] sm:$0xf]
        %v6976 = vld [vmem:[%s6973 + $0x8] sm:$0xf]
        %v6977 = vld [vmem:[%s6973 + $0xc] sm:$0xf]
        %v6978 = vunpack.c.l.b16 %v6752
        %v6979 = vunpack.c.l.b16 %v6755
        %v6980 = vunpack.c.l.b16 %v6759
        %v6981 = vunpack.c.l.b16 %v6762
        %v6982 = vunpack.c.l.b16 %v6766
        %v6983 = vunpack.c.l.b16 %v6769
        %v6984 = vunpack.c.l.b16 %v6773
        %v6985 = vunpack.c.l.b16 %v6776
        %v6986 = vunpack.c.l.b16 %v6780
        %v6987 = vunpack.c.l.b16 %v6783
        %v6988 = vunpack.c.l.b16 %v6787
        %v6989 = vunpack.c.l.b16 %v6790
        %v6990 = vunpack.c.l.b16 %v6794
        %v6991 = vunpack.c.l.b16 %v6797
        %v6992 = vunpack.c.l.b16 %v6801
        %v6993 = vunpack.c.l.b16 %v6804
        %v6994 = vunpack.c.l.b16 %v6808
        %v6995 = vunpack.c.l.b16 %v6811
        %v6996 = vunpack.c.l.b16 %v6815
        %v6997 = vunpack.c.l.b16 %v6818
        %v6998 = vunpack.c.l.b16 %v6822
        %v6999 = vunpack.c.l.b16 %v6825
        %v7000 = vunpack.c.l.b16 %v6829
        %v7001 = vunpack.c.l.b16 %v6832
        %v7002 = vunpack.c.l.b16 %v6836
        %v7003 = vunpack.c.l.b16 %v6839
        %v7004 = vunpack.c.l.b16 %v6843
        %v7005 = vunpack.c.l.b16 %v6846
        %v7006 = vunpack.c.l.b16 %v6850
        %v7007 = vunpack.c.l.b16 %v6853
        %v7008 = vunpack.c.l.b16 %v6857
        %v7009 = vunpack.c.l.b16 %v6860
        %v7010 = vunpack.c.l.b16 %v6864
        %v7011 = vunpack.c.l.b16 %v6867
        %v7012 = vunpack.c.l.b16 %v6871
        %v7013 = vunpack.c.l.b16 %v6874
        %v7014 = vunpack.c.l.b16 %v6878
        %v7015 = vunpack.c.l.b16 %v6881
        %v7016 = vunpack.c.l.b16 %v6885
        %v7017 = vunpack.c.l.b16 %v6888
        %v7018 = vunpack.c.l.b16 %v6892
        %v7019 = vunpack.c.l.b16 %v6895
        %v7020 = vunpack.c.l.b16 %v6899
        %v7021 = vunpack.c.l.b16 %v6902
        %v7022 = vunpack.c.l.b16 %v6906
        %v7023 = vunpack.c.l.b16 %v6909
        %v7024 = vunpack.c.l.b16 %v6913
        %v7025 = vunpack.c.l.b16 %v6916
        %v7026 = vunpack.c.l.b16 %v6920
        %v7027 = vunpack.c.l.b16 %v6923
        %v7028 = vunpack.c.l.b16 %v6927
        %v7029 = vunpack.c.l.b16 %v6930
        %v7030 = vunpack.c.l.b16 %v6934
        %v7031 = vunpack.c.l.b16 %v6937
        %v7032 = vunpack.c.l.b16 %v6941
        %v7033 = vunpack.c.l.b16 %v6944
        %v7034 = vunpack.c.l.b16 %v6948
        %v7035 = vunpack.c.l.b16 %v6951
        %v7036 = vunpack.c.l.b16 %v6955
        %v7037 = vunpack.c.l.b16 %v6958
        %v7038 = vunpack.c.l.b16 %v6962
        %v7039 = vunpack.c.l.b16 %v6965
        %v7040 = vunpack.c.l.b16 %v6969
        %v7041 = vunpack.c.l.b16 %v6972
        %v7042 = vpack.c.b16 %v6979, %v6978
        %v7043 = vpack.c.b16 %v6981, %v6980
        %v7044 = vpack.c.b16 %v6983, %v6982
        %v7045 = vpack.c.b16 %v6985, %v6984
        %v7046 = vpack.c.b16 %v6987, %v6986
        %v7047 = vpack.c.b16 %v6989, %v6988
        %v7048 = vpack.c.b16 %v6991, %v6990
        %v7049 = vpack.c.b16 %v6993, %v6992
        %v7050 = vpack.c.b16 %v6995, %v6994
        %v7051 = vpack.c.b16 %v6997, %v6996
        %v7052 = vpack.c.b16 %v6999, %v6998
        %v7053 = vpack.c.b16 %v7001, %v7000
        %v7054 = vpack.c.b16 %v7003, %v7002
        %v7055 = vpack.c.b16 %v7005, %v7004
        %v7056 = vpack.c.b16 %v7007, %v7006
        %v7057 = vpack.c.b16 %v7009, %v7008
        %v7058 = vpack.c.b16 %v7011, %v7010
        %v7059 = vpack.c.b16 %v7013, %v7012
        %v7060 = vpack.c.b16 %v7015, %v7014
        %v7061 = vpack.c.b16 %v7017, %v7016
        %v7062 = vpack.c.b16 %v7019, %v7018
        %v7063 = vpack.c.b16 %v7021, %v7020
        %v7064 = vpack.c.b16 %v7023, %v7022
        %v7065 = vpack.c.b16 %v7025, %v7024
        %v7066 = vpack.c.b16 %v7027, %v7026
        %v7067 = vpack.c.b16 %v7029, %v7028
        %v7068 = vpack.c.b16 %v7031, %v7030
        %v7069 = vpack.c.b16 %v7033, %v7032
        %v7070 = vpack.c.b16 %v7035, %v7034
        %v7071 = vpack.c.b16 %v7037, %v7036
        %v7072 = vpack.c.b16 %v7039, %v7038
        %v7073 = vpack.c.b16 %v7041, %v7040
        %v7078 = vunpack.c.l.b16 %v6974
        %v7079 = vunpack.c.l.b16 %v6975
        %v7080 = vunpack.c.l.b16 %v6976
        %v7081 = vunpack.c.l.b16 %v6977
        %v7082 = vpack.c.b16 %v7079, %v7078
        %v7083 = vpack.c.b16 %v7081, %v7080
        %v7087 = vsel %vm2676, %v7042, 0
        %v7090 = vsel %vm2676, %v7043, 0
        %v7093 = vsel %vm2676, %v7044, 0
        %v7096 = vsel %vm2676, %v7045, 0
        %v7099 = vsel %vm2676, %v7046, 0
        %v7102 = vsel %vm2676, %v7047, 0
        %v7105 = vsel %vm2676, %v7048, 0
        %v7108 = vsel %vm2676, %v7049, 0
        %v7111 = vsel %vm2676, %v7050, 0
        %v7114 = vsel %vm2676, %v7051, 0
        %v7117 = vsel %vm2676, %v7052, 0
        %v7120 = vsel %vm2676, %v7053, 0
        %v7123 = vsel %vm2676, %v7054, 0
        %v7126 = vsel %vm2676, %v7055, 0
        %v7129 = vsel %vm2676, %v7056, 0
        %v7132 = vsel %vm2676, %v7057, 0
        %v7135 = vsel %vm2676, %v7058, 0
        %v7138 = vsel %vm2676, %v7059, 0
        %v7141 = vsel %vm2676, %v7060, 0
        %v7144 = vsel %vm2676, %v7061, 0
        %v7147 = vsel %vm2676, %v7062, 0
        %v7150 = vsel %vm2676, %v7063, 0
        %v7153 = vsel %vm2676, %v7064, 0
        %v7156 = vsel %vm2676, %v7065, 0
        %v7159 = vsel %vm2676, %v7066, 0
        %v7162 = vsel %vm2676, %v7067, 0
        %v7165 = vsel %vm2676, %v7068, 0
        %v7168 = vsel %vm2676, %v7069, 0
        %v7171 = vsel %vm2676, %v7070, 0
        %v7174 = vsel %vm2676, %v7071, 0
        %v7177 = vsel %vm2676, %v7072, 0
        %v7180 = vsel %vm2676, %v7073, 0
        %7182 = vmatprep.subr.bf16.mxu0 0
        %7183 = vmatpush1.bf16.msra.mxu0 0
        %7184 = vmatprep.subr.bf16.mxu0 0
        %7185 = vmatpush1.bf16.msra.mxu0 0
        %7186 = vmatprep.subr.bf16.mxu0 0
        %7187 = vmatpush1.bf16.msra.mxu0 0
        %7188 = vmatprep.subr.bf16.mxu0 0
        %7189 = vmatpush1.bf16.msra.mxu0 0
        %7190 = vmatprep.subr.bf16.mxu0 0
        %7191 = vmatpush1.bf16.msra.mxu0 0
        %7192 = vmatprep.subr.bf16.mxu0 0
        %7193 = vmatpush1.bf16.msra.mxu0 0
        %7194 = vmatprep.subr.bf16.mxu0 0
        %7195 = vmatpush1.bf16.msra.mxu0 %v7083
        %7196 = vmatprep.subr.bf16.mxu0 0
        %7197 = vmatpush1.bf16.msra.mxu0 %v7082
        %7198 = vmatprep.subr.bf16.mxu0 0
        %7199 = vmatpush2.bf16.msra.mxu0 0
        %7200 = vmatprep.subr.bf16.mxu0 0
        %7201 = vmatpush2.bf16.msra.mxu0 0
        %7202 = vmatprep.subr.bf16.mxu0 0
        %7203 = vmatpush2.bf16.msra.mxu0 0
        %7204 = vmatprep.subr.bf16.mxu0 0
        %7205 = vmatpush2.bf16.msra.mxu0 0
        %7206 = vmatprep.subr.bf16.mxu0 0
        %7207 = vmatpush2.bf16.msra.mxu0 0
        %7208 = vmatprep.subr.bf16.mxu0 0
        %7209 = vmatpush2.bf16.msra.mxu0 0
        %7210 = vmatprep.subr.bf16.mxu0 0
        %7211 = vmatpush2.bf16.msra.mxu0 0
        %7212 = vmatprep.subr.bf16.mxu0 0
        %7213 = vmatpush2.bf16.msra.mxu0 0
        %7214 = vmatprep.mubr.bf16.mxu0 0
        %7215 = vmatmul.mubr.bf16.gmra.mxu0 %v7087
        %v7216 = vpop.f32.mrf.mxu0
        %v7217 = vadd.f32 0.0, %v7216
        %v7218 = vpop.f32.mrf.mxu0
        %v7219 = vpop.f32.mrf.mxu0
        %v7220 = vadd.f32 0.0, %v7219
        %v7221 = vpop.f32.mrf.mxu0
        %7222 = vmatprep.mubr.bf16.mxu0 0
        %7223 = vmatmul.mubr.bf16.gmra.mxu0 %v7090
        %v7224 = vpop.f32.mrf.mxu0
        %v7225 = vadd.f32 0.0, %v7224
        %v7226 = vpop.f32.mrf.mxu0
        %v7227 = vpop.f32.mrf.mxu0
        %v7228 = vadd.f32 0.0, %v7227
        %v7229 = vpop.f32.mrf.mxu0
        %7230 = vmatprep.mubr.bf16.mxu0 0
        %7231 = vmatmul.mubr.bf16.gmra.mxu0 %v7093
        %v7232 = vpop.f32.mrf.mxu0
        %v7233 = vadd.f32 0.0, %v7232
        %v7234 = vpop.f32.mrf.mxu0
        %v7235 = vpop.f32.mrf.mxu0
        %v7236 = vadd.f32 0.0, %v7235
        %v7237 = vpop.f32.mrf.mxu0
        %7238 = vmatprep.mubr.bf16.mxu0 0
        %7239 = vmatmul.mubr.bf16.gmra.mxu0 %v7096
        %v7240 = vpop.f32.mrf.mxu0
        %v7241 = vadd.f32 0.0, %v7240
        %v7242 = vpop.f32.mrf.mxu0
        %v7243 = vpop.f32.mrf.mxu0
        %v7244 = vadd.f32 0.0, %v7243
        %v7245 = vpop.f32.mrf.mxu0
        %7246 = vmatprep.mubr.bf16.mxu0 0
        %7247 = vmatmul.mubr.bf16.gmra.mxu0 %v7099
        %v7248 = vpop.f32.mrf.mxu0
        %v7249 = vadd.f32 0.0, %v7248
        %v7250 = vpop.f32.mrf.mxu0
        %v7251 = vpop.f32.mrf.mxu0
        %v7252 = vadd.f32 0.0, %v7251
        %v7253 = vpop.f32.mrf.mxu0
        %7254 = vmatprep.mubr.bf16.mxu0 0
        %7255 = vmatmul.mubr.bf16.gmra.mxu0 %v7102
        %v7256 = vpop.f32.mrf.mxu0
        %v7257 = vadd.f32 0.0, %v7256
        %v7258 = vpop.f32.mrf.mxu0
        %v7259 = vpop.f32.mrf.mxu0
        %v7260 = vadd.f32 0.0, %v7259
        %v7261 = vpop.f32.mrf.mxu0
        %7262 = vmatprep.mubr.bf16.mxu0 0
        %7263 = vmatmul.mubr.bf16.gmra.mxu0 %v7105
        %v7264 = vpop.f32.mrf.mxu0
        %v7265 = vadd.f32 0.0, %v7264
        %v7266 = vpop.f32.mrf.mxu0
        %v7267 = vpop.f32.mrf.mxu0
        %v7268 = vadd.f32 0.0, %v7267
        %v7269 = vpop.f32.mrf.mxu0
        %7270 = vmatprep.mubr.bf16.mxu0 0
        %7271 = vmatmul.mubr.bf16.gmra.mxu0 %v7108
        %v7272 = vpop.f32.mrf.mxu0
        %v7273 = vadd.f32 0.0, %v7272
        %v7274 = vpop.f32.mrf.mxu0
        %v7275 = vpop.f32.mrf.mxu0
        %v7276 = vadd.f32 0.0, %v7275
        %v7277 = vpop.f32.mrf.mxu0
        %7278 = vmatprep.mubr.bf16.mxu0 0
        %7279 = vmatmul.mubr.bf16.gmra.mxu0 %v7111
        %v7280 = vpop.f32.mrf.mxu0
        %v7281 = vadd.f32 0.0, %v7280
        %v7282 = vpop.f32.mrf.mxu0
        %v7283 = vpop.f32.mrf.mxu0
        %v7284 = vadd.f32 0.0, %v7283
        %v7285 = vpop.f32.mrf.mxu0
        %7286 = vmatprep.mubr.bf16.mxu0 0
        %7287 = vmatmul.mubr.bf16.gmra.mxu0 %v7114
        %v7288 = vpop.f32.mrf.mxu0
        %v7289 = vadd.f32 0.0, %v7288
        %v7290 = vpop.f32.mrf.mxu0
        %v7291 = vpop.f32.mrf.mxu0
        %v7292 = vadd.f32 0.0, %v7291
        %v7293 = vpop.f32.mrf.mxu0
        %7294 = vmatprep.mubr.bf16.mxu0 0
        %7295 = vmatmul.mubr.bf16.gmra.mxu0 %v7117
        %v7296 = vpop.f32.mrf.mxu0
        %v7297 = vadd.f32 0.0, %v7296
        %v7298 = vpop.f32.mrf.mxu0
        %v7299 = vpop.f32.mrf.mxu0
        %v7300 = vadd.f32 0.0, %v7299
        %v7301 = vpop.f32.mrf.mxu0
        %7302 = vmatprep.mubr.bf16.mxu0 0
        %7303 = vmatmul.mubr.bf16.gmra.mxu0 %v7120
        %v7304 = vpop.f32.mrf.mxu0
        %v7305 = vadd.f32 0.0, %v7304
        %v7306 = vpop.f32.mrf.mxu0
        %v7307 = vpop.f32.mrf.mxu0
        %v7308 = vadd.f32 0.0, %v7307
        %v7309 = vpop.f32.mrf.mxu0
        %7310 = vmatprep.mubr.bf16.mxu0 0
        %7311 = vmatmul.mubr.bf16.gmra.mxu0 %v7123
        %v7312 = vpop.f32.mrf.mxu0
        %v7313 = vadd.f32 0.0, %v7312
        %v7314 = vpop.f32.mrf.mxu0
        %v7315 = vpop.f32.mrf.mxu0
        %v7316 = vadd.f32 0.0, %v7315
        %v7317 = vpop.f32.mrf.mxu0
        %7318 = vmatprep.mubr.bf16.mxu0 0
        %7319 = vmatmul.mubr.bf16.gmra.mxu0 %v7126
        %v7320 = vpop.f32.mrf.mxu0
        %v7321 = vadd.f32 0.0, %v7320
        %v7322 = vpop.f32.mrf.mxu0
        %v7323 = vpop.f32.mrf.mxu0
        %v7324 = vadd.f32 0.0, %v7323
        %v7325 = vpop.f32.mrf.mxu0
        %7326 = vmatprep.mubr.bf16.mxu0 0
        %7327 = vmatmul.mubr.bf16.gmra.mxu0 %v7129
        %v7328 = vpop.f32.mrf.mxu0
        %v7329 = vadd.f32 0.0, %v7328
        %v7330 = vpop.f32.mrf.mxu0
        %v7331 = vpop.f32.mrf.mxu0
        %v7332 = vadd.f32 0.0, %v7331
        %v7333 = vpop.f32.mrf.mxu0
        %7334 = vmatprep.mubr.bf16.mxu0 0
        %7335 = vmatmul.mubr.bf16.gmra.mxu0 %v7132
        %v7336 = vpop.f32.mrf.mxu0
        %v7337 = vadd.f32 0.0, %v7336
        %v7338 = vpop.f32.mrf.mxu0
        %v7339 = vpop.f32.mrf.mxu0
        %v7340 = vadd.f32 0.0, %v7339
        %v7341 = vpop.f32.mrf.mxu0
        %7342 = vmatprep.mubr.bf16.mxu0 0
        %7343 = vmatmul.mubr.bf16.gmra.mxu0 %v7135
        %v7344 = vpop.f32.mrf.mxu0
        %v7345 = vadd.f32 0.0, %v7344
        %v7346 = vpop.f32.mrf.mxu0
        %v7347 = vpop.f32.mrf.mxu0
        %v7348 = vadd.f32 0.0, %v7347
        %v7349 = vpop.f32.mrf.mxu0
        %7350 = vmatprep.mubr.bf16.mxu0 0
        %7351 = vmatmul.mubr.bf16.gmra.mxu0 %v7138
        %v7352 = vpop.f32.mrf.mxu0
        %v7353 = vadd.f32 0.0, %v7352
        %v7354 = vpop.f32.mrf.mxu0
        %v7355 = vpop.f32.mrf.mxu0
        %v7356 = vadd.f32 0.0, %v7355
        %v7357 = vpop.f32.mrf.mxu0
        %7358 = vmatprep.mubr.bf16.mxu0 0
        %7359 = vmatmul.mubr.bf16.gmra.mxu0 %v7141
        %v7360 = vpop.f32.mrf.mxu0
        %v7361 = vadd.f32 0.0, %v7360
        %v7362 = vpop.f32.mrf.mxu0
        %v7363 = vpop.f32.mrf.mxu0
        %v7364 = vadd.f32 0.0, %v7363
        %v7365 = vpop.f32.mrf.mxu0
        %7366 = vmatprep.mubr.bf16.mxu0 0
        %7367 = vmatmul.mubr.bf16.gmra.mxu0 %v7144
        %v7368 = vpop.f32.mrf.mxu0
        %v7369 = vadd.f32 0.0, %v7368
        %v7370 = vpop.f32.mrf.mxu0
        %v7371 = vpop.f32.mrf.mxu0
        %v7372 = vadd.f32 0.0, %v7371
        %v7373 = vpop.f32.mrf.mxu0
        %7374 = vmatprep.mubr.bf16.mxu0 0
        %7375 = vmatmul.mubr.bf16.gmra.mxu0 %v7147
        %v7376 = vpop.f32.mrf.mxu0
        %v7377 = vadd.f32 0.0, %v7376
        %v7378 = vpop.f32.mrf.mxu0
        %v7379 = vpop.f32.mrf.mxu0
        %v7380 = vadd.f32 0.0, %v7379
        %v7381 = vpop.f32.mrf.mxu0
        %7382 = vmatprep.mubr.bf16.mxu0 0
        %7383 = vmatmul.mubr.bf16.gmra.mxu0 %v7150
        %v7384 = vpop.f32.mrf.mxu0
        %v7385 = vadd.f32 0.0, %v7384
        %v7386 = vpop.f32.mrf.mxu0
        %v7387 = vpop.f32.mrf.mxu0
        %v7388 = vadd.f32 0.0, %v7387
        %v7389 = vpop.f32.mrf.mxu0
        %7390 = vmatprep.mubr.bf16.mxu0 0
        %7391 = vmatmul.mubr.bf16.gmra.mxu0 %v7153
        %v7392 = vpop.f32.mrf.mxu0
        %v7393 = vadd.f32 0.0, %v7392
        %v7394 = vpop.f32.mrf.mxu0
        %v7395 = vpop.f32.mrf.mxu0
        %v7396 = vadd.f32 0.0, %v7395
        %v7397 = vpop.f32.mrf.mxu0
        %7398 = vmatprep.mubr.bf16.mxu0 0
        %7399 = vmatmul.mubr.bf16.gmra.mxu0 %v7156
        %v7400 = vpop.f32.mrf.mxu0
        %v7401 = vadd.f32 0.0, %v7400
        %v7402 = vpop.f32.mrf.mxu0
        %v7403 = vpop.f32.mrf.mxu0
        %v7404 = vadd.f32 0.0, %v7403
        %v7405 = vpop.f32.mrf.mxu0
        %7406 = vmatprep.mubr.bf16.mxu0 0
        %7407 = vmatmul.mubr.bf16.gmra.mxu0 %v7159
        %v7408 = vpop.f32.mrf.mxu0
        %v7409 = vadd.f32 0.0, %v7408
        %v7410 = vpop.f32.mrf.mxu0
        %v7411 = vpop.f32.mrf.mxu0
        %v7412 = vadd.f32 0.0, %v7411
        %v7413 = vpop.f32.mrf.mxu0
        %7414 = vmatprep.mubr.bf16.mxu0 0
        %7415 = vmatmul.mubr.bf16.gmra.mxu0 %v7162
        %v7416 = vpop.f32.mrf.mxu0
        %v7417 = vadd.f32 0.0, %v7416
        %v7418 = vpop.f32.mrf.mxu0
        %v7419 = vpop.f32.mrf.mxu0
        %v7420 = vadd.f32 0.0, %v7419
        %v7421 = vpop.f32.mrf.mxu0
        %7422 = vmatprep.mubr.bf16.mxu0 0
        %7423 = vmatmul.mubr.bf16.gmra.mxu0 %v7165
        %v7424 = vpop.f32.mrf.mxu0
        %v7425 = vadd.f32 0.0, %v7424
        %v7426 = vpop.f32.mrf.mxu0
        %v7427 = vpop.f32.mrf.mxu0
        %v7428 = vadd.f32 0.0, %v7427
        %v7429 = vpop.f32.mrf.mxu0
        %7430 = vmatprep.mubr.bf16.mxu0 0
        %7431 = vmatmul.mubr.bf16.gmra.mxu0 %v7168
        %v7432 = vpop.f32.mrf.mxu0
        %v7433 = vadd.f32 0.0, %v7432
        %v7434 = vpop.f32.mrf.mxu0
        %v7435 = vpop.f32.mrf.mxu0
        %v7436 = vadd.f32 0.0, %v7435
        %v7437 = vpop.f32.mrf.mxu0
        %7438 = vmatprep.mubr.bf16.mxu0 0
        %7439 = vmatmul.mubr.bf16.gmra.mxu0 %v7171
        %v7440 = vpop.f32.mrf.mxu0
        %v7441 = vadd.f32 0.0, %v7440
        %v7442 = vpop.f32.mrf.mxu0
        %v7443 = vpop.f32.mrf.mxu0
        %v7444 = vadd.f32 0.0, %v7443
        %v7445 = vpop.f32.mrf.mxu0
        %7446 = vmatprep.mubr.bf16.mxu0 0
        %7447 = vmatmul.mubr.bf16.gmra.mxu0 %v7174
        %v7448 = vpop.f32.mrf.mxu0
        %v7449 = vadd.f32 0.0, %v7448
        %v7450 = vpop.f32.mrf.mxu0
        %v7451 = vpop.f32.mrf.mxu0
        %v7452 = vadd.f32 0.0, %v7451
        %v7453 = vpop.f32.mrf.mxu0
        %7454 = vmatprep.mubr.bf16.mxu0 0
        %7455 = vmatmul.mubr.bf16.gmra.mxu0 %v7177
        %v7456 = vpop.f32.mrf.mxu0
        %v7457 = vadd.f32 0.0, %v7456
        %v7458 = vpop.f32.mrf.mxu0
        %v7459 = vpop.f32.mrf.mxu0
        %v7460 = vadd.f32 0.0, %v7459
        %v7461 = vpop.f32.mrf.mxu0
        %7462 = vmatprep.mubr.bf16.mxu0 0
        %7463 = vmatmul.mubr.bf16.gmra.mxu0 %v7180
        %v7464 = vpop.f32.mrf.mxu0
        %v7465 = vadd.f32 0.0, %v7464
        %v7466 = vpop.f32.mrf.mxu0
        %v7467 = vpop.f32.mrf.mxu0
        %v7468 = vadd.f32 0.0, %v7467
        %v7469 = vpop.f32.mrf.mxu0
        %7470 = vdwg.mxu0
        %v7471 = vadd.f32 %v6557, %v7217
        %v7472 = vadd.f32 %v6558, %v7220
        %v7473 = vadd.f32 %v6559, %v7225
        %v7474 = vadd.f32 %v6560, %v7228
        %v7475 = vadd.f32 %v6561, %v7233
        %v7476 = vadd.f32 %v6562, %v7236
        %v7477 = vadd.f32 %v6563, %v7241
        %v7478 = vadd.f32 %v6564, %v7244
        %v7479 = vadd.f32 %v6565, %v7249
        %v7480 = vadd.f32 %v6566, %v7252
        %v7481 = vadd.f32 %v6567, %v7257
        %v7482 = vadd.f32 %v6568, %v7260
        %v7483 = vadd.f32 %v6569, %v7265
        %v7484 = vadd.f32 %v6570, %v7268
        %v7485 = vadd.f32 %v6571, %v7273
        %v7486 = vadd.f32 %v6572, %v7276
        %v7487 = vadd.f32 %v6573, %v7281
        %v7488 = vadd.f32 %v6574, %v7284
        %v7489 = vadd.f32 %v6575, %v7289
        %v7490 = vadd.f32 %v6576, %v7292
        %v7491 = vadd.f32 %v6577, %v7297
        %v7492 = vadd.f32 %v6578, %v7300
        %v7493 = vadd.f32 %v6579, %v7305
        %v7494 = vadd.f32 %v6580, %v7308
        %v7495 = vadd.f32 %v6581, %v7313
        %v7496 = vadd.f32 %v6582, %v7316
        %v7497 = vadd.f32 %v6583, %v7321
        %v7498 = vadd.f32 %v6584, %v7324
        %v7499 = vadd.f32 %v6585, %v7329
        %v7500 = vadd.f32 %v6586, %v7332
        %v7501 = vadd.f32 %v6587, %v7337
        %v7502 = vadd.f32 %v6588, %v7340
        %v7503 = vadd.f32 %v6589, %v7345
        %v7504 = vadd.f32 %v6590, %v7348
        %v7505 = vadd.f32 %v6591, %v7353
        %v7506 = vadd.f32 %v6592, %v7356
        %v7507 = vadd.f32 %v6593, %v7361
        %v7508 = vadd.f32 %v6594, %v7364
        %v7509 = vadd.f32 %v6595, %v7369
        %v7510 = vadd.f32 %v6596, %v7372
        %v7511 = vadd.f32 %v6597, %v7377
        %v7512 = vadd.f32 %v6598, %v7380
        %v7513 = vadd.f32 %v6599, %v7385
        %v7514 = vadd.f32 %v6600, %v7388
        %v7515 = vadd.f32 %v6601, %v7393
        %v7516 = vadd.f32 %v6602, %v7396
        %v7517 = vadd.f32 %v6603, %v7401
        %v7518 = vadd.f32 %v6604, %v7404
        %v7519 = vadd.f32 %v6605, %v7409
        %v7520 = vadd.f32 %v6606, %v7412
        %v7521 = vadd.f32 %v6607, %v7417
        %v7522 = vadd.f32 %v6608, %v7420
        %v7523 = vadd.f32 %v6609, %v7425
        %v7524 = vadd.f32 %v6610, %v7428
        %v7525 = vadd.f32 %v6611, %v7433
        %v7526 = vadd.f32 %v6612, %v7436
        %v7527 = vadd.f32 %v6613, %v7441
        %v7528 = vadd.f32 %v6614, %v7444
        %v7529 = vadd.f32 %v6615, %v7449
        %v7530 = vadd.f32 %v6616, %v7452
        %v7531 = vadd.f32 %v6617, %v7457
        %v7532 = vadd.f32 %v6618, %v7460
        %v7533 = vadd.f32 %v6619, %v7465
        %v7534 = vadd.f32 %v6620, %v7468
        %s7535 = scalar_lea.vmem [#allocation2], 24
        %v7536 = vld [vmem:[%s7535] sm:$0xf]
        %v7537 = vld [vmem:[%s7535 + $0x4] sm:$0xf]
        %v7538 = vld [vmem:[%s7535 + $0xc] sm:$0xf]
        %v7539 = vld [vmem:[%s7535 + $0x10] sm:$0xf]
        %v7540 = vld [vmem:[%s7535 + $0x18] sm:$0xf]
        %v7541 = vld [vmem:[%s7535 + $0x1c] sm:$0xf]
        %v7542 = vld [vmem:[%s7535 + $0x24] sm:$0xf]
        %v7543 = vld [vmem:[%s7535 + $0x28] sm:$0xf]
        %v7544 = vld [vmem:[%s7535 + $0x30] sm:$0xf]
        %v7545 = vld [vmem:[%s7535 + $0x34] sm:$0xf]
        %v7546 = vld [vmem:[%s7535 + $0x3c] sm:$0xf]
        %v7547 = vld [vmem:[%s7535 + $0x40] sm:$0xf]
        %v7548 = vld [vmem:[%s7535 + $0x48] sm:$0xf]
        %v7549 = vld [vmem:[%s7535 + $0x4c] sm:$0xf]
        %v7550 = vld [vmem:[%s7535 + $0x54] sm:$0xf]
        %v7551 = vld [vmem:[%s7535 + $0x58] sm:$0xf]
        %v7552 = vld [vmem:[%s7535 + $0x60] sm:$0xf]
        %v7553 = vld [vmem:[%s7535 + $0x64] sm:$0xf]
        %v7554 = vld [vmem:[%s7535 + $0x6c] sm:$0xf]
        %v7555 = vld [vmem:[%s7535 + $0x70] sm:$0xf]
        %v7556 = vld [vmem:[%s7535 + $0x78] sm:$0xf]
        %v7557 = vld [vmem:[%s7535 + $0x7c] sm:$0xf]
        %v7558 = vld [vmem:[%s7535 + $0x84] sm:$0xf]
        %v7559 = vld [vmem:[%s7535 + $0x88] sm:$0xf]
        %v7560 = vld [vmem:[%s7535 + $0x90] sm:$0xf]
        %v7561 = vld [vmem:[%s7535 + $0x94] sm:$0xf]
        %v7562 = vld [vmem:[%s7535 + $0x9c] sm:$0xf]
        %v7563 = vld [vmem:[%s7535 + $0xa0] sm:$0xf]
        %v7564 = vld [vmem:[%s7535 + $0xa8] sm:$0xf]
        %v7565 = vld [vmem:[%s7535 + $0xac] sm:$0xf]
        %v7566 = vld [vmem:[%s7535 + $0xb4] sm:$0xf]
        %v7567 = vld [vmem:[%s7535 + $0xb8] sm:$0xf]
        %v7568 = vld [vmem:[%s7535 + $0xd8] sm:$0xf]
        %v7569 = vld [vmem:[%s7535 + $0xdc] sm:$0xf]
        %v7570 = vld [vmem:[%s7535 + $0xe4] sm:$0xf]
        %v7571 = vld [vmem:[%s7535 + $0xe8] sm:$0xf]
        %v7572 = vld [vmem:[%s7535 + $0xf0] sm:$0xf]
        %v7573 = vld [vmem:[%s7535 + $0xf4] sm:$0xf]
        %v7574 = vld [vmem:[%s7535 + $0xfc] sm:$0xf]
        %v7575 = vld [vmem:[%s7535 + $0x100] sm:$0xf]
        %v7576 = vld [vmem:[%s7535 + $0x108] sm:$0xf]
        %v7577 = vld [vmem:[%s7535 + $0x10c] sm:$0xf]
        %v7578 = vld [vmem:[%s7535 + $0x114] sm:$0xf]
        %v7579 = vld [vmem:[%s7535 + $0x118] sm:$0xf]
        %v7580 = vld [vmem:[%s7535 + $0x120] sm:$0xf]
        %v7581 = vld [vmem:[%s7535 + $0x124] sm:$0xf]
        %v7582 = vld [vmem:[%s7535 + $0x12c] sm:$0xf]
        %v7583 = vld [vmem:[%s7535 + $0x130] sm:$0xf]
        %v7584 = vld [vmem:[%s7535 + $0x138] sm:$0xf]
        %v7585 = vld [vmem:[%s7535 + $0x13c] sm:$0xf]
        %v7586 = vld [vmem:[%s7535 + $0x144] sm:$0xf]
        %v7587 = vld [vmem:[%s7535 + $0x148] sm:$0xf]
        %v7588 = vld [vmem:[%s7535 + $0x150] sm:$0xf]
        %v7589 = vld [vmem:[%s7535 + $0x154] sm:$0xf]
        %v7590 = vld [vmem:[%s7535 + $0x15c] sm:$0xf]
        %v7591 = vld [vmem:[%s7535 + $0x160] sm:$0xf]
        %v7592 = vld [vmem:[%s7535 + $0x168] sm:$0xf]
        %v7593 = vld [vmem:[%s7535 + $0x16c] sm:$0xf]
        %v7594 = vld [vmem:[%s7535 + $0x174] sm:$0xf]
        %v7595 = vld [vmem:[%s7535 + $0x178] sm:$0xf]
        %v7596 = vld [vmem:[%s7535 + $0x180] sm:$0xf]
        %v7597 = vld [vmem:[%s7535 + $0x184] sm:$0xf]
        %v7598 = vld [vmem:[%s7535 + $0x18c] sm:$0xf]
        %v7599 = vld [vmem:[%s7535 + $0x190] sm:$0xf]
        %s7600 = scalar_lea.vmem [#allocation6], 96
        %v7601 = vld [vmem:[%s7600] sm:$0xf]
        %v7602 = vld [vmem:[%s7600 + $0x4] sm:$0xf]
        %v7603 = vld [vmem:[%s7600 + $0x8] sm:$0xf]
        %v7604 = vld [vmem:[%s7600 + $0xc] sm:$0xf]
        %v7669 = vunpack.c.l.b16 %v7536
        %v7670 = vunpack.c.l.b16 %v7537
        %v7671 = vunpack.c.l.b16 %v7538
        %v7672 = vunpack.c.l.b16 %v7539
        %v7673 = vunpack.c.l.b16 %v7540
        %v7674 = vunpack.c.l.b16 %v7541
        %v7675 = vunpack.c.l.b16 %v7542
        %v7676 = vunpack.c.l.b16 %v7543
        %v7677 = vunpack.c.l.b16 %v7544
        %v7678 = vunpack.c.l.b16 %v7545
        %v7679 = vunpack.c.l.b16 %v7546
        %v7680 = vunpack.c.l.b16 %v7547
        %v7681 = vunpack.c.l.b16 %v7548
        %v7682 = vunpack.c.l.b16 %v7549
        %v7683 = vunpack.c.l.b16 %v7550
        %v7684 = vunpack.c.l.b16 %v7551
        %v7685 = vunpack.c.l.b16 %v7552
        %v7686 = vunpack.c.l.b16 %v7553
        %v7687 = vunpack.c.l.b16 %v7554
        %v7688 = vunpack.c.l.b16 %v7555
        %v7689 = vunpack.c.l.b16 %v7556
        %v7690 = vunpack.c.l.b16 %v7557
        %v7691 = vunpack.c.l.b16 %v7558
        %v7692 = vunpack.c.l.b16 %v7559
        %v7693 = vunpack.c.l.b16 %v7560
        %v7694 = vunpack.c.l.b16 %v7561
        %v7695 = vunpack.c.l.b16 %v7562
        %v7696 = vunpack.c.l.b16 %v7563
        %v7697 = vunpack.c.l.b16 %v7564
        %v7698 = vunpack.c.l.b16 %v7565
        %v7699 = vunpack.c.l.b16 %v7566
        %v7700 = vunpack.c.l.b16 %v7567
        %v7701 = vunpack.c.l.b16 %v7568
        %v7702 = vunpack.c.l.b16 %v7569
        %v7703 = vunpack.c.l.b16 %v7570
        %v7704 = vunpack.c.l.b16 %v7571
        %v7705 = vunpack.c.l.b16 %v7572
        %v7706 = vunpack.c.l.b16 %v7573
        %v7707 = vunpack.c.l.b16 %v7574
        %v7708 = vunpack.c.l.b16 %v7575
        %v7709 = vunpack.c.l.b16 %v7576
        %v7710 = vunpack.c.l.b16 %v7577
        %v7711 = vunpack.c.l.b16 %v7578
        %v7712 = vunpack.c.l.b16 %v7579
        %v7713 = vunpack.c.l.b16 %v7580
        %v7714 = vunpack.c.l.b16 %v7581
        %v7715 = vunpack.c.l.b16 %v7582
        %v7716 = vunpack.c.l.b16 %v7583
        %v7717 = vunpack.c.l.b16 %v7584
        %v7718 = vunpack.c.l.b16 %v7585
        %v7719 = vunpack.c.l.b16 %v7586
        %v7720 = vunpack.c.l.b16 %v7587
        %v7721 = vunpack.c.l.b16 %v7588
        %v7722 = vunpack.c.l.b16 %v7589
        %v7723 = vunpack.c.l.b16 %v7590
        %v7724 = vunpack.c.l.b16 %v7591
        %v7725 = vunpack.c.l.b16 %v7592
        %v7726 = vunpack.c.l.b16 %v7593
        %v7727 = vunpack.c.l.b16 %v7594
        %v7728 = vunpack.c.l.b16 %v7595
        %v7729 = vunpack.c.l.b16 %v7596
        %v7730 = vunpack.c.l.b16 %v7597
        %v7731 = vunpack.c.l.b16 %v7598
        %v7732 = vunpack.c.l.b16 %v7599
        %v7733 = vpack.c.b16 %v7670, %v7669
        %v7734 = vpack.c.b16 %v7672, %v7671
        %v7735 = vpack.c.b16 %v7674, %v7673
        %v7736 = vpack.c.b16 %v7676, %v7675
        %v7737 = vpack.c.b16 %v7678, %v7677
        %v7738 = vpack.c.b16 %v7680, %v7679
        %v7739 = vpack.c.b16 %v7682, %v7681
        %v7740 = vpack.c.b16 %v7684, %v7683
        %v7741 = vpack.c.b16 %v7686, %v7685
        %v7742 = vpack.c.b16 %v7688, %v7687
        %v7743 = vpack.c.b16 %v7690, %v7689
        %v7744 = vpack.c.b16 %v7692, %v7691
        %v7745 = vpack.c.b16 %v7694, %v7693
        %v7746 = vpack.c.b16 %v7696, %v7695
        %v7747 = vpack.c.b16 %v7698, %v7697
        %v7748 = vpack.c.b16 %v7700, %v7699
        %v7749 = vpack.c.b16 %v7702, %v7701
        %v7750 = vpack.c.b16 %v7704, %v7703
        %v7751 = vpack.c.b16 %v7706, %v7705
        %v7752 = vpack.c.b16 %v7708, %v7707
        %v7753 = vpack.c.b16 %v7710, %v7709
        %v7754 = vpack.c.b16 %v7712, %v7711
        %v7755 = vpack.c.b16 %v7714, %v7713
        %v7756 = vpack.c.b16 %v7716, %v7715
        %v7757 = vpack.c.b16 %v7718, %v7717
        %v7758 = vpack.c.b16 %v7720, %v7719
        %v7759 = vpack.c.b16 %v7722, %v7721
        %v7760 = vpack.c.b16 %v7724, %v7723
        %v7761 = vpack.c.b16 %v7726, %v7725
        %v7762 = vpack.c.b16 %v7728, %v7727
        %v7763 = vpack.c.b16 %v7730, %v7729
        %v7764 = vpack.c.b16 %v7732, %v7731
        %v7769 = vunpack.c.l.b16 %v7601
        %v7770 = vunpack.c.l.b16 %v7602
        %v7771 = vunpack.c.l.b16 %v7603
        %v7772 = vunpack.c.l.b16 %v7604
        %v7773 = vpack.c.b16 %v7770, %v7769
        %v7774 = vpack.c.b16 %v7772, %v7771
        %v7778 = vsel %vm2676, %v7733, 0
        %v7781 = vsel %vm2676, %v7734, 0
        %v7784 = vsel %vm2676, %v7735, 0
        %v7787 = vsel %vm2676, %v7736, 0
        %v7790 = vsel %vm2676, %v7737, 0
        %v7793 = vsel %vm2676, %v7738, 0
        %v7796 = vsel %vm2676, %v7739, 0
        %v7799 = vsel %vm2676, %v7740, 0
        %v7802 = vsel %vm2676, %v7741, 0
        %v7805 = vsel %vm2676, %v7742, 0
        %v7808 = vsel %vm2676, %v7743, 0
        %v7811 = vsel %vm2676, %v7744, 0
        %v7814 = vsel %vm2676, %v7745, 0
        %v7817 = vsel %vm2676, %v7746, 0
        %v7820 = vsel %vm2676, %v7747, 0
        %v7823 = vsel %vm2676, %v7748, 0
        %v7826 = vsel %vm2676, %v7749, 0
        %v7829 = vsel %vm2676, %v7750, 0
        %v7832 = vsel %vm2676, %v7751, 0
        %v7835 = vsel %vm2676, %v7752, 0
        %v7838 = vsel %vm2676, %v7753, 0
        %v7841 = vsel %vm2676, %v7754, 0
        %v7844 = vsel %vm2676, %v7755, 0
        %v7847 = vsel %vm2676, %v7756, 0
        %v7850 = vsel %vm2676, %v7757, 0
        %v7853 = vsel %vm2676, %v7758, 0
        %v7856 = vsel %vm2676, %v7759, 0
        %v7859 = vsel %vm2676, %v7760, 0
        %v7862 = vsel %vm2676, %v7761, 0
        %v7865 = vsel %vm2676, %v7762, 0
        %v7868 = vsel %vm2676, %v7763, 0
        %v7871 = vsel %vm2676, %v7764, 0
        %7873 = vmatprep.subr.bf16.mxu0 0
        %7874 = vmatpush1.bf16.msra.mxu0 0
        %7875 = vmatprep.subr.bf16.mxu0 0
        %7876 = vmatpush1.bf16.msra.mxu0 0
        %7877 = vmatprep.subr.bf16.mxu0 0
        %7878 = vmatpush1.bf16.msra.mxu0 0
        %7879 = vmatprep.subr.bf16.mxu0 0
        %7880 = vmatpush1.bf16.msra.mxu0 0
        %7881 = vmatprep.subr.bf16.mxu0 0
        %7882 = vmatpush1.bf16.msra.mxu0 0
        %7883 = vmatprep.subr.bf16.mxu0 0
        %7884 = vmatpush1.bf16.msra.mxu0 0
        %7885 = vmatprep.subr.bf16.mxu0 0
        %7886 = vmatpush1.bf16.msra.mxu0 %v7774
        %7887 = vmatprep.subr.bf16.mxu0 0
        %7888 = vmatpush1.bf16.msra.mxu0 %v7773
        %7889 = vmatprep.subr.bf16.mxu0 0
        %7890 = vmatpush2.bf16.msra.mxu0 0
        %7891 = vmatprep.subr.bf16.mxu0 0
        %7892 = vmatpush2.bf16.msra.mxu0 0
        %7893 = vmatprep.subr.bf16.mxu0 0
        %7894 = vmatpush2.bf16.msra.mxu0 0
        %7895 = vmatprep.subr.bf16.mxu0 0
        %7896 = vmatpush2.bf16.msra.mxu0 0
        %7897 = vmatprep.subr.bf16.mxu0 0
        %7898 = vmatpush2.bf16.msra.mxu0 0
        %7899 = vmatprep.subr.bf16.mxu0 0
        %7900 = vmatpush2.bf16.msra.mxu0 0
        %7901 = vmatprep.subr.bf16.mxu0 0
        %7902 = vmatpush2.bf16.msra.mxu0 0
        %7903 = vmatprep.subr.bf16.mxu0 0
        %7904 = vmatpush2.bf16.msra.mxu0 0
        %7905 = vmatprep.mubr.bf16.mxu0 0
        %7906 = vmatmul.mubr.bf16.gmra.mxu0 %v7778
        %v7907 = vpop.f32.mrf.mxu0
        %v7908 = vadd.f32 0.0, %v7907
        %v7909 = vpop.f32.mrf.mxu0
        %v7910 = vpop.f32.mrf.mxu0
        %v7911 = vadd.f32 0.0, %v7910
        %v7912 = vpop.f32.mrf.mxu0
        %7913 = vmatprep.mubr.bf16.mxu0 0
        %7914 = vmatmul.mubr.bf16.gmra.mxu0 %v7781
        %v7915 = vpop.f32.mrf.mxu0
        %v7916 = vadd.f32 0.0, %v7915
        %v7917 = vpop.f32.mrf.mxu0
        %v7918 = vpop.f32.mrf.mxu0
        %v7919 = vadd.f32 0.0, %v7918
        %v7920 = vpop.f32.mrf.mxu0
        %7921 = vmatprep.mubr.bf16.mxu0 0
        %7922 = vmatmul.mubr.bf16.gmra.mxu0 %v7784
        %v7923 = vpop.f32.mrf.mxu0
        %v7924 = vadd.f32 0.0, %v7923
        %v7925 = vpop.f32.mrf.mxu0
        %v7926 = vpop.f32.mrf.mxu0
        %v7927 = vadd.f32 0.0, %v7926
        %v7928 = vpop.f32.mrf.mxu0
        %7929 = vmatprep.mubr.bf16.mxu0 0
        %7930 = vmatmul.mubr.bf16.gmra.mxu0 %v7787
        %v7931 = vpop.f32.mrf.mxu0
        %v7932 = vadd.f32 0.0, %v7931
        %v7933 = vpop.f32.mrf.mxu0
        %v7934 = vpop.f32.mrf.mxu0
        %v7935 = vadd.f32 0.0, %v7934
        %v7936 = vpop.f32.mrf.mxu0
        %7937 = vmatprep.mubr.bf16.mxu0 0
        %7938 = vmatmul.mubr.bf16.gmra.mxu0 %v7790
        %v7939 = vpop.f32.mrf.mxu0
        %v7940 = vadd.f32 0.0, %v7939
        %v7941 = vpop.f32.mrf.mxu0
        %v7942 = vpop.f32.mrf.mxu0
        %v7943 = vadd.f32 0.0, %v7942
        %v7944 = vpop.f32.mrf.mxu0
        %7945 = vmatprep.mubr.bf16.mxu0 0
        %7946 = vmatmul.mubr.bf16.gmra.mxu0 %v7793
        %v7947 = vpop.f32.mrf.mxu0
        %v7948 = vadd.f32 0.0, %v7947
        %v7949 = vpop.f32.mrf.mxu0
        %v7950 = vpop.f32.mrf.mxu0
        %v7951 = vadd.f32 0.0, %v7950
        %v7952 = vpop.f32.mrf.mxu0
        %7953 = vmatprep.mubr.bf16.mxu0 0
        %7954 = vmatmul.mubr.bf16.gmra.mxu0 %v7796
        %v7955 = vpop.f32.mrf.mxu0
        %v7956 = vadd.f32 0.0, %v7955
        %v7957 = vpop.f32.mrf.mxu0
        %v7958 = vpop.f32.mrf.mxu0
        %v7959 = vadd.f32 0.0, %v7958
        %v7960 = vpop.f32.mrf.mxu0
        %7961 = vmatprep.mubr.bf16.mxu0 0
        %7962 = vmatmul.mubr.bf16.gmra.mxu0 %v7799
        %v7963 = vpop.f32.mrf.mxu0
        %v7964 = vadd.f32 0.0, %v7963
        %v7965 = vpop.f32.mrf.mxu0
        %v7966 = vpop.f32.mrf.mxu0
        %v7967 = vadd.f32 0.0, %v7966
        %v7968 = vpop.f32.mrf.mxu0
        %7969 = vmatprep.mubr.bf16.mxu0 0
        %7970 = vmatmul.mubr.bf16.gmra.mxu0 %v7802
        %v7971 = vpop.f32.mrf.mxu0
        %v7972 = vadd.f32 0.0, %v7971
        %v7973 = vpop.f32.mrf.mxu0
        %v7974 = vpop.f32.mrf.mxu0
        %v7975 = vadd.f32 0.0, %v7974
        %v7976 = vpop.f32.mrf.mxu0
        %7977 = vmatprep.mubr.bf16.mxu0 0
        %7978 = vmatmul.mubr.bf16.gmra.mxu0 %v7805
        %v7979 = vpop.f32.mrf.mxu0
        %v7980 = vadd.f32 0.0, %v7979
        %v7981 = vpop.f32.mrf.mxu0
        %v7982 = vpop.f32.mrf.mxu0
        %v7983 = vadd.f32 0.0, %v7982
        %v7984 = vpop.f32.mrf.mxu0
        %7985 = vmatprep.mubr.bf16.mxu0 0
        %7986 = vmatmul.mubr.bf16.gmra.mxu0 %v7808
        %v7987 = vpop.f32.mrf.mxu0
        %v7988 = vadd.f32 0.0, %v7987
        %v7989 = vpop.f32.mrf.mxu0
        %v7990 = vpop.f32.mrf.mxu0
        %v7991 = vadd.f32 0.0, %v7990
        %v7992 = vpop.f32.mrf.mxu0
        %7993 = vmatprep.mubr.bf16.mxu0 0
        %7994 = vmatmul.mubr.bf16.gmra.mxu0 %v7811
        %v7995 = vpop.f32.mrf.mxu0
        %v7996 = vadd.f32 0.0, %v7995
        %v7997 = vpop.f32.mrf.mxu0
        %v7998 = vpop.f32.mrf.mxu0
        %v7999 = vadd.f32 0.0, %v7998
        %v8000 = vpop.f32.mrf.mxu0
        %8001 = vmatprep.mubr.bf16.mxu0 0
        %8002 = vmatmul.mubr.bf16.gmra.mxu0 %v7814
        %v8003 = vpop.f32.mrf.mxu0
        %v8004 = vadd.f32 0.0, %v8003
        %v8005 = vpop.f32.mrf.mxu0
        %v8006 = vpop.f32.mrf.mxu0
        %v8007 = vadd.f32 0.0, %v8006
        %v8008 = vpop.f32.mrf.mxu0
        %8009 = vmatprep.mubr.bf16.mxu0 0
        %8010 = vmatmul.mubr.bf16.gmra.mxu0 %v7817
        %v8011 = vpop.f32.mrf.mxu0
        %v8012 = vadd.f32 0.0, %v8011
        %v8013 = vpop.f32.mrf.mxu0
        %v8014 = vpop.f32.mrf.mxu0
        %v8015 = vadd.f32 0.0, %v8014
        %v8016 = vpop.f32.mrf.mxu0
        %8017 = vmatprep.mubr.bf16.mxu0 0
        %8018 = vmatmul.mubr.bf16.gmra.mxu0 %v7820
        %v8019 = vpop.f32.mrf.mxu0
        %v8020 = vadd.f32 0.0, %v8019
        %v8021 = vpop.f32.mrf.mxu0
        %v8022 = vpop.f32.mrf.mxu0
        %v8023 = vadd.f32 0.0, %v8022
        %v8024 = vpop.f32.mrf.mxu0
        %8025 = vmatprep.mubr.bf16.mxu0 0
        %8026 = vmatmul.mubr.bf16.gmra.mxu0 %v7823
        %v8027 = vpop.f32.mrf.mxu0
        %v8028 = vadd.f32 0.0, %v8027
        %v8029 = vpop.f32.mrf.mxu0
        %v8030 = vpop.f32.mrf.mxu0
        %v8031 = vadd.f32 0.0, %v8030
        %v8032 = vpop.f32.mrf.mxu0
        %8033 = vmatprep.mubr.bf16.mxu0 0
        %8034 = vmatmul.mubr.bf16.gmra.mxu0 %v7826
        %v8035 = vpop.f32.mrf.mxu0
        %v8036 = vadd.f32 0.0, %v8035
        %v8037 = vpop.f32.mrf.mxu0
        %v8038 = vpop.f32.mrf.mxu0
        %v8039 = vadd.f32 0.0, %v8038
        %v8040 = vpop.f32.mrf.mxu0
        %8041 = vmatprep.mubr.bf16.mxu0 0
        %8042 = vmatmul.mubr.bf16.gmra.mxu0 %v7829
        %v8043 = vpop.f32.mrf.mxu0
        %v8044 = vadd.f32 0.0, %v8043
        %v8045 = vpop.f32.mrf.mxu0
        %v8046 = vpop.f32.mrf.mxu0
        %v8047 = vadd.f32 0.0, %v8046
        %v8048 = vpop.f32.mrf.mxu0
        %8049 = vmatprep.mubr.bf16.mxu0 0
        %8050 = vmatmul.mubr.bf16.gmra.mxu0 %v7832
        %v8051 = vpop.f32.mrf.mxu0
        %v8052 = vadd.f32 0.0, %v8051
        %v8053 = vpop.f32.mrf.mxu0
        %v8054 = vpop.f32.mrf.mxu0
        %v8055 = vadd.f32 0.0, %v8054
        %v8056 = vpop.f32.mrf.mxu0
        %8057 = vmatprep.mubr.bf16.mxu0 0
        %8058 = vmatmul.mubr.bf16.gmra.mxu0 %v7835
        %v8059 = vpop.f32.mrf.mxu0
        %v8060 = vadd.f32 0.0, %v8059
        %v8061 = vpop.f32.mrf.mxu0
        %v8062 = vpop.f32.mrf.mxu0
        %v8063 = vadd.f32 0.0, %v8062
        %v8064 = vpop.f32.mrf.mxu0
        %8065 = vmatprep.mubr.bf16.mxu0 0
        %8066 = vmatmul.mubr.bf16.gmra.mxu0 %v7838
        %v8067 = vpop.f32.mrf.mxu0
        %v8068 = vadd.f32 0.0, %v8067
        %v8069 = vpop.f32.mrf.mxu0
        %v8070 = vpop.f32.mrf.mxu0
        %v8071 = vadd.f32 0.0, %v8070
        %v8072 = vpop.f32.mrf.mxu0
        %8073 = vmatprep.mubr.bf16.mxu0 0
        %8074 = vmatmul.mubr.bf16.gmra.mxu0 %v7841
        %v8075 = vpop.f32.mrf.mxu0
        %v8076 = vadd.f32 0.0, %v8075
        %v8077 = vpop.f32.mrf.mxu0
        %v8078 = vpop.f32.mrf.mxu0
        %v8079 = vadd.f32 0.0, %v8078
        %v8080 = vpop.f32.mrf.mxu0
        %8081 = vmatprep.mubr.bf16.mxu0 0
        %8082 = vmatmul.mubr.bf16.gmra.mxu0 %v7844
        %v8083 = vpop.f32.mrf.mxu0
        %v8084 = vadd.f32 0.0, %v8083
        %v8085 = vpop.f32.mrf.mxu0
        %v8086 = vpop.f32.mrf.mxu0
        %v8087 = vadd.f32 0.0, %v8086
        %v8088 = vpop.f32.mrf.mxu0
        %8089 = vmatprep.mubr.bf16.mxu0 0
        %8090 = vmatmul.mubr.bf16.gmra.mxu0 %v7847
        %v8091 = vpop.f32.mrf.mxu0
        %v8092 = vadd.f32 0.0, %v8091
        %v8093 = vpop.f32.mrf.mxu0
        %v8094 = vpop.f32.mrf.mxu0
        %v8095 = vadd.f32 0.0, %v8094
        %v8096 = vpop.f32.mrf.mxu0
        %8097 = vmatprep.mubr.bf16.mxu0 0
        %8098 = vmatmul.mubr.bf16.gmra.mxu0 %v7850
        %v8099 = vpop.f32.mrf.mxu0
        %v8100 = vadd.f32 0.0, %v8099
        %v8101 = vpop.f32.mrf.mxu0
        %v8102 = vpop.f32.mrf.mxu0
        %v8103 = vadd.f32 0.0, %v8102
        %v8104 = vpop.f32.mrf.mxu0
        %8105 = vmatprep.mubr.bf16.mxu0 0
        %8106 = vmatmul.mubr.bf16.gmra.mxu0 %v7853
        %v8107 = vpop.f32.mrf.mxu0
        %v8108 = vadd.f32 0.0, %v8107
        %v8109 = vpop.f32.mrf.mxu0
        %v8110 = vpop.f32.mrf.mxu0
        %v8111 = vadd.f32 0.0, %v8110
        %v8112 = vpop.f32.mrf.mxu0
        %8113 = vmatprep.mubr.bf16.mxu0 0
        %8114 = vmatmul.mubr.bf16.gmra.mxu0 %v7856
        %v8115 = vpop.f32.mrf.mxu0
        %v8116 = vadd.f32 0.0, %v8115
        %v8117 = vpop.f32.mrf.mxu0
        %v8118 = vpop.f32.mrf.mxu0
        %v8119 = vadd.f32 0.0, %v8118
        %v8120 = vpop.f32.mrf.mxu0
        %8121 = vmatprep.mubr.bf16.mxu0 0
        %8122 = vmatmul.mubr.bf16.gmra.mxu0 %v7859
        %v8123 = vpop.f32.mrf.mxu0
        %v8124 = vadd.f32 0.0, %v8123
        %v8125 = vpop.f32.mrf.mxu0
        %v8126 = vpop.f32.mrf.mxu0
        %v8127 = vadd.f32 0.0, %v8126
        %v8128 = vpop.f32.mrf.mxu0
        %8129 = vmatprep.mubr.bf16.mxu0 0
        %8130 = vmatmul.mubr.bf16.gmra.mxu0 %v7862
        %v8131 = vpop.f32.mrf.mxu0
        %v8132 = vadd.f32 0.0, %v8131
        %v8133 = vpop.f32.mrf.mxu0
        %v8134 = vpop.f32.mrf.mxu0
        %v8135 = vadd.f32 0.0, %v8134
        %v8136 = vpop.f32.mrf.mxu0
        %8137 = vmatprep.mubr.bf16.mxu0 0
        %8138 = vmatmul.mubr.bf16.gmra.mxu0 %v7865
        %v8139 = vpop.f32.mrf.mxu0
        %v8140 = vadd.f32 0.0, %v8139
        %v8141 = vpop.f32.mrf.mxu0
        %v8142 = vpop.f32.mrf.mxu0
        %v8143 = vadd.f32 0.0, %v8142
        %v8144 = vpop.f32.mrf.mxu0
        %8145 = vmatprep.mubr.bf16.mxu0 0
        %8146 = vmatmul.mubr.bf16.gmra.mxu0 %v7868
        %v8147 = vpop.f32.mrf.mxu0
        %v8148 = vadd.f32 0.0, %v8147
        %v8149 = vpop.f32.mrf.mxu0
        %v8150 = vpop.f32.mrf.mxu0
        %v8151 = vadd.f32 0.0, %v8150
        %v8152 = vpop.f32.mrf.mxu0
        %8153 = vmatprep.mubr.bf16.mxu0 0
        %8154 = vmatmul.mubr.bf16.gmra.mxu0 %v7871
        %v8155 = vpop.f32.mrf.mxu0
        %v8156 = vadd.f32 0.0, %v8155
        %v8157 = vpop.f32.mrf.mxu0
        %v8158 = vpop.f32.mrf.mxu0
        %v8159 = vadd.f32 0.0, %v8158
        %v8160 = vpop.f32.mrf.mxu0
        %8161 = vdwg.mxu0
        %v8162 = vadd.f32 %v7471, %v7908
        %v8163 = vadd.f32 %v7472, %v7911
        %v8164 = vadd.f32 %v7473, %v7916
        %v8165 = vadd.f32 %v7474, %v7919
        %v8166 = vadd.f32 %v7475, %v7924
        %v8167 = vadd.f32 %v7476, %v7927
        %v8168 = vadd.f32 %v7477, %v7932
        %v8169 = vadd.f32 %v7478, %v7935
        %v8170 = vadd.f32 %v7479, %v7940
        %v8171 = vadd.f32 %v7480, %v7943
        %v8172 = vadd.f32 %v7481, %v7948
        %v8173 = vadd.f32 %v7482, %v7951
        %v8174 = vadd.f32 %v7483, %v7956
        %v8175 = vadd.f32 %v7484, %v7959
        %v8176 = vadd.f32 %v7485, %v7964
        %v8177 = vadd.f32 %v7486, %v7967
        %v8178 = vadd.f32 %v7487, %v7972
        %v8179 = vadd.f32 %v7488, %v7975
        %v8180 = vadd.f32 %v7489, %v7980
        %v8181 = vadd.f32 %v7490, %v7983
        %v8182 = vadd.f32 %v7491, %v7988
        %v8183 = vadd.f32 %v7492, %v7991
        %v8184 = vadd.f32 %v7493, %v7996
        %v8185 = vadd.f32 %v7494, %v7999
        %v8186 = vadd.f32 %v7495, %v8004
        %v8187 = vadd.f32 %v7496, %v8007
        %v8188 = vadd.f32 %v7497, %v8012
        %v8189 = vadd.f32 %v7498, %v8015
        %v8190 = vadd.f32 %v7499, %v8020
        %v8191 = vadd.f32 %v7500, %v8023
        %v8192 = vadd.f32 %v7501, %v8028
        %v8193 = vadd.f32 %v7502, %v8031
        %v8194 = vadd.f32 %v7503, %v8036
        %v8195 = vadd.f32 %v7504, %v8039
        %v8196 = vadd.f32 %v7505, %v8044
        %v8197 = vadd.f32 %v7506, %v8047
        %v8198 = vadd.f32 %v7507, %v8052
        %v8199 = vadd.f32 %v7508, %v8055
        %v8200 = vadd.f32 %v7509, %v8060
        %v8201 = vadd.f32 %v7510, %v8063
        %v8202 = vadd.f32 %v7511, %v8068
        %v8203 = vadd.f32 %v7512, %v8071
        %v8204 = vadd.f32 %v7513, %v8076
        %v8205 = vadd.f32 %v7514, %v8079
        %v8206 = vadd.f32 %v7515, %v8084
        %v8207 = vadd.f32 %v7516, %v8087
        %v8208 = vadd.f32 %v7517, %v8092
        %v8209 = vadd.f32 %v7518, %v8095
        %v8210 = vadd.f32 %v7519, %v8100
        %v8211 = vadd.f32 %v7520, %v8103
        %v8212 = vadd.f32 %v7521, %v8108
        %v8213 = vadd.f32 %v7522, %v8111
        %v8214 = vadd.f32 %v7523, %v8116
        %v8215 = vadd.f32 %v7524, %v8119
        %v8216 = vadd.f32 %v7525, %v8124
        %v8217 = vadd.f32 %v7526, %v8127
        %v8218 = vadd.f32 %v7527, %v8132
        %v8219 = vadd.f32 %v7528, %v8135
        %v8220 = vadd.f32 %v7529, %v8140
        %v8221 = vadd.f32 %v7530, %v8143
        %v8222 = vadd.f32 %v7531, %v8148
        %v8223 = vadd.f32 %v7532, %v8151
        %v8224 = vadd.f32 %v7533, %v8156
        %v8225 = vadd.f32 %v7534, %v8159
        %v8226 = vld [vmem:[%s7535] sm:$0xf]
        %v8227 = vld [vmem:[%s7535 + $0x4] sm:$0xf]
        %v8228 = vld [vmem:[%s7535 + $0x8] sm:$0x1]
        %v8229 = vld [vmem:[%s7535 + $0xc] sm:$0xf]
        %v8230 = vld [vmem:[%s7535 + $0x10] sm:$0xf]
        %v8231 = vld [vmem:[%s7535 + $0x14] sm:$0x1]
        %v8232 = vld [vmem:[%s7535 + $0x18] sm:$0xf]
        %v8233 = vld [vmem:[%s7535 + $0x1c] sm:$0xf]
        %v8234 = vld [vmem:[%s7535 + $0x20] sm:$0x1]
        %v8235 = vld [vmem:[%s7535 + $0x24] sm:$0xf]
        %v8236 = vld [vmem:[%s7535 + $0x28] sm:$0xf]
        %v8237 = vld [vmem:[%s7535 + $0x2c] sm:$0x1]
        %v8238 = vld [vmem:[%s7535 + $0x30] sm:$0xf]
        %v8239 = vld [vmem:[%s7535 + $0x34] sm:$0xf]
        %v8240 = vld [vmem:[%s7535 + $0x38] sm:$0x1]
        %v8241 = vld [vmem:[%s7535 + $0x3c] sm:$0xf]
        %v8242 = vld [vmem:[%s7535 + $0x40] sm:$0xf]
        %v8243 = vld [vmem:[%s7535 + $0x44] sm:$0x1]
        %v8244 = vld [vmem:[%s7535 + $0x48] sm:$0xf]
        %v8245 = vld [vmem:[%s7535 + $0x4c] sm:$0xf]
        %v8246 = vld [vmem:[%s7535 + $0x50] sm:$0x1]
        %v8247 = vld [vmem:[%s7535 + $0x54] sm:$0xf]
        %v8248 = vld [vmem:[%s7535 + $0x58] sm:$0xf]
        %v8249 = vld [vmem:[%s7535 + $0x5c] sm:$0x1]
        %v8250 = vld [vmem:[%s7535 + $0x60] sm:$0xf]
        %v8251 = vld [vmem:[%s7535 + $0x64] sm:$0xf]
        %v8252 = vld [vmem:[%s7535 + $0x68] sm:$0x1]
        %v8253 = vld [vmem:[%s7535 + $0x6c] sm:$0xf]
        %v8254 = vld [vmem:[%s7535 + $0x70] sm:$0xf]
        %v8255 = vld [vmem:[%s7535 + $0x74] sm:$0x1]
        %v8256 = vld [vmem:[%s7535 + $0x78] sm:$0xf]
        %v8257 = vld [vmem:[%s7535 + $0x7c] sm:$0xf]
        %v8258 = vld [vmem:[%s7535 + $0x80] sm:$0x1]
        %v8259 = vld [vmem:[%s7535 + $0x84] sm:$0xf]
        %v8260 = vld [vmem:[%s7535 + $0x88] sm:$0xf]
        %v8261 = vld [vmem:[%s7535 + $0x8c] sm:$0x1]
        %v8262 = vld [vmem:[%s7535 + $0x90] sm:$0xf]
        %v8263 = vld [vmem:[%s7535 + $0x94] sm:$0xf]
        %v8264 = vld [vmem:[%s7535 + $0x98] sm:$0x1]
        %v8265 = vld [vmem:[%s7535 + $0x9c] sm:$0xf]
        %v8266 = vld [vmem:[%s7535 + $0xa0] sm:$0xf]
        %v8267 = vld [vmem:[%s7535 + $0xa4] sm:$0x1]
        %v8268 = vld [vmem:[%s7535 + $0xa8] sm:$0xf]
        %v8269 = vld [vmem:[%s7535 + $0xac] sm:$0xf]
        %v8270 = vld [vmem:[%s7535 + $0xb0] sm:$0x1]
        %v8271 = vld [vmem:[%s7535 + $0xb4] sm:$0xf]
        %v8272 = vld [vmem:[%s7535 + $0xb8] sm:$0xf]
        %v8273 = vld [vmem:[%s7535 + $0xbc] sm:$0x1]
        %v8274 = vld [vmem:[%s7535 + $0xd8] sm:$0xf]
        %v8275 = vld [vmem:[%s7535 + $0xdc] sm:$0xf]
        %v8276 = vld [vmem:[%s7535 + $0xe0] sm:$0x1]
        %v8277 = vld [vmem:[%s7535 + $0xe4] sm:$0xf]
        %v8278 = vld [vmem:[%s7535 + $0xe8] sm:$0xf]
        %v8279 = vld [vmem:[%s7535 + $0xec] sm:$0x1]
        %v8280 = vld [vmem:[%s7535 + $0xf0] sm:$0xf]
        %v8281 = vld [vmem:[%s7535 + $0xf4] sm:$0xf]
        %v8282 = vld [vmem:[%s7535 + $0xf8] sm:$0x1]
        %v8283 = vld [vmem:[%s7535 + $0xfc] sm:$0xf]
        %v8284 = vld [vmem:[%s7535 + $0x100] sm:$0xf]
        %v8285 = vld [vmem:[%s7535 + $0x104] sm:$0x1]
        %v8286 = vld [vmem:[%s7535 + $0x108] sm:$0xf]
        %v8287 = vld [vmem:[%s7535 + $0x10c] sm:$0xf]
        %v8288 = vld [vmem:[%s7535 + $0x110] sm:$0x1]
        %v8289 = vld [vmem:[%s7535 + $0x114] sm:$0xf]
        %v8290 = vld [vmem:[%s7535 + $0x118] sm:$0xf]
        %v8291 = vld [vmem:[%s7535 + $0x11c] sm:$0x1]
        %v8292 = vld [vmem:[%s7535 + $0x120] sm:$0xf]
        %v8293 = vld [vmem:[%s7535 + $0x124] sm:$0xf]
        %v8294 = vld [vmem:[%s7535 + $0x128] sm:$0x1]
        %v8295 = vld [vmem:[%s7535 + $0x12c] sm:$0xf]
        %v8296 = vld [vmem:[%s7535 + $0x130] sm:$0xf]
        %v8297 = vld [vmem:[%s7535 + $0x134] sm:$0x1]
        %v8298 = vld [vmem:[%s7535 + $0x138] sm:$0xf]
        %v8299 = vld [vmem:[%s7535 + $0x13c] sm:$0xf]
        %v8300 = vld [vmem:[%s7535 + $0x140] sm:$0x1]
        %v8301 = vld [vmem:[%s7535 + $0x144] sm:$0xf]
        %v8302 = vld [vmem:[%s7535 + $0x148] sm:$0xf]
        %v8303 = vld [vmem:[%s7535 + $0x14c] sm:$0x1]
        %v8304 = vld [vmem:[%s7535 + $0x150] sm:$0xf]
        %v8305 = vld [vmem:[%s7535 + $0x154] sm:$0xf]
        %v8306 = vld [vmem:[%s7535 + $0x158] sm:$0x1]
        %v8307 = vld [vmem:[%s7535 + $0x15c] sm:$0xf]
        %v8308 = vld [vmem:[%s7535 + $0x160] sm:$0xf]
        %v8309 = vld [vmem:[%s7535 + $0x164] sm:$0x1]
        %v8310 = vld [vmem:[%s7535 + $0x168] sm:$0xf]
        %v8311 = vld [vmem:[%s7535 + $0x16c] sm:$0xf]
        %v8312 = vld [vmem:[%s7535 + $0x170] sm:$0x1]
        %v8313 = vld [vmem:[%s7535 + $0x174] sm:$0xf]
        %v8314 = vld [vmem:[%s7535 + $0x178] sm:$0xf]
        %v8315 = vld [vmem:[%s7535 + $0x17c] sm:$0x1]
        %v8316 = vld [vmem:[%s7535 + $0x180] sm:$0xf]
        %v8317 = vld [vmem:[%s7535 + $0x184] sm:$0xf]
        %v8318 = vld [vmem:[%s7535 + $0x188] sm:$0x1]
        %v8319 = vld [vmem:[%s7535 + $0x18c] sm:$0xf]
        %v8320 = vld [vmem:[%s7535 + $0x190] sm:$0xf]
        %v8321 = vld [vmem:[%s7535 + $0x194] sm:$0x1]
        %v8323 = vshrl.u32 %v8226, 16
        %v8325 = vrot.slane %v8323, 4
        %v8326 = vshll.u32 %v8226, 16
        %v8328 = vrot.slane %v8326, 5
        %v8329 = vor.u32 %v8325, %v8328
        %v8330 = vrot.slane %v8329, 4
        %v8332 = vshll.u32 %v8227, 16
        %v8334 = vrot.slane %v8332, 5
        %v8335 = vsel %vm1794, %v8330, %v8334
        %v8336 = vshrl.u32 %v8227, 16
        %v8338 = vrot.slane %v8336, 4
        %v8339 = vor.u32 %v8338, %v8334
        %v8340 = vrot.slane %v8339, 4
        %v8342 = vshll.u32 %v8228, 16
        %v8344 = vrot.slane %v8342, 5
        %v8345 = vsel %vm1794, %v8340, %v8344
        %v8347 = vshrl.u32 %v8229, 16
        %v8349 = vrot.slane %v8347, 4
        %v8350 = vshll.u32 %v8229, 16
        %v8352 = vrot.slane %v8350, 5
        %v8353 = vor.u32 %v8349, %v8352
        %v8354 = vrot.slane %v8353, 4
        %v8356 = vshll.u32 %v8230, 16
        %v8358 = vrot.slane %v8356, 5
        %v8359 = vsel %vm1794, %v8354, %v8358
        %v8360 = vshrl.u32 %v8230, 16
        %v8362 = vrot.slane %v8360, 4
        %v8363 = vor.u32 %v8362, %v8358
        %v8364 = vrot.slane %v8363, 4
        %v8366 = vshll.u32 %v8231, 16
        %v8368 = vrot.slane %v8366, 5
        %v8369 = vsel %vm1794, %v8364, %v8368
        %v8371 = vshrl.u32 %v8232, 16
        %v8373 = vrot.slane %v8371, 4
        %v8374 = vshll.u32 %v8232, 16
        %v8376 = vrot.slane %v8374, 5
        %v8377 = vor.u32 %v8373, %v8376
        %v8378 = vrot.slane %v8377, 4
        %v8380 = vshll.u32 %v8233, 16
        %v8382 = vrot.slane %v8380, 5
        %v8383 = vsel %vm1794, %v8378, %v8382
        %v8384 = vshrl.u32 %v8233, 16
        %v8386 = vrot.slane %v8384, 4
        %v8387 = vor.u32 %v8386, %v8382
        %v8388 = vrot.slane %v8387, 4
        %v8390 = vshll.u32 %v8234, 16
        %v8392 = vrot.slane %v8390, 5
        %v8393 = vsel %vm1794, %v8388, %v8392
        %v8395 = vshrl.u32 %v8235, 16
        %v8397 = vrot.slane %v8395, 4
        %v8398 = vshll.u32 %v8235, 16
        %v8400 = vrot.slane %v8398, 5
        %v8401 = vor.u32 %v8397, %v8400
        %v8402 = vrot.slane %v8401, 4
        %v8404 = vshll.u32 %v8236, 16
        %v8406 = vrot.slane %v8404, 5
        %v8407 = vsel %vm1794, %v8402, %v8406
        %v8408 = vshrl.u32 %v8236, 16
        %v8410 = vrot.slane %v8408, 4
        %v8411 = vor.u32 %v8410, %v8406
        %v8412 = vrot.slane %v8411, 4
        %v8414 = vshll.u32 %v8237, 16
        %v8416 = vrot.slane %v8414, 5
        %v8417 = vsel %vm1794, %v8412, %v8416
        %v8419 = vshrl.u32 %v8238, 16
        %v8421 = vrot.slane %v8419, 4
        %v8422 = vshll.u32 %v8238, 16
        %v8424 = vrot.slane %v8422, 5
        %v8425 = vor.u32 %v8421, %v8424
        %v8426 = vrot.slane %v8425, 4
        %v8428 = vshll.u32 %v8239, 16
        %v8430 = vrot.slane %v8428, 5
        %v8431 = vsel %vm1794, %v8426, %v8430
        %v8432 = vshrl.u32 %v8239, 16
        %v8434 = vrot.slane %v8432, 4
        %v8435 = vor.u32 %v8434, %v8430
        %v8436 = vrot.slane %v8435, 4
        %v8438 = vshll.u32 %v8240, 16
        %v8440 = vrot.slane %v8438, 5
        %v8441 = vsel %vm1794, %v8436, %v8440
        %v8443 = vshrl.u32 %v8241, 16
        %v8445 = vrot.slane %v8443, 4
        %v8446 = vshll.u32 %v8241, 16
        %v8448 = vrot.slane %v8446, 5
        %v8449 = vor.u32 %v8445, %v8448
        %v8450 = vrot.slane %v8449, 4
        %v8452 = vshll.u32 %v8242, 16
        %v8454 = vrot.slane %v8452, 5
        %v8455 = vsel %vm1794, %v8450, %v8454
        %v8456 = vshrl.u32 %v8242, 16
        %v8458 = vrot.slane %v8456, 4
        %v8459 = vor.u32 %v8458, %v8454
        %v8460 = vrot.slane %v8459, 4
        %v8462 = vshll.u32 %v8243, 16
        %v8464 = vrot.slane %v8462, 5
        %v8465 = vsel %vm1794, %v8460, %v8464
        %v8467 = vshrl.u32 %v8244, 16
        %v8469 = vrot.slane %v8467, 4
        %v8470 = vshll.u32 %v8244, 16
        %v8472 = vrot.slane %v8470, 5
        %v8473 = vor.u32 %v8469, %v8472
        %v8474 = vrot.slane %v8473, 4
        %v8476 = vshll.u32 %v8245, 16
        %v8478 = vrot.slane %v8476, 5
        %v8479 = vsel %vm1794, %v8474, %v8478
        %v8480 = vshrl.u32 %v8245, 16
        %v8482 = vrot.slane %v8480, 4
        %v8483 = vor.u32 %v8482, %v8478
        %v8484 = vrot.slane %v8483, 4
        %v8486 = vshll.u32 %v8246, 16
        %v8488 = vrot.slane %v8486, 5
        %v8489 = vsel %vm1794, %v8484, %v8488
        %v8491 = vshrl.u32 %v8247, 16
        %v8493 = vrot.slane %v8491, 4
        %v8494 = vshll.u32 %v8247, 16
        %v8496 = vrot.slane %v8494, 5
        %v8497 = vor.u32 %v8493, %v8496
        %v8498 = vrot.slane %v8497, 4
        %v8500 = vshll.u32 %v8248, 16
        %v8502 = vrot.slane %v8500, 5
        %v8503 = vsel %vm1794, %v8498, %v8502
        %v8504 = vshrl.u32 %v8248, 16
        %v8506 = vrot.slane %v8504, 4
        %v8507 = vor.u32 %v8506, %v8502
        %v8508 = vrot.slane %v8507, 4
        %v8510 = vshll.u32 %v8249, 16
        %v8512 = vrot.slane %v8510, 5
        %v8513 = vsel %vm1794, %v8508, %v8512
        %v8515 = vshrl.u32 %v8250, 16
        %v8517 = vrot.slane %v8515, 4
        %v8518 = vshll.u32 %v8250, 16
        %v8520 = vrot.slane %v8518, 5
        %v8521 = vor.u32 %v8517, %v8520
        %v8522 = vrot.slane %v8521, 4
        %v8524 = vshll.u32 %v8251, 16
        %v8526 = vrot.slane %v8524, 5
        %v8527 = vsel %vm1794, %v8522, %v8526
        %v8528 = vshrl.u32 %v8251, 16
        %v8530 = vrot.slane %v8528, 4
        %v8531 = vor.u32 %v8530, %v8526
        %v8532 = vrot.slane %v8531, 4
        %v8534 = vshll.u32 %v8252, 16
        %v8536 = vrot.slane %v8534, 5
        %v8537 = vsel %vm1794, %v8532, %v8536
        %v8539 = vshrl.u32 %v8253, 16
        %v8541 = vrot.slane %v8539, 4
        %v8542 = vshll.u32 %v8253, 16
        %v8544 = vrot.slane %v8542, 5
        %v8545 = vor.u32 %v8541, %v8544
        %v8546 = vrot.slane %v8545, 4
        %v8548 = vshll.u32 %v8254, 16
        %v8550 = vrot.slane %v8548, 5
        %v8551 = vsel %vm1794, %v8546, %v8550
        %v8552 = vshrl.u32 %v8254, 16
        %v8554 = vrot.slane %v8552, 4
        %v8555 = vor.u32 %v8554, %v8550
        %v8556 = vrot.slane %v8555, 4
        %v8558 = vshll.u32 %v8255, 16
        %v8560 = vrot.slane %v8558, 5
        %v8561 = vsel %vm1794, %v8556, %v8560
        %v8563 = vshrl.u32 %v8256, 16
        %v8565 = vrot.slane %v8563, 4
        %v8566 = vshll.u32 %v8256, 16
        %v8568 = vrot.slane %v8566, 5
        %v8569 = vor.u32 %v8565, %v8568
        %v8570 = vrot.slane %v8569, 4
        %v8572 = vshll.u32 %v8257, 16
        %v8574 = vrot.slane %v8572, 5
        %v8575 = vsel %vm1794, %v8570, %v8574
        %v8576 = vshrl.u32 %v8257, 16
        %v8578 = vrot.slane %v8576, 4
        %v8579 = vor.u32 %v8578, %v8574
        %v8580 = vrot.slane %v8579, 4
        %v8582 = vshll.u32 %v8258, 16
        %v8584 = vrot.slane %v8582, 5
        %v8585 = vsel %vm1794, %v8580, %v8584
        %v8587 = vshrl.u32 %v8259, 16
        %v8589 = vrot.slane %v8587, 4
        %v8590 = vshll.u32 %v8259, 16
        %v8592 = vrot.slane %v8590, 5
        %v8593 = vor.u32 %v8589, %v8592
        %v8594 = vrot.slane %v8593, 4
        %v8596 = vshll.u32 %v8260, 16
        %v8598 = vrot.slane %v8596, 5
        %v8599 = vsel %vm1794, %v8594, %v8598
        %v8600 = vshrl.u32 %v8260, 16
        %v8602 = vrot.slane %v8600, 4
        %v8603 = vor.u32 %v8602, %v8598
        %v8604 = vrot.slane %v8603, 4
        %v8606 = vshll.u32 %v8261, 16
        %v8608 = vrot.slane %v8606, 5
        %v8609 = vsel %vm1794, %v8604, %v8608
        %v8611 = vshrl.u32 %v8262, 16
        %v8613 = vrot.slane %v8611, 4
        %v8614 = vshll.u32 %v8262, 16
        %v8616 = vrot.slane %v8614, 5
        %v8617 = vor.u32 %v8613, %v8616
        %v8618 = vrot.slane %v8617, 4
        %v8620 = vshll.u32 %v8263, 16
        %v8622 = vrot.slane %v8620, 5
        %v8623 = vsel %vm1794, %v8618, %v8622
        %v8624 = vshrl.u32 %v8263, 16
        %v8626 = vrot.slane %v8624, 4
        %v8627 = vor.u32 %v8626, %v8622
        %v8628 = vrot.slane %v8627, 4
        %v8630 = vshll.u32 %v8264, 16
        %v8632 = vrot.slane %v8630, 5
        %v8633 = vsel %vm1794, %v8628, %v8632
        %v8635 = vshrl.u32 %v8265, 16
        %v8637 = vrot.slane %v8635, 4
        %v8638 = vshll.u32 %v8265, 16
        %v8640 = vrot.slane %v8638, 5
        %v8641 = vor.u32 %v8637, %v8640
        %v8642 = vrot.slane %v8641, 4
        %v8644 = vshll.u32 %v8266, 16
        %v8646 = vrot.slane %v8644, 5
        %v8647 = vsel %vm1794, %v8642, %v8646
        %v8648 = vshrl.u32 %v8266, 16
        %v8650 = vrot.slane %v8648, 4
        %v8651 = vor.u32 %v8650, %v8646
        %v8652 = vrot.slane %v8651, 4
        %v8654 = vshll.u32 %v8267, 16
        %v8656 = vrot.slane %v8654, 5
        %v8657 = vsel %vm1794, %v8652, %v8656
        %v8659 = vshrl.u32 %v8268, 16
        %v8661 = vrot.slane %v8659, 4
        %v8662 = vshll.u32 %v8268, 16
        %v8664 = vrot.slane %v8662, 5
        %v8665 = vor.u32 %v8661, %v8664
        %v8666 = vrot.slane %v8665, 4
        %v8668 = vshll.u32 %v8269, 16
        %v8670 = vrot.slane %v8668, 5
        %v8671 = vsel %vm1794, %v8666, %v8670
        %v8672 = vshrl.u32 %v8269, 16
        %v8674 = vrot.slane %v8672, 4
        %v8675 = vor.u32 %v8674, %v8670
        %v8676 = vrot.slane %v8675, 4
        %v8678 = vshll.u32 %v8270, 16
        %v8680 = vrot.slane %v8678, 5
        %v8681 = vsel %vm1794, %v8676, %v8680
        %v8683 = vshrl.u32 %v8271, 16
        %v8685 = vrot.slane %v8683, 4
        %v8686 = vshll.u32 %v8271, 16
        %v8688 = vrot.slane %v8686, 5
        %v8689 = vor.u32 %v8685, %v8688
        %v8690 = vrot.slane %v8689, 4
        %v8692 = vshll.u32 %v8272, 16
        %v8694 = vrot.slane %v8692, 5
        %v8695 = vsel %vm1794, %v8690, %v8694
        %v8696 = vshrl.u32 %v8272, 16
        %v8698 = vrot.slane %v8696, 4
        %v8699 = vor.u32 %v8698, %v8694
        %v8700 = vrot.slane %v8699, 4
        %v8702 = vshll.u32 %v8273, 16
        %v8704 = vrot.slane %v8702, 5
        %v8705 = vsel %vm1794, %v8700, %v8704
        %v8707 = vshrl.u32 %v8274, 16
        %v8709 = vrot.slane %v8707, 4
        %v8710 = vshll.u32 %v8274, 16
        %v8712 = vrot.slane %v8710, 5
        %v8713 = vor.u32 %v8709, %v8712
        %v8714 = vrot.slane %v8713, 4
        %v8716 = vshll.u32 %v8275, 16
        %v8718 = vrot.slane %v8716, 5
        %v8719 = vsel %vm1794, %v8714, %v8718
        %v8720 = vshrl.u32 %v8275, 16
        %v8722 = vrot.slane %v8720, 4
        %v8723 = vor.u32 %v8722, %v8718
        %v8724 = vrot.slane %v8723, 4
        %v8726 = vshll.u32 %v8276, 16
        %v8728 = vrot.slane %v8726, 5
        %v8729 = vsel %vm1794, %v8724, %v8728
        %v8731 = vshrl.u32 %v8277, 16
        %v8733 = vrot.slane %v8731, 4
        %v8734 = vshll.u32 %v8277, 16
        %v8736 = vrot.slane %v8734, 5
        %v8737 = vor.u32 %v8733, %v8736
        %v8738 = vrot.slane %v8737, 4
        %v8740 = vshll.u32 %v8278, 16
        %v8742 = vrot.slane %v8740, 5
        %v8743 = vsel %vm1794, %v8738, %v8742
        %v8744 = vshrl.u32 %v8278, 16
        %v8746 = vrot.slane %v8744, 4
        %v8747 = vor.u32 %v8746, %v8742
        %v8748 = vrot.slane %v8747, 4
        %v8750 = vshll.u32 %v8279, 16
        %v8752 = vrot.slane %v8750, 5
        %v8753 = vsel %vm1794, %v8748, %v8752
        %v8755 = vshrl.u32 %v8280, 16
        %v8757 = vrot.slane %v8755, 4
        %v8758 = vshll.u32 %v8280, 16
        %v8760 = vrot.slane %v8758, 5
        %v8761 = vor.u32 %v8757, %v8760
        %v8762 = vrot.slane %v8761, 4
        %v8764 = vshll.u32 %v8281, 16
        %v8766 = vrot.slane %v8764, 5
        %v8767 = vsel %vm1794, %v8762, %v8766
        %v8768 = vshrl.u32 %v8281, 16
        %v8770 = vrot.slane %v8768, 4
        %v8771 = vor.u32 %v8770, %v8766
        %v8772 = vrot.slane %v8771, 4
        %v8774 = vshll.u32 %v8282, 16
        %v8776 = vrot.slane %v8774, 5
        %v8777 = vsel %vm1794, %v8772, %v8776
        %v8779 = vshrl.u32 %v8283, 16
        %v8781 = vrot.slane %v8779, 4
        %v8782 = vshll.u32 %v8283, 16
        %v8784 = vrot.slane %v8782, 5
        %v8785 = vor.u32 %v8781, %v8784
        %v8786 = vrot.slane %v8785, 4
        %v8788 = vshll.u32 %v8284, 16
        %v8790 = vrot.slane %v8788, 5
        %v8791 = vsel %vm1794, %v8786, %v8790
        %v8792 = vshrl.u32 %v8284, 16
        %v8794 = vrot.slane %v8792, 4
        %v8795 = vor.u32 %v8794, %v8790
        %v8796 = vrot.slane %v8795, 4
        %v8798 = vshll.u32 %v8285, 16
        %v8800 = vrot.slane %v8798, 5
        %v8801 = vsel %vm1794, %v8796, %v8800
        %v8803 = vshrl.u32 %v8286, 16
        %v8805 = vrot.slane %v8803, 4
        %v8806 = vshll.u32 %v8286, 16
        %v8808 = vrot.slane %v8806, 5
        %v8809 = vor.u32 %v8805, %v8808
        %v8810 = vrot.slane %v8809, 4
        %v8812 = vshll.u32 %v8287, 16
        %v8814 = vrot.slane %v8812, 5
        %v8815 = vsel %vm1794, %v8810, %v8814
        %v8816 = vshrl.u32 %v8287, 16
        %v8818 = vrot.slane %v8816, 4
        %v8819 = vor.u32 %v8818, %v8814
        %v8820 = vrot.slane %v8819, 4
        %v8822 = vshll.u32 %v8288, 16
        %v8824 = vrot.slane %v8822, 5
        %v8825 = vsel %vm1794, %v8820, %v8824
        %v8827 = vshrl.u32 %v8289, 16
        %v8829 = vrot.slane %v8827, 4
        %v8830 = vshll.u32 %v8289, 16
        %v8832 = vrot.slane %v8830, 5
        %v8833 = vor.u32 %v8829, %v8832
        %v8834 = vrot.slane %v8833, 4
        %v8836 = vshll.u32 %v8290, 16
        %v8838 = vrot.slane %v8836, 5
        %v8839 = vsel %vm1794, %v8834, %v8838
        %v8840 = vshrl.u32 %v8290, 16
        %v8842 = vrot.slane %v8840, 4
        %v8843 = vor.u32 %v8842, %v8838
        %v8844 = vrot.slane %v8843, 4
        %v8846 = vshll.u32 %v8291, 16
        %v8848 = vrot.slane %v8846, 5
        %v8849 = vsel %vm1794, %v8844, %v8848
        %v8851 = vshrl.u32 %v8292, 16
        %v8853 = vrot.slane %v8851, 4
        %v8854 = vshll.u32 %v8292, 16
        %v8856 = vrot.slane %v8854, 5
        %v8857 = vor.u32 %v8853, %v8856
        %v8858 = vrot.slane %v8857, 4
        %v8860 = vshll.u32 %v8293, 16
        %v8862 = vrot.slane %v8860, 5
        %v8863 = vsel %vm1794, %v8858, %v8862
        %v8864 = vshrl.u32 %v8293, 16
        %v8866 = vrot.slane %v8864, 4
        %v8867 = vor.u32 %v8866, %v8862
        %v8868 = vrot.slane %v8867, 4
        %v8870 = vshll.u32 %v8294, 16
        %v8872 = vrot.slane %v8870, 5
        %v8873 = vsel %vm1794, %v8868, %v8872
        %v8875 = vshrl.u32 %v8295, 16
        %v8877 = vrot.slane %v8875, 4
        %v8878 = vshll.u32 %v8295, 16
        %v8880 = vrot.slane %v8878, 5
        %v8881 = vor.u32 %v8877, %v8880
        %v8882 = vrot.slane %v8881, 4
        %v8884 = vshll.u32 %v8296, 16
        %v8886 = vrot.slane %v8884, 5
        %v8887 = vsel %vm1794, %v8882, %v8886
        %v8888 = vshrl.u32 %v8296, 16
        %v8890 = vrot.slane %v8888, 4
        %v8891 = vor.u32 %v8890, %v8886
        %v8892 = vrot.slane %v8891, 4
        %v8894 = vshll.u32 %v8297, 16
        %v8896 = vrot.slane %v8894, 5
        %v8897 = vsel %vm1794, %v8892, %v8896
        %v8899 = vshrl.u32 %v8298, 16
        %v8901 = vrot.slane %v8899, 4
        %v8902 = vshll.u32 %v8298, 16
        %v8904 = vrot.slane %v8902, 5
        %v8905 = vor.u32 %v8901, %v8904
        %v8906 = vrot.slane %v8905, 4
        %v8908 = vshll.u32 %v8299, 16
        %v8910 = vrot.slane %v8908, 5
        %v8911 = vsel %vm1794, %v8906, %v8910
        %v8912 = vshrl.u32 %v8299, 16
        %v8914 = vrot.slane %v8912, 4
        %v8915 = vor.u32 %v8914, %v8910
        %v8916 = vrot.slane %v8915, 4
        %v8918 = vshll.u32 %v8300, 16
        %v8920 = vrot.slane %v8918, 5
        %v8921 = vsel %vm1794, %v8916, %v8920
        %v8923 = vshrl.u32 %v8301, 16
        %v8925 = vrot.slane %v8923, 4
        %v8926 = vshll.u32 %v8301, 16
        %v8928 = vrot.slane %v8926, 5
        %v8929 = vor.u32 %v8925, %v8928
        %v8930 = vrot.slane %v8929, 4
        %v8932 = vshll.u32 %v8302, 16
        %v8934 = vrot.slane %v8932, 5
        %v8935 = vsel %vm1794, %v8930, %v8934
        %v8936 = vshrl.u32 %v8302, 16
        %v8938 = vrot.slane %v8936, 4
        %v8939 = vor.u32 %v8938, %v8934
        %v8940 = vrot.slane %v8939, 4
        %v8942 = vshll.u32 %v8303, 16
        %v8944 = vrot.slane %v8942, 5
        %v8945 = vsel %vm1794, %v8940, %v8944
        %v8947 = vshrl.u32 %v8304, 16
        %v8949 = vrot.slane %v8947, 4
        %v8950 = vshll.u32 %v8304, 16
        %v8952 = vrot.slane %v8950, 5
        %v8953 = vor.u32 %v8949, %v8952
        %v8954 = vrot.slane %v8953, 4
        %v8956 = vshll.u32 %v8305, 16
        %v8958 = vrot.slane %v8956, 5
        %v8959 = vsel %vm1794, %v8954, %v8958
        %v8960 = vshrl.u32 %v8305, 16
        %v8962 = vrot.slane %v8960, 4
        %v8963 = vor.u32 %v8962, %v8958
        %v8964 = vrot.slane %v8963, 4
        %v8966 = vshll.u32 %v8306, 16
        %v8968 = vrot.slane %v8966, 5
        %v8969 = vsel %vm1794, %v8964, %v8968
        %v8971 = vshrl.u32 %v8307, 16
        %v8973 = vrot.slane %v8971, 4
        %v8974 = vshll.u32 %v8307, 16
        %v8976 = vrot.slane %v8974, 5
        %v8977 = vor.u32 %v8973, %v8976
        %v8978 = vrot.slane %v8977, 4
        %v8980 = vshll.u32 %v8308, 16
        %v8982 = vrot.slane %v8980, 5
        %v8983 = vsel %vm1794, %v8978, %v8982
        %v8984 = vshrl.u32 %v8308, 16
        %v8986 = vrot.slane %v8984, 4
        %v8987 = vor.u32 %v8986, %v8982
        %v8988 = vrot.slane %v8987, 4
        %v8990 = vshll.u32 %v8309, 16
        %v8992 = vrot.slane %v8990, 5
        %v8993 = vsel %vm1794, %v8988, %v8992
        %v8995 = vshrl.u32 %v8310, 16
        %v8997 = vrot.slane %v8995, 4
        %v8998 = vshll.u32 %v8310, 16
        %v9000 = vrot.slane %v8998, 5
        %v9001 = vor.u32 %v8997, %v9000
        %v9002 = vrot.slane %v9001, 4
        %v9004 = vshll.u32 %v8311, 16
        %v9006 = vrot.slane %v9004, 5
        %v9007 = vsel %vm1794, %v9002, %v9006
        %v9008 = vshrl.u32 %v8311, 16
        %v9010 = vrot.slane %v9008, 4
        %v9011 = vor.u32 %v9010, %v9006
        %v9012 = vrot.slane %v9011, 4
        %v9014 = vshll.u32 %v8312, 16
        %v9016 = vrot.slane %v9014, 5
        %v9017 = vsel %vm1794, %v9012, %v9016
        %v9019 = vshrl.u32 %v8313, 16
        %v9021 = vrot.slane %v9019, 4
        %v9022 = vshll.u32 %v8313, 16
        %v9024 = vrot.slane %v9022, 5
        %v9025 = vor.u32 %v9021, %v9024
        %v9026 = vrot.slane %v9025, 4
        %v9028 = vshll.u32 %v8314, 16
        %v9030 = vrot.slane %v9028, 5
        %v9031 = vsel %vm1794, %v9026, %v9030
        %v9032 = vshrl.u32 %v8314, 16
        %v9034 = vrot.slane %v9032, 4
        %v9035 = vor.u32 %v9034, %v9030
        %v9036 = vrot.slane %v9035, 4
        %v9038 = vshll.u32 %v8315, 16
        %v9040 = vrot.slane %v9038, 5
        %v9041 = vsel %vm1794, %v9036, %v9040
        %v9043 = vshrl.u32 %v8316, 16
        %v9045 = vrot.slane %v9043, 4
        %v9046 = vshll.u32 %v8316, 16
        %v9048 = vrot.slane %v9046, 5
        %v9049 = vor.u32 %v9045, %v9048
        %v9050 = vrot.slane %v9049, 4
        %v9052 = vshll.u32 %v8317, 16
        %v9054 = vrot.slane %v9052, 5
        %v9055 = vsel %vm1794, %v9050, %v9054
        %v9056 = vshrl.u32 %v8317, 16
        %v9058 = vrot.slane %v9056, 4
        %v9059 = vor.u32 %v9058, %v9054
        %v9060 = vrot.slane %v9059, 4
        %v9062 = vshll.u32 %v8318, 16
        %v9064 = vrot.slane %v9062, 5
        %v9065 = vsel %vm1794, %v9060, %v9064
        %v9067 = vshrl.u32 %v8319, 16
        %v9069 = vrot.slane %v9067, 4
        %v9070 = vshll.u32 %v8319, 16
        %v9072 = vrot.slane %v9070, 5
        %v9073 = vor.u32 %v9069, %v9072
        %v9074 = vrot.slane %v9073, 4
        %v9076 = vshll.u32 %v8320, 16
        %v9078 = vrot.slane %v9076, 5
        %v9079 = vsel %vm1794, %v9074, %v9078
        %v9080 = vshrl.u32 %v8320, 16
        %v9082 = vrot.slane %v9080, 4
        %v9083 = vor.u32 %v9082, %v9078
        %v9084 = vrot.slane %v9083, 4
        %v9086 = vshll.u32 %v8321, 16
        %v9088 = vrot.slane %v9086, 5
        %v9089 = vsel %vm1794, %v9084, %v9088
        %s9090 = scalar_lea.vmem [#allocation6], 112
        %v9091 = vld [vmem:[%s9090] sm:$0xf]
        %v9092 = vld [vmem:[%s9090 + $0x4] sm:$0xf]
        %v9093 = vld [vmem:[%s9090 + $0x8] sm:$0xf]
        %v9094 = vld [vmem:[%s9090 + $0xc] sm:$0xf]
        %v9095 = vunpack.c.l.b16 %v8335
        %v9096 = vunpack.c.l.b16 %v8345
        %v9097 = vunpack.c.l.b16 %v8359
        %v9098 = vunpack.c.l.b16 %v8369
        %v9099 = vunpack.c.l.b16 %v8383
        %v9100 = vunpack.c.l.b16 %v8393
        %v9101 = vunpack.c.l.b16 %v8407
        %v9102 = vunpack.c.l.b16 %v8417
        %v9103 = vunpack.c.l.b16 %v8431
        %v9104 = vunpack.c.l.b16 %v8441
        %v9105 = vunpack.c.l.b16 %v8455
        %v9106 = vunpack.c.l.b16 %v8465
        %v9107 = vunpack.c.l.b16 %v8479
        %v9108 = vunpack.c.l.b16 %v8489
        %v9109 = vunpack.c.l.b16 %v8503
        %v9110 = vunpack.c.l.b16 %v8513
        %v9111 = vunpack.c.l.b16 %v8527
        %v9112 = vunpack.c.l.b16 %v8537
        %v9113 = vunpack.c.l.b16 %v8551
        %v9114 = vunpack.c.l.b16 %v8561
        %v9115 = vunpack.c.l.b16 %v8575
        %v9116 = vunpack.c.l.b16 %v8585
        %v9117 = vunpack.c.l.b16 %v8599
        %v9118 = vunpack.c.l.b16 %v8609
        %v9119 = vunpack.c.l.b16 %v8623
        %v9120 = vunpack.c.l.b16 %v8633
        %v9121 = vunpack.c.l.b16 %v8647
        %v9122 = vunpack.c.l.b16 %v8657
        %v9123 = vunpack.c.l.b16 %v8671
        %v9124 = vunpack.c.l.b16 %v8681
        %v9125 = vunpack.c.l.b16 %v8695
        %v9126 = vunpack.c.l.b16 %v8705
        %v9127 = vunpack.c.l.b16 %v8719
        %v9128 = vunpack.c.l.b16 %v8729
        %v9129 = vunpack.c.l.b16 %v8743
        %v9130 = vunpack.c.l.b16 %v8753
        %v9131 = vunpack.c.l.b16 %v8767
        %v9132 = vunpack.c.l.b16 %v8777
        %v9133 = vunpack.c.l.b16 %v8791
        %v9134 = vunpack.c.l.b16 %v8801
        %v9135 = vunpack.c.l.b16 %v8815
        %v9136 = vunpack.c.l.b16 %v8825
        %v9137 = vunpack.c.l.b16 %v8839
        %v9138 = vunpack.c.l.b16 %v8849
        %v9139 = vunpack.c.l.b16 %v8863
        %v9140 = vunpack.c.l.b16 %v8873
        %v9141 = vunpack.c.l.b16 %v8887
        %v9142 = vunpack.c.l.b16 %v8897
        %v9143 = vunpack.c.l.b16 %v8911
        %v9144 = vunpack.c.l.b16 %v8921
        %v9145 = vunpack.c.l.b16 %v8935
        %v9146 = vunpack.c.l.b16 %v8945
        %v9147 = vunpack.c.l.b16 %v8959
        %v9148 = vunpack.c.l.b16 %v8969
        %v9149 = vunpack.c.l.b16 %v8983
        %v9150 = vunpack.c.l.b16 %v8993
        %v9151 = vunpack.c.l.b16 %v9007
        %v9152 = vunpack.c.l.b16 %v9017
        %v9153 = vunpack.c.l.b16 %v9031
        %v9154 = vunpack.c.l.b16 %v9041
        %v9155 = vunpack.c.l.b16 %v9055
        %v9156 = vunpack.c.l.b16 %v9065
        %v9157 = vunpack.c.l.b16 %v9079
        %v9158 = vunpack.c.l.b16 %v9089
        %v9159 = vpack.c.b16 %v9096, %v9095
        %v9160 = vpack.c.b16 %v9098, %v9097
        %v9161 = vpack.c.b16 %v9100, %v9099
        %v9162 = vpack.c.b16 %v9102, %v9101
        %v9163 = vpack.c.b16 %v9104, %v9103
        %v9164 = vpack.c.b16 %v9106, %v9105
        %v9165 = vpack.c.b16 %v9108, %v9107
        %v9166 = vpack.c.b16 %v9110, %v9109
        %v9167 = vpack.c.b16 %v9112, %v9111
        %v9168 = vpack.c.b16 %v9114, %v9113
        %v9169 = vpack.c.b16 %v9116, %v9115
        %v9170 = vpack.c.b16 %v9118, %v9117
        %v9171 = vpack.c.b16 %v9120, %v9119
        %v9172 = vpack.c.b16 %v9122, %v9121
        %v9173 = vpack.c.b16 %v9124, %v9123
        %v9174 = vpack.c.b16 %v9126, %v9125
        %v9175 = vpack.c.b16 %v9128, %v9127
        %v9176 = vpack.c.b16 %v9130, %v9129
        %v9177 = vpack.c.b16 %v9132, %v9131
        %v9178 = vpack.c.b16 %v9134, %v9133
        %v9179 = vpack.c.b16 %v9136, %v9135
        %v9180 = vpack.c.b16 %v9138, %v9137
        %v9181 = vpack.c.b16 %v9140, %v9139
        %v9182 = vpack.c.b16 %v9142, %v9141
        %v9183 = vpack.c.b16 %v9144, %v9143
        %v9184 = vpack.c.b16 %v9146, %v9145
        %v9185 = vpack.c.b16 %v9148, %v9147
        %v9186 = vpack.c.b16 %v9150, %v9149
        %v9187 = vpack.c.b16 %v9152, %v9151
        %v9188 = vpack.c.b16 %v9154, %v9153
        %v9189 = vpack.c.b16 %v9156, %v9155
        %v9190 = vpack.c.b16 %v9158, %v9157
        %v9195 = vunpack.c.l.b16 %v9091
        %v9196 = vunpack.c.l.b16 %v9092
        %v9197 = vunpack.c.l.b16 %v9093
        %v9198 = vunpack.c.l.b16 %v9094
        %v9199 = vpack.c.b16 %v9196, %v9195
        %v9200 = vpack.c.b16 %v9198, %v9197
        %v9204 = vsel %vm2676, %v9159, 0
        %v9207 = vsel %vm2676, %v9160, 0
        %v9210 = vsel %vm2676, %v9161, 0
        %v9213 = vsel %vm2676, %v9162, 0
        %v9216 = vsel %vm2676, %v9163, 0
        %v9219 = vsel %vm2676, %v9164, 0
        %v9222 = vsel %vm2676, %v9165, 0
        %v9225 = vsel %vm2676, %v9166, 0
        %v9228 = vsel %vm2676, %v9167, 0
        %v9231 = vsel %vm2676, %v9168, 0
        %v9234 = vsel %vm2676, %v9169, 0
        %v9237 = vsel %vm2676, %v9170, 0
        %v9240 = vsel %vm2676, %v9171, 0
        %v9243 = vsel %vm2676, %v9172, 0
        %v9246 = vsel %vm2676, %v9173, 0
        %v9249 = vsel %vm2676, %v9174, 0
        %v9252 = vsel %vm2676, %v9175, 0
        %v9255 = vsel %vm2676, %v9176, 0
        %v9258 = vsel %vm2676, %v9177, 0
        %v9261 = vsel %vm2676, %v9178, 0
        %v9264 = vsel %vm2676, %v9179, 0
        %v9267 = vsel %vm2676, %v9180, 0
        %v9270 = vsel %vm2676, %v9181, 0
        %v9273 = vsel %vm2676, %v9182, 0
        %v9276 = vsel %vm2676, %v9183, 0
        %v9279 = vsel %vm2676, %v9184, 0
        %v9282 = vsel %vm2676, %v9185, 0
        %v9285 = vsel %vm2676, %v9186, 0
        %v9288 = vsel %vm2676, %v9187, 0
        %v9291 = vsel %vm2676, %v9188, 0
        %v9294 = vsel %vm2676, %v9189, 0
        %v9297 = vsel %vm2676, %v9190, 0
        %9299 = vmatprep.subr.bf16.mxu0 0
        %9300 = vmatpush1.bf16.msra.mxu0 0
        %9301 = vmatprep.subr.bf16.mxu0 0
        %9302 = vmatpush1.bf16.msra.mxu0 0
        %9303 = vmatprep.subr.bf16.mxu0 0
        %9304 = vmatpush1.bf16.msra.mxu0 0
        %9305 = vmatprep.subr.bf16.mxu0 0
        %9306 = vmatpush1.bf16.msra.mxu0 0
        %9307 = vmatprep.subr.bf16.mxu0 0
        %9308 = vmatpush1.bf16.msra.mxu0 0
        %9309 = vmatprep.subr.bf16.mxu0 0
        %9310 = vmatpush1.bf16.msra.mxu0 0
        %9311 = vmatprep.subr.bf16.mxu0 0
        %9312 = vmatpush1.bf16.msra.mxu0 %v9200
        %9313 = vmatprep.subr.bf16.mxu0 0
        %9314 = vmatpush1.bf16.msra.mxu0 %v9199
        %9315 = vmatprep.subr.bf16.mxu0 0
        %9316 = vmatpush2.bf16.msra.mxu0 0
        %9317 = vmatprep.subr.bf16.mxu0 0
        %9318 = vmatpush2.bf16.msra.mxu0 0
        %9319 = vmatprep.subr.bf16.mxu0 0
        %9320 = vmatpush2.bf16.msra.mxu0 0
        %9321 = vmatprep.subr.bf16.mxu0 0
        %9322 = vmatpush2.bf16.msra.mxu0 0
        %9323 = vmatprep.subr.bf16.mxu0 0
        %9324 = vmatpush2.bf16.msra.mxu0 0
        %9325 = vmatprep.subr.bf16.mxu0 0
        %9326 = vmatpush2.bf16.msra.mxu0 0
        %9327 = vmatprep.subr.bf16.mxu0 0
        %9328 = vmatpush2.bf16.msra.mxu0 0
        %9329 = vmatprep.subr.bf16.mxu0 0
        %9330 = vmatpush2.bf16.msra.mxu0 0
        %9331 = vmatprep.mubr.bf16.mxu0 0
        %9332 = vmatmul.mubr.bf16.gmra.mxu0 %v9204
        %v9333 = vpop.f32.mrf.mxu0
        %v9334 = vadd.f32 0.0, %v9333
        %v9335 = vpop.f32.mrf.mxu0
        %v9336 = vpop.f32.mrf.mxu0
        %v9337 = vadd.f32 0.0, %v9336
        %v9338 = vpop.f32.mrf.mxu0
        %9339 = vmatprep.mubr.bf16.mxu0 0
        %9340 = vmatmul.mubr.bf16.gmra.mxu0 %v9207
        %v9341 = vpop.f32.mrf.mxu0
        %v9342 = vadd.f32 0.0, %v9341
        %v9343 = vpop.f32.mrf.mxu0
        %v9344 = vpop.f32.mrf.mxu0
        %v9345 = vadd.f32 0.0, %v9344
        %v9346 = vpop.f32.mrf.mxu0
        %9347 = vmatprep.mubr.bf16.mxu0 0
        %9348 = vmatmul.mubr.bf16.gmra.mxu0 %v9210
        %v9349 = vpop.f32.mrf.mxu0
        %v9350 = vadd.f32 0.0, %v9349
        %v9351 = vpop.f32.mrf.mxu0
        %v9352 = vpop.f32.mrf.mxu0
        %v9353 = vadd.f32 0.0, %v9352
        %v9354 = vpop.f32.mrf.mxu0
        %9355 = vmatprep.mubr.bf16.mxu0 0
        %9356 = vmatmul.mubr.bf16.gmra.mxu0 %v9213
        %v9357 = vpop.f32.mrf.mxu0
        %v9358 = vadd.f32 0.0, %v9357
        %v9359 = vpop.f32.mrf.mxu0
        %v9360 = vpop.f32.mrf.mxu0
        %v9361 = vadd.f32 0.0, %v9360
        %v9362 = vpop.f32.mrf.mxu0
        %9363 = vmatprep.mubr.bf16.mxu0 0
        %9364 = vmatmul.mubr.bf16.gmra.mxu0 %v9216
        %v9365 = vpop.f32.mrf.mxu0
        %v9366 = vadd.f32 0.0, %v9365
        %v9367 = vpop.f32.mrf.mxu0
        %v9368 = vpop.f32.mrf.mxu0
        %v9369 = vadd.f32 0.0, %v9368
        %v9370 = vpop.f32.mrf.mxu0
        %9371 = vmatprep.mubr.bf16.mxu0 0
        %9372 = vmatmul.mubr.bf16.gmra.mxu0 %v9219
        %v9373 = vpop.f32.mrf.mxu0
        %v9374 = vadd.f32 0.0, %v9373
        %v9375 = vpop.f32.mrf.mxu0
        %v9376 = vpop.f32.mrf.mxu0
        %v9377 = vadd.f32 0.0, %v9376
        %v9378 = vpop.f32.mrf.mxu0
        %9379 = vmatprep.mubr.bf16.mxu0 0
        %9380 = vmatmul.mubr.bf16.gmra.mxu0 %v9222
        %v9381 = vpop.f32.mrf.mxu0
        %v9382 = vadd.f32 0.0, %v9381
        %v9383 = vpop.f32.mrf.mxu0
        %v9384 = vpop.f32.mrf.mxu0
        %v9385 = vadd.f32 0.0, %v9384
        %v9386 = vpop.f32.mrf.mxu0
        %9387 = vmatprep.mubr.bf16.mxu0 0
        %9388 = vmatmul.mubr.bf16.gmra.mxu0 %v9225
        %v9389 = vpop.f32.mrf.mxu0
        %v9390 = vadd.f32 0.0, %v9389
        %v9391 = vpop.f32.mrf.mxu0
        %v9392 = vpop.f32.mrf.mxu0
        %v9393 = vadd.f32 0.0, %v9392
        %v9394 = vpop.f32.mrf.mxu0
        %9395 = vmatprep.mubr.bf16.mxu0 0
        %9396 = vmatmul.mubr.bf16.gmra.mxu0 %v9228
        %v9397 = vpop.f32.mrf.mxu0
        %v9398 = vadd.f32 0.0, %v9397
        %v9399 = vpop.f32.mrf.mxu0
        %v9400 = vpop.f32.mrf.mxu0
        %v9401 = vadd.f32 0.0, %v9400
        %v9402 = vpop.f32.mrf.mxu0
        %9403 = vmatprep.mubr.bf16.mxu0 0
        %9404 = vmatmul.mubr.bf16.gmra.mxu0 %v9231
        %v9405 = vpop.f32.mrf.mxu0
        %v9406 = vadd.f32 0.0, %v9405
        %v9407 = vpop.f32.mrf.mxu0
        %v9408 = vpop.f32.mrf.mxu0
        %v9409 = vadd.f32 0.0, %v9408
        %v9410 = vpop.f32.mrf.mxu0
        %9411 = vmatprep.mubr.bf16.mxu0 0
        %9412 = vmatmul.mubr.bf16.gmra.mxu0 %v9234
        %v9413 = vpop.f32.mrf.mxu0
        %v9414 = vadd.f32 0.0, %v9413
        %v9415 = vpop.f32.mrf.mxu0
        %v9416 = vpop.f32.mrf.mxu0
        %v9417 = vadd.f32 0.0, %v9416
        %v9418 = vpop.f32.mrf.mxu0
        %9419 = vmatprep.mubr.bf16.mxu0 0
        %9420 = vmatmul.mubr.bf16.gmra.mxu0 %v9237
        %v9421 = vpop.f32.mrf.mxu0
        %v9422 = vadd.f32 0.0, %v9421
        %v9423 = vpop.f32.mrf.mxu0
        %v9424 = vpop.f32.mrf.mxu0
        %v9425 = vadd.f32 0.0, %v9424
        %v9426 = vpop.f32.mrf.mxu0
        %9427 = vmatprep.mubr.bf16.mxu0 0
        %9428 = vmatmul.mubr.bf16.gmra.mxu0 %v9240
        %v9429 = vpop.f32.mrf.mxu0
        %v9430 = vadd.f32 0.0, %v9429
        %v9431 = vpop.f32.mrf.mxu0
        %v9432 = vpop.f32.mrf.mxu0
        %v9433 = vadd.f32 0.0, %v9432
        %v9434 = vpop.f32.mrf.mxu0
        %9435 = vmatprep.mubr.bf16.mxu0 0
        %9436 = vmatmul.mubr.bf16.gmra.mxu0 %v9243
        %v9437 = vpop.f32.mrf.mxu0
        %v9438 = vadd.f32 0.0, %v9437
        %v9439 = vpop.f32.mrf.mxu0
        %v9440 = vpop.f32.mrf.mxu0
        %v9441 = vadd.f32 0.0, %v9440
        %v9442 = vpop.f32.mrf.mxu0
        %9443 = vmatprep.mubr.bf16.mxu0 0
        %9444 = vmatmul.mubr.bf16.gmra.mxu0 %v9246
        %v9445 = vpop.f32.mrf.mxu0
        %v9446 = vadd.f32 0.0, %v9445
        %v9447 = vpop.f32.mrf.mxu0
        %v9448 = vpop.f32.mrf.mxu0
        %v9449 = vadd.f32 0.0, %v9448
        %v9450 = vpop.f32.mrf.mxu0
        %9451 = vmatprep.mubr.bf16.mxu0 0
        %9452 = vmatmul.mubr.bf16.gmra.mxu0 %v9249
        %v9453 = vpop.f32.mrf.mxu0
        %v9454 = vadd.f32 0.0, %v9453
        %v9455 = vpop.f32.mrf.mxu0
        %v9456 = vpop.f32.mrf.mxu0
        %v9457 = vadd.f32 0.0, %v9456
        %v9458 = vpop.f32.mrf.mxu0
        %9459 = vmatprep.mubr.bf16.mxu0 0
        %9460 = vmatmul.mubr.bf16.gmra.mxu0 %v9252
        %v9461 = vpop.f32.mrf.mxu0
        %v9462 = vadd.f32 0.0, %v9461
        %v9463 = vpop.f32.mrf.mxu0
        %v9464 = vpop.f32.mrf.mxu0
        %v9465 = vadd.f32 0.0, %v9464
        %v9466 = vpop.f32.mrf.mxu0
        %9467 = vmatprep.mubr.bf16.mxu0 0
        %9468 = vmatmul.mubr.bf16.gmra.mxu0 %v9255
        %v9469 = vpop.f32.mrf.mxu0
        %v9470 = vadd.f32 0.0, %v9469
        %v9471 = vpop.f32.mrf.mxu0
        %v9472 = vpop.f32.mrf.mxu0
        %v9473 = vadd.f32 0.0, %v9472
        %v9474 = vpop.f32.mrf.mxu0
        %9475 = vmatprep.mubr.bf16.mxu0 0
        %9476 = vmatmul.mubr.bf16.gmra.mxu0 %v9258
        %v9477 = vpop.f32.mrf.mxu0
        %v9478 = vadd.f32 0.0, %v9477
        %v9479 = vpop.f32.mrf.mxu0
        %v9480 = vpop.f32.mrf.mxu0
        %v9481 = vadd.f32 0.0, %v9480
        %v9482 = vpop.f32.mrf.mxu0
        %9483 = vmatprep.mubr.bf16.mxu0 0
        %9484 = vmatmul.mubr.bf16.gmra.mxu0 %v9261
        %v9485 = vpop.f32.mrf.mxu0
        %v9486 = vadd.f32 0.0, %v9485
        %v9487 = vpop.f32.mrf.mxu0
        %v9488 = vpop.f32.mrf.mxu0
        %v9489 = vadd.f32 0.0, %v9488
        %v9490 = vpop.f32.mrf.mxu0
        %9491 = vmatprep.mubr.bf16.mxu0 0
        %9492 = vmatmul.mubr.bf16.gmra.mxu0 %v9264
        %v9493 = vpop.f32.mrf.mxu0
        %v9494 = vadd.f32 0.0, %v9493
        %v9495 = vpop.f32.mrf.mxu0
        %v9496 = vpop.f32.mrf.mxu0
        %v9497 = vadd.f32 0.0, %v9496
        %v9498 = vpop.f32.mrf.mxu0
        %9499 = vmatprep.mubr.bf16.mxu0 0
        %9500 = vmatmul.mubr.bf16.gmra.mxu0 %v9267
        %v9501 = vpop.f32.mrf.mxu0
        %v9502 = vadd.f32 0.0, %v9501
        %v9503 = vpop.f32.mrf.mxu0
        %v9504 = vpop.f32.mrf.mxu0
        %v9505 = vadd.f32 0.0, %v9504
        %v9506 = vpop.f32.mrf.mxu0
        %9507 = vmatprep.mubr.bf16.mxu0 0
        %9508 = vmatmul.mubr.bf16.gmra.mxu0 %v9270
        %v9509 = vpop.f32.mrf.mxu0
        %v9510 = vadd.f32 0.0, %v9509
        %v9511 = vpop.f32.mrf.mxu0
        %v9512 = vpop.f32.mrf.mxu0
        %v9513 = vadd.f32 0.0, %v9512
        %v9514 = vpop.f32.mrf.mxu0
        %9515 = vmatprep.mubr.bf16.mxu0 0
        %9516 = vmatmul.mubr.bf16.gmra.mxu0 %v9273
        %v9517 = vpop.f32.mrf.mxu0
        %v9518 = vadd.f32 0.0, %v9517
        %v9519 = vpop.f32.mrf.mxu0
        %v9520 = vpop.f32.mrf.mxu0
        %v9521 = vadd.f32 0.0, %v9520
        %v9522 = vpop.f32.mrf.mxu0
        %9523 = vmatprep.mubr.bf16.mxu0 0
        %9524 = vmatmul.mubr.bf16.gmra.mxu0 %v9276
        %v9525 = vpop.f32.mrf.mxu0
        %v9526 = vadd.f32 0.0, %v9525
        %v9527 = vpop.f32.mrf.mxu0
        %v9528 = vpop.f32.mrf.mxu0
        %v9529 = vadd.f32 0.0, %v9528
        %v9530 = vpop.f32.mrf.mxu0
        %9531 = vmatprep.mubr.bf16.mxu0 0
        %9532 = vmatmul.mubr.bf16.gmra.mxu0 %v9279
        %v9533 = vpop.f32.mrf.mxu0
        %v9534 = vadd.f32 0.0, %v9533
        %v9535 = vpop.f32.mrf.mxu0
        %v9536 = vpop.f32.mrf.mxu0
        %v9537 = vadd.f32 0.0, %v9536
        %v9538 = vpop.f32.mrf.mxu0
        %9539 = vmatprep.mubr.bf16.mxu0 0
        %9540 = vmatmul.mubr.bf16.gmra.mxu0 %v9282
        %v9541 = vpop.f32.mrf.mxu0
        %v9542 = vadd.f32 0.0, %v9541
        %v9543 = vpop.f32.mrf.mxu0
        %v9544 = vpop.f32.mrf.mxu0
        %v9545 = vadd.f32 0.0, %v9544
        %v9546 = vpop.f32.mrf.mxu0
        %9547 = vmatprep.mubr.bf16.mxu0 0
        %9548 = vmatmul.mubr.bf16.gmra.mxu0 %v9285
        %v9549 = vpop.f32.mrf.mxu0
        %v9550 = vadd.f32 0.0, %v9549
        %v9551 = vpop.f32.mrf.mxu0
        %v9552 = vpop.f32.mrf.mxu0
        %v9553 = vadd.f32 0.0, %v9552
        %v9554 = vpop.f32.mrf.mxu0
        %9555 = vmatprep.mubr.bf16.mxu0 0
        %9556 = vmatmul.mubr.bf16.gmra.mxu0 %v9288
        %v9557 = vpop.f32.mrf.mxu0
        %v9558 = vadd.f32 0.0, %v9557
        %v9559 = vpop.f32.mrf.mxu0
        %v9560 = vpop.f32.mrf.mxu0
        %v9561 = vadd.f32 0.0, %v9560
        %v9562 = vpop.f32.mrf.mxu0
        %9563 = vmatprep.mubr.bf16.mxu0 0
        %9564 = vmatmul.mubr.bf16.gmra.mxu0 %v9291
        %v9565 = vpop.f32.mrf.mxu0
        %v9566 = vadd.f32 0.0, %v9565
        %v9567 = vpop.f32.mrf.mxu0
        %v9568 = vpop.f32.mrf.mxu0
        %v9569 = vadd.f32 0.0, %v9568
        %v9570 = vpop.f32.mrf.mxu0
        %9571 = vmatprep.mubr.bf16.mxu0 0
        %9572 = vmatmul.mubr.bf16.gmra.mxu0 %v9294
        %v9573 = vpop.f32.mrf.mxu0
        %v9574 = vadd.f32 0.0, %v9573
        %v9575 = vpop.f32.mrf.mxu0
        %v9576 = vpop.f32.mrf.mxu0
        %v9577 = vadd.f32 0.0, %v9576
        %v9578 = vpop.f32.mrf.mxu0
        %9579 = vmatprep.mubr.bf16.mxu0 0
        %9580 = vmatmul.mubr.bf16.gmra.mxu0 %v9297
        %v9581 = vpop.f32.mrf.mxu0
        %v9582 = vadd.f32 0.0, %v9581
        %v9583 = vpop.f32.mrf.mxu0
        %v9584 = vpop.f32.mrf.mxu0
        %v9585 = vadd.f32 0.0, %v9584
        %v9586 = vpop.f32.mrf.mxu0
        %9587 = vdwg.mxu0
        %v9588 = vadd.f32 %v8162, %v9334
        %v9589 = vadd.f32 %v8163, %v9337
        %v9590 = vadd.f32 %v8164, %v9342
        %v9591 = vadd.f32 %v8165, %v9345
        %v9592 = vadd.f32 %v8166, %v9350
        %v9593 = vadd.f32 %v8167, %v9353
        %v9594 = vadd.f32 %v8168, %v9358
        %v9595 = vadd.f32 %v8169, %v9361
        %v9596 = vadd.f32 %v8170, %v9366
        %v9597 = vadd.f32 %v8171, %v9369
        %v9598 = vadd.f32 %v8172, %v9374
        %v9599 = vadd.f32 %v8173, %v9377
        %v9600 = vadd.f32 %v8174, %v9382
        %v9601 = vadd.f32 %v8175, %v9385
        %v9602 = vadd.f32 %v8176, %v9390
        %v9603 = vadd.f32 %v8177, %v9393
        %v9604 = vadd.f32 %v8178, %v9398
        %v9605 = vadd.f32 %v8179, %v9401
        %v9606 = vadd.f32 %v8180, %v9406
        %v9607 = vadd.f32 %v8181, %v9409
        %v9608 = vadd.f32 %v8182, %v9414
        %v9609 = vadd.f32 %v8183, %v9417
        %v9610 = vadd.f32 %v8184, %v9422
        %v9611 = vadd.f32 %v8185, %v9425
        %v9612 = vadd.f32 %v8186, %v9430
        %v9613 = vadd.f32 %v8187, %v9433
        %v9614 = vadd.f32 %v8188, %v9438
        %v9615 = vadd.f32 %v8189, %v9441
        %v9616 = vadd.f32 %v8190, %v9446
        %v9617 = vadd.f32 %v8191, %v9449
        %v9618 = vadd.f32 %v8192, %v9454
        %v9619 = vadd.f32 %v8193, %v9457
        %v9620 = vadd.f32 %v8194, %v9462
        %v9621 = vadd.f32 %v8195, %v9465
        %v9622 = vadd.f32 %v8196, %v9470
        %v9623 = vadd.f32 %v8197, %v9473
        %v9624 = vadd.f32 %v8198, %v9478
        %v9625 = vadd.f32 %v8199, %v9481
        %v9626 = vadd.f32 %v8200, %v9486
        %v9627 = vadd.f32 %v8201, %v9489
        %v9628 = vadd.f32 %v8202, %v9494
        %v9629 = vadd.f32 %v8203, %v9497
        %v9630 = vadd.f32 %v8204, %v9502
        %v9631 = vadd.f32 %v8205, %v9505
        %v9632 = vadd.f32 %v8206, %v9510
        %v9633 = vadd.f32 %v8207, %v9513
        %v9634 = vadd.f32 %v8208, %v9518
        %v9635 = vadd.f32 %v8209, %v9521
        %v9636 = vadd.f32 %v8210, %v9526
        %v9637 = vadd.f32 %v8211, %v9529
        %v9638 = vadd.f32 %v8212, %v9534
        %v9639 = vadd.f32 %v8213, %v9537
        %v9640 = vadd.f32 %v8214, %v9542
        %v9641 = vadd.f32 %v8215, %v9545
        %v9642 = vadd.f32 %v8216, %v9550
        %v9643 = vadd.f32 %v8217, %v9553
        %v9644 = vadd.f32 %v8218, %v9558
        %v9645 = vadd.f32 %v8219, %v9561
        %v9646 = vadd.f32 %v8220, %v9566
        %v9647 = vadd.f32 %v8221, %v9569
        %v9648 = vadd.f32 %v8222, %v9574
        %v9649 = vadd.f32 %v8223, %v9577
        %v9650 = vadd.f32 %v8224, %v9582
        %v9651 = vadd.f32 %v8225, %v9585
        %v9652 = vld [vmem:[%s7535] sm:$0xe]
        %v9653 = vld [vmem:[%s7535 + $0xc] sm:$0xe]
        %v9654 = vld [vmem:[%s7535 + $0x18] sm:$0xe]
        %v9655 = vld [vmem:[%s7535 + $0x24] sm:$0xe]
        %v9656 = vld [vmem:[%s7535 + $0x30] sm:$0xe]
        %v9657 = vld [vmem:[%s7535 + $0x3c] sm:$0xe]
        %v9658 = vld [vmem:[%s7535 + $0x48] sm:$0xe]
        %v9659 = vld [vmem:[%s7535 + $0x54] sm:$0xe]
        %v9660 = vld [vmem:[%s7535 + $0x60] sm:$0xe]
        %v9661 = vld [vmem:[%s7535 + $0x6c] sm:$0xe]
        %v9662 = vld [vmem:[%s7535 + $0x78] sm:$0xe]
        %v9663 = vld [vmem:[%s7535 + $0x84] sm:$0xe]
        %v9664 = vld [vmem:[%s7535 + $0x90] sm:$0xe]
        %v9665 = vld [vmem:[%s7535 + $0x9c] sm:$0xe]
        %v9666 = vld [vmem:[%s7535 + $0xa8] sm:$0xe]
        %v9667 = vld [vmem:[%s7535 + $0xb4] sm:$0xe]
        %v9668 = vld [vmem:[%s7535 + $0xd8] sm:$0xe]
        %v9669 = vld [vmem:[%s7535 + $0xe4] sm:$0xe]
        %v9670 = vld [vmem:[%s7535 + $0xf0] sm:$0xe]
        %v9671 = vld [vmem:[%s7535 + $0xfc] sm:$0xe]
        %v9672 = vld [vmem:[%s7535 + $0x108] sm:$0xe]
        %v9673 = vld [vmem:[%s7535 + $0x114] sm:$0xe]
        %v9674 = vld [vmem:[%s7535 + $0x120] sm:$0xe]
        %v9675 = vld [vmem:[%s7535 + $0x12c] sm:$0xe]
        %v9676 = vld [vmem:[%s7535 + $0x138] sm:$0xe]
        %v9677 = vld [vmem:[%s7535 + $0x144] sm:$0xe]
        %v9678 = vld [vmem:[%s7535 + $0x150] sm:$0xe]
        %v9679 = vld [vmem:[%s7535 + $0x15c] sm:$0xe]
        %v9680 = vld [vmem:[%s7535 + $0x168] sm:$0xe]
        %v9681 = vld [vmem:[%s7535 + $0x174] sm:$0xe]
        %v9682 = vld [vmem:[%s7535 + $0x180] sm:$0xe]
        %v9683 = vld [vmem:[%s7535 + $0x18c] sm:$0xe]
        %v9780 = vrot.slane %v9652, 5
        %v9781 = vrot.slane %v9780, 4
        %v9782 = vrot.slane %v8227, 5
        %v9783 = vsel %vm3717, %v9781, %v9782
        %v9784 = vrot.slane %v9782, 4
        %v9785 = vrot.slane %v8228, 5
        %v9786 = vsel %vm3717, %v9784, %v9785
        %v9787 = vrot.slane %v9653, 5
        %v9788 = vrot.slane %v9787, 4
        %v9789 = vrot.slane %v8230, 5
        %v9790 = vsel %vm3717, %v9788, %v9789
        %v9791 = vrot.slane %v9789, 4
        %v9792 = vrot.slane %v8231, 5
        %v9793 = vsel %vm3717, %v9791, %v9792
        %v9794 = vrot.slane %v9654, 5
        %v9795 = vrot.slane %v9794, 4
        %v9796 = vrot.slane %v8233, 5
        %v9797 = vsel %vm3717, %v9795, %v9796
        %v9798 = vrot.slane %v9796, 4
        %v9799 = vrot.slane %v8234, 5
        %v9800 = vsel %vm3717, %v9798, %v9799
        %v9801 = vrot.slane %v9655, 5
        %v9802 = vrot.slane %v9801, 4
        %v9803 = vrot.slane %v8236, 5
        %v9804 = vsel %vm3717, %v9802, %v9803
        %v9805 = vrot.slane %v9803, 4
        %v9806 = vrot.slane %v8237, 5
        %v9807 = vsel %vm3717, %v9805, %v9806
        %v9808 = vrot.slane %v9656, 5
        %v9809 = vrot.slane %v9808, 4
        %v9810 = vrot.slane %v8239, 5
        %v9811 = vsel %vm3717, %v9809, %v9810
        %v9812 = vrot.slane %v9810, 4
        %v9813 = vrot.slane %v8240, 5
        %v9814 = vsel %vm3717, %v9812, %v9813
        %v9815 = vrot.slane %v9657, 5
        %v9816 = vrot.slane %v9815, 4
        %v9817 = vrot.slane %v8242, 5
        %v9818 = vsel %vm3717, %v9816, %v9817
        %v9819 = vrot.slane %v9817, 4
        %v9820 = vrot.slane %v8243, 5
        %v9821 = vsel %vm3717, %v9819, %v9820
        %v9822 = vrot.slane %v9658, 5
        %v9823 = vrot.slane %v9822, 4
        %v9824 = vrot.slane %v8245, 5
        %v9825 = vsel %vm3717, %v9823, %v9824
        %v9826 = vrot.slane %v9824, 4
        %v9827 = vrot.slane %v8246, 5
        %v9828 = vsel %vm3717, %v9826, %v9827
        %v9829 = vrot.slane %v9659, 5
        %v9830 = vrot.slane %v9829, 4
        %v9831 = vrot.slane %v8248, 5
        %v9832 = vsel %vm3717, %v9830, %v9831
        %v9833 = vrot.slane %v9831, 4
        %v9834 = vrot.slane %v8249, 5
        %v9835 = vsel %vm3717, %v9833, %v9834
        %v9836 = vrot.slane %v9660, 5
        %v9837 = vrot.slane %v9836, 4
        %v9838 = vrot.slane %v8251, 5
        %v9839 = vsel %vm3717, %v9837, %v9838
        %v9840 = vrot.slane %v9838, 4
        %v9841 = vrot.slane %v8252, 5
        %v9842 = vsel %vm3717, %v9840, %v9841
        %v9843 = vrot.slane %v9661, 5
        %v9844 = vrot.slane %v9843, 4
        %v9845 = vrot.slane %v8254, 5
        %v9846 = vsel %vm3717, %v9844, %v9845
        %v9847 = vrot.slane %v9845, 4
        %v9848 = vrot.slane %v8255, 5
        %v9849 = vsel %vm3717, %v9847, %v9848
        %v9850 = vrot.slane %v9662, 5
        %v9851 = vrot.slane %v9850, 4
        %v9852 = vrot.slane %v8257, 5
        %v9853 = vsel %vm3717, %v9851, %v9852
        %v9854 = vrot.slane %v9852, 4
        %v9855 = vrot.slane %v8258, 5
        %v9856 = vsel %vm3717, %v9854, %v9855
        %v9857 = vrot.slane %v9663, 5
        %v9858 = vrot.slane %v9857, 4
        %v9859 = vrot.slane %v8260, 5
        %v9860 = vsel %vm3717, %v9858, %v9859
        %v9861 = vrot.slane %v9859, 4
        %v9862 = vrot.slane %v8261, 5
        %v9863 = vsel %vm3717, %v9861, %v9862
        %v9864 = vrot.slane %v9664, 5
        %v9865 = vrot.slane %v9864, 4
        %v9866 = vrot.slane %v8263, 5
        %v9867 = vsel %vm3717, %v9865, %v9866
        %v9868 = vrot.slane %v9866, 4
        %v9869 = vrot.slane %v8264, 5
        %v9870 = vsel %vm3717, %v9868, %v9869
        %v9871 = vrot.slane %v9665, 5
        %v9872 = vrot.slane %v9871, 4
        %v9873 = vrot.slane %v8266, 5
        %v9874 = vsel %vm3717, %v9872, %v9873
        %v9875 = vrot.slane %v9873, 4
        %v9876 = vrot.slane %v8267, 5
        %v9877 = vsel %vm3717, %v9875, %v9876
        %v9878 = vrot.slane %v9666, 5
        %v9879 = vrot.slane %v9878, 4
        %v9880 = vrot.slane %v8269, 5
        %v9881 = vsel %vm3717, %v9879, %v9880
        %v9882 = vrot.slane %v9880, 4
        %v9883 = vrot.slane %v8270, 5
        %v9884 = vsel %vm3717, %v9882, %v9883
        %v9885 = vrot.slane %v9667, 5
        %v9886 = vrot.slane %v9885, 4
        %v9887 = vrot.slane %v8272, 5
        %v9888 = vsel %vm3717, %v9886, %v9887
        %v9889 = vrot.slane %v9887, 4
        %v9890 = vrot.slane %v8273, 5
        %v9891 = vsel %vm3717, %v9889, %v9890
        %v9892 = vrot.slane %v9668, 5
        %v9893 = vrot.slane %v9892, 4
        %v9894 = vrot.slane %v8275, 5
        %v9895 = vsel %vm3717, %v9893, %v9894
        %v9896 = vrot.slane %v9894, 4
        %v9897 = vrot.slane %v8276, 5
        %v9898 = vsel %vm3717, %v9896, %v9897
        %v9899 = vrot.slane %v9669, 5
        %v9900 = vrot.slane %v9899, 4
        %v9901 = vrot.slane %v8278, 5
        %v9902 = vsel %vm3717, %v9900, %v9901
        %v9903 = vrot.slane %v9901, 4
        %v9904 = vrot.slane %v8279, 5
        %v9905 = vsel %vm3717, %v9903, %v9904
        %v9906 = vrot.slane %v9670, 5
        %v9907 = vrot.slane %v9906, 4
        %v9908 = vrot.slane %v8281, 5
        %v9909 = vsel %vm3717, %v9907, %v9908
        %v9910 = vrot.slane %v9908, 4
        %v9911 = vrot.slane %v8282, 5
        %v9912 = vsel %vm3717, %v9910, %v9911
        %v9913 = vrot.slane %v9671, 5
        %v9914 = vrot.slane %v9913, 4
        %v9915 = vrot.slane %v8284, 5
        %v9916 = vsel %vm3717, %v9914, %v9915
        %v9917 = vrot.slane %v9915, 4
        %v9918 = vrot.slane %v8285, 5
        %v9919 = vsel %vm3717, %v9917, %v9918
        %v9920 = vrot.slane %v9672, 5
        %v9921 = vrot.slane %v9920, 4
        %v9922 = vrot.slane %v8287, 5
        %v9923 = vsel %vm3717, %v9921, %v9922
        %v9924 = vrot.slane %v9922, 4
        %v9925 = vrot.slane %v8288, 5
        %v9926 = vsel %vm3717, %v9924, %v9925
        %v9927 = vrot.slane %v9673, 5
        %v9928 = vrot.slane %v9927, 4
        %v9929 = vrot.slane %v8290, 5
        %v9930 = vsel %vm3717, %v9928, %v9929
        %v9931 = vrot.slane %v9929, 4
        %v9932 = vrot.slane %v8291, 5
        %v9933 = vsel %vm3717, %v9931, %v9932
        %v9934 = vrot.slane %v9674, 5
        %v9935 = vrot.slane %v9934, 4
        %v9936 = vrot.slane %v8293, 5
        %v9937 = vsel %vm3717, %v9935, %v9936
        %v9938 = vrot.slane %v9936, 4
        %v9939 = vrot.slane %v8294, 5
        %v9940 = vsel %vm3717, %v9938, %v9939
        %v9941 = vrot.slane %v9675, 5
        %v9942 = vrot.slane %v9941, 4
        %v9943 = vrot.slane %v8296, 5
        %v9944 = vsel %vm3717, %v9942, %v9943
        %v9945 = vrot.slane %v9943, 4
        %v9946 = vrot.slane %v8297, 5
        %v9947 = vsel %vm3717, %v9945, %v9946
        %v9948 = vrot.slane %v9676, 5
        %v9949 = vrot.slane %v9948, 4
        %v9950 = vrot.slane %v8299, 5
        %v9951 = vsel %vm3717, %v9949, %v9950
        %v9952 = vrot.slane %v9950, 4
        %v9953 = vrot.slane %v8300, 5
        %v9954 = vsel %vm3717, %v9952, %v9953
        %v9955 = vrot.slane %v9677, 5
        %v9956 = vrot.slane %v9955, 4
        %v9957 = vrot.slane %v8302, 5
        %v9958 = vsel %vm3717, %v9956, %v9957
        %v9959 = vrot.slane %v9957, 4
        %v9960 = vrot.slane %v8303, 5
        %v9961 = vsel %vm3717, %v9959, %v9960
        %v9962 = vrot.slane %v9678, 5
        %v9963 = vrot.slane %v9962, 4
        %v9964 = vrot.slane %v8305, 5
        %v9965 = vsel %vm3717, %v9963, %v9964
        %v9966 = vrot.slane %v9964, 4
        %v9967 = vrot.slane %v8306, 5
        %v9968 = vsel %vm3717, %v9966, %v9967
        %v9969 = vrot.slane %v9679, 5
        %v9970 = vrot.slane %v9969, 4
        %v9971 = vrot.slane %v8308, 5
        %v9972 = vsel %vm3717, %v9970, %v9971
        %v9973 = vrot.slane %v9971, 4
        %v9974 = vrot.slane %v8309, 5
        %v9975 = vsel %vm3717, %v9973, %v9974
        %v9976 = vrot.slane %v9680, 5
        %v9977 = vrot.slane %v9976, 4
        %v9978 = vrot.slane %v8311, 5
        %v9979 = vsel %vm3717, %v9977, %v9978
        %v9980 = vrot.slane %v9978, 4
        %v9981 = vrot.slane %v8312, 5
        %v9982 = vsel %vm3717, %v9980, %v9981
        %v9983 = vrot.slane %v9681, 5
        %v9984 = vrot.slane %v9983, 4
        %v9985 = vrot.slane %v8314, 5
        %v9986 = vsel %vm3717, %v9984, %v9985
        %v9987 = vrot.slane %v9985, 4
        %v9988 = vrot.slane %v8315, 5
        %v9989 = vsel %vm3717, %v9987, %v9988
        %v9990 = vrot.slane %v9682, 5
        %v9991 = vrot.slane %v9990, 4
        %v9992 = vrot.slane %v8317, 5
        %v9993 = vsel %vm3717, %v9991, %v9992
        %v9994 = vrot.slane %v9992, 4
        %v9995 = vrot.slane %v8318, 5
        %v9996 = vsel %vm3717, %v9994, %v9995
        %v9997 = vrot.slane %v9683, 5
        %v9998 = vrot.slane %v9997, 4
        %v9999 = vrot.slane %v8320, 5
        %v10000 = vsel %vm3717, %v9998, %v9999
        %v10001 = vrot.slane %v9999, 4
        %v10002 = vrot.slane %v8321, 5
        %v10003 = vsel %vm3717, %v10001, %v10002
        %s10004 = scalar_lea.vmem [#allocation6], 128
        %v10005 = vld [vmem:[%s10004] sm:$0xf]
        %v10006 = vld [vmem:[%s10004 + $0x4] sm:$0xf]
        %v10007 = vld [vmem:[%s10004 + $0x8] sm:$0xf]
        %v10008 = vld [vmem:[%s10004 + $0xc] sm:$0xf]
        %v10009 = vunpack.c.l.b16 %v9783
        %v10010 = vunpack.c.l.b16 %v9786
        %v10011 = vunpack.c.l.b16 %v9790
        %v10012 = vunpack.c.l.b16 %v9793
        %v10013 = vunpack.c.l.b16 %v9797
        %v10014 = vunpack.c.l.b16 %v9800
        %v10015 = vunpack.c.l.b16 %v9804
        %v10016 = vunpack.c.l.b16 %v9807
        %v10017 = vunpack.c.l.b16 %v9811
        %v10018 = vunpack.c.l.b16 %v9814
        %v10019 = vunpack.c.l.b16 %v9818
        %v10020 = vunpack.c.l.b16 %v9821
        %v10021 = vunpack.c.l.b16 %v9825
        %v10022 = vunpack.c.l.b16 %v9828
        %v10023 = vunpack.c.l.b16 %v9832
        %v10024 = vunpack.c.l.b16 %v9835
        %v10025 = vunpack.c.l.b16 %v9839
        %v10026 = vunpack.c.l.b16 %v9842
        %v10027 = vunpack.c.l.b16 %v9846
        %v10028 = vunpack.c.l.b16 %v9849
        %v10029 = vunpack.c.l.b16 %v9853
        %v10030 = vunpack.c.l.b16 %v9856
        %v10031 = vunpack.c.l.b16 %v9860
        %v10032 = vunpack.c.l.b16 %v9863
        %v10033 = vunpack.c.l.b16 %v9867
        %v10034 = vunpack.c.l.b16 %v9870
        %v10035 = vunpack.c.l.b16 %v9874
        %v10036 = vunpack.c.l.b16 %v9877
        %v10037 = vunpack.c.l.b16 %v9881
        %v10038 = vunpack.c.l.b16 %v9884
        %v10039 = vunpack.c.l.b16 %v9888
        %v10040 = vunpack.c.l.b16 %v9891
        %v10041 = vunpack.c.l.b16 %v9895
        %v10042 = vunpack.c.l.b16 %v9898
        %v10043 = vunpack.c.l.b16 %v9902
        %v10044 = vunpack.c.l.b16 %v9905
        %v10045 = vunpack.c.l.b16 %v9909
        %v10046 = vunpack.c.l.b16 %v9912
        %v10047 = vunpack.c.l.b16 %v9916
        %v10048 = vunpack.c.l.b16 %v9919
        %v10049 = vunpack.c.l.b16 %v9923
        %v10050 = vunpack.c.l.b16 %v9926
        %v10051 = vunpack.c.l.b16 %v9930
        %v10052 = vunpack.c.l.b16 %v9933
        %v10053 = vunpack.c.l.b16 %v9937
        %v10054 = vunpack.c.l.b16 %v9940
        %v10055 = vunpack.c.l.b16 %v9944
        %v10056 = vunpack.c.l.b16 %v9947
        %v10057 = vunpack.c.l.b16 %v9951
        %v10058 = vunpack.c.l.b16 %v9954
        %v10059 = vunpack.c.l.b16 %v9958
        %v10060 = vunpack.c.l.b16 %v9961
        %v10061 = vunpack.c.l.b16 %v9965
        %v10062 = vunpack.c.l.b16 %v9968
        %v10063 = vunpack.c.l.b16 %v9972
        %v10064 = vunpack.c.l.b16 %v9975
        %v10065 = vunpack.c.l.b16 %v9979
        %v10066 = vunpack.c.l.b16 %v9982
        %v10067 = vunpack.c.l.b16 %v9986
        %v10068 = vunpack.c.l.b16 %v9989
        %v10069 = vunpack.c.l.b16 %v9993
        %v10070 = vunpack.c.l.b16 %v9996
        %v10071 = vunpack.c.l.b16 %v10000
        %v10072 = vunpack.c.l.b16 %v10003
        %v10073 = vpack.c.b16 %v10010, %v10009
        %v10074 = vpack.c.b16 %v10012, %v10011
        %v10075 = vpack.c.b16 %v10014, %v10013
        %v10076 = vpack.c.b16 %v10016, %v10015
        %v10077 = vpack.c.b16 %v10018, %v10017
        %v10078 = vpack.c.b16 %v10020, %v10019
        %v10079 = vpack.c.b16 %v10022, %v10021
        %v10080 = vpack.c.b16 %v10024, %v10023
        %v10081 = vpack.c.b16 %v10026, %v10025
        %v10082 = vpack.c.b16 %v10028, %v10027
        %v10083 = vpack.c.b16 %v10030, %v10029
        %v10084 = vpack.c.b16 %v10032, %v10031
        %v10085 = vpack.c.b16 %v10034, %v10033
        %v10086 = vpack.c.b16 %v10036, %v10035
        %v10087 = vpack.c.b16 %v10038, %v10037
        %v10088 = vpack.c.b16 %v10040, %v10039
        %v10089 = vpack.c.b16 %v10042, %v10041
        %v10090 = vpack.c.b16 %v10044, %v10043
        %v10091 = vpack.c.b16 %v10046, %v10045
        %v10092 = vpack.c.b16 %v10048, %v10047
        %v10093 = vpack.c.b16 %v10050, %v10049
        %v10094 = vpack.c.b16 %v10052, %v10051
        %v10095 = vpack.c.b16 %v10054, %v10053
        %v10096 = vpack.c.b16 %v10056, %v10055
        %v10097 = vpack.c.b16 %v10058, %v10057
        %v10098 = vpack.c.b16 %v10060, %v10059
        %v10099 = vpack.c.b16 %v10062, %v10061
        %v10100 = vpack.c.b16 %v10064, %v10063
        %v10101 = vpack.c.b16 %v10066, %v10065
        %v10102 = vpack.c.b16 %v10068, %v10067
        %v10103 = vpack.c.b16 %v10070, %v10069
        %v10104 = vpack.c.b16 %v10072, %v10071
        %v10109 = vunpack.c.l.b16 %v10005
        %v10110 = vunpack.c.l.b16 %v10006
        %v10111 = vunpack.c.l.b16 %v10007
        %v10112 = vunpack.c.l.b16 %v10008
        %v10113 = vpack.c.b16 %v10110, %v10109
        %v10114 = vpack.c.b16 %v10112, %v10111
        %v10118 = vsel %vm2676, %v10073, 0
        %v10121 = vsel %vm2676, %v10074, 0
        %v10124 = vsel %vm2676, %v10075, 0
        %v10127 = vsel %vm2676, %v10076, 0
        %v10130 = vsel %vm2676, %v10077, 0
        %v10133 = vsel %vm2676, %v10078, 0
        %v10136 = vsel %vm2676, %v10079, 0
        %v10139 = vsel %vm2676, %v10080, 0
        %v10142 = vsel %vm2676, %v10081, 0
        %v10145 = vsel %vm2676, %v10082, 0
        %v10148 = vsel %vm2676, %v10083, 0
        %v10151 = vsel %vm2676, %v10084, 0
        %v10154 = vsel %vm2676, %v10085, 0
        %v10157 = vsel %vm2676, %v10086, 0
        %v10160 = vsel %vm2676, %v10087, 0
        %v10163 = vsel %vm2676, %v10088, 0
        %v10166 = vsel %vm2676, %v10089, 0
        %v10169 = vsel %vm2676, %v10090, 0
        %v10172 = vsel %vm2676, %v10091, 0
        %v10175 = vsel %vm2676, %v10092, 0
        %v10178 = vsel %vm2676, %v10093, 0
        %v10181 = vsel %vm2676, %v10094, 0
        %v10184 = vsel %vm2676, %v10095, 0
        %v10187 = vsel %vm2676, %v10096, 0
        %v10190 = vsel %vm2676, %v10097, 0
        %v10193 = vsel %vm2676, %v10098, 0
        %v10196 = vsel %vm2676, %v10099, 0
        %v10199 = vsel %vm2676, %v10100, 0
        %v10202 = vsel %vm2676, %v10101, 0
        %v10205 = vsel %vm2676, %v10102, 0
        %v10208 = vsel %vm2676, %v10103, 0
        %v10211 = vsel %vm2676, %v10104, 0
        %10213 = vmatprep.subr.bf16.mxu0 0
        %10214 = vmatpush1.bf16.msra.mxu0 0
        %10215 = vmatprep.subr.bf16.mxu0 0
        %10216 = vmatpush1.bf16.msra.mxu0 0
        %10217 = vmatprep.subr.bf16.mxu0 0
        %10218 = vmatpush1.bf16.msra.mxu0 0
        %10219 = vmatprep.subr.bf16.mxu0 0
        %10220 = vmatpush1.bf16.msra.mxu0 0
        %10221 = vmatprep.subr.bf16.mxu0 0
        %10222 = vmatpush1.bf16.msra.mxu0 0
        %10223 = vmatprep.subr.bf16.mxu0 0
        %10224 = vmatpush1.bf16.msra.mxu0 0
        %10225 = vmatprep.subr.bf16.mxu0 0
        %10226 = vmatpush1.bf16.msra.mxu0 %v10114
        %10227 = vmatprep.subr.bf16.mxu0 0
        %10228 = vmatpush1.bf16.msra.mxu0 %v10113
        %10229 = vmatprep.subr.bf16.mxu0 0
        %10230 = vmatpush2.bf16.msra.mxu0 0
        %10231 = vmatprep.subr.bf16.mxu0 0
        %10232 = vmatpush2.bf16.msra.mxu0 0
        %10233 = vmatprep.subr.bf16.mxu0 0
        %10234 = vmatpush2.bf16.msra.mxu0 0
        %10235 = vmatprep.subr.bf16.mxu0 0
        %10236 = vmatpush2.bf16.msra.mxu0 0
        %10237 = vmatprep.subr.bf16.mxu0 0
        %10238 = vmatpush2.bf16.msra.mxu0 0
        %10239 = vmatprep.subr.bf16.mxu0 0
        %10240 = vmatpush2.bf16.msra.mxu0 0
        %10241 = vmatprep.subr.bf16.mxu0 0
        %10242 = vmatpush2.bf16.msra.mxu0 0
        %10243 = vmatprep.subr.bf16.mxu0 0
        %10244 = vmatpush2.bf16.msra.mxu0 0
        %10245 = vmatprep.mubr.bf16.mxu0 0
        %10246 = vmatmul.mubr.bf16.gmra.mxu0 %v10118
        %v10247 = vpop.f32.mrf.mxu0
        %v10248 = vadd.f32 0.0, %v10247
        %v10249 = vpop.f32.mrf.mxu0
        %v10250 = vpop.f32.mrf.mxu0
        %v10251 = vadd.f32 0.0, %v10250
        %v10252 = vpop.f32.mrf.mxu0
        %10253 = vmatprep.mubr.bf16.mxu0 0
        %10254 = vmatmul.mubr.bf16.gmra.mxu0 %v10121
        %v10255 = vpop.f32.mrf.mxu0
        %v10256 = vadd.f32 0.0, %v10255
        %v10257 = vpop.f32.mrf.mxu0
        %v10258 = vpop.f32.mrf.mxu0
        %v10259 = vadd.f32 0.0, %v10258
        %v10260 = vpop.f32.mrf.mxu0
        %10261 = vmatprep.mubr.bf16.mxu0 0
        %10262 = vmatmul.mubr.bf16.gmra.mxu0 %v10124
        %v10263 = vpop.f32.mrf.mxu0
        %v10264 = vadd.f32 0.0, %v10263
        %v10265 = vpop.f32.mrf.mxu0
        %v10266 = vpop.f32.mrf.mxu0
        %v10267 = vadd.f32 0.0, %v10266
        %v10268 = vpop.f32.mrf.mxu0
        %10269 = vmatprep.mubr.bf16.mxu0 0
        %10270 = vmatmul.mubr.bf16.gmra.mxu0 %v10127
        %v10271 = vpop.f32.mrf.mxu0
        %v10272 = vadd.f32 0.0, %v10271
        %v10273 = vpop.f32.mrf.mxu0
        %v10274 = vpop.f32.mrf.mxu0
        %v10275 = vadd.f32 0.0, %v10274
        %v10276 = vpop.f32.mrf.mxu0
        %10277 = vmatprep.mubr.bf16.mxu0 0
        %10278 = vmatmul.mubr.bf16.gmra.mxu0 %v10130
        %v10279 = vpop.f32.mrf.mxu0
        %v10280 = vadd.f32 0.0, %v10279
        %v10281 = vpop.f32.mrf.mxu0
        %v10282 = vpop.f32.mrf.mxu0
        %v10283 = vadd.f32 0.0, %v10282
        %v10284 = vpop.f32.mrf.mxu0
        %10285 = vmatprep.mubr.bf16.mxu0 0
        %10286 = vmatmul.mubr.bf16.gmra.mxu0 %v10133
        %v10287 = vpop.f32.mrf.mxu0
        %v10288 = vadd.f32 0.0, %v10287
        %v10289 = vpop.f32.mrf.mxu0
        %v10290 = vpop.f32.mrf.mxu0
        %v10291 = vadd.f32 0.0, %v10290
        %v10292 = vpop.f32.mrf.mxu0
        %10293 = vmatprep.mubr.bf16.mxu0 0
        %10294 = vmatmul.mubr.bf16.gmra.mxu0 %v10136
        %v10295 = vpop.f32.mrf.mxu0
        %v10296 = vadd.f32 0.0, %v10295
        %v10297 = vpop.f32.mrf.mxu0
        %v10298 = vpop.f32.mrf.mxu0
        %v10299 = vadd.f32 0.0, %v10298
        %v10300 = vpop.f32.mrf.mxu0
        %10301 = vmatprep.mubr.bf16.mxu0 0
        %10302 = vmatmul.mubr.bf16.gmra.mxu0 %v10139
        %v10303 = vpop.f32.mrf.mxu0
        %v10304 = vadd.f32 0.0, %v10303
        %v10305 = vpop.f32.mrf.mxu0
        %v10306 = vpop.f32.mrf.mxu0
        %v10307 = vadd.f32 0.0, %v10306
        %v10308 = vpop.f32.mrf.mxu0
        %10309 = vmatprep.mubr.bf16.mxu0 0
        %10310 = vmatmul.mubr.bf16.gmra.mxu0 %v10142
        %v10311 = vpop.f32.mrf.mxu0
        %v10312 = vadd.f32 0.0, %v10311
        %v10313 = vpop.f32.mrf.mxu0
        %v10314 = vpop.f32.mrf.mxu0
        %v10315 = vadd.f32 0.0, %v10314
        %v10316 = vpop.f32.mrf.mxu0
        %10317 = vmatprep.mubr.bf16.mxu0 0
        %10318 = vmatmul.mubr.bf16.gmra.mxu0 %v10145
        %v10319 = vpop.f32.mrf.mxu0
        %v10320 = vadd.f32 0.0, %v10319
        %v10321 = vpop.f32.mrf.mxu0
        %v10322 = vpop.f32.mrf.mxu0
        %v10323 = vadd.f32 0.0, %v10322
        %v10324 = vpop.f32.mrf.mxu0
        %10325 = vmatprep.mubr.bf16.mxu0 0
        %10326 = vmatmul.mubr.bf16.gmra.mxu0 %v10148
        %v10327 = vpop.f32.mrf.mxu0
        %v10328 = vadd.f32 0.0, %v10327
        %v10329 = vpop.f32.mrf.mxu0
        %v10330 = vpop.f32.mrf.mxu0
        %v10331 = vadd.f32 0.0, %v10330
        %v10332 = vpop.f32.mrf.mxu0
        %10333 = vmatprep.mubr.bf16.mxu0 0
        %10334 = vmatmul.mubr.bf16.gmra.mxu0 %v10151
        %v10335 = vpop.f32.mrf.mxu0
        %v10336 = vadd.f32 0.0, %v10335
        %v10337 = vpop.f32.mrf.mxu0
        %v10338 = vpop.f32.mrf.mxu0
        %v10339 = vadd.f32 0.0, %v10338
        %v10340 = vpop.f32.mrf.mxu0
        %10341 = vmatprep.mubr.bf16.mxu0 0
        %10342 = vmatmul.mubr.bf16.gmra.mxu0 %v10154
        %v10343 = vpop.f32.mrf.mxu0
        %v10344 = vadd.f32 0.0, %v10343
        %v10345 = vpop.f32.mrf.mxu0
        %v10346 = vpop.f32.mrf.mxu0
        %v10347 = vadd.f32 0.0, %v10346
        %v10348 = vpop.f32.mrf.mxu0
        %10349 = vmatprep.mubr.bf16.mxu0 0
        %10350 = vmatmul.mubr.bf16.gmra.mxu0 %v10157
        %v10351 = vpop.f32.mrf.mxu0
        %v10352 = vadd.f32 0.0, %v10351
        %v10353 = vpop.f32.mrf.mxu0
        %v10354 = vpop.f32.mrf.mxu0
        %v10355 = vadd.f32 0.0, %v10354
        %v10356 = vpop.f32.mrf.mxu0
        %10357 = vmatprep.mubr.bf16.mxu0 0
        %10358 = vmatmul.mubr.bf16.gmra.mxu0 %v10160
        %v10359 = vpop.f32.mrf.mxu0
        %v10360 = vadd.f32 0.0, %v10359
        %v10361 = vpop.f32.mrf.mxu0
        %v10362 = vpop.f32.mrf.mxu0
        %v10363 = vadd.f32 0.0, %v10362
        %v10364 = vpop.f32.mrf.mxu0
        %10365 = vmatprep.mubr.bf16.mxu0 0
        %10366 = vmatmul.mubr.bf16.gmra.mxu0 %v10163
        %v10367 = vpop.f32.mrf.mxu0
        %v10368 = vadd.f32 0.0, %v10367
        %v10369 = vpop.f32.mrf.mxu0
        %v10370 = vpop.f32.mrf.mxu0
        %v10371 = vadd.f32 0.0, %v10370
        %v10372 = vpop.f32.mrf.mxu0
        %10373 = vmatprep.mubr.bf16.mxu0 0
        %10374 = vmatmul.mubr.bf16.gmra.mxu0 %v10166
        %v10375 = vpop.f32.mrf.mxu0
        %v10376 = vadd.f32 0.0, %v10375
        %v10377 = vpop.f32.mrf.mxu0
        %v10378 = vpop.f32.mrf.mxu0
        %v10379 = vadd.f32 0.0, %v10378
        %v10380 = vpop.f32.mrf.mxu0
        %10381 = vmatprep.mubr.bf16.mxu0 0
        %10382 = vmatmul.mubr.bf16.gmra.mxu0 %v10169
        %v10383 = vpop.f32.mrf.mxu0
        %v10384 = vadd.f32 0.0, %v10383
        %v10385 = vpop.f32.mrf.mxu0
        %v10386 = vpop.f32.mrf.mxu0
        %v10387 = vadd.f32 0.0, %v10386
        %v10388 = vpop.f32.mrf.mxu0
        %10389 = vmatprep.mubr.bf16.mxu0 0
        %10390 = vmatmul.mubr.bf16.gmra.mxu0 %v10172
        %v10391 = vpop.f32.mrf.mxu0
        %v10392 = vadd.f32 0.0, %v10391
        %v10393 = vpop.f32.mrf.mxu0
        %v10394 = vpop.f32.mrf.mxu0
        %v10395 = vadd.f32 0.0, %v10394
        %v10396 = vpop.f32.mrf.mxu0
        %10397 = vmatprep.mubr.bf16.mxu0 0
        %10398 = vmatmul.mubr.bf16.gmra.mxu0 %v10175
        %v10399 = vpop.f32.mrf.mxu0
        %v10400 = vadd.f32 0.0, %v10399
        %v10401 = vpop.f32.mrf.mxu0
        %v10402 = vpop.f32.mrf.mxu0
        %v10403 = vadd.f32 0.0, %v10402
        %v10404 = vpop.f32.mrf.mxu0
        %10405 = vmatprep.mubr.bf16.mxu0 0
        %10406 = vmatmul.mubr.bf16.gmra.mxu0 %v10178
        %v10407 = vpop.f32.mrf.mxu0
        %v10408 = vadd.f32 0.0, %v10407
        %v10409 = vpop.f32.mrf.mxu0
        %v10410 = vpop.f32.mrf.mxu0
        %v10411 = vadd.f32 0.0, %v10410
        %v10412 = vpop.f32.mrf.mxu0
        %10413 = vmatprep.mubr.bf16.mxu0 0
        %10414 = vmatmul.mubr.bf16.gmra.mxu0 %v10181
        %v10415 = vpop.f32.mrf.mxu0
        %v10416 = vadd.f32 0.0, %v10415
        %v10417 = vpop.f32.mrf.mxu0
        %v10418 = vpop.f32.mrf.mxu0
        %v10419 = vadd.f32 0.0, %v10418
        %v10420 = vpop.f32.mrf.mxu0
        %10421 = vmatprep.mubr.bf16.mxu0 0
        %10422 = vmatmul.mubr.bf16.gmra.mxu0 %v10184
        %v10423 = vpop.f32.mrf.mxu0
        %v10424 = vadd.f32 0.0, %v10423
        %v10425 = vpop.f32.mrf.mxu0
        %v10426 = vpop.f32.mrf.mxu0
        %v10427 = vadd.f32 0.0, %v10426
        %v10428 = vpop.f32.mrf.mxu0
        %10429 = vmatprep.mubr.bf16.mxu0 0
        %10430 = vmatmul.mubr.bf16.gmra.mxu0 %v10187
        %v10431 = vpop.f32.mrf.mxu0
        %v10432 = vadd.f32 0.0, %v10431
        %v10433 = vpop.f32.mrf.mxu0
        %v10434 = vpop.f32.mrf.mxu0
        %v10435 = vadd.f32 0.0, %v10434
        %v10436 = vpop.f32.mrf.mxu0
        %10437 = vmatprep.mubr.bf16.mxu0 0
        %10438 = vmatmul.mubr.bf16.gmra.mxu0 %v10190
        %v10439 = vpop.f32.mrf.mxu0
        %v10440 = vadd.f32 0.0, %v10439
        %v10441 = vpop.f32.mrf.mxu0
        %v10442 = vpop.f32.mrf.mxu0
        %v10443 = vadd.f32 0.0, %v10442
        %v10444 = vpop.f32.mrf.mxu0
        %10445 = vmatprep.mubr.bf16.mxu0 0
        %10446 = vmatmul.mubr.bf16.gmra.mxu0 %v10193
        %v10447 = vpop.f32.mrf.mxu0
        %v10448 = vadd.f32 0.0, %v10447
        %v10449 = vpop.f32.mrf.mxu0
        %v10450 = vpop.f32.mrf.mxu0
        %v10451 = vadd.f32 0.0, %v10450
        %v10452 = vpop.f32.mrf.mxu0
        %10453 = vmatprep.mubr.bf16.mxu0 0
        %10454 = vmatmul.mubr.bf16.gmra.mxu0 %v10196
        %v10455 = vpop.f32.mrf.mxu0
        %v10456 = vadd.f32 0.0, %v10455
        %v10457 = vpop.f32.mrf.mxu0
        %v10458 = vpop.f32.mrf.mxu0
        %v10459 = vadd.f32 0.0, %v10458
        %v10460 = vpop.f32.mrf.mxu0
        %10461 = vmatprep.mubr.bf16.mxu0 0
        %10462 = vmatmul.mubr.bf16.gmra.mxu0 %v10199
        %v10463 = vpop.f32.mrf.mxu0
        %v10464 = vadd.f32 0.0, %v10463
        %v10465 = vpop.f32.mrf.mxu0
        %v10466 = vpop.f32.mrf.mxu0
        %v10467 = vadd.f32 0.0, %v10466
        %v10468 = vpop.f32.mrf.mxu0
        %10469 = vmatprep.mubr.bf16.mxu0 0
        %10470 = vmatmul.mubr.bf16.gmra.mxu0 %v10202
        %v10471 = vpop.f32.mrf.mxu0
        %v10472 = vadd.f32 0.0, %v10471
        %v10473 = vpop.f32.mrf.mxu0
        %v10474 = vpop.f32.mrf.mxu0
        %v10475 = vadd.f32 0.0, %v10474
        %v10476 = vpop.f32.mrf.mxu0
        %10477 = vmatprep.mubr.bf16.mxu0 0
        %10478 = vmatmul.mubr.bf16.gmra.mxu0 %v10205
        %v10479 = vpop.f32.mrf.mxu0
        %v10480 = vadd.f32 0.0, %v10479
        %v10481 = vpop.f32.mrf.mxu0
        %v10482 = vpop.f32.mrf.mxu0
        %v10483 = vadd.f32 0.0, %v10482
        %v10484 = vpop.f32.mrf.mxu0
        %10485 = vmatprep.mubr.bf16.mxu0 0
        %10486 = vmatmul.mubr.bf16.gmra.mxu0 %v10208
        %v10487 = vpop.f32.mrf.mxu0
        %v10488 = vadd.f32 0.0, %v10487
        %v10489 = vpop.f32.mrf.mxu0
        %v10490 = vpop.f32.mrf.mxu0
        %v10491 = vadd.f32 0.0, %v10490
        %v10492 = vpop.f32.mrf.mxu0
        %10493 = vmatprep.mubr.bf16.mxu0 0
        %10494 = vmatmul.mubr.bf16.gmra.mxu0 %v10211
        %v10495 = vpop.f32.mrf.mxu0
        %v10496 = vadd.f32 0.0, %v10495
        %v10497 = vpop.f32.mrf.mxu0
        %v10498 = vpop.f32.mrf.mxu0
        %v10499 = vadd.f32 0.0, %v10498
        %v10500 = vpop.f32.mrf.mxu0
        %10501 = vdwg.mxu0
        %v10502 = vadd.f32 %v9588, %v10248
        %v10503 = vadd.f32 %v9589, %v10251
        %v10504 = vadd.f32 %v9590, %v10256
        %v10505 = vadd.f32 %v9591, %v10259
        %v10506 = vadd.f32 %v9592, %v10264
        %v10507 = vadd.f32 %v9593, %v10267
        %v10508 = vadd.f32 %v9594, %v10272
        %v10509 = vadd.f32 %v9595, %v10275
        %v10510 = vadd.f32 %v9596, %v10280
        %v10511 = vadd.f32 %v9597, %v10283
        %v10512 = vadd.f32 %v9598, %v10288
        %v10513 = vadd.f32 %v9599, %v10291
        %v10514 = vadd.f32 %v9600, %v10296
        %v10515 = vadd.f32 %v9601, %v10299
        %v10516 = vadd.f32 %v9602, %v10304
        %v10517 = vadd.f32 %v9603, %v10307
        %v10518 = vadd.f32 %v9604, %v10312
        %v10519 = vadd.f32 %v9605, %v10315
        %v10520 = vadd.f32 %v9606, %v10320
        %v10521 = vadd.f32 %v9607, %v10323
        %v10522 = vadd.f32 %v9608, %v10328
        %v10523 = vadd.f32 %v9609, %v10331
        %v10524 = vadd.f32 %v9610, %v10336
        %v10525 = vadd.f32 %v9611, %v10339
        %v10526 = vadd.f32 %v9612, %v10344
        %v10527 = vadd.f32 %v9613, %v10347
        %v10528 = vadd.f32 %v9614, %v10352
        %v10529 = vadd.f32 %v9615, %v10355
        %v10530 = vadd.f32 %v9616, %v10360
        %v10531 = vadd.f32 %v9617, %v10363
        %v10532 = vadd.f32 %v9618, %v10368
        %v10533 = vadd.f32 %v9619, %v10371
        %v10534 = vadd.f32 %v9620, %v10376
        %v10535 = vadd.f32 %v9621, %v10379
        %v10536 = vadd.f32 %v9622, %v10384
        %v10537 = vadd.f32 %v9623, %v10387
        %v10538 = vadd.f32 %v9624, %v10392
        %v10539 = vadd.f32 %v9625, %v10395
        %v10540 = vadd.f32 %v9626, %v10400
        %v10541 = vadd.f32 %v9627, %v10403
        %v10542 = vadd.f32 %v9628, %v10408
        %v10543 = vadd.f32 %v9629, %v10411
        %v10544 = vadd.f32 %v9630, %v10416
        %v10545 = vadd.f32 %v9631, %v10419
        %v10546 = vadd.f32 %v9632, %v10424
        %v10547 = vadd.f32 %v9633, %v10427
        %v10548 = vadd.f32 %v9634, %v10432
        %v10549 = vadd.f32 %v9635, %v10435
        %v10550 = vadd.f32 %v9636, %v10440
        %v10551 = vadd.f32 %v9637, %v10443
        %v10552 = vadd.f32 %v9638, %v10448
        %v10553 = vadd.f32 %v9639, %v10451
        %v10554 = vadd.f32 %v9640, %v10456
        %v10555 = vadd.f32 %v9641, %v10459
        %v10556 = vadd.f32 %v9642, %v10464
        %v10557 = vadd.f32 %v9643, %v10467
        %v10558 = vadd.f32 %v9644, %v10472
        %v10559 = vadd.f32 %v9645, %v10475
        %v10560 = vadd.f32 %v9646, %v10480
        %v10561 = vadd.f32 %v9647, %v10483
        %v10562 = vadd.f32 %v9648, %v10488
        %v10563 = vadd.f32 %v9649, %v10491
        %v10564 = vadd.f32 %v9650, %v10496
        %v10565 = vadd.f32 %v9651, %v10499
        %v10566 = vld [vmem:[%s4] sm:$0x1]
        %v10568 = vlaneseq
        %v10569 = vshrl.u32 %v10568, 7
        %v10570 = vsub.s32 0, %v10569
        %v10571 = vrot.slane %v10566, %v10570
        %v10573 = vadd.f32 %v10502, %v10571
        %v10574 = vadd.f32 %v10503, %v10571
        %v10575 = vadd.f32 %v10504, %v10571
        %v10576 = vadd.f32 %v10505, %v10571
        %v10577 = vadd.f32 %v10506, %v10571
        %v10578 = vadd.f32 %v10507, %v10571
        %v10579 = vadd.f32 %v10508, %v10571
        %v10580 = vadd.f32 %v10509, %v10571
        %v10581 = vadd.f32 %v10510, %v10571
        %v10582 = vadd.f32 %v10511, %v10571
        %v10583 = vadd.f32 %v10512, %v10571
        %v10584 = vadd.f32 %v10513, %v10571
        %v10585 = vadd.f32 %v10514, %v10571
        %v10586 = vadd.f32 %v10515, %v10571
        %v10587 = vadd.f32 %v10516, %v10571
        %v10588 = vadd.f32 %v10517, %v10571
        %v10589 = vadd.f32 %v10518, %v10571
        %v10590 = vadd.f32 %v10519, %v10571
        %v10591 = vadd.f32 %v10520, %v10571
        %v10592 = vadd.f32 %v10521, %v10571
        %v10593 = vadd.f32 %v10522, %v10571
        %v10594 = vadd.f32 %v10523, %v10571
        %v10595 = vadd.f32 %v10524, %v10571
        %v10596 = vadd.f32 %v10525, %v10571
        %v10597 = vadd.f32 %v10526, %v10571
        %v10598 = vadd.f32 %v10527, %v10571
        %v10599 = vadd.f32 %v10528, %v10571
        %v10600 = vadd.f32 %v10529, %v10571
        %v10601 = vadd.f32 %v10530, %v10571
        %v10602 = vadd.f32 %v10531, %v10571
        %v10603 = vadd.f32 %v10532, %v10571
        %v10604 = vadd.f32 %v10533, %v10571
        %v10605 = vadd.f32 %v10534, %v10571
        %v10606 = vadd.f32 %v10535, %v10571
        %v10607 = vadd.f32 %v10536, %v10571
        %v10608 = vadd.f32 %v10537, %v10571
        %v10609 = vadd.f32 %v10538, %v10571
        %v10610 = vadd.f32 %v10539, %v10571
        %v10611 = vadd.f32 %v10540, %v10571
        %v10612 = vadd.f32 %v10541, %v10571
        %v10613 = vadd.f32 %v10542, %v10571
        %v10614 = vadd.f32 %v10543, %v10571
        %v10615 = vadd.f32 %v10544, %v10571
        %v10616 = vadd.f32 %v10545, %v10571
        %v10617 = vadd.f32 %v10546, %v10571
        %v10618 = vadd.f32 %v10547, %v10571
        %v10619 = vadd.f32 %v10548, %v10571
        %v10620 = vadd.f32 %v10549, %v10571
        %v10621 = vadd.f32 %v10550, %v10571
        %v10622 = vadd.f32 %v10551, %v10571
        %v10623 = vadd.f32 %v10552, %v10571
        %v10624 = vadd.f32 %v10553, %v10571
        %v10625 = vadd.f32 %v10554, %v10571
        %v10626 = vadd.f32 %v10555, %v10571
        %v10627 = vadd.f32 %v10556, %v10571
        %v10628 = vadd.f32 %v10557, %v10571
        %v10629 = vadd.f32 %v10558, %v10571
        %v10630 = vadd.f32 %v10559, %v10571
        %v10631 = vadd.f32 %v10560, %v10571
        %v10632 = vadd.f32 %v10561, %v10571
        %v10633 = vadd.f32 %v10562, %v10571
        %v10634 = vadd.f32 %v10563, %v10571
        %v10635 = vadd.f32 %v10564, %v10571
        %v10636 = vadd.f32 %v10565, %v10571
        %v10637 = vmax.f32 %v10573, 0.0
        %v10638 = vmax.f32 %v10574, 0.0
        %v10639 = vmax.f32 %v10575, 0.0
        %v10640 = vmax.f32 %v10576, 0.0
        %v10641 = vmax.f32 %v10577, 0.0
        %v10642 = vmax.f32 %v10578, 0.0
        %v10643 = vmax.f32 %v10579, 0.0
        %v10644 = vmax.f32 %v10580, 0.0
        %v10645 = vmax.f32 %v10581, 0.0
        %v10646 = vmax.f32 %v10582, 0.0
        %v10647 = vmax.f32 %v10583, 0.0
        %v10648 = vmax.f32 %v10584, 0.0
        %v10649 = vmax.f32 %v10585, 0.0
        %v10650 = vmax.f32 %v10586, 0.0
        %v10651 = vmax.f32 %v10587, 0.0
        %v10652 = vmax.f32 %v10588, 0.0
        %v10653 = vmax.f32 %v10589, 0.0
        %v10654 = vmax.f32 %v10590, 0.0
        %v10655 = vmax.f32 %v10591, 0.0
        %v10656 = vmax.f32 %v10592, 0.0
        %v10657 = vmax.f32 %v10593, 0.0
        %v10658 = vmax.f32 %v10594, 0.0
        %v10659 = vmax.f32 %v10595, 0.0
        %v10660 = vmax.f32 %v10596, 0.0
        %v10661 = vmax.f32 %v10597, 0.0
        %v10662 = vmax.f32 %v10598, 0.0
        %v10663 = vmax.f32 %v10599, 0.0
        %v10664 = vmax.f32 %v10600, 0.0
        %v10665 = vmax.f32 %v10601, 0.0
        %v10666 = vmax.f32 %v10602, 0.0
        %v10667 = vmax.f32 %v10603, 0.0
        %v10668 = vmax.f32 %v10604, 0.0
        %v10669 = vmax.f32 %v10605, 0.0
        %v10670 = vmax.f32 %v10606, 0.0
        %v10671 = vmax.f32 %v10607, 0.0
        %v10672 = vmax.f32 %v10608, 0.0
        %v10673 = vmax.f32 %v10609, 0.0
        %v10674 = vmax.f32 %v10610, 0.0
        %v10675 = vmax.f32 %v10611, 0.0
        %v10676 = vmax.f32 %v10612, 0.0
        %v10677 = vmax.f32 %v10613, 0.0
        %v10678 = vmax.f32 %v10614, 0.0
        %v10679 = vmax.f32 %v10615, 0.0
        %v10680 = vmax.f32 %v10616, 0.0
        %v10681 = vmax.f32 %v10617, 0.0
        %v10682 = vmax.f32 %v10618, 0.0
        %v10683 = vmax.f32 %v10619, 0.0
        %v10684 = vmax.f32 %v10620, 0.0
        %v10685 = vmax.f32 %v10621, 0.0
        %v10686 = vmax.f32 %v10622, 0.0
        %v10687 = vmax.f32 %v10623, 0.0
        %v10688 = vmax.f32 %v10624, 0.0
        %v10689 = vmax.f32 %v10625, 0.0
        %v10690 = vmax.f32 %v10626, 0.0
        %v10691 = vmax.f32 %v10627, 0.0
        %v10692 = vmax.f32 %v10628, 0.0
        %v10693 = vmax.f32 %v10629, 0.0
        %v10694 = vmax.f32 %v10630, 0.0
        %v10695 = vmax.f32 %v10631, 0.0
        %v10696 = vmax.f32 %v10632, 0.0
        %v10697 = vmax.f32 %v10633, 0.0
        %v10698 = vmax.f32 %v10634, 0.0
        %v10699 = vmax.f32 %v10635, 0.0
        %v10700 = vmax.f32 %v10636, 0.0
        %v10701 = vpack.c.bf16 %v10638, %v10637
        %v10702 = vpack.c.bf16 %v10640, %v10639
        %v10703 = vpack.c.bf16 %v10642, %v10641
        %v10704 = vpack.c.bf16 %v10644, %v10643
        %v10705 = vpack.c.bf16 %v10646, %v10645
        %v10706 = vpack.c.bf16 %v10648, %v10647
        %v10707 = vpack.c.bf16 %v10650, %v10649
        %v10708 = vpack.c.bf16 %v10652, %v10651
        %v10709 = vpack.c.bf16 %v10654, %v10653
        %v10710 = vpack.c.bf16 %v10656, %v10655
        %v10711 = vpack.c.bf16 %v10658, %v10657
        %v10712 = vpack.c.bf16 %v10660, %v10659
        %v10713 = vpack.c.bf16 %v10662, %v10661
        %v10714 = vpack.c.bf16 %v10664, %v10663
        %v10715 = vpack.c.bf16 %v10666, %v10665
        %v10716 = vpack.c.bf16 %v10668, %v10667
        %v10717 = vpack.c.bf16 %v10670, %v10669
        %v10718 = vpack.c.bf16 %v10672, %v10671
        %v10719 = vpack.c.bf16 %v10674, %v10673
        %v10720 = vpack.c.bf16 %v10676, %v10675
        %v10721 = vpack.c.bf16 %v10678, %v10677
        %v10722 = vpack.c.bf16 %v10680, %v10679
        %v10723 = vpack.c.bf16 %v10682, %v10681
        %v10724 = vpack.c.bf16 %v10684, %v10683
        %v10725 = vpack.c.bf16 %v10686, %v10685
        %v10726 = vpack.c.bf16 %v10688, %v10687
        %v10727 = vpack.c.bf16 %v10690, %v10689
        %v10728 = vpack.c.bf16 %v10692, %v10691
        %v10729 = vpack.c.bf16 %v10694, %v10693
        %v10730 = vpack.c.bf16 %v10696, %v10695
        %v10731 = vpack.c.bf16 %v10698, %v10697
        %v10732 = vpack.c.bf16 %v10700, %v10699
        %v10733 = vld [vmem:[%s5] sm:$0xf]
        %v10734 = vld [vmem:[%s5 + $0x4] sm:$0xf]
        %v10735 = vld [vmem:[%s5 + $0x8] sm:$0xf]
        %v10736 = vld [vmem:[%s5 + $0xc] sm:$0xf]
        %v10737 = vld [vmem:[%s6] sm:$0x1]
        %v10739 = vlaneseq
        %v10740 = vshrl.u32 %v10739, 7
        %v10741 = vsub.s32 0, %v10740
        %v10742 = vrot.slane %v10737, %v10741
        %v10748 = vunpack.c.l.b16 %v10733
        %v10749 = vunpack.c.l.b16 %v10734
        %v10750 = vunpack.c.l.b16 %v10735
        %v10751 = vunpack.c.l.b16 %v10736
        %v10752 = vpack.c.b16 %v10749, %v10748
        %v10753 = vpack.c.b16 %v10751, %v10750
        %v10757 = vsel %vm2676, %v10701, 0
        %v10760 = vsel %vm2676, %v10702, 0
        %v10763 = vsel %vm2676, %v10703, 0
        %v10766 = vsel %vm2676, %v10704, 0
        %v10769 = vsel %vm2676, %v10705, 0
        %v10772 = vsel %vm2676, %v10706, 0
        %v10775 = vsel %vm2676, %v10707, 0
        %v10778 = vsel %vm2676, %v10708, 0
        %v10781 = vsel %vm2676, %v10709, 0
        %v10784 = vsel %vm2676, %v10710, 0
        %v10787 = vsel %vm2676, %v10711, 0
        %v10790 = vsel %vm2676, %v10712, 0
        %v10793 = vsel %vm2676, %v10713, 0
        %v10796 = vsel %vm2676, %v10714, 0
        %v10799 = vsel %vm2676, %v10715, 0
        %v10802 = vsel %vm2676, %v10716, 0
        %v10805 = vsel %vm2676, %v10717, 0
        %v10808 = vsel %vm2676, %v10718, 0
        %v10811 = vsel %vm2676, %v10719, 0
        %v10814 = vsel %vm2676, %v10720, 0
        %v10817 = vsel %vm2676, %v10721, 0
        %v10820 = vsel %vm2676, %v10722, 0
        %v10823 = vsel %vm2676, %v10723, 0
        %v10826 = vsel %vm2676, %v10724, 0
        %v10829 = vsel %vm2676, %v10725, 0
        %v10832 = vsel %vm2676, %v10726, 0
        %v10835 = vsel %vm2676, %v10727, 0
        %v10838 = vsel %vm2676, %v10728, 0
        %v10841 = vsel %vm2676, %v10729, 0
        %v10844 = vsel %vm2676, %v10730, 0
        %v10847 = vsel %vm2676, %v10731, 0
        %v10850 = vsel %vm2676, %v10732, 0
        %10852 = vmatprep.subr.bf16.mxu0 0
        %10853 = vmatpush1.bf16.msra.mxu0 0
        %10854 = vmatprep.subr.bf16.mxu0 0
        %10855 = vmatpush1.bf16.msra.mxu0 0
        %10856 = vmatprep.subr.bf16.mxu0 0
        %10857 = vmatpush1.bf16.msra.mxu0 0
        %10858 = vmatprep.subr.bf16.mxu0 0
        %10859 = vmatpush1.bf16.msra.mxu0 0
        %10860 = vmatprep.subr.bf16.mxu0 0
        %10861 = vmatpush1.bf16.msra.mxu0 0
        %10862 = vmatprep.subr.bf16.mxu0 0
        %10863 = vmatpush1.bf16.msra.mxu0 0
        %10864 = vmatprep.subr.bf16.mxu0 0
        %10865 = vmatpush1.bf16.msra.mxu0 %v10753
        %10866 = vmatprep.subr.bf16.mxu0 0
        %10867 = vmatpush1.bf16.msra.mxu0 %v10752
        %10868 = vmatprep.subr.bf16.mxu0 0
        %10869 = vmatpush2.bf16.msra.mxu0 0
        %10870 = vmatprep.subr.bf16.mxu0 0
        %10871 = vmatpush2.bf16.msra.mxu0 0
        %10872 = vmatprep.subr.bf16.mxu0 0
        %10873 = vmatpush2.bf16.msra.mxu0 0
        %10874 = vmatprep.subr.bf16.mxu0 0
        %10875 = vmatpush2.bf16.msra.mxu0 0
        %10876 = vmatprep.subr.bf16.mxu0 0
        %10877 = vmatpush2.bf16.msra.mxu0 0
        %10878 = vmatprep.subr.bf16.mxu0 0
        %10879 = vmatpush2.bf16.msra.mxu0 0
        %10880 = vmatprep.subr.bf16.mxu0 0
        %10881 = vmatpush2.bf16.msra.mxu0 0
        %10882 = vmatprep.subr.bf16.mxu0 0
        %10883 = vmatpush2.bf16.msra.mxu0 0
        %10884 = vmatprep.mubr.bf16.mxu0 0
        %10885 = vmatmul.mubr.bf16.gmra.mxu0 %v10757
        %v10886 = vpop.f32.mrf.mxu0
        %v10887 = vadd.f32 %v10742, %v10886
        %v10888 = vpop.f32.mrf.mxu0
        %v10889 = vpop.f32.mrf.mxu0
        %v10890 = vadd.f32 %v10742, %v10889
        %v10891 = vpop.f32.mrf.mxu0
        %10892 = vmatprep.mubr.bf16.mxu0 0
        %10893 = vmatmul.mubr.bf16.gmra.mxu0 %v10760
        %v10894 = vpop.f32.mrf.mxu0
        %v10895 = vadd.f32 %v10742, %v10894
        %v10896 = vpop.f32.mrf.mxu0
        %v10897 = vpop.f32.mrf.mxu0
        %v10898 = vadd.f32 %v10742, %v10897
        %v10899 = vpop.f32.mrf.mxu0
        %10900 = vmatprep.mubr.bf16.mxu0 0
        %10901 = vmatmul.mubr.bf16.gmra.mxu0 %v10763
        %v10902 = vpop.f32.mrf.mxu0
        %v10903 = vadd.f32 %v10742, %v10902
        %v10904 = vpop.f32.mrf.mxu0
        %v10905 = vpop.f32.mrf.mxu0
        %v10906 = vadd.f32 %v10742, %v10905
        %v10907 = vpop.f32.mrf.mxu0
        %10908 = vmatprep.mubr.bf16.mxu0 0
        %10909 = vmatmul.mubr.bf16.gmra.mxu0 %v10766
        %v10910 = vpop.f32.mrf.mxu0
        %v10911 = vadd.f32 %v10742, %v10910
        %v10912 = vpop.f32.mrf.mxu0
        %v10913 = vpop.f32.mrf.mxu0
        %v10914 = vadd.f32 %v10742, %v10913
        %v10915 = vpop.f32.mrf.mxu0
        %10916 = vmatprep.mubr.bf16.mxu0 0
        %10917 = vmatmul.mubr.bf16.gmra.mxu0 %v10769
        %v10918 = vpop.f32.mrf.mxu0
        %v10919 = vadd.f32 %v10742, %v10918
        %v10920 = vpop.f32.mrf.mxu0
        %v10921 = vpop.f32.mrf.mxu0
        %v10922 = vadd.f32 %v10742, %v10921
        %v10923 = vpop.f32.mrf.mxu0
        %10924 = vmatprep.mubr.bf16.mxu0 0
        %10925 = vmatmul.mubr.bf16.gmra.mxu0 %v10772
        %v10926 = vpop.f32.mrf.mxu0
        %v10927 = vadd.f32 %v10742, %v10926
        %v10928 = vpop.f32.mrf.mxu0
        %v10929 = vpop.f32.mrf.mxu0
        %v10930 = vadd.f32 %v10742, %v10929
        %v10931 = vpop.f32.mrf.mxu0
        %10932 = vmatprep.mubr.bf16.mxu0 0
        %10933 = vmatmul.mubr.bf16.gmra.mxu0 %v10775
        %v10934 = vpop.f32.mrf.mxu0
        %v10935 = vadd.f32 %v10742, %v10934
        %v10936 = vpop.f32.mrf.mxu0
        %v10937 = vpop.f32.mrf.mxu0
        %v10938 = vadd.f32 %v10742, %v10937
        %v10939 = vpop.f32.mrf.mxu0
        %10940 = vmatprep.mubr.bf16.mxu0 0
        %10941 = vmatmul.mubr.bf16.gmra.mxu0 %v10778
        %v10942 = vpop.f32.mrf.mxu0
        %v10943 = vadd.f32 %v10742, %v10942
        %v10944 = vpop.f32.mrf.mxu0
        %v10945 = vpop.f32.mrf.mxu0
        %v10946 = vadd.f32 %v10742, %v10945
        %v10947 = vpop.f32.mrf.mxu0
        %10948 = vmatprep.mubr.bf16.mxu0 0
        %10949 = vmatmul.mubr.bf16.gmra.mxu0 %v10781
        %v10950 = vpop.f32.mrf.mxu0
        %v10951 = vadd.f32 %v10742, %v10950
        %v10952 = vpop.f32.mrf.mxu0
        %v10953 = vpop.f32.mrf.mxu0
        %v10954 = vadd.f32 %v10742, %v10953
        %v10955 = vpop.f32.mrf.mxu0
        %10956 = vmatprep.mubr.bf16.mxu0 0
        %10957 = vmatmul.mubr.bf16.gmra.mxu0 %v10784
        %v10958 = vpop.f32.mrf.mxu0
        %v10959 = vadd.f32 %v10742, %v10958
        %v10960 = vpop.f32.mrf.mxu0
        %v10961 = vpop.f32.mrf.mxu0
        %v10962 = vadd.f32 %v10742, %v10961
        %v10963 = vpop.f32.mrf.mxu0
        %10964 = vmatprep.mubr.bf16.mxu0 0
        %10965 = vmatmul.mubr.bf16.gmra.mxu0 %v10787
        %v10966 = vpop.f32.mrf.mxu0
        %v10967 = vadd.f32 %v10742, %v10966
        %v10968 = vpop.f32.mrf.mxu0
        %v10969 = vpop.f32.mrf.mxu0
        %v10970 = vadd.f32 %v10742, %v10969
        %v10971 = vpop.f32.mrf.mxu0
        %10972 = vmatprep.mubr.bf16.mxu0 0
        %10973 = vmatmul.mubr.bf16.gmra.mxu0 %v10790
        %v10974 = vpop.f32.mrf.mxu0
        %v10975 = vadd.f32 %v10742, %v10974
        %v10976 = vpop.f32.mrf.mxu0
        %v10977 = vpop.f32.mrf.mxu0
        %v10978 = vadd.f32 %v10742, %v10977
        %v10979 = vpop.f32.mrf.mxu0
        %10980 = vmatprep.mubr.bf16.mxu0 0
        %10981 = vmatmul.mubr.bf16.gmra.mxu0 %v10793
        %v10982 = vpop.f32.mrf.mxu0
        %v10983 = vadd.f32 %v10742, %v10982
        %v10984 = vpop.f32.mrf.mxu0
        %v10985 = vpop.f32.mrf.mxu0
        %v10986 = vadd.f32 %v10742, %v10985
        %v10987 = vpop.f32.mrf.mxu0
        %10988 = vmatprep.mubr.bf16.mxu0 0
        %10989 = vmatmul.mubr.bf16.gmra.mxu0 %v10796
        %v10990 = vpop.f32.mrf.mxu0
        %v10991 = vadd.f32 %v10742, %v10990
        %v10992 = vpop.f32.mrf.mxu0
        %v10993 = vpop.f32.mrf.mxu0
        %v10994 = vadd.f32 %v10742, %v10993
        %v10995 = vpop.f32.mrf.mxu0
        %10996 = vmatprep.mubr.bf16.mxu0 0
        %10997 = vmatmul.mubr.bf16.gmra.mxu0 %v10799
        %v10998 = vpop.f32.mrf.mxu0
        %v10999 = vadd.f32 %v10742, %v10998
        %v11000 = vpop.f32.mrf.mxu0
        %v11001 = vpop.f32.mrf.mxu0
        %v11002 = vadd.f32 %v10742, %v11001
        %v11003 = vpop.f32.mrf.mxu0
        %11004 = vmatprep.mubr.bf16.mxu0 0
        %11005 = vmatmul.mubr.bf16.gmra.mxu0 %v10802
        %v11006 = vpop.f32.mrf.mxu0
        %v11007 = vadd.f32 %v10742, %v11006
        %v11008 = vpop.f32.mrf.mxu0
        %v11009 = vpop.f32.mrf.mxu0
        %v11010 = vadd.f32 %v10742, %v11009
        %v11011 = vpop.f32.mrf.mxu0
        %11012 = vmatprep.mubr.bf16.mxu0 0
        %11013 = vmatmul.mubr.bf16.gmra.mxu0 %v10805
        %v11014 = vpop.f32.mrf.mxu0
        %v11015 = vadd.f32 %v10742, %v11014
        %v11016 = vpop.f32.mrf.mxu0
        %v11017 = vpop.f32.mrf.mxu0
        %v11018 = vadd.f32 %v10742, %v11017
        %v11019 = vpop.f32.mrf.mxu0
        %11020 = vmatprep.mubr.bf16.mxu0 0
        %11021 = vmatmul.mubr.bf16.gmra.mxu0 %v10808
        %v11022 = vpop.f32.mrf.mxu0
        %v11023 = vadd.f32 %v10742, %v11022
        %v11024 = vpop.f32.mrf.mxu0
        %v11025 = vpop.f32.mrf.mxu0
        %v11026 = vadd.f32 %v10742, %v11025
        %v11027 = vpop.f32.mrf.mxu0
        %11028 = vmatprep.mubr.bf16.mxu0 0
        %11029 = vmatmul.mubr.bf16.gmra.mxu0 %v10811
        %v11030 = vpop.f32.mrf.mxu0
        %v11031 = vadd.f32 %v10742, %v11030
        %v11032 = vpop.f32.mrf.mxu0
        %v11033 = vpop.f32.mrf.mxu0
        %v11034 = vadd.f32 %v10742, %v11033
        %v11035 = vpop.f32.mrf.mxu0
        %11036 = vmatprep.mubr.bf16.mxu0 0
        %11037 = vmatmul.mubr.bf16.gmra.mxu0 %v10814
        %v11038 = vpop.f32.mrf.mxu0
        %v11039 = vadd.f32 %v10742, %v11038
        %v11040 = vpop.f32.mrf.mxu0
        %v11041 = vpop.f32.mrf.mxu0
        %v11042 = vadd.f32 %v10742, %v11041
        %v11043 = vpop.f32.mrf.mxu0
        %11044 = vmatprep.mubr.bf16.mxu0 0
        %11045 = vmatmul.mubr.bf16.gmra.mxu0 %v10817
        %v11046 = vpop.f32.mrf.mxu0
        %v11047 = vadd.f32 %v10742, %v11046
        %v11048 = vpop.f32.mrf.mxu0
        %v11049 = vpop.f32.mrf.mxu0
        %v11050 = vadd.f32 %v10742, %v11049
        %v11051 = vpop.f32.mrf.mxu0
        %11052 = vmatprep.mubr.bf16.mxu0 0
        %11053 = vmatmul.mubr.bf16.gmra.mxu0 %v10820
        %v11054 = vpop.f32.mrf.mxu0
        %v11055 = vadd.f32 %v10742, %v11054
        %v11056 = vpop.f32.mrf.mxu0
        %v11057 = vpop.f32.mrf.mxu0
        %v11058 = vadd.f32 %v10742, %v11057
        %v11059 = vpop.f32.mrf.mxu0
        %11060 = vmatprep.mubr.bf16.mxu0 0
        %11061 = vmatmul.mubr.bf16.gmra.mxu0 %v10823
        %v11062 = vpop.f32.mrf.mxu0
        %v11063 = vadd.f32 %v10742, %v11062
        %v11064 = vpop.f32.mrf.mxu0
        %v11065 = vpop.f32.mrf.mxu0
        %v11066 = vadd.f32 %v10742, %v11065
        %v11067 = vpop.f32.mrf.mxu0
        %11068 = vmatprep.mubr.bf16.mxu0 0
        %11069 = vmatmul.mubr.bf16.gmra.mxu0 %v10826
        %v11070 = vpop.f32.mrf.mxu0
        %v11071 = vadd.f32 %v10742, %v11070
        %v11072 = vpop.f32.mrf.mxu0
        %v11073 = vpop.f32.mrf.mxu0
        %v11074 = vadd.f32 %v10742, %v11073
        %v11075 = vpop.f32.mrf.mxu0
        %11076 = vmatprep.mubr.bf16.mxu0 0
        %11077 = vmatmul.mubr.bf16.gmra.mxu0 %v10829
        %v11078 = vpop.f32.mrf.mxu0
        %v11079 = vadd.f32 %v10742, %v11078
        %v11080 = vpop.f32.mrf.mxu0
        %v11081 = vpop.f32.mrf.mxu0
        %v11082 = vadd.f32 %v10742, %v11081
        %v11083 = vpop.f32.mrf.mxu0
        %11084 = vmatprep.mubr.bf16.mxu0 0
        %11085 = vmatmul.mubr.bf16.gmra.mxu0 %v10832
        %v11086 = vpop.f32.mrf.mxu0
        %v11087 = vadd.f32 %v10742, %v11086
        %v11088 = vpop.f32.mrf.mxu0
        %v11089 = vpop.f32.mrf.mxu0
        %v11090 = vadd.f32 %v10742, %v11089
        %v11091 = vpop.f32.mrf.mxu0
        %11092 = vmatprep.mubr.bf16.mxu0 0
        %11093 = vmatmul.mubr.bf16.gmra.mxu0 %v10835
        %v11094 = vpop.f32.mrf.mxu0
        %v11095 = vadd.f32 %v10742, %v11094
        %v11096 = vpop.f32.mrf.mxu0
        %v11097 = vpop.f32.mrf.mxu0
        %v11098 = vadd.f32 %v10742, %v11097
        %v11099 = vpop.f32.mrf.mxu0
        %11100 = vmatprep.mubr.bf16.mxu0 0
        %11101 = vmatmul.mubr.bf16.gmra.mxu0 %v10838
        %v11102 = vpop.f32.mrf.mxu0
        %v11103 = vadd.f32 %v10742, %v11102
        %v11104 = vpop.f32.mrf.mxu0
        %v11105 = vpop.f32.mrf.mxu0
        %v11106 = vadd.f32 %v10742, %v11105
        %v11107 = vpop.f32.mrf.mxu0
        %11108 = vmatprep.mubr.bf16.mxu0 0
        %11109 = vmatmul.mubr.bf16.gmra.mxu0 %v10841
        %v11110 = vpop.f32.mrf.mxu0
        %v11111 = vadd.f32 %v10742, %v11110
        %v11112 = vpop.f32.mrf.mxu0
        %v11113 = vpop.f32.mrf.mxu0
        %v11114 = vadd.f32 %v10742, %v11113
        %v11115 = vpop.f32.mrf.mxu0
        %11116 = vmatprep.mubr.bf16.mxu0 0
        %11117 = vmatmul.mubr.bf16.gmra.mxu0 %v10844
        %v11118 = vpop.f32.mrf.mxu0
        %v11119 = vadd.f32 %v10742, %v11118
        %v11120 = vpop.f32.mrf.mxu0
        %v11121 = vpop.f32.mrf.mxu0
        %v11122 = vadd.f32 %v10742, %v11121
        %v11123 = vpop.f32.mrf.mxu0
        %11124 = vmatprep.mubr.bf16.mxu0 0
        %11125 = vmatmul.mubr.bf16.gmra.mxu0 %v10847
        %v11126 = vpop.f32.mrf.mxu0
        %v11127 = vadd.f32 %v10742, %v11126
        %v11128 = vpop.f32.mrf.mxu0
        %v11129 = vpop.f32.mrf.mxu0
        %v11130 = vadd.f32 %v10742, %v11129
        %v11131 = vpop.f32.mrf.mxu0
        %11132 = vmatprep.mubr.bf16.mxu0 0
        %11133 = vmatmul.mubr.bf16.gmra.mxu0 %v10850
        %v11134 = vpop.f32.mrf.mxu0
        %v11135 = vadd.f32 %v10742, %v11134
        %v11136 = vpop.f32.mrf.mxu0
        %v11137 = vpop.f32.mrf.mxu0
        %v11138 = vadd.f32 %v10742, %v11137
        %v11139 = vpop.f32.mrf.mxu0
        %11140 = vdwg.mxu0
        %v11141 = vld [vmem:[%s278] sm:$0xff]
        %v11142 = vld [vmem:[%s278 + $0x8] sm:$0xff]
        %v11143 = vld [vmem:[%s278 + $0x10] sm:$0xff]
        %v11144 = vld [vmem:[%s278 + $0x18] sm:$0xff]
        %v11145 = vld [vmem:[%s278 + $0x20] sm:$0xff]
        %v11146 = vld [vmem:[%s278 + $0x28] sm:$0xff]
        %v11147 = vld [vmem:[%s278 + $0x30] sm:$0xff]
        %v11148 = vld [vmem:[%s278 + $0x38] sm:$0xff]
        %v11149 = vld [vmem:[%s278 + $0x40] sm:$0xff]
        %v11150 = vld [vmem:[%s278 + $0x48] sm:$0xff]
        %v11151 = vld [vmem:[%s278 + $0x50] sm:$0xff]
        %v11152 = vld [vmem:[%s278 + $0x58] sm:$0xff]
        %v11153 = vld [vmem:[%s278 + $0x60] sm:$0xff]
        %v11154 = vld [vmem:[%s278 + $0x68] sm:$0xff]
        %v11155 = vld [vmem:[%s278 + $0x70] sm:$0xff]
        %v11156 = vld [vmem:[%s278 + $0x78] sm:$0xff]
        %v11157 = vld [vmem:[%s278 + $0x80] sm:$0xff]
        %v11158 = vld [vmem:[%s278 + $0x88] sm:$0xff]
        %v11159 = vld [vmem:[%s278 + $0x90] sm:$0xff]
        %v11160 = vld [vmem:[%s278 + $0x98] sm:$0xff]
        %v11161 = vld [vmem:[%s278 + $0xa0] sm:$0xff]
        %v11162 = vld [vmem:[%s278 + $0xa8] sm:$0xff]
        %v11163 = vld [vmem:[%s278 + $0xb0] sm:$0xff]
        %v11164 = vld [vmem:[%s278 + $0xb8] sm:$0xff]
        %v11165 = vld [vmem:[%s278 + $0xc0] sm:$0xff]
        %v11166 = vld [vmem:[%s278 + $0xc8] sm:$0xff]
        %v11167 = vld [vmem:[%s278 + $0xd0] sm:$0xff]
        %v11168 = vld [vmem:[%s278 + $0xd8] sm:$0xff]
        %v11169 = vld [vmem:[%s278 + $0xe0] sm:$0xff]
        %v11170 = vld [vmem:[%s278 + $0xe8] sm:$0xff]
        %v11171 = vld [vmem:[%s278 + $0xf0] sm:$0xff]
        %v11172 = vld [vmem:[%s278 + $0xf8] sm:$0xff]
        %v11173 = vld [vmem:[%s278 + $0x100] sm:$0xff]
        %v11174 = vld [vmem:[%s278 + $0x108] sm:$0xff]
        %v11175 = vld [vmem:[%s278 + $0x110] sm:$0xff]
        %v11176 = vld [vmem:[%s278 + $0x118] sm:$0xff]
        %v11177 = vld [vmem:[%s278 + $0x120] sm:$0xff]
        %v11178 = vld [vmem:[%s278 + $0x128] sm:$0xff]
        %v11179 = vld [vmem:[%s278 + $0x130] sm:$0xff]
        %v11180 = vld [vmem:[%s278 + $0x138] sm:$0xff]
        %v11181 = vld [vmem:[%s278 + $0x140] sm:$0xff]
        %v11182 = vld [vmem:[%s278 + $0x148] sm:$0xff]
        %v11183 = vld [vmem:[%s278 + $0x150] sm:$0xff]
        %v11184 = vld [vmem:[%s278 + $0x158] sm:$0xff]
        %v11185 = vld [vmem:[%s278 + $0x160] sm:$0xff]
        %v11186 = vld [vmem:[%s278 + $0x168] sm:$0xff]
        %v11187 = vld [vmem:[%s278 + $0x170] sm:$0xff]
        %v11188 = vld [vmem:[%s278 + $0x178] sm:$0xff]
        %v11189 = vld [vmem:[%s278 + $0x180] sm:$0xff]
        %v11190 = vld [vmem:[%s278 + $0x188] sm:$0xff]
        %v11191 = vld [vmem:[%s278 + $0x190] sm:$0xff]
        %v11192 = vld [vmem:[%s278 + $0x198] sm:$0xff]
        %v11193 = vld [vmem:[%s278 + $0x1a0] sm:$0xff]
        %v11194 = vld [vmem:[%s278 + $0x1a8] sm:$0xff]
        %v11195 = vld [vmem:[%s278 + $0x1b0] sm:$0xff]
        %v11196 = vld [vmem:[%s278 + $0x1b8] sm:$0xff]
        %v11197 = vld [vmem:[%s278 + $0x1c0] sm:$0xff]
        %v11198 = vld [vmem:[%s278 + $0x1c8] sm:$0xff]
        %v11199 = vld [vmem:[%s278 + $0x1d0] sm:$0xff]
        %v11200 = vld [vmem:[%s278 + $0x1d8] sm:$0xff]
        %v11201 = vld [vmem:[%s278 + $0x1e0] sm:$0xff]
        %v11202 = vld [vmem:[%s278 + $0x1e8] sm:$0xff]
        %v11203 = vld [vmem:[%s278 + $0x1f0] sm:$0xff]
        %v11204 = vld [vmem:[%s278 + $0x1f8] sm:$0xff]
        %v11205 = vadd.f32 %v10887, %v11141
        %v11206 = vadd.f32 %v10890, %v11142
        %v11207 = vadd.f32 %v10895, %v11143
        %v11208 = vadd.f32 %v10898, %v11144
        %v11209 = vadd.f32 %v10903, %v11145
        %v11210 = vadd.f32 %v10906, %v11146
        %v11211 = vadd.f32 %v10911, %v11147
        %v11212 = vadd.f32 %v10914, %v11148
        %v11213 = vadd.f32 %v10919, %v11149
        %v11214 = vadd.f32 %v10922, %v11150
        %v11215 = vadd.f32 %v10927, %v11151
        %v11216 = vadd.f32 %v10930, %v11152
        %v11217 = vadd.f32 %v10935, %v11153
        %v11218 = vadd.f32 %v10938, %v11154
        %v11219 = vadd.f32 %v10943, %v11155
        %v11220 = vadd.f32 %v10946, %v11156
        %v11221 = vadd.f32 %v10951, %v11157
        %v11222 = vadd.f32 %v10954, %v11158
        %v11223 = vadd.f32 %v10959, %v11159
        %v11224 = vadd.f32 %v10962, %v11160
        %v11225 = vadd.f32 %v10967, %v11161
        %v11226 = vadd.f32 %v10970, %v11162
        %v11227 = vadd.f32 %v10975, %v11163
        %v11228 = vadd.f32 %v10978, %v11164
        %v11229 = vadd.f32 %v10983, %v11165
        %v11230 = vadd.f32 %v10986, %v11166
        %v11231 = vadd.f32 %v10991, %v11167
        %v11232 = vadd.f32 %v10994, %v11168
        %v11233 = vadd.f32 %v10999, %v11169
        %v11234 = vadd.f32 %v11002, %v11170
        %v11235 = vadd.f32 %v11007, %v11171
        %v11236 = vadd.f32 %v11010, %v11172
        %v11237 = vadd.f32 %v11015, %v11173
        %v11238 = vadd.f32 %v11018, %v11174
        %v11239 = vadd.f32 %v11023, %v11175
        %v11240 = vadd.f32 %v11026, %v11176
        %v11241 = vadd.f32 %v11031, %v11177
        %v11242 = vadd.f32 %v11034, %v11178
        %v11243 = vadd.f32 %v11039, %v11179
        %v11244 = vadd.f32 %v11042, %v11180
        %v11245 = vadd.f32 %v11047, %v11181
        %v11246 = vadd.f32 %v11050, %v11182
        %v11247 = vadd.f32 %v11055, %v11183
        %v11248 = vadd.f32 %v11058, %v11184
        %v11249 = vadd.f32 %v11063, %v11185
        %v11250 = vadd.f32 %v11066, %v11186
        %v11251 = vadd.f32 %v11071, %v11187
        %v11252 = vadd.f32 %v11074, %v11188
        %v11253 = vadd.f32 %v11079, %v11189
        %v11254 = vadd.f32 %v11082, %v11190
        %v11255 = vadd.f32 %v11087, %v11191
        %v11256 = vadd.f32 %v11090, %v11192
        %v11257 = vadd.f32 %v11095, %v11193
        %v11258 = vadd.f32 %v11098, %v11194
        %v11259 = vadd.f32 %v11103, %v11195
        %v11260 = vadd.f32 %v11106, %v11196
        %v11261 = vadd.f32 %v11111, %v11197
        %v11262 = vadd.f32 %v11114, %v11198
        %v11263 = vadd.f32 %v11119, %v11199
        %v11264 = vadd.f32 %v11122, %v11200
        %v11265 = vadd.f32 %v11127, %v11201
        %v11266 = vadd.f32 %v11130, %v11202
        %v11267 = vadd.f32 %v11135, %v11203
        %v11268 = vadd.f32 %v11138, %v11204
        %v11269 = vmax.f32 %v11205, 0.0
        %v11270 = vmax.f32 %v11206, 0.0
        %v11271 = vmax.f32 %v11207, 0.0
        %v11272 = vmax.f32 %v11208, 0.0
        %v11273 = vmax.f32 %v11209, 0.0
        %v11274 = vmax.f32 %v11210, 0.0
        %v11275 = vmax.f32 %v11211, 0.0
        %v11276 = vmax.f32 %v11212, 0.0
        %v11277 = vmax.f32 %v11213, 0.0
        %v11278 = vmax.f32 %v11214, 0.0
        %v11279 = vmax.f32 %v11215, 0.0
        %v11280 = vmax.f32 %v11216, 0.0
        %v11281 = vmax.f32 %v11217, 0.0
        %v11282 = vmax.f32 %v11218, 0.0
        %v11283 = vmax.f32 %v11219, 0.0
        %v11284 = vmax.f32 %v11220, 0.0
        %v11285 = vmax.f32 %v11221, 0.0
        %v11286 = vmax.f32 %v11222, 0.0
        %v11287 = vmax.f32 %v11223, 0.0
        %v11288 = vmax.f32 %v11224, 0.0
        %v11289 = vmax.f32 %v11225, 0.0
        %v11290 = vmax.f32 %v11226, 0.0
        %v11291 = vmax.f32 %v11227, 0.0
        %v11292 = vmax.f32 %v11228, 0.0
        %v11293 = vmax.f32 %v11229, 0.0
        %v11294 = vmax.f32 %v11230, 0.0
        %v11295 = vmax.f32 %v11231, 0.0
        %v11296 = vmax.f32 %v11232, 0.0
        %v11297 = vmax.f32 %v11233, 0.0
        %v11298 = vmax.f32 %v11234, 0.0
        %v11299 = vmax.f32 %v11235, 0.0
        %v11300 = vmax.f32 %v11236, 0.0
        %v11301 = vmax.f32 %v11237, 0.0
        %v11302 = vmax.f32 %v11238, 0.0
        %v11303 = vmax.f32 %v11239, 0.0
        %v11304 = vmax.f32 %v11240, 0.0
        %v11305 = vmax.f32 %v11241, 0.0
        %v11306 = vmax.f32 %v11242, 0.0
        %v11307 = vmax.f32 %v11243, 0.0
        %v11308 = vmax.f32 %v11244, 0.0
        %v11309 = vmax.f32 %v11245, 0.0
        %v11310 = vmax.f32 %v11246, 0.0
        %v11311 = vmax.f32 %v11247, 0.0
        %v11312 = vmax.f32 %v11248, 0.0
        %v11313 = vmax.f32 %v11249, 0.0
        %v11314 = vmax.f32 %v11250, 0.0
        %v11315 = vmax.f32 %v11251, 0.0
        %v11316 = vmax.f32 %v11252, 0.0
        %v11317 = vmax.f32 %v11253, 0.0
        %v11318 = vmax.f32 %v11254, 0.0
        %v11319 = vmax.f32 %v11255, 0.0
        %v11320 = vmax.f32 %v11256, 0.0
        %v11321 = vmax.f32 %v11257, 0.0
        %v11322 = vmax.f32 %v11258, 0.0
        %v11323 = vmax.f32 %v11259, 0.0
        %v11324 = vmax.f32 %v11260, 0.0
        %v11325 = vmax.f32 %v11261, 0.0
        %v11326 = vmax.f32 %v11262, 0.0
        %v11327 = vmax.f32 %v11263, 0.0
        %v11328 = vmax.f32 %v11264, 0.0
        %v11329 = vmax.f32 %v11265, 0.0
        %v11330 = vmax.f32 %v11266, 0.0
        %v11331 = vmax.f32 %v11267, 0.0
        %v11332 = vmax.f32 %v11268, 0.0
        %11333 = vst [vmem:[%s312] sm:$0xff] %v11269
        %11334 = vst [vmem:[%s312 + $0x8] sm:$0xff] %v11270
        %11335 = vst [vmem:[%s312 + $0x10] sm:$0xff] %v11271
        %11336 = vst [vmem:[%s312 + $0x18] sm:$0xff] %v11272
        %11337 = vst [vmem:[%s312 + $0x20] sm:$0xff] %v11273
        %11338 = vst [vmem:[%s312 + $0x28] sm:$0xff] %v11274
        %11339 = vst [vmem:[%s312 + $0x30] sm:$0xff] %v11275
        %11340 = vst [vmem:[%s312 + $0x38] sm:$0xff] %v11276
        %11341 = vst [vmem:[%s312 + $0x40] sm:$0xff] %v11277
        %11342 = vst [vmem:[%s312 + $0x48] sm:$0xff] %v11278
        %11343 = vst [vmem:[%s312 + $0x50] sm:$0xff] %v11279
        %11344 = vst [vmem:[%s312 + $0x58] sm:$0xff] %v11280
        %11345 = vst [vmem:[%s312 + $0x60] sm:$0xff] %v11281
        %11346 = vst [vmem:[%s312 + $0x68] sm:$0xff] %v11282
        %11347 = vst [vmem:[%s312 + $0x70] sm:$0xff] %v11283
        %11348 = vst [vmem:[%s312 + $0x78] sm:$0xff] %v11284
        %11349 = vst [vmem:[%s312 + $0x80] sm:$0xff] %v11285
        %11350 = vst [vmem:[%s312 + $0x88] sm:$0xff] %v11286
        %11351 = vst [vmem:[%s312 + $0x90] sm:$0xff] %v11287
        %11352 = vst [vmem:[%s312 + $0x98] sm:$0xff] %v11288
        %11353 = vst [vmem:[%s312 + $0xa0] sm:$0xff] %v11289
        %11354 = vst [vmem:[%s312 + $0xa8] sm:$0xff] %v11290
        %11355 = vst [vmem:[%s312 + $0xb0] sm:$0xff] %v11291
        %11356 = vst [vmem:[%s312 + $0xb8] sm:$0xff] %v11292
        %11357 = vst [vmem:[%s312 + $0xc0] sm:$0xff] %v11293
        %11358 = vst [vmem:[%s312 + $0xc8] sm:$0xff] %v11294
        %11359 = vst [vmem:[%s312 + $0xd0] sm:$0xff] %v11295
        %11360 = vst [vmem:[%s312 + $0xd8] sm:$0xff] %v11296
        %11361 = vst [vmem:[%s312 + $0xe0] sm:$0xff] %v11297
        %11362 = vst [vmem:[%s312 + $0xe8] sm:$0xff] %v11298
        %11363 = vst [vmem:[%s312 + $0xf0] sm:$0xff] %v11299
        %11364 = vst [vmem:[%s312 + $0xf8] sm:$0xff] %v11300
        %11365 = vst [vmem:[%s312 + $0x100] sm:$0xff] %v11301
        %11366 = vst [vmem:[%s312 + $0x108] sm:$0xff] %v11302
        %11367 = vst [vmem:[%s312 + $0x110] sm:$0xff] %v11303
        %11368 = vst [vmem:[%s312 + $0x118] sm:$0xff] %v11304
        %11369 = vst [vmem:[%s312 + $0x120] sm:$0xff] %v11305
        %11370 = vst [vmem:[%s312 + $0x128] sm:$0xff] %v11306
        %11371 = vst [vmem:[%s312 + $0x130] sm:$0xff] %v11307
        %11372 = vst [vmem:[%s312 + $0x138] sm:$0xff] %v11308
        %11373 = vst [vmem:[%s312 + $0x140] sm:$0xff] %v11309
        %11374 = vst [vmem:[%s312 + $0x148] sm:$0xff] %v11310
        %11375 = vst [vmem:[%s312 + $0x150] sm:$0xff] %v11311
        %11376 = vst [vmem:[%s312 + $0x158] sm:$0xff] %v11312
        %11377 = vst [vmem:[%s312 + $0x160] sm:$0xff] %v11313
        %11378 = vst [vmem:[%s312 + $0x168] sm:$0xff] %v11314
        %11379 = vst [vmem:[%s312 + $0x170] sm:$0xff] %v11315
        %11380 = vst [vmem:[%s312 + $0x178] sm:$0xff] %v11316
        %11381 = vst [vmem:[%s312 + $0x180] sm:$0xff] %v11317
        %11382 = vst [vmem:[%s312 + $0x188] sm:$0xff] %v11318
        %11383 = vst [vmem:[%s312 + $0x190] sm:$0xff] %v11319
        %11384 = vst [vmem:[%s312 + $0x198] sm:$0xff] %v11320
        %11385 = vst [vmem:[%s312 + $0x1a0] sm:$0xff] %v11321
        %11386 = vst [vmem:[%s312 + $0x1a8] sm:$0xff] %v11322
        %11387 = vst [vmem:[%s312 + $0x1b0] sm:$0xff] %v11323
        %11388 = vst [vmem:[%s312 + $0x1b8] sm:$0xff] %v11324
        %11389 = vst [vmem:[%s312 + $0x1c0] sm:$0xff] %v11325
        %11390 = vst [vmem:[%s312 + $0x1c8] sm:$0xff] %v11326
        %11391 = vst [vmem:[%s312 + $0x1d0] sm:$0xff] %v11327
        %11392 = vst [vmem:[%s312 + $0x1d8] sm:$0xff] %v11328
        %11393 = vst [vmem:[%s312 + $0x1e0] sm:$0xff] %v11329
        %11394 = vst [vmem:[%s312 + $0x1e8] sm:$0xff] %v11330
        %11395 = vst [vmem:[%s312 + $0x1f0] sm:$0xff] %v11331
        %11396 = vst [vmem:[%s312 + $0x1f8] sm:$0xff] %v11332
        %s11397 = sand.u32 %s185, 1
        %s11398 = scalar_lea.sflag [#allocation5], %s11397
        %s11399 = sand.u32 %s185, 1
        %s11400 = smul.addr %s11399, 512
        %s11401 = scalar_lea.vmem [#allocation8], %s11400
        // Predicated region
        $region57: #{tpu_custom_call.1} parent=47 // pred_check
          %p11402 = pneg %p195
        $region58: #{tpu_custom_call.1} parent=47 // pred_check_branch
          %11404 = sbr.rel (%p11402) target = $region60
        $region59: #{tpu_custom_call.1} parent=47 // pred_region
          %s11405 = smul.u32 2, %s25
          %s11407 = ssub.s32 8192, 8192
          %11408 = vsyncadd %s11398, %s11407
          %s11409 = smul.addr %s11405, 32
          %s11410 = smul.addr %s11409, 128
          %s11411 = scalar_lea.hbm %s7, %s11410
          %s11412 = sshll.u32 %s11401, 4
          %s11413 = int_to_ptr.vmem [resolvable:$true] %s11412
          %11418 = dma.vmem_to_hbm [thread:$0]  %s11413, 8192, %s11411, %s11398, 128, 128, 8
        $region60: #{tpu_custom_call.1} parent=47 // pred_fallthru
          _
      $region48: #{tpu_custom_call.1} parent=5 // pred_fallthru
        _
      %p11419 = scmp.le.s32.totalorder 2, %s20
      // Predicated region
      $region61: #{tpu_custom_call.1} parent=5 // pred_check
        %p11420 = pneg %p11419
      $region62: #{tpu_custom_call.1} parent=5 // pred_check_branch
        %11422 = sbr.rel (%p11420) target = $region64
      $region63: #{tpu_custom_call.1} parent=5 // pred_region
        %s11423 = ssub.s32 %s20, 2
        // Predicated region
        $region65: #{tpu_custom_call.1} parent=63 // pred_check
          %p11424 = pneg %p201
        $region66: #{tpu_custom_call.1} parent=63 // pred_check_branch
          %11426 = sbr.rel (%p11424) target = $region68
        $region67: #{tpu_custom_call.1} parent=63 // pred_region
          %s11427 = sand.u32 %s186, 1
          %s11428 = scalar_lea.sflag [#allocation5], %s11427
          %s11429 = sand.u32 %s186, 1
          %s11430 = smul.addr %s11429, 512
          %s11431 = scalar_lea.vmem [#allocation8], %s11430
          %11432 = dma.done %s11428, 8192
        $region68: #{tpu_custom_call.1} parent=63 // pred_fallthru
          _
      $region64: #{tpu_custom_call.1} parent=5 // pred_fallthru
        _
    $region6: #{tpu_custom_call.1} parent=1 // loop_footer
      %s24 = sadd.s32 1, %s20
    $region7: #{tpu_custom_call.1} parent=1 // loop_footer_branch
      %19 = sbr.rel target = $region3
    $region8: #{tpu_custom_call.1} parent=1 // loop_exit
      _
    %11433 = vsyncpa [#allocation4], 1
    %s11434 = scalar_lea.sflag [#allocation4], 1
    %11435 = vsyncpa %s11434, 1
    %11436 = vsyncpa [#allocation7], 1
    %11437 = vsyncpa [#allocation5], 1
    %s11438 = scalar_lea.sflag [#allocation5], 1
    %11439 = vsyncpa %s11438, 1

</llo_original>
